<compile_context>
chip_gen: v6e
topology: v6e:2x2x1
jax: 0.10.0
libtpu: 0.0.40
codegen_flags: <defaults>
</compile_context>

<pallas_src>
import math

import jax
import jax.numpy as jnp
from jax import lax
from jax.experimental import pallas as pl
from jax.experimental.pallas import tpu as pltpu

BN_EPS = 1e-5
_INV_SQRT2 = 1.0 / math.sqrt(2.0)
HEAD_LANES = 128          # padded lane width of the boundary-head output


def _gelu_exact(x):
    return 0.5 * x * (1.0 + lax.erf(x * _INV_SQRT2))


# ------------------------------------------------------------------ kernel

def _make_kernel(B, N, H, W, C):
    NH, WC = N * H, W * C

    def kernel(x_ref, rowh_ref, wmw_ref, wmh_ref, whead_ref, bhead_ref,
               w5_ref, w13_ref, w31_ref, w17_ref, w71_ref, vec_ref, wpw_ref,
               bnd_ref, res_ref,
               cur, attn_s, g0_s, g1_s, wdiag_s, whead_s):
        b = pl.program_id(0)

        @pl.when(b == 0)
        def _init():
            cur[...] = x_ref[...]

        # H-direction zero-pad masks: derived ONCE per block (not per tap).
        h_of_row = rowh_ref[...]                                   # (NH, 1) i32
        hmask = {di: ((h_of_row + di >= 0) & (h_of_row + di < H)).astype(jnp.float32)
                 for di in (-3, -2, -1, 1, 2, 3)}

        def shift_h(v, di):
            # out(h, w) = in(h + di, w); zero outside [0, H).
            if di == 0:
                return v
            return pltpu.roll(v, (-di) % NH, axis=0) * hmask[di]

        def roll_w(v, dj):
            # out(h, w) = in(h, w + dj); W zero-padding is folded into weights.
            if dj == 0:
                return v
            return pltpu.roll(v, (-dj * C) % WC, axis=1)

        def vrow(i):
            return vec_ref[i:i + 1, :]                             # (1, WC)
        b5r, b13r, b31r, b17r, b71r, bpwr, gmr, btr = [vrow(i) for i in range(8)]

        # -------------------- depthwise 5x5 -> attn --------------------
        xv = cur[...]
        acc = None
        for i in range(5):
            vi = shift_h(xv, i - 2)
            for j in range(5):
                t = roll_w(vi, j - 2) * w5_ref[i * 5 + j:i * 5 + j + 1, :]
                acc = t if acc is None else acc + t
        attn_s[...] = acc + b5r

        # ---- gate branch: shared W-rolls of attn feed 1x7 and 1x3 ----
        attn = attn_s[...]
        for dj in range(-3, 4):
            r = roll_w(attn, dj)
            t1 = r * w17_ref[dj + 3:dj + 4, :]
            if dj == -3:
                g1_s[...] = t1
            else:
                g1_s[...] += t1
            if -1 <= dj <= 1:
                t0 = r * w13_ref[dj + 1:dj + 2, :]
                if dj == -1:
                    g0_s[...] = t0
                else:
                    g0_s[...] += t0

        # ---- gate = dw7x1(g1 + b17) + dw3x1(g0 + b13) ----
        g1v = g1_s[...] + b17r
        gate = None
        for di in range(-3, 4):
            t = shift_h(g1v, di) * w71_ref[di + 3:di + 4, :]
            gate = t if gate is None else gate + t
        gate = gate + b71r
        g0v = g0_s[...] + b13r
        for di in range(-1, 2):
            gate = gate + shift_h(g0v, di) * w31_ref[di + 1:di + 2, :]
        gate = gate + b31r

        attn_s[...] = attn_s[...] * gate          # gated attention

        # ---- 1x1 conv: block-diagonal weight built in VMEM, MXU matmul ----
        wpt = wpw_ref[...]                        # (C, WC) lane-tiled weight
        for w in range(W):
            wdiag_s[pl.ds(w * C, C), :] = wpt * wmw_ref[w:w + 1, :]
        y = jnp.dot(attn_s[...], wdiag_s[...], preferred_element_type=jnp.float32)
        y = y + bpwr + cur[...]                   # conv bias + residual

        # ---- BatchNorm2d (train-mode batch stats) + GELU ----
        s1 = jnp.sum(y, axis=0, keepdims=True)            # (1, WC)
        s2 = jnp.sum(y * y, axis=0, keepdims=True)        # (1, WC)
        shift = C
        while shift < WC:        # log2(W) lane-roll tree over the W positions
            s1 = s1 + pltpu.roll(s1, shift, axis=1)
            s2 = s2 + pltpu.roll(s2, shift, axis=1)
            shift *= 2
        inv_cnt = 1.0 / float(N * H * W)
        mean = s1 * inv_cnt
        var = jnp.maximum(s2 * inv_cnt - mean * mean, 0.0)
        yn = (y - mean) * lax.rsqrt(var + BN_EPS)
        cur[...] = _gelu_exact(yn * gmr + btr)

        # ---- last block: 2-channel 1x1 head (lane-padded) + residual ----
        @pl.when(b == B - 1)
        def _finish():
            xf = cur[...]
            wh = whead_ref[...]                   # (C, 128) lane-tiled head weight
            for w in range(W):
                whead_s[pl.ds(w * C, C), :] = wh * wmh_ref[w:w + 1, :]
            bnd_ref[...] = jnp.dot(xf, whead_s[...],
                                   preferred_element_type=jnp.float32) + bhead_ref[...]
            res_ref[...] = xf + x_ref[...]

    return kernel


# ----------------------------------------------------------------- wrapper

def _prep_inputs(x, params):
    """Flatten + retile parameters into the lane-dense kernel layout."""
    N, H, W, C = x.shape
    NH, WC = N * H, W * C
    blocks, head = params

    w_of_lane = jnp.arange(WC, dtype=jnp.int32) // C           # (WC,)

    def wmask(dj):                                             # (1, WC) f32
        return ((w_of_lane + dj >= 0) & (w_of_lane + dj < W)).astype(jnp.float32)[None, :]

    def tile_row(a):                                           # (1, C) -> (1, WC)
        return jnp.tile(a, (1, W))

    def dw_rows(wt, kh, kw):
        # (kh*kw, C) -> (kh*kw, WC) with W zero-pad mask folded per tap.
        rows = []
        for i in range(kh):
            for j in range(kw):
                dj = j - (kw - 1) // 2
                rows.append(jnp.tile(wt[i * kw + j][None, :], (1, W)) * wmask(dj))
        return jnp.concatenate(rows, axis=0)

    w5_all = jnp.stack([dw_rows(p["w5"], 5, 5) for p in blocks])      # (B,25,WC)
    w13_all = jnp.stack([dw_rows(p["w13"], 1, 3) for p in blocks])    # (B, 3,WC)
    w31_all = jnp.stack([dw_rows(p["w31"], 3, 1) for p in blocks])    # (B, 3,WC)
    w17_all = jnp.stack([dw_rows(p["w17"], 1, 7) for p in blocks])    # (B, 7,WC)
    w71_all = jnp.stack([dw_rows(p["w71"], 7, 1) for p in blocks])    # (B, 7,WC)
    vecs_all = jnp.stack([jnp.concatenate(
        [tile_row(p[k]) for k in ("b5", "b13", "b31", "b17", "b71", "bpw", "gamma", "beta")],
        axis=0) for p in blocks])                                     # (B, 8,WC)
    wpw_all = jnp.stack([jnp.tile(p["wpw"], (1, W)) for p in blocks])  # (B, C,WC)

    wmaskW = (w_of_lane[None, :] == jnp.arange(W)[:, None]).astype(jnp.float32)        # (W, WC)
    headmask = ((jnp.arange(HEAD_LANES)[None, :] // 2)
                == jnp.arange(W)[:, None]).astype(jnp.float32)                         # (W, 128)
    row_h = (jnp.arange(NH, dtype=jnp.int32) % H).reshape(NH, 1)                       # (NH, 1)

    whead_t = jnp.tile(head["w"], (1, HEAD_LANES // 2))               # (C, 128)
    bhead_t = jnp.pad(jnp.tile(head["b"], (1, W)),
                      ((0, 0), (0, HEAD_LANES - 2 * W)))              # (1, 128)

    x2d = x.reshape(NH, WC).astype(jnp.float32)
    return (x2d, row_h, wmaskW, headmask, whead_t, bhead_t,
            w5_all, w13_all, w31_all, w17_all, w71_all, vecs_all, wpw_all)


def boundary_branch(x, params):
    """x: (N, H, W, C) f32.  Returns (boundary (N,H,W,2), blocks(x) + x)."""
    N, H, W, C = x.shape
    assert W & (W - 1) == 0, "lane-roll BN reduction requires power-of-two W"
    assert (W * C) % 128 == 0, "lane-dense layout requires W*C % 128 == 0"
    assert 2 * W <= HEAD_LANES
    blocks, head = params
    B = len(blocks)
    NH, WC = N * H, W * C

    args = _prep_inputs(x, params)
    kernel = _make_kernel(B, N, H, W, C)

    def const2(shape):
        return pl.BlockSpec(shape, lambda b: (0, 0))

    def per_block(k):
        return pl.BlockSpec((None, k, WC), lambda b: (b, 0, 0))

    grid_spec = pltpu.PrefetchScalarGridSpec(
        num_scalar_prefetch=0,
        grid=(B,),
        in_specs=[
            const2((NH, WC)),          # x (lane-dense slab)
            const2((NH, 1)),           # row -> h index
            const2((W, WC)),           # per-w block-diag masks (1x1 conv)
            const2((W, HEAD_LANES)),   # per-w block-diag masks (head)
            const2((C, HEAD_LANES)),   # tiled head weight
            const2((1, HEAD_LANES)),   # tiled head bias
            per_block(25),             # dw5x5 taps (pre-masked)
            per_block(3),              # dw1x3 taps
            per_block(3),              # dw3x1 taps
            per_block(7),              # dw1x7 taps
            per_block(7),              # dw7x1 taps
            per_block(8),              # b5,b13,b31,b17,b71,bpw,gamma,beta rows
            per_block(C),              # tiled 1x1 conv weight
        ],
        out_specs=(const2((NH, HEAD_LANES)), const2((NH, WC))),
        scratch_shapes=[
            pltpu.VMEM((NH, WC), jnp.float32),          # cur (activation, carried)
            pltpu.VMEM((NH, WC), jnp.float32),          # attn
            pltpu.VMEM((NH, WC), jnp.float32),          # gate partial (1x3)
            pltpu.VMEM((NH, WC), jnp.float32),          # gate partial (1x7)
            pltpu.VMEM((WC, WC), jnp.float32),          # block-diag 1x1 weight
            pltpu.VMEM((WC, HEAD_LANES), jnp.float32),  # block-diag head weight
        ],
    )

    bnd_pad, res2d = pl.pallas_call(
        kernel,
        out_shape=(jax.ShapeDtypeStruct((NH, HEAD_LANES), jnp.float32),
                   jax.ShapeDtypeStruct((NH, WC), jnp.float32)),
        grid_spec=grid_spec,
        compiler_params=pltpu.CompilerParams(
            dimension_semantics=("arbitrary",),
            vmem_limit_bytes=32 * 1024 * 1024),
    )(*args)

    boundary = bnd_pad[:, :2 * W].reshape(N, H, W, 2)
    return boundary, res2d.reshape(N, H, W, C)


# ------------------------------------------------------------- param init

def init_params(key, C, block_num):
    keys = jax.random.split(key, block_num + 1)
    blocks = []
    for i in range(block_num):
        ks = jax.random.split(keys[i], 14)

        def dw_w(k, kh, kw):
            return jax.random.normal(k, (kh * kw, C), jnp.float32) * (1.0 / (kh * kw))

        def bias(k, n=None):
            n = C if n is None else n
            return jax.random.normal(k, (1, n), jnp.float32) * 0.05

        blocks.append(dict(
            w5=dw_w(ks[0], 5, 5), b5=bias(ks[1]),
            w13=dw_w(ks[2], 1, 3), b13=bias(ks[3]),
            w31=dw_w(ks[4], 3, 1), b31=bias(ks[5]),
            w17=dw_w(ks[6], 1, 7), b17=bias(ks[7]),
            w71=dw_w(ks[8], 7, 1), b71=bias(ks[9]),
            wpw=jax.random.normal(ks[10], (C, C), jnp.float32) / math.sqrt(C),
            bpw=bias(ks[11]),
            gamma=1.0 + 0.1 * jax.random.normal(ks[12], (1, C), jnp.float32),
            beta=0.05 * jax.random.normal(ks[13], (1, C), jnp.float32),
        ))
    kh = jax.random.split(keys[block_num], 2)
    head = dict(w=jax.random.normal(kh[0], (C, 2), jnp.float32) / math.sqrt(C),
                b=jax.random.normal(kh[1], (1, 2), jnp.float32) * 0.05)
    return blocks, head


# --------------------------------------------------------- pure-JAX reference

def _ref_block(x, p):
    C = x.shape[-1]

    def dwconv(inp, w, b, kh, kw):
        wk = w.reshape(kh, kw, 1, C)
        out = lax.conv_general_dilated(
            inp, wk, (1, 1),
            [((kh - 1) // 2, (kh - 1) // 2), ((kw - 1) // 2, (kw - 1) // 2)],
            dimension_numbers=("NHWC", "HWIO", "NHWC"),
            feature_group_count=C)
        return out + b.reshape(1, 1, 1, C)

    attn = dwconv(x, p["w5"], p["b5"], 5, 5)
    a0 = dwconv(attn, p["w13"], p["b13"], 1, 3)
    a0 = dwconv(a0, p["w31"], p["b31"], 3, 1)
    a1 = dwconv(attn, p["w17"], p["b17"], 1, 7)
    a1 = dwconv(a1, p["w71"], p["b71"], 7, 1)
    attn = attn * (a0 + a1)
    attn = jnp.einsum("nhwc,cd->nhwd", attn, p["wpw"]) + p["bpw"].reshape(1, 1, 1, C)
    y = attn + x
    mean = jnp.mean(y, axis=(0, 1, 2), keepdims=True)
    var = jnp.mean((y - mean) ** 2, axis=(0, 1, 2), keepdims=True)
    y = (y - mean) * lax.rsqrt(var + BN_EPS)
    y = y * p["gamma"].reshape(1, 1, 1, C) + p["beta"].reshape(1, 1, 1, C)
    return _gelu_exact(y)


def _ref_branch(x, params):
    blocks, head = params
    shortcut = x
    for p in blocks:
        x = _ref_block(x, p)
    boundary = jnp.einsum("nhwc,cd->nhwd", x, head["w"]) + head["b"].reshape(1, 1, 1, 2)
    return boundary, x + shortcut


# --------------------------------------------------------------------- main

if __name__ == "__main__":
    N, C, H, W = 2, 32, 16, 16      # dim=32
    block_num = 2

    key = jax.random.PRNGKey(0)
    k_x, k_p = jax.random.split(key)
    x_nchw = jax.random.normal(k_x, (N, C, H, W), jnp.float32)   # PyTorch layout
    x = jnp.transpose(x_nchw, (0, 2, 3, 1))                      # -> NHWC

    params = init_params(k_p, C, block_num)

    branch_fn = jax.jit(boundary_branch)
    boundary, res = branch_fn(x, params)
    jax.block_until_ready((boundary, res))

    b_ref, r_ref = _ref_branch(x, params)
    assert bool(jnp.allclose(boundary, b_ref, atol=1e-3, rtol=1e-3)), "boundary mismatch"
    assert bool(jnp.allclose(res, r_ref, atol=1e-3, rtol=1e-3)), "residual mismatch"

    print("KERNEL_OK")
</pallas_src>

<mosaic_0001>
module attributes {stable_mosaic.version = 11 : i64} {
  func.func @kernel(%arg0: i32, %arg1: memref<32x512xf32, #tpu.memory_space<vmem>>, %arg2: memref<32x1xi32, #tpu.memory_space<vmem>>, %arg3: memref<16x512xf32, #tpu.memory_space<vmem>>, %arg4: memref<16x128xf32, #tpu.memory_space<vmem>>, %arg5: memref<32x128xf32, #tpu.memory_space<vmem>>, %arg6: memref<1x128xf32, #tpu.memory_space<vmem>>, %arg7: memref<1x25x512xf32, #tpu.memory_space<vmem>>, %arg8: memref<1x3x512xf32, #tpu.memory_space<vmem>>, %arg9: memref<1x3x512xf32, #tpu.memory_space<vmem>>, %arg10: memref<1x7x512xf32, #tpu.memory_space<vmem>>, %arg11: memref<1x7x512xf32, #tpu.memory_space<vmem>>, %arg12: memref<1x8x512xf32, #tpu.memory_space<vmem>>, %arg13: memref<1x32x512xf32, #tpu.memory_space<vmem>>, %arg14: memref<32x128xf32, #tpu.memory_space<vmem>>, %arg15: memref<32x512xf32, #tpu.memory_space<vmem>>, %arg16: memref<32x512xf32, #tpu.memory_space<vmem>>, %arg17: memref<32x512xf32, #tpu.memory_space<vmem>>, %arg18: memref<32x512xf32, #tpu.memory_space<vmem>>, %arg19: memref<32x512xf32, #tpu.memory_space<vmem>>, %arg20: memref<512x512xf32, #tpu.memory_space<vmem>>, %arg21: memref<512x128xf32, #tpu.memory_space<vmem>>) attributes {dimension_semantics = [#tpu.dimension_semantics<arbitrary>], iteration_bounds = array<i64: 2>, scalar_prefetch = 0 : i64, scratch_operands = 6 : i64, tpu.core_type = #tpu.core_type<tc>, window_params = [{pipeline_mode = #tpu.pipeline_mode<synchronous>, transform_indices = @transform_0, window_bounds = array<i64: 32, 512>}, {pipeline_mode = #tpu.pipeline_mode<synchronous>, transform_indices = @transform_1, window_bounds = array<i64: 32, 1>}, {pipeline_mode = #tpu.pipeline_mode<synchronous>, transform_indices = @transform_2, window_bounds = array<i64: 16, 512>}, {pipeline_mode = #tpu.pipeline_mode<synchronous>, transform_indices = @transform_3, window_bounds = array<i64: 16, 128>}, {pipeline_mode = #tpu.pipeline_mode<synchronous>, transform_indices = @transform_4, window_bounds = array<i64: 32, 128>}, {pipeline_mode = #tpu.pipeline_mode<synchronous>, transform_indices = @transform_5, window_bounds = array<i64: 1, 128>}, {transform_indices = @transform_6, window_bounds = array<i64: 1, 25, 512>}, {transform_indices = @transform_7, window_bounds = array<i64: 1, 3, 512>}, {transform_indices = @transform_8, window_bounds = array<i64: 1, 3, 512>}, {transform_indices = @transform_9, window_bounds = array<i64: 1, 7, 512>}, {transform_indices = @transform_10, window_bounds = array<i64: 1, 7, 512>}, {transform_indices = @transform_11, window_bounds = array<i64: 1, 8, 512>}, {transform_indices = @transform_12, window_bounds = array<i64: 1, 32, 512>}, {pipeline_mode = #tpu.pipeline_mode<synchronous>, transform_indices = @transform_13, window_bounds = array<i64: 32, 128>}, {pipeline_mode = #tpu.pipeline_mode<synchronous>, transform_indices = @transform_14, window_bounds = array<i64: 32, 512>}]} {
    %c0_i32 = arith.constant 0 : i32
    %0 = arith.cmpi eq, %arg0, %c0_i32 : i32
    %1 = arith.extui %0 : i1 to i32
    %c0_i32_0 = arith.constant 0 : i32
    %2 = arith.cmpi ne, %1, %c0_i32_0 : i32
    scf.if %2 {
      %c0_310 = arith.constant 0 : index
      %c0_311 = arith.constant 0 : index
      %530 = vector.load %arg1[%c0_310, %c0_311] : memref<32x512xf32, #tpu.memory_space<vmem>>, vector<32x512xf32>
      %c0_312 = arith.constant 0 : index
      %c0_313 = arith.constant 0 : index
      %531 = vector.load %arg16[%c0_312, %c0_313] : memref<32x512xf32, #tpu.memory_space<vmem>>, vector<32x512xf32>
      tpu.vector_store %arg16[%c0_312, %c0_313], %530 {strides = array<i32>} : memref<32x512xf32, #tpu.memory_space<vmem>>, vector<32x512xf32>,
    } else {
    }
    %c0 = arith.constant 0 : index
    %c0_1 = arith.constant 0 : index
    %3 = vector.load %arg2[%c0, %c0_1] : memref<32x1xi32, #tpu.memory_space<vmem>>, vector<32x1xi32>
    %c-3_i32 = arith.constant -3 : i32
    %4 = vector.broadcast %c-3_i32 : i32 to vector<32x1xi32>
    %5 = arith.addi %3, %4 : vector<32x1xi32>
    %c0_i32_2 = arith.constant 0 : i32
    %6 = vector.broadcast %c0_i32_2 : i32 to vector<32x1xi32>
    %7 = arith.cmpi sge, %5, %6 : vector<32x1xi32>
    %c-3_i32_3 = arith.constant -3 : i32
    %8 = vector.broadcast %c-3_i32_3 : i32 to vector<32x1xi32>
    %9 = arith.addi %3, %8 : vector<32x1xi32>
    %c16_i32 = arith.constant 16 : i32
    %10 = vector.broadcast %c16_i32 : i32 to vector<32x1xi32>
    %11 = arith.cmpi slt, %9, %10 : vector<32x1xi32>
    %12 = arith.andi %7, %11 : vector<32x1xi1>
    %13 = arith.extui %12 : vector<32x1xi1> to vector<32x1xi32>
    %14 = arith.sitofp %13 : vector<32x1xi32> to vector<32x1xf32>
    %c-2_i32 = arith.constant -2 : i32
    %15 = vector.broadcast %c-2_i32 : i32 to vector<32x1xi32>
    %16 = arith.addi %3, %15 : vector<32x1xi32>
    %c0_i32_4 = arith.constant 0 : i32
    %17 = vector.broadcast %c0_i32_4 : i32 to vector<32x1xi32>
    %18 = arith.cmpi sge, %16, %17 : vector<32x1xi32>
    %c-2_i32_5 = arith.constant -2 : i32
    %19 = vector.broadcast %c-2_i32_5 : i32 to vector<32x1xi32>
    %20 = arith.addi %3, %19 : vector<32x1xi32>
    %c16_i32_6 = arith.constant 16 : i32
    %21 = vector.broadcast %c16_i32_6 : i32 to vector<32x1xi32>
    %22 = arith.cmpi slt, %20, %21 : vector<32x1xi32>
    %23 = arith.andi %18, %22 : vector<32x1xi1>
    %24 = arith.extui %23 : vector<32x1xi1> to vector<32x1xi32>
    %25 = arith.sitofp %24 : vector<32x1xi32> to vector<32x1xf32>
    %c-1_i32 = arith.constant -1 : i32
    %26 = vector.broadcast %c-1_i32 : i32 to vector<32x1xi32>
    %27 = arith.addi %3, %26 : vector<32x1xi32>
    %c0_i32_7 = arith.constant 0 : i32
    %28 = vector.broadcast %c0_i32_7 : i32 to vector<32x1xi32>
    %29 = arith.cmpi sge, %27, %28 : vector<32x1xi32>
    %c-1_i32_8 = arith.constant -1 : i32
    %30 = vector.broadcast %c-1_i32_8 : i32 to vector<32x1xi32>
    %31 = arith.addi %3, %30 : vector<32x1xi32>
    %c16_i32_9 = arith.constant 16 : i32
    %32 = vector.broadcast %c16_i32_9 : i32 to vector<32x1xi32>
    %33 = arith.cmpi slt, %31, %32 : vector<32x1xi32>
    %34 = arith.andi %29, %33 : vector<32x1xi1>
    %35 = arith.extui %34 : vector<32x1xi1> to vector<32x1xi32>
    %36 = arith.sitofp %35 : vector<32x1xi32> to vector<32x1xf32>
    %c1_i32 = arith.constant 1 : i32
    %37 = vector.broadcast %c1_i32 : i32 to vector<32x1xi32>
    %38 = arith.addi %3, %37 : vector<32x1xi32>
    %c0_i32_10 = arith.constant 0 : i32
    %39 = vector.broadcast %c0_i32_10 : i32 to vector<32x1xi32>
    %40 = arith.cmpi sge, %38, %39 : vector<32x1xi32>
    %c1_i32_11 = arith.constant 1 : i32
    %41 = vector.broadcast %c1_i32_11 : i32 to vector<32x1xi32>
    %42 = arith.addi %3, %41 : vector<32x1xi32>
    %c16_i32_12 = arith.constant 16 : i32
    %43 = vector.broadcast %c16_i32_12 : i32 to vector<32x1xi32>
    %44 = arith.cmpi slt, %42, %43 : vector<32x1xi32>
    %45 = arith.andi %40, %44 : vector<32x1xi1>
    %46 = arith.extui %45 : vector<32x1xi1> to vector<32x1xi32>
    %47 = arith.sitofp %46 : vector<32x1xi32> to vector<32x1xf32>
    %c2_i32 = arith.constant 2 : i32
    %48 = vector.broadcast %c2_i32 : i32 to vector<32x1xi32>
    %49 = arith.addi %3, %48 : vector<32x1xi32>
    %c0_i32_13 = arith.constant 0 : i32
    %50 = vector.broadcast %c0_i32_13 : i32 to vector<32x1xi32>
    %51 = arith.cmpi sge, %49, %50 : vector<32x1xi32>
    %c2_i32_14 = arith.constant 2 : i32
    %52 = vector.broadcast %c2_i32_14 : i32 to vector<32x1xi32>
    %53 = arith.addi %3, %52 : vector<32x1xi32>
    %c16_i32_15 = arith.constant 16 : i32
    %54 = vector.broadcast %c16_i32_15 : i32 to vector<32x1xi32>
    %55 = arith.cmpi slt, %53, %54 : vector<32x1xi32>
    %56 = arith.andi %51, %55 : vector<32x1xi1>
    %57 = arith.extui %56 : vector<32x1xi1> to vector<32x1xi32>
    %58 = arith.sitofp %57 : vector<32x1xi32> to vector<32x1xf32>
    %c3_i32 = arith.constant 3 : i32
    %59 = vector.broadcast %c3_i32 : i32 to vector<32x1xi32>
    %60 = arith.addi %3, %59 : vector<32x1xi32>
    %c0_i32_16 = arith.constant 0 : i32
    %61 = vector.broadcast %c0_i32_16 : i32 to vector<32x1xi32>
    %62 = arith.cmpi sge, %60, %61 : vector<32x1xi32>
    %c3_i32_17 = arith.constant 3 : i32
    %63 = vector.broadcast %c3_i32_17 : i32 to vector<32x1xi32>
    %64 = arith.addi %3, %63 : vector<32x1xi32>
    %c16_i32_18 = arith.constant 16 : i32
    %65 = vector.broadcast %c16_i32_18 : i32 to vector<32x1xi32>
    %66 = arith.cmpi slt, %64, %65 : vector<32x1xi32>
    %67 = arith.andi %62, %66 : vector<32x1xi1>
    %68 = arith.extui %67 : vector<32x1xi1> to vector<32x1xi32>
    %69 = arith.sitofp %68 : vector<32x1xi32> to vector<32x1xf32>
    %c0_19 = arith.constant 0 : index
    %c0_20 = arith.constant 0 : index
    %c0_21 = arith.constant 0 : index
    %70 = vector.load %arg12[%c0_19, %c0_20, %c0_21] : memref<1x8x512xf32, #tpu.memory_space<vmem>>, vector<1x1x512xf32>
    %71 = vector.shape_cast %70 : vector<1x1x512xf32> to vector<1x512xf32>
    %c0_22 = arith.constant 0 : index
    %c1 = arith.constant 1 : index
    %c0_23 = arith.constant 0 : index
    %72 = vector.load %arg12[%c0_22, %c1, %c0_23] : memref<1x8x512xf32, #tpu.memory_space<vmem>>, vector<1x1x512xf32>
    %73 = vector.shape_cast %72 : vector<1x1x512xf32> to vector<1x512xf32>
    %c0_24 = arith.constant 0 : index
    %c2 = arith.constant 2 : index
    %c0_25 = arith.constant 0 : index
    %74 = vector.load %arg12[%c0_24, %c2, %c0_25] : memref<1x8x512xf32, #tpu.memory_space<vmem>>, vector<1x1x512xf32>
    %75 = vector.shape_cast %74 : vector<1x1x512xf32> to vector<1x512xf32>
    %c0_26 = arith.constant 0 : index
    %c3 = arith.constant 3 : index
    %c0_27 = arith.constant 0 : index
    %76 = vector.load %arg12[%c0_26, %c3, %c0_27] : memref<1x8x512xf32, #tpu.memory_space<vmem>>, vector<1x1x512xf32>
    %77 = vector.shape_cast %76 : vector<1x1x512xf32> to vector<1x512xf32>
    %c0_28 = arith.constant 0 : index
    %c4 = arith.constant 4 : index
    %c0_29 = arith.constant 0 : index
    %78 = vector.load %arg12[%c0_28, %c4, %c0_29] : memref<1x8x512xf32, #tpu.memory_space<vmem>>, vector<1x1x512xf32>
    %79 = vector.shape_cast %78 : vector<1x1x512xf32> to vector<1x512xf32>
    %c0_30 = arith.constant 0 : index
    %c5 = arith.constant 5 : index
    %c0_31 = arith.constant 0 : index
    %80 = vector.load %arg12[%c0_30, %c5, %c0_31] : memref<1x8x512xf32, #tpu.memory_space<vmem>>, vector<1x1x512xf32>
    %81 = vector.shape_cast %80 : vector<1x1x512xf32> to vector<1x512xf32>
    %c0_32 = arith.constant 0 : index
    %c6 = arith.constant 6 : index
    %c0_33 = arith.constant 0 : index
    %82 = vector.load %arg12[%c0_32, %c6, %c0_33] : memref<1x8x512xf32, #tpu.memory_space<vmem>>, vector<1x1x512xf32>
    %83 = vector.shape_cast %82 : vector<1x1x512xf32> to vector<1x512xf32>
    %c0_34 = arith.constant 0 : index
    %c7 = arith.constant 7 : index
    %c0_35 = arith.constant 0 : index
    %84 = vector.load %arg12[%c0_34, %c7, %c0_35] : memref<1x8x512xf32, #tpu.memory_space<vmem>>, vector<1x1x512xf32>
    %85 = vector.shape_cast %84 : vector<1x1x512xf32> to vector<1x512xf32>
    %c0_36 = arith.constant 0 : index
    %c0_37 = arith.constant 0 : index
    %86 = vector.load %arg16[%c0_36, %c0_37] : memref<32x512xf32, #tpu.memory_space<vmem>>, vector<32x512xf32>
    %c2_i32_38 = arith.constant 2 : i32
    %87 = tpu.dynamic_rotate %86 by %c2_i32_38 dim 0 : vector<32x512xf32>, i32 -> vector<32x512xf32>
    %88 = vector.broadcast %25 : vector<32x1xf32> to vector<32x512xf32>
    %89 = arith.mulf %87, %88 : vector<32x512xf32>
    %c64_i32 = arith.constant 64 : i32
    %90 = tpu.dynamic_rotate %89 by %c64_i32 dim 1 : vector<32x512xf32>, i32 -> vector<32x512xf32>
    %c0_39 = arith.constant 0 : index
    %c0_40 = arith.constant 0 : index
    %c0_41 = arith.constant 0 : index
    %91 = vector.load %arg7[%c0_39, %c0_40, %c0_41] : memref<1x25x512xf32, #tpu.memory_space<vmem>>, vector<1x1x512xf32>
    %92 = vector.shape_cast %91 : vector<1x1x512xf32> to vector<1x512xf32>
    %93 = vector.broadcast %92 : vector<1x512xf32> to vector<32x512xf32>
    %94 = arith.mulf %90, %93 : vector<32x512xf32>
    %c32_i32 = arith.constant 32 : i32
    %95 = tpu.dynamic_rotate %89 by %c32_i32 dim 1 : vector<32x512xf32>, i32 -> vector<32x512xf32>
    %c0_42 = arith.constant 0 : index
    %c1_43 = arith.constant 1 : index
    %c0_44 = arith.constant 0 : index
    %96 = vector.load %arg7[%c0_42, %c1_43, %c0_44] : memref<1x25x512xf32, #tpu.memory_space<vmem>>, vector<1x1x512xf32>
    %97 = vector.shape_cast %96 : vector<1x1x512xf32> to vector<1x512xf32>
    %98 = vector.broadcast %97 : vector<1x512xf32> to vector<32x512xf32>
    %99 = arith.mulf %95, %98 : vector<32x512xf32>
    %100 = arith.addf %94, %99 : vector<32x512xf32>
    %c0_45 = arith.constant 0 : index
    %c2_46 = arith.constant 2 : index
    %c0_47 = arith.constant 0 : index
    %101 = vector.load %arg7[%c0_45, %c2_46, %c0_47] : memref<1x25x512xf32, #tpu.memory_space<vmem>>, vector<1x1x512xf32>
    %102 = vector.shape_cast %101 : vector<1x1x512xf32> to vector<1x512xf32>
    %103 = vector.broadcast %102 : vector<1x512xf32> to vector<32x512xf32>
    %104 = arith.mulf %89, %103 : vector<32x512xf32>
    %105 = arith.addf %100, %104 : vector<32x512xf32>
    %c480_i32 = arith.constant 480 : i32
    %106 = tpu.dynamic_rotate %89 by %c480_i32 dim 1 : vector<32x512xf32>, i32 -> vector<32x512xf32>
    %c0_48 = arith.constant 0 : index
    %c3_49 = arith.constant 3 : index
    %c0_50 = arith.constant 0 : index
    %107 = vector.load %arg7[%c0_48, %c3_49, %c0_50] : memref<1x25x512xf32, #tpu.memory_space<vmem>>, vector<1x1x512xf32>
    %108 = vector.shape_cast %107 : vector<1x1x512xf32> to vector<1x512xf32>
    %109 = vector.broadcast %108 : vector<1x512xf32> to vector<32x512xf32>
    %110 = arith.mulf %106, %109 : vector<32x512xf32>
    %111 = arith.addf %105, %110 : vector<32x512xf32>
    %c448_i32 = arith.constant 448 : i32
    %112 = tpu.dynamic_rotate %89 by %c448_i32 dim 1 : vector<32x512xf32>, i32 -> vector<32x512xf32>
    %c0_51 = arith.constant 0 : index
    %c4_52 = arith.constant 4 : index
    %c0_53 = arith.constant 0 : index
    %113 = vector.load %arg7[%c0_51, %c4_52, %c0_53] : memref<1x25x512xf32, #tpu.memory_space<vmem>>, vector<1x1x512xf32>
    %114 = vector.shape_cast %113 : vector<1x1x512xf32> to vector<1x512xf32>
    %115 = vector.broadcast %114 : vector<1x512xf32> to vector<32x512xf32>
    %116 = arith.mulf %112, %115 : vector<32x512xf32>
    %117 = arith.addf %111, %116 : vector<32x512xf32>
    %c1_i32_54 = arith.constant 1 : i32
    %118 = tpu.dynamic_rotate %86 by %c1_i32_54 dim 0 : vector<32x512xf32>, i32 -> vector<32x512xf32>
    %119 = vector.broadcast %36 : vector<32x1xf32> to vector<32x512xf32>
    %120 = arith.mulf %118, %119 : vector<32x512xf32>
    %c64_i32_55 = arith.constant 64 : i32
    %121 = tpu.dynamic_rotate %120 by %c64_i32_55 dim 1 : vector<32x512xf32>, i32 -> vector<32x512xf32>
    %c0_56 = arith.constant 0 : index
    %c5_57 = arith.constant 5 : index
    %c0_58 = arith.constant 0 : index
    %122 = vector.load %arg7[%c0_56, %c5_57, %c0_58] : memref<1x25x512xf32, #tpu.memory_space<vmem>>, vector<1x1x512xf32>
    %123 = vector.shape_cast %122 : vector<1x1x512xf32> to vector<1x512xf32>
    %124 = vector.broadcast %123 : vector<1x512xf32> to vector<32x512xf32>
    %125 = arith.mulf %121, %124 : vector<32x512xf32>
    %126 = arith.addf %117, %125 : vector<32x512xf32>
    %c32_i32_59 = arith.constant 32 : i32
    %127 = tpu.dynamic_rotate %120 by %c32_i32_59 dim 1 : vector<32x512xf32>, i32 -> vector<32x512xf32>
    %c0_60 = arith.constant 0 : index
    %c6_61 = arith.constant 6 : index
    %c0_62 = arith.constant 0 : index
    %128 = vector.load %arg7[%c0_60, %c6_61, %c0_62] : memref<1x25x512xf32, #tpu.memory_space<vmem>>, vector<1x1x512xf32>
    %129 = vector.shape_cast %128 : vector<1x1x512xf32> to vector<1x512xf32>
    %130 = vector.broadcast %129 : vector<1x512xf32> to vector<32x512xf32>
    %131 = arith.mulf %127, %130 : vector<32x512xf32>
    %132 = arith.addf %126, %131 : vector<32x512xf32>
    %c0_63 = arith.constant 0 : index
    %c7_64 = arith.constant 7 : index
    %c0_65 = arith.constant 0 : index
    %133 = vector.load %arg7[%c0_63, %c7_64, %c0_65] : memref<1x25x512xf32, #tpu.memory_space<vmem>>, vector<1x1x512xf32>
    %134 = vector.shape_cast %133 : vector<1x1x512xf32> to vector<1x512xf32>
    %135 = vector.broadcast %134 : vector<1x512xf32> to vector<32x512xf32>
    %136 = arith.mulf %120, %135 : vector<32x512xf32>
    %137 = arith.addf %132, %136 : vector<32x512xf32>
    %c480_i32_66 = arith.constant 480 : i32
    %138 = tpu.dynamic_rotate %120 by %c480_i32_66 dim 1 : vector<32x512xf32>, i32 -> vector<32x512xf32>
    %c0_67 = arith.constant 0 : index
    %c8 = arith.constant 8 : index
    %c0_68 = arith.constant 0 : index
    %139 = vector.load %arg7[%c0_67, %c8, %c0_68] : memref<1x25x512xf32, #tpu.memory_space<vmem>>, vector<1x1x512xf32>
    %140 = vector.shape_cast %139 : vector<1x1x512xf32> to vector<1x512xf32>
    %141 = vector.broadcast %140 : vector<1x512xf32> to vector<32x512xf32>
    %142 = arith.mulf %138, %141 : vector<32x512xf32>
    %143 = arith.addf %137, %142 : vector<32x512xf32>
    %c448_i32_69 = arith.constant 448 : i32
    %144 = tpu.dynamic_rotate %120 by %c448_i32_69 dim 1 : vector<32x512xf32>, i32 -> vector<32x512xf32>
    %c0_70 = arith.constant 0 : index
    %c9 = arith.constant 9 : index
    %c0_71 = arith.constant 0 : index
    %145 = vector.load %arg7[%c0_70, %c9, %c0_71] : memref<1x25x512xf32, #tpu.memory_space<vmem>>, vector<1x1x512xf32>
    %146 = vector.shape_cast %145 : vector<1x1x512xf32> to vector<1x512xf32>
    %147 = vector.broadcast %146 : vector<1x512xf32> to vector<32x512xf32>
    %148 = arith.mulf %144, %147 : vector<32x512xf32>
    %149 = arith.addf %143, %148 : vector<32x512xf32>
    %c64_i32_72 = arith.constant 64 : i32
    %150 = tpu.dynamic_rotate %86 by %c64_i32_72 dim 1 : vector<32x512xf32>, i32 -> vector<32x512xf32>
    %c0_73 = arith.constant 0 : index
    %c10 = arith.constant 10 : index
    %c0_74 = arith.constant 0 : index
    %151 = vector.load %arg7[%c0_73, %c10, %c0_74] : memref<1x25x512xf32, #tpu.memory_space<vmem>>, vector<1x1x512xf32>
    %152 = vector.shape_cast %151 : vector<1x1x512xf32> to vector<1x512xf32>
    %153 = vector.broadcast %152 : vector<1x512xf32> to vector<32x512xf32>
    %154 = arith.mulf %150, %153 : vector<32x512xf32>
    %155 = arith.addf %149, %154 : vector<32x512xf32>
    %c32_i32_75 = arith.constant 32 : i32
    %156 = tpu.dynamic_rotate %86 by %c32_i32_75 dim 1 : vector<32x512xf32>, i32 -> vector<32x512xf32>
    %c0_76 = arith.constant 0 : index
    %c11 = arith.constant 11 : index
    %c0_77 = arith.constant 0 : index
    %157 = vector.load %arg7[%c0_76, %c11, %c0_77] : memref<1x25x512xf32, #tpu.memory_space<vmem>>, vector<1x1x512xf32>
    %158 = vector.shape_cast %157 : vector<1x1x512xf32> to vector<1x512xf32>
    %159 = vector.broadcast %158 : vector<1x512xf32> to vector<32x512xf32>
    %160 = arith.mulf %156, %159 : vector<32x512xf32>
    %161 = arith.addf %155, %160 : vector<32x512xf32>
    %c0_78 = arith.constant 0 : index
    %c12 = arith.constant 12 : index
    %c0_79 = arith.constant 0 : index
    %162 = vector.load %arg7[%c0_78, %c12, %c0_79] : memref<1x25x512xf32, #tpu.memory_space<vmem>>, vector<1x1x512xf32>
    %163 = vector.shape_cast %162 : vector<1x1x512xf32> to vector<1x512xf32>
    %164 = vector.broadcast %163 : vector<1x512xf32> to vector<32x512xf32>
    %165 = arith.mulf %86, %164 : vector<32x512xf32>
    %166 = arith.addf %161, %165 : vector<32x512xf32>
    %c480_i32_80 = arith.constant 480 : i32
    %167 = tpu.dynamic_rotate %86 by %c480_i32_80 dim 1 : vector<32x512xf32>, i32 -> vector<32x512xf32>
    %c0_81 = arith.constant 0 : index
    %c13 = arith.constant 13 : index
    %c0_82 = arith.constant 0 : index
    %168 = vector.load %arg7[%c0_81, %c13, %c0_82] : memref<1x25x512xf32, #tpu.memory_space<vmem>>, vector<1x1x512xf32>
    %169 = vector.shape_cast %168 : vector<1x1x512xf32> to vector<1x512xf32>
    %170 = vector.broadcast %169 : vector<1x512xf32> to vector<32x512xf32>
    %171 = arith.mulf %167, %170 : vector<32x512xf32>
    %172 = arith.addf %166, %171 : vector<32x512xf32>
    %c448_i32_83 = arith.constant 448 : i32
    %173 = tpu.dynamic_rotate %86 by %c448_i32_83 dim 1 : vector<32x512xf32>, i32 -> vector<32x512xf32>
    %c0_84 = arith.constant 0 : index
    %c14 = arith.constant 14 : index
    %c0_85 = arith.constant 0 : index
    %174 = vector.load %arg7[%c0_84, %c14, %c0_85] : memref<1x25x512xf32, #tpu.memory_space<vmem>>, vector<1x1x512xf32>
    %175 = vector.shape_cast %174 : vector<1x1x512xf32> to vector<1x512xf32>
    %176 = vector.broadcast %175 : vector<1x512xf32> to vector<32x512xf32>
    %177 = arith.mulf %173, %176 : vector<32x512xf32>
    %178 = arith.addf %172, %177 : vector<32x512xf32>
    %c31_i32 = arith.constant 31 : i32
    %179 = tpu.dynamic_rotate %86 by %c31_i32 dim 0 : vector<32x512xf32>, i32 -> vector<32x512xf32>
    %180 = vector.broadcast %47 : vector<32x1xf32> to vector<32x512xf32>
    %181 = arith.mulf %179, %180 : vector<32x512xf32>
    %c64_i32_86 = arith.constant 64 : i32
    %182 = tpu.dynamic_rotate %181 by %c64_i32_86 dim 1 : vector<32x512xf32>, i32 -> vector<32x512xf32>
    %c0_87 = arith.constant 0 : index
    %c15 = arith.constant 15 : index
    %c0_88 = arith.constant 0 : index
    %183 = vector.load %arg7[%c0_87, %c15, %c0_88] : memref<1x25x512xf32, #tpu.memory_space<vmem>>, vector<1x1x512xf32>
    %184 = vector.shape_cast %183 : vector<1x1x512xf32> to vector<1x512xf32>
    %185 = vector.broadcast %184 : vector<1x512xf32> to vector<32x512xf32>
    %186 = arith.mulf %182, %185 : vector<32x512xf32>
    %187 = arith.addf %178, %186 : vector<32x512xf32>
    %c32_i32_89 = arith.constant 32 : i32
    %188 = tpu.dynamic_rotate %181 by %c32_i32_89 dim 1 : vector<32x512xf32>, i32 -> vector<32x512xf32>
    %c0_90 = arith.constant 0 : index
    %c16 = arith.constant 16 : index
    %c0_91 = arith.constant 0 : index
    %189 = vector.load %arg7[%c0_90, %c16, %c0_91] : memref<1x25x512xf32, #tpu.memory_space<vmem>>, vector<1x1x512xf32>
    %190 = vector.shape_cast %189 : vector<1x1x512xf32> to vector<1x512xf32>
    %191 = vector.broadcast %190 : vector<1x512xf32> to vector<32x512xf32>
    %192 = arith.mulf %188, %191 : vector<32x512xf32>
    %193 = arith.addf %187, %192 : vector<32x512xf32>
    %c0_92 = arith.constant 0 : index
    %c17 = arith.constant 17 : index
    %c0_93 = arith.constant 0 : index
    %194 = vector.load %arg7[%c0_92, %c17, %c0_93] : memref<1x25x512xf32, #tpu.memory_space<vmem>>, vector<1x1x512xf32>
    %195 = vector.shape_cast %194 : vector<1x1x512xf32> to vector<1x512xf32>
    %196 = vector.broadcast %195 : vector<1x512xf32> to vector<32x512xf32>
    %197 = arith.mulf %181, %196 : vector<32x512xf32>
    %198 = arith.addf %193, %197 : vector<32x512xf32>
    %c480_i32_94 = arith.constant 480 : i32
    %199 = tpu.dynamic_rotate %181 by %c480_i32_94 dim 1 : vector<32x512xf32>, i32 -> vector<32x512xf32>
    %c0_95 = arith.constant 0 : index
    %c18 = arith.constant 18 : index
    %c0_96 = arith.constant 0 : index
    %200 = vector.load %arg7[%c0_95, %c18, %c0_96] : memref<1x25x512xf32, #tpu.memory_space<vmem>>, vector<1x1x512xf32>
    %201 = vector.shape_cast %200 : vector<1x1x512xf32> to vector<1x512xf32>
    %202 = vector.broadcast %201 : vector<1x512xf32> to vector<32x512xf32>
    %203 = arith.mulf %199, %202 : vector<32x512xf32>
    %204 = arith.addf %198, %203 : vector<32x512xf32>
    %c448_i32_97 = arith.constant 448 : i32
    %205 = tpu.dynamic_rotate %181 by %c448_i32_97 dim 1 : vector<32x512xf32>, i32 -> vector<32x512xf32>
    %c0_98 = arith.constant 0 : index
    %c19 = arith.constant 19 : index
    %c0_99 = arith.constant 0 : index
    %206 = vector.load %arg7[%c0_98, %c19, %c0_99] : memref<1x25x512xf32, #tpu.memory_space<vmem>>, vector<1x1x512xf32>
    %207 = vector.shape_cast %206 : vector<1x1x512xf32> to vector<1x512xf32>
    %208 = vector.broadcast %207 : vector<1x512xf32> to vector<32x512xf32>
    %209 = arith.mulf %205, %208 : vector<32x512xf32>
    %210 = arith.addf %204, %209 : vector<32x512xf32>
    %c30_i32 = arith.constant 30 : i32
    %211 = tpu.dynamic_rotate %86 by %c30_i32 dim 0 : vector<32x512xf32>, i32 -> vector<32x512xf32>
    %212 = vector.broadcast %58 : vector<32x1xf32> to vector<32x512xf32>
    %213 = arith.mulf %211, %212 : vector<32x512xf32>
    %c64_i32_100 = arith.constant 64 : i32
    %214 = tpu.dynamic_rotate %213 by %c64_i32_100 dim 1 : vector<32x512xf32>, i32 -> vector<32x512xf32>
    %c0_101 = arith.constant 0 : index
    %c20 = arith.constant 20 : index
    %c0_102 = arith.constant 0 : index
    %215 = vector.load %arg7[%c0_101, %c20, %c0_102] : memref<1x25x512xf32, #tpu.memory_space<vmem>>, vector<1x1x512xf32>
    %216 = vector.shape_cast %215 : vector<1x1x512xf32> to vector<1x512xf32>
    %217 = vector.broadcast %216 : vector<1x512xf32> to vector<32x512xf32>
    %218 = arith.mulf %214, %217 : vector<32x512xf32>
    %219 = arith.addf %210, %218 : vector<32x512xf32>
    %c32_i32_103 = arith.constant 32 : i32
    %220 = tpu.dynamic_rotate %213 by %c32_i32_103 dim 1 : vector<32x512xf32>, i32 -> vector<32x512xf32>
    %c0_104 = arith.constant 0 : index
    %c21 = arith.constant 21 : index
    %c0_105 = arith.constant 0 : index
    %221 = vector.load %arg7[%c0_104, %c21, %c0_105] : memref<1x25x512xf32, #tpu.memory_space<vmem>>, vector<1x1x512xf32>
    %222 = vector.shape_cast %221 : vector<1x1x512xf32> to vector<1x512xf32>
    %223 = vector.broadcast %222 : vector<1x512xf32> to vector<32x512xf32>
    %224 = arith.mulf %220, %223 : vector<32x512xf32>
    %225 = arith.addf %219, %224 : vector<32x512xf32>
    %c0_106 = arith.constant 0 : index
    %c22 = arith.constant 22 : index
    %c0_107 = arith.constant 0 : index
    %226 = vector.load %arg7[%c0_106, %c22, %c0_107] : memref<1x25x512xf32, #tpu.memory_space<vmem>>, vector<1x1x512xf32>
    %227 = vector.shape_cast %226 : vector<1x1x512xf32> to vector<1x512xf32>
    %228 = vector.broadcast %227 : vector<1x512xf32> to vector<32x512xf32>
    %229 = arith.mulf %213, %228 : vector<32x512xf32>
    %230 = arith.addf %225, %229 : vector<32x512xf32>
    %c480_i32_108 = arith.constant 480 : i32
    %231 = tpu.dynamic_rotate %213 by %c480_i32_108 dim 1 : vector<32x512xf32>, i32 -> vector<32x512xf32>
    %c0_109 = arith.constant 0 : index
    %c23 = arith.constant 23 : index
    %c0_110 = arith.constant 0 : index
    %232 = vector.load %arg7[%c0_109, %c23, %c0_110] : memref<1x25x512xf32, #tpu.memory_space<vmem>>, vector<1x1x512xf32>
    %233 = vector.shape_cast %232 : vector<1x1x512xf32> to vector<1x512xf32>
    %234 = vector.broadcast %233 : vector<1x512xf32> to vector<32x512xf32>
    %235 = arith.mulf %231, %234 : vector<32x512xf32>
    %236 = arith.addf %230, %235 : vector<32x512xf32>
    %c448_i32_111 = arith.constant 448 : i32
    %237 = tpu.dynamic_rotate %213 by %c448_i32_111 dim 1 : vector<32x512xf32>, i32 -> vector<32x512xf32>
    %c0_112 = arith.constant 0 : index
    %c24 = arith.constant 24 : index
    %c0_113 = arith.constant 0 : index
    %238 = vector.load %arg7[%c0_112, %c24, %c0_113] : memref<1x25x512xf32, #tpu.memory_space<vmem>>, vector<1x1x512xf32>
    %239 = vector.shape_cast %238 : vector<1x1x512xf32> to vector<1x512xf32>
    %240 = vector.broadcast %239 : vector<1x512xf32> to vector<32x512xf32>
    %241 = arith.mulf %237, %240 : vector<32x512xf32>
    %242 = arith.addf %236, %241 : vector<32x512xf32>
    %243 = vector.broadcast %71 : vector<1x512xf32> to vector<32x512xf32>
    %244 = arith.addf %242, %243 : vector<32x512xf32>
    %c0_114 = arith.constant 0 : index
    %c0_115 = arith.constant 0 : index
    %245 = vector.load %arg17[%c0_114, %c0_115] : memref<32x512xf32, #tpu.memory_space<vmem>>, vector<32x512xf32>
    tpu.vector_store %arg17[%c0_114, %c0_115], %244 {strides = array<i32>} : memref<32x512xf32, #tpu.memory_space<vmem>>, vector<32x512xf32>,
    %c0_116 = arith.constant 0 : index
    %c0_117 = arith.constant 0 : index
    %246 = vector.load %arg17[%c0_116, %c0_117] : memref<32x512xf32, #tpu.memory_space<vmem>>, vector<32x512xf32>
    %c96_i32 = arith.constant 96 : i32
    %247 = tpu.dynamic_rotate %246 by %c96_i32 dim 1 : vector<32x512xf32>, i32 -> vector<32x512xf32>
    %c0_118 = arith.constant 0 : index
    %c0_119 = arith.constant 0 : index
    %c0_120 = arith.constant 0 : index
    %248 = vector.load %arg10[%c0_118, %c0_119, %c0_120] : memref<1x7x512xf32, #tpu.memory_space<vmem>>, vector<1x1x512xf32>
    %249 = vector.shape_cast %248 : vector<1x1x512xf32> to vector<1x512xf32>
    %250 = vector.broadcast %249 : vector<1x512xf32> to vector<32x512xf32>
    %251 = arith.mulf %247, %250 : vector<32x512xf32>
    %c0_121 = arith.constant 0 : index
    %c0_122 = arith.constant 0 : index
    %252 = vector.load %arg19[%c0_121, %c0_122] : memref<32x512xf32, #tpu.memory_space<vmem>>, vector<32x512xf32>
    tpu.vector_store %arg19[%c0_121, %c0_122], %251 {strides = array<i32>} : memref<32x512xf32, #tpu.memory_space<vmem>>, vector<32x512xf32>,
    %c64_i32_123 = arith.constant 64 : i32
    %253 = tpu.dynamic_rotate %246 by %c64_i32_123 dim 1 : vector<32x512xf32>, i32 -> vector<32x512xf32>
    %c0_124 = arith.constant 0 : index
    %c1_125 = arith.constant 1 : index
    %c0_126 = arith.constant 0 : index
    %254 = vector.load %arg10[%c0_124, %c1_125, %c0_126] : memref<1x7x512xf32, #tpu.memory_space<vmem>>, vector<1x1x512xf32>
    %255 = vector.shape_cast %254 : vector<1x1x512xf32> to vector<1x512xf32>
    %256 = vector.broadcast %255 : vector<1x512xf32> to vector<32x512xf32>
    %257 = arith.mulf %253, %256 : vector<32x512xf32>
    %c0_127 = arith.constant 0 : index
    %c0_128 = arith.constant 0 : index
    %258 = vector.load %arg19[%c0_127, %c0_128] : memref<32x512xf32, #tpu.memory_space<vmem>>, vector<32x512xf32>
    %259 = arith.addf %258, %257 : vector<32x512xf32>
    %c0_129 = arith.constant 0 : index
    %c0_130 = arith.constant 0 : index
    %260 = vector.load %arg19[%c0_129, %c0_130] : memref<32x512xf32, #tpu.memory_space<vmem>>, vector<32x512xf32>
    tpu.vector_store %arg19[%c0_129, %c0_130], %259 {strides = array<i32>} : memref<32x512xf32, #tpu.memory_space<vmem>>, vector<32x512xf32>,
    %c32_i32_131 = arith.constant 32 : i32
    %261 = tpu.dynamic_rotate %246 by %c32_i32_131 dim 1 : vector<32x512xf32>, i32 -> vector<32x512xf32>
    %c0_132 = arith.constant 0 : index
    %c2_133 = arith.constant 2 : index
    %c0_134 = arith.constant 0 : index
    %262 = vector.load %arg10[%c0_132, %c2_133, %c0_134] : memref<1x7x512xf32, #tpu.memory_space<vmem>>, vector<1x1x512xf32>
    %263 = vector.shape_cast %262 : vector<1x1x512xf32> to vector<1x512xf32>
    %264 = vector.broadcast %263 : vector<1x512xf32> to vector<32x512xf32>
    %265 = arith.mulf %261, %264 : vector<32x512xf32>
    %c0_135 = arith.constant 0 : index
    %c0_136 = arith.constant 0 : index
    %266 = vector.load %arg19[%c0_135, %c0_136] : memref<32x512xf32, #tpu.memory_space<vmem>>, vector<32x512xf32>
    %267 = arith.addf %266, %265 : vector<32x512xf32>
    %c0_137 = arith.constant 0 : index
    %c0_138 = arith.constant 0 : index
    %268 = vector.load %arg19[%c0_137, %c0_138] : memref<32x512xf32, #tpu.memory_space<vmem>>, vector<32x512xf32>
    tpu.vector_store %arg19[%c0_137, %c0_138], %267 {strides = array<i32>} : memref<32x512xf32, #tpu.memory_space<vmem>>, vector<32x512xf32>,
    %c0_139 = arith.constant 0 : index
    %c0_140 = arith.constant 0 : index
    %c0_141 = arith.constant 0 : index
    %269 = vector.load %arg8[%c0_139, %c0_140, %c0_141] : memref<1x3x512xf32, #tpu.memory_space<vmem>>, vector<1x1x512xf32>
    %270 = vector.shape_cast %269 : vector<1x1x512xf32> to vector<1x512xf32>
    %271 = vector.broadcast %270 : vector<1x512xf32> to vector<32x512xf32>
    %272 = arith.mulf %261, %271 : vector<32x512xf32>
    %c0_142 = arith.constant 0 : index
    %c0_143 = arith.constant 0 : index
    %273 = vector.load %arg18[%c0_142, %c0_143] : memref<32x512xf32, #tpu.memory_space<vmem>>, vector<32x512xf32>
    tpu.vector_store %arg18[%c0_142, %c0_143], %272 {strides = array<i32>} : memref<32x512xf32, #tpu.memory_space<vmem>>, vector<32x512xf32>,
    %c0_144 = arith.constant 0 : index
    %c3_145 = arith.constant 3 : index
    %c0_146 = arith.constant 0 : index
    %274 = vector.load %arg10[%c0_144, %c3_145, %c0_146] : memref<1x7x512xf32, #tpu.memory_space<vmem>>, vector<1x1x512xf32>
    %275 = vector.shape_cast %274 : vector<1x1x512xf32> to vector<1x512xf32>
    %276 = vector.broadcast %275 : vector<1x512xf32> to vector<32x512xf32>
    %277 = arith.mulf %246, %276 : vector<32x512xf32>
    %c0_147 = arith.constant 0 : index
    %c0_148 = arith.constant 0 : index
    %278 = vector.load %arg19[%c0_147, %c0_148] : memref<32x512xf32, #tpu.memory_space<vmem>>, vector<32x512xf32>
    %279 = arith.addf %278, %277 : vector<32x512xf32>
    %c0_149 = arith.constant 0 : index
    %c0_150 = arith.constant 0 : index
    %280 = vector.load %arg19[%c0_149, %c0_150] : memref<32x512xf32, #tpu.memory_space<vmem>>, vector<32x512xf32>
    tpu.vector_store %arg19[%c0_149, %c0_150], %279 {strides = array<i32>} : memref<32x512xf32, #tpu.memory_space<vmem>>, vector<32x512xf32>,
    %c0_151 = arith.constant 0 : index
    %c1_152 = arith.constant 1 : index
    %c0_153 = arith.constant 0 : index
    %281 = vector.load %arg8[%c0_151, %c1_152, %c0_153] : memref<1x3x512xf32, #tpu.memory_space<vmem>>, vector<1x1x512xf32>
    %282 = vector.shape_cast %281 : vector<1x1x512xf32> to vector<1x512xf32>
    %283 = vector.broadcast %282 : vector<1x512xf32> to vector<32x512xf32>
    %284 = arith.mulf %246, %283 : vector<32x512xf32>
    %c0_154 = arith.constant 0 : index
    %c0_155 = arith.constant 0 : index
    %285 = vector.load %arg18[%c0_154, %c0_155] : memref<32x512xf32, #tpu.memory_space<vmem>>, vector<32x512xf32>
    %286 = arith.addf %285, %284 : vector<32x512xf32>
    %c0_156 = arith.constant 0 : index
    %c0_157 = arith.constant 0 : index
    %287 = vector.load %arg18[%c0_156, %c0_157] : memref<32x512xf32, #tpu.memory_space<vmem>>, vector<32x512xf32>
    tpu.vector_store %arg18[%c0_156, %c0_157], %286 {strides = array<i32>} : memref<32x512xf32, #tpu.memory_space<vmem>>, vector<32x512xf32>,
    %c480_i32_158 = arith.constant 480 : i32
    %288 = tpu.dynamic_rotate %246 by %c480_i32_158 dim 1 : vector<32x512xf32>, i32 -> vector<32x512xf32>
    %c0_159 = arith.constant 0 : index
    %c4_160 = arith.constant 4 : index
    %c0_161 = arith.constant 0 : index
    %289 = vector.load %arg10[%c0_159, %c4_160, %c0_161] : memref<1x7x512xf32, #tpu.memory_space<vmem>>, vector<1x1x512xf32>
    %290 = vector.shape_cast %289 : vector<1x1x512xf32> to vector<1x512xf32>
    %291 = vector.broadcast %290 : vector<1x512xf32> to vector<32x512xf32>
    %292 = arith.mulf %288, %291 : vector<32x512xf32>
    %c0_162 = arith.constant 0 : index
    %c0_163 = arith.constant 0 : index
    %293 = vector.load %arg19[%c0_162, %c0_163] : memref<32x512xf32, #tpu.memory_space<vmem>>, vector<32x512xf32>
    %294 = arith.addf %293, %292 : vector<32x512xf32>
    %c0_164 = arith.constant 0 : index
    %c0_165 = arith.constant 0 : index
    %295 = vector.load %arg19[%c0_164, %c0_165] : memref<32x512xf32, #tpu.memory_space<vmem>>, vector<32x512xf32>
    tpu.vector_store %arg19[%c0_164, %c0_165], %294 {strides = array<i32>} : memref<32x512xf32, #tpu.memory_space<vmem>>, vector<32x512xf32>,
    %c0_166 = arith.constant 0 : index
    %c2_167 = arith.constant 2 : index
    %c0_168 = arith.constant 0 : index
    %296 = vector.load %arg8[%c0_166, %c2_167, %c0_168] : memref<1x3x512xf32, #tpu.memory_space<vmem>>, vector<1x1x512xf32>
    %297 = vector.shape_cast %296 : vector<1x1x512xf32> to vector<1x512xf32>
    %298 = vector.broadcast %297 : vector<1x512xf32> to vector<32x512xf32>
    %299 = arith.mulf %288, %298 : vector<32x512xf32>
    %c0_169 = arith.constant 0 : index
    %c0_170 = arith.constant 0 : index
    %300 = vector.load %arg18[%c0_169, %c0_170] : memref<32x512xf32, #tpu.memory_space<vmem>>, vector<32x512xf32>
    %301 = arith.addf %300, %299 : vector<32x512xf32>
    %c0_171 = arith.constant 0 : index
    %c0_172 = arith.constant 0 : index
    %302 = vector.load %arg18[%c0_171, %c0_172] : memref<32x512xf32, #tpu.memory_space<vmem>>, vector<32x512xf32>
    tpu.vector_store %arg18[%c0_171, %c0_172], %301 {strides = array<i32>} : memref<32x512xf32, #tpu.memory_space<vmem>>, vector<32x512xf32>,
    %c448_i32_173 = arith.constant 448 : i32
    %303 = tpu.dynamic_rotate %246 by %c448_i32_173 dim 1 : vector<32x512xf32>, i32 -> vector<32x512xf32>
    %c0_174 = arith.constant 0 : index
    %c5_175 = arith.constant 5 : index
    %c0_176 = arith.constant 0 : index
    %304 = vector.load %arg10[%c0_174, %c5_175, %c0_176] : memref<1x7x512xf32, #tpu.memory_space<vmem>>, vector<1x1x512xf32>
    %305 = vector.shape_cast %304 : vector<1x1x512xf32> to vector<1x512xf32>
    %306 = vector.broadcast %305 : vector<1x512xf32> to vector<32x512xf32>
    %307 = arith.mulf %303, %306 : vector<32x512xf32>
    %c0_177 = arith.constant 0 : index
    %c0_178 = arith.constant 0 : index
    %308 = vector.load %arg19[%c0_177, %c0_178] : memref<32x512xf32, #tpu.memory_space<vmem>>, vector<32x512xf32>
    %309 = arith.addf %308, %307 : vector<32x512xf32>
    %c0_179 = arith.constant 0 : index
    %c0_180 = arith.constant 0 : index
    %310 = vector.load %arg19[%c0_179, %c0_180] : memref<32x512xf32, #tpu.memory_space<vmem>>, vector<32x512xf32>
    tpu.vector_store %arg19[%c0_179, %c0_180], %309 {strides = array<i32>} : memref<32x512xf32, #tpu.memory_space<vmem>>, vector<32x512xf32>,
    %c416_i32 = arith.constant 416 : i32
    %311 = tpu.dynamic_rotate %246 by %c416_i32 dim 1 : vector<32x512xf32>, i32 -> vector<32x512xf32>
    %c0_181 = arith.constant 0 : index
    %c6_182 = arith.constant 6 : index
    %c0_183 = arith.constant 0 : index
    %312 = vector.load %arg10[%c0_181, %c6_182, %c0_183] : memref<1x7x512xf32, #tpu.memory_space<vmem>>, vector<1x1x512xf32>
    %313 = vector.shape_cast %312 : vector<1x1x512xf32> to vector<1x512xf32>
    %314 = vector.broadcast %313 : vector<1x512xf32> to vector<32x512xf32>
    %315 = arith.mulf %311, %314 : vector<32x512xf32>
    %c0_184 = arith.constant 0 : index
    %c0_185 = arith.constant 0 : index
    %316 = vector.load %arg19[%c0_184, %c0_185] : memref<32x512xf32, #tpu.memory_space<vmem>>, vector<32x512xf32>
    %317 = arith.addf %316, %315 : vector<32x512xf32>
    %c0_186 = arith.constant 0 : index
    %c0_187 = arith.constant 0 : index
    %318 = vector.load %arg19[%c0_186, %c0_187] : memref<32x512xf32, #tpu.memory_space<vmem>>, vector<32x512xf32>
    tpu.vector_store %arg19[%c0_186, %c0_187], %317 {strides = array<i32>} : memref<32x512xf32, #tpu.memory_space<vmem>>, vector<32x512xf32>,
    %c0_188 = arith.constant 0 : index
    %c0_189 = arith.constant 0 : index
    %319 = vector.load %arg19[%c0_188, %c0_189] : memref<32x512xf32, #tpu.memory_space<vmem>>, vector<32x512xf32>
    %320 = vector.broadcast %77 : vector<1x512xf32> to vector<32x512xf32>
    %321 = arith.addf %319, %320 : vector<32x512xf32>
    %c3_i32_190 = arith.constant 3 : i32
    %322 = tpu.dynamic_rotate %321 by %c3_i32_190 dim 0 : vector<32x512xf32>, i32 -> vector<32x512xf32>
    %323 = vector.broadcast %14 : vector<32x1xf32> to vector<32x512xf32>
    %324 = arith.mulf %322, %323 : vector<32x512xf32>
    %c0_191 = arith.constant 0 : index
    %c0_192 = arith.constant 0 : index
    %c0_193 = arith.constant 0 : index
    %325 = vector.load %arg11[%c0_191, %c0_192, %c0_193] : memref<1x7x512xf32, #tpu.memory_space<vmem>>, vector<1x1x512xf32>
    %326 = vector.shape_cast %325 : vector<1x1x512xf32> to vector<1x512xf32>
    %327 = vector.broadcast %326 : vector<1x512xf32> to vector<32x512xf32>
    %328 = arith.mulf %324, %327 : vector<32x512xf32>
    %c2_i32_194 = arith.constant 2 : i32
    %329 = tpu.dynamic_rotate %321 by %c2_i32_194 dim 0 : vector<32x512xf32>, i32 -> vector<32x512xf32>
    %330 = vector.broadcast %25 : vector<32x1xf32> to vector<32x512xf32>
    %331 = arith.mulf %329, %330 : vector<32x512xf32>
    %c0_195 = arith.constant 0 : index
    %c1_196 = arith.constant 1 : index
    %c0_197 = arith.constant 0 : index
    %332 = vector.load %arg11[%c0_195, %c1_196, %c0_197] : memref<1x7x512xf32, #tpu.memory_space<vmem>>, vector<1x1x512xf32>
    %333 = vector.shape_cast %332 : vector<1x1x512xf32> to vector<1x512xf32>
    %334 = vector.broadcast %333 : vector<1x512xf32> to vector<32x512xf32>
    %335 = arith.mulf %331, %334 : vector<32x512xf32>
    %336 = arith.addf %328, %335 : vector<32x512xf32>
    %c1_i32_198 = arith.constant 1 : i32
    %337 = tpu.dynamic_rotate %321 by %c1_i32_198 dim 0 : vector<32x512xf32>, i32 -> vector<32x512xf32>
    %338 = vector.broadcast %36 : vector<32x1xf32> to vector<32x512xf32>
    %339 = arith.mulf %337, %338 : vector<32x512xf32>
    %c0_199 = arith.constant 0 : index
    %c2_200 = arith.constant 2 : index
    %c0_201 = arith.constant 0 : index
    %340 = vector.load %arg11[%c0_199, %c2_200, %c0_201] : memref<1x7x512xf32, #tpu.memory_space<vmem>>, vector<1x1x512xf32>
    %341 = vector.shape_cast %340 : vector<1x1x512xf32> to vector<1x512xf32>
    %342 = vector.broadcast %341 : vector<1x512xf32> to vector<32x512xf32>
    %343 = arith.mulf %339, %342 : vector<32x512xf32>
    %344 = arith.addf %336, %343 : vector<32x512xf32>
    %c0_202 = arith.constant 0 : index
    %c3_203 = arith.constant 3 : index
    %c0_204 = arith.constant 0 : index
    %345 = vector.load %arg11[%c0_202, %c3_203, %c0_204] : memref<1x7x512xf32, #tpu.memory_space<vmem>>, vector<1x1x512xf32>
    %346 = vector.shape_cast %345 : vector<1x1x512xf32> to vector<1x512xf32>
    %347 = vector.broadcast %346 : vector<1x512xf32> to vector<32x512xf32>
    %348 = arith.mulf %321, %347 : vector<32x512xf32>
    %349 = arith.addf %344, %348 : vector<32x512xf32>
    %c31_i32_205 = arith.constant 31 : i32
    %350 = tpu.dynamic_rotate %321 by %c31_i32_205 dim 0 : vector<32x512xf32>, i32 -> vector<32x512xf32>
    %351 = vector.broadcast %47 : vector<32x1xf32> to vector<32x512xf32>
    %352 = arith.mulf %350, %351 : vector<32x512xf32>
    %c0_206 = arith.constant 0 : index
    %c4_207 = arith.constant 4 : index
    %c0_208 = arith.constant 0 : index
    %353 = vector.load %arg11[%c0_206, %c4_207, %c0_208] : memref<1x7x512xf32, #tpu.memory_space<vmem>>, vector<1x1x512xf32>
    %354 = vector.shape_cast %353 : vector<1x1x512xf32> to vector<1x512xf32>
    %355 = vector.broadcast %354 : vector<1x512xf32> to vector<32x512xf32>
    %356 = arith.mulf %352, %355 : vector<32x512xf32>
    %357 = arith.addf %349, %356 : vector<32x512xf32>
    %c30_i32_209 = arith.constant 30 : i32
    %358 = tpu.dynamic_rotate %321 by %c30_i32_209 dim 0 : vector<32x512xf32>, i32 -> vector<32x512xf32>
    %359 = vector.broadcast %58 : vector<32x1xf32> to vector<32x512xf32>
    %360 = arith.mulf %358, %359 : vector<32x512xf32>
    %c0_210 = arith.constant 0 : index
    %c5_211 = arith.constant 5 : index
    %c0_212 = arith.constant 0 : index
    %361 = vector.load %arg11[%c0_210, %c5_211, %c0_212] : memref<1x7x512xf32, #tpu.memory_space<vmem>>, vector<1x1x512xf32>
    %362 = vector.shape_cast %361 : vector<1x1x512xf32> to vector<1x512xf32>
    %363 = vector.broadcast %362 : vector<1x512xf32> to vector<32x512xf32>
    %364 = arith.mulf %360, %363 : vector<32x512xf32>
    %365 = arith.addf %357, %364 : vector<32x512xf32>
    %c29_i32 = arith.constant 29 : i32
    %366 = tpu.dynamic_rotate %321 by %c29_i32 dim 0 : vector<32x512xf32>, i32 -> vector<32x512xf32>
    %367 = vector.broadcast %69 : vector<32x1xf32> to vector<32x512xf32>
    %368 = arith.mulf %366, %367 : vector<32x512xf32>
    %c0_213 = arith.constant 0 : index
    %c6_214 = arith.constant 6 : index
    %c0_215 = arith.constant 0 : index
    %369 = vector.load %arg11[%c0_213, %c6_214, %c0_215] : memref<1x7x512xf32, #tpu.memory_space<vmem>>, vector<1x1x512xf32>
    %370 = vector.shape_cast %369 : vector<1x1x512xf32> to vector<1x512xf32>
    %371 = vector.broadcast %370 : vector<1x512xf32> to vector<32x512xf32>
    %372 = arith.mulf %368, %371 : vector<32x512xf32>
    %373 = arith.addf %365, %372 : vector<32x512xf32>
    %374 = vector.broadcast %79 : vector<1x512xf32> to vector<32x512xf32>
    %375 = arith.addf %373, %374 : vector<32x512xf32>
    %c0_216 = arith.constant 0 : index
    %c0_217 = arith.constant 0 : index
    %376 = vector.load %arg18[%c0_216, %c0_217] : memref<32x512xf32, #tpu.memory_space<vmem>>, vector<32x512xf32>
    %377 = vector.broadcast %73 : vector<1x512xf32> to vector<32x512xf32>
    %378 = arith.addf %376, %377 : vector<32x512xf32>
    %c1_i32_218 = arith.constant 1 : i32
    %379 = tpu.dynamic_rotate %378 by %c1_i32_218 dim 0 : vector<32x512xf32>, i32 -> vector<32x512xf32>
    %380 = vector.broadcast %36 : vector<32x1xf32> to vector<32x512xf32>
    %381 = arith.mulf %379, %380 : vector<32x512xf32>
    %c0_219 = arith.constant 0 : index
    %c0_220 = arith.constant 0 : index
    %c0_221 = arith.constant 0 : index
    %382 = vector.load %arg9[%c0_219, %c0_220, %c0_221] : memref<1x3x512xf32, #tpu.memory_space<vmem>>, vector<1x1x512xf32>
    %383 = vector.shape_cast %382 : vector<1x1x512xf32> to vector<1x512xf32>
    %384 = vector.broadcast %383 : vector<1x512xf32> to vector<32x512xf32>
    %385 = arith.mulf %381, %384 : vector<32x512xf32>
    %386 = arith.addf %375, %385 : vector<32x512xf32>
    %c0_222 = arith.constant 0 : index
    %c1_223 = arith.constant 1 : index
    %c0_224 = arith.constant 0 : index
    %387 = vector.load %arg9[%c0_222, %c1_223, %c0_224] : memref<1x3x512xf32, #tpu.memory_space<vmem>>, vector<1x1x512xf32>
    %388 = vector.shape_cast %387 : vector<1x1x512xf32> to vector<1x512xf32>
    %389 = vector.broadcast %388 : vector<1x512xf32> to vector<32x512xf32>
    %390 = arith.mulf %378, %389 : vector<32x512xf32>
    %391 = arith.addf %386, %390 : vector<32x512xf32>
    %c31_i32_225 = arith.constant 31 : i32
    %392 = tpu.dynamic_rotate %378 by %c31_i32_225 dim 0 : vector<32x512xf32>, i32 -> vector<32x512xf32>
    %393 = vector.broadcast %47 : vector<32x1xf32> to vector<32x512xf32>
    %394 = arith.mulf %392, %393 : vector<32x512xf32>
    %c0_226 = arith.constant 0 : index
    %c2_227 = arith.constant 2 : index
    %c0_228 = arith.constant 0 : index
    %395 = vector.load %arg9[%c0_226, %c2_227, %c0_228] : memref<1x3x512xf32, #tpu.memory_space<vmem>>, vector<1x1x512xf32>
    %396 = vector.shape_cast %395 : vector<1x1x512xf32> to vector<1x512xf32>
    %397 = vector.broadcast %396 : vector<1x512xf32> to vector<32x512xf32>
    %398 = arith.mulf %394, %397 : vector<32x512xf32>
    %399 = arith.addf %391, %398 : vector<32x512xf32>
    %400 = vector.broadcast %75 : vector<1x512xf32> to vector<32x512xf32>
    %401 = arith.addf %399, %400 : vector<32x512xf32>
    %c0_229 = arith.constant 0 : index
    %c0_230 = arith.constant 0 : index
    %402 = vector.load %arg17[%c0_229, %c0_230] : memref<32x512xf32, #tpu.memory_space<vmem>>, vector<32x512xf32>
    %403 = arith.mulf %402, %401 : vector<32x512xf32>
    %c0_231 = arith.constant 0 : index
    %c0_232 = arith.constant 0 : index
    %404 = vector.load %arg17[%c0_231, %c0_232] : memref<32x512xf32, #tpu.memory_space<vmem>>, vector<32x512xf32>
    tpu.vector_store %arg17[%c0_231, %c0_232], %403 {strides = array<i32>} : memref<32x512xf32, #tpu.memory_space<vmem>>, vector<32x512xf32>,
    %c0_233 = arith.constant 0 : index
    %c0_234 = arith.constant 0 : index
    %c0_235 = arith.constant 0 : index
    %405 = vector.load %arg13[%c0_233, %c0_234, %c0_235] : memref<1x32x512xf32, #tpu.memory_space<vmem>>, vector<1x32x512xf32>
    %406 = vector.shape_cast %405 : vector<1x32x512xf32> to vector<32x512xf32>
    %c0_236 = arith.constant 0 : index
    %c0_237 = arith.constant 0 : index
    %407 = vector.load %arg3[%c0_236, %c0_237] : memref<16x512xf32, #tpu.memory_space<vmem>>, vector<1x512xf32>
    %408 = vector.broadcast %407 : vector<1x512xf32> to vector<32x512xf32>
    %409 = arith.mulf %406, %408 : vector<32x512xf32>
    %c0_238 = arith.constant 0 : index
    %c0_239 = arith.constant 0 : index
    %410 = vector.load %arg20[%c0_238, %c0_239] : memref<512x512xf32, #tpu.memory_space<vmem>>, vector<32x512xf32>
    tpu.vector_store %arg20[%c0_238, %c0_239], %409 {strides = array<i32>} : memref<512x512xf32, #tpu.memory_space<vmem>>, vector<32x512xf32>,
    %c1_240 = arith.constant 1 : index
    %c0_241 = arith.constant 0 : index
    %411 = vector.load %arg3[%c1_240, %c0_241] : memref<16x512xf32, #tpu.memory_space<vmem>>, vector<1x512xf32>
    %412 = vector.broadcast %411 : vector<1x512xf32> to vector<32x512xf32>
    %413 = arith.mulf %406, %412 : vector<32x512xf32>
    %c32 = arith.constant 32 : index
    %c0_242 = arith.constant 0 : index
    %414 = vector.load %arg20[%c32, %c0_242] : memref<512x512xf32, #tpu.memory_space<vmem>>, vector<32x512xf32>
    tpu.vector_store %arg20[%c32, %c0_242], %413 {strides = array<i32>} : memref<512x512xf32, #tpu.memory_space<vmem>>, vector<32x512xf32>,
    %c2_243 = arith.constant 2 : index
    %c0_244 = arith.constant 0 : index
    %415 = vector.load %arg3[%c2_243, %c0_244] : memref<16x512xf32, #tpu.memory_space<vmem>>, vector<1x512xf32>
    %416 = vector.broadcast %415 : vector<1x512xf32> to vector<32x512xf32>
    %417 = arith.mulf %406, %416 : vector<32x512xf32>
    %c64 = arith.constant 64 : index
    %c0_245 = arith.constant 0 : index
    %418 = vector.load %arg20[%c64, %c0_245] : memref<512x512xf32, #tpu.memory_space<vmem>>, vector<32x512xf32>
    tpu.vector_store %arg20[%c64, %c0_245], %417 {strides = array<i32>} : memref<512x512xf32, #tpu.memory_space<vmem>>, vector<32x512xf32>,
    %c3_246 = arith.constant 3 : index
    %c0_247 = arith.constant 0 : index
    %419 = vector.load %arg3[%c3_246, %c0_247] : memref<16x512xf32, #tpu.memory_space<vmem>>, vector<1x512xf32>
    %420 = vector.broadcast %419 : vector<1x512xf32> to vector<32x512xf32>
    %421 = arith.mulf %406, %420 : vector<32x512xf32>
    %c96 = arith.constant 96 : index
    %c0_248 = arith.constant 0 : index
    %422 = vector.load %arg20[%c96, %c0_248] : memref<512x512xf32, #tpu.memory_space<vmem>>, vector<32x512xf32>
    tpu.vector_store %arg20[%c96, %c0_248], %421 {strides = array<i32>} : memref<512x512xf32, #tpu.memory_space<vmem>>, vector<32x512xf32>,
    %c4_249 = arith.constant 4 : index
    %c0_250 = arith.constant 0 : index
    %423 = vector.load %arg3[%c4_249, %c0_250] : memref<16x512xf32, #tpu.memory_space<vmem>>, vector<1x512xf32>
    %424 = vector.broadcast %423 : vector<1x512xf32> to vector<32x512xf32>
    %425 = arith.mulf %406, %424 : vector<32x512xf32>
    %c128 = arith.constant 128 : index
    %c0_251 = arith.constant 0 : index
    %426 = vector.load %arg20[%c128, %c0_251] : memref<512x512xf32, #tpu.memory_space<vmem>>, vector<32x512xf32>
    tpu.vector_store %arg20[%c128, %c0_251], %425 {strides = array<i32>} : memref<512x512xf32, #tpu.memory_space<vmem>>, vector<32x512xf32>,
    %c5_252 = arith.constant 5 : index
    %c0_253 = arith.constant 0 : index
    %427 = vector.load %arg3[%c5_252, %c0_253] : memref<16x512xf32, #tpu.memory_space<vmem>>, vector<1x512xf32>
    %428 = vector.broadcast %427 : vector<1x512xf32> to vector<32x512xf32>
    %429 = arith.mulf %406, %428 : vector<32x512xf32>
    %c160 = arith.constant 160 : index
    %c0_254 = arith.constant 0 : index
    %430 = vector.load %arg20[%c160, %c0_254] : memref<512x512xf32, #tpu.memory_space<vmem>>, vector<32x512xf32>
    tpu.vector_store %arg20[%c160, %c0_254], %429 {strides = array<i32>} : memref<512x512xf32, #tpu.memory_space<vmem>>, vector<32x512xf32>,
    %c6_255 = arith.constant 6 : index
    %c0_256 = arith.constant 0 : index
    %431 = vector.load %arg3[%c6_255, %c0_256] : memref<16x512xf32, #tpu.memory_space<vmem>>, vector<1x512xf32>
    %432 = vector.broadcast %431 : vector<1x512xf32> to vector<32x512xf32>
    %433 = arith.mulf %406, %432 : vector<32x512xf32>
    %c192 = arith.constant 192 : index
    %c0_257 = arith.constant 0 : index
    %434 = vector.load %arg20[%c192, %c0_257] : memref<512x512xf32, #tpu.memory_space<vmem>>, vector<32x512xf32>
    tpu.vector_store %arg20[%c192, %c0_257], %433 {strides = array<i32>} : memref<512x512xf32, #tpu.memory_space<vmem>>, vector<32x512xf32>,
    %c7_258 = arith.constant 7 : index
    %c0_259 = arith.constant 0 : index
    %435 = vector.load %arg3[%c7_258, %c0_259] : memref<16x512xf32, #tpu.memory_space<vmem>>, vector<1x512xf32>
    %436 = vector.broadcast %435 : vector<1x512xf32> to vector<32x512xf32>
    %437 = arith.mulf %406, %436 : vector<32x512xf32>
    %c224 = arith.constant 224 : index
    %c0_260 = arith.constant 0 : index
    %438 = vector.load %arg20[%c224, %c0_260] : memref<512x512xf32, #tpu.memory_space<vmem>>, vector<32x512xf32>
    tpu.vector_store %arg20[%c224, %c0_260], %437 {strides = array<i32>} : memref<512x512xf32, #tpu.memory_space<vmem>>, vector<32x512xf32>,
    %c8_261 = arith.constant 8 : index
    %c0_262 = arith.constant 0 : index
    %439 = vector.load %arg3[%c8_261, %c0_262] : memref<16x512xf32, #tpu.memory_space<vmem>>, vector<1x512xf32>
    %440 = vector.broadcast %439 : vector<1x512xf32> to vector<32x512xf32>
    %441 = arith.mulf %406, %440 : vector<32x512xf32>
    %c256 = arith.constant 256 : index
    %c0_263 = arith.constant 0 : index
    %442 = vector.load %arg20[%c256, %c0_263] : memref<512x512xf32, #tpu.memory_space<vmem>>, vector<32x512xf32>
    tpu.vector_store %arg20[%c256, %c0_263], %441 {strides = array<i32>} : memref<512x512xf32, #tpu.memory_space<vmem>>, vector<32x512xf32>,
    %c9_264 = arith.constant 9 : index
    %c0_265 = arith.constant 0 : index
    %443 = vector.load %arg3[%c9_264, %c0_265] : memref<16x512xf32, #tpu.memory_space<vmem>>, vector<1x512xf32>
    %444 = vector.broadcast %443 : vector<1x512xf32> to vector<32x512xf32>
    %445 = arith.mulf %406, %444 : vector<32x512xf32>
    %c288 = arith.constant 288 : index
    %c0_266 = arith.constant 0 : index
    %446 = vector.load %arg20[%c288, %c0_266] : memref<512x512xf32, #tpu.memory_space<vmem>>, vector<32x512xf32>
    tpu.vector_store %arg20[%c288, %c0_266], %445 {strides = array<i32>} : memref<512x512xf32, #tpu.memory_space<vmem>>, vector<32x512xf32>,
    %c10_267 = arith.constant 10 : index
    %c0_268 = arith.constant 0 : index
    %447 = vector.load %arg3[%c10_267, %c0_268] : memref<16x512xf32, #tpu.memory_space<vmem>>, vector<1x512xf32>
    %448 = vector.broadcast %447 : vector<1x512xf32> to vector<32x512xf32>
    %449 = arith.mulf %406, %448 : vector<32x512xf32>
    %c320 = arith.constant 320 : index
    %c0_269 = arith.constant 0 : index
    %450 = vector.load %arg20[%c320, %c0_269] : memref<512x512xf32, #tpu.memory_space<vmem>>, vector<32x512xf32>
    tpu.vector_store %arg20[%c320, %c0_269], %449 {strides = array<i32>} : memref<512x512xf32, #tpu.memory_space<vmem>>, vector<32x512xf32>,
    %c11_270 = arith.constant 11 : index
    %c0_271 = arith.constant 0 : index
    %451 = vector.load %arg3[%c11_270, %c0_271] : memref<16x512xf32, #tpu.memory_space<vmem>>, vector<1x512xf32>
    %452 = vector.broadcast %451 : vector<1x512xf32> to vector<32x512xf32>
    %453 = arith.mulf %406, %452 : vector<32x512xf32>
    %c352 = arith.constant 352 : index
    %c0_272 = arith.constant 0 : index
    %454 = vector.load %arg20[%c352, %c0_272] : memref<512x512xf32, #tpu.memory_space<vmem>>, vector<32x512xf32>
    tpu.vector_store %arg20[%c352, %c0_272], %453 {strides = array<i32>} : memref<512x512xf32, #tpu.memory_space<vmem>>, vector<32x512xf32>,
    %c12_273 = arith.constant 12 : index
    %c0_274 = arith.constant 0 : index
    %455 = vector.load %arg3[%c12_273, %c0_274] : memref<16x512xf32, #tpu.memory_space<vmem>>, vector<1x512xf32>
    %456 = vector.broadcast %455 : vector<1x512xf32> to vector<32x512xf32>
    %457 = arith.mulf %406, %456 : vector<32x512xf32>
    %c384 = arith.constant 384 : index
    %c0_275 = arith.constant 0 : index
    %458 = vector.load %arg20[%c384, %c0_275] : memref<512x512xf32, #tpu.memory_space<vmem>>, vector<32x512xf32>
    tpu.vector_store %arg20[%c384, %c0_275], %457 {strides = array<i32>} : memref<512x512xf32, #tpu.memory_space<vmem>>, vector<32x512xf32>,
    %c13_276 = arith.constant 13 : index
    %c0_277 = arith.constant 0 : index
    %459 = vector.load %arg3[%c13_276, %c0_277] : memref<16x512xf32, #tpu.memory_space<vmem>>, vector<1x512xf32>
    %460 = vector.broadcast %459 : vector<1x512xf32> to vector<32x512xf32>
    %461 = arith.mulf %406, %460 : vector<32x512xf32>
    %c416 = arith.constant 416 : index
    %c0_278 = arith.constant 0 : index
    %462 = vector.load %arg20[%c416, %c0_278] : memref<512x512xf32, #tpu.memory_space<vmem>>, vector<32x512xf32>
    tpu.vector_store %arg20[%c416, %c0_278], %461 {strides = array<i32>} : memref<512x512xf32, #tpu.memory_space<vmem>>, vector<32x512xf32>,
    %c14_279 = arith.constant 14 : index
    %c0_280 = arith.constant 0 : index
    %463 = vector.load %arg3[%c14_279, %c0_280] : memref<16x512xf32, #tpu.memory_space<vmem>>, vector<1x512xf32>
    %464 = vector.broadcast %463 : vector<1x512xf32> to vector<32x512xf32>
    %465 = arith.mulf %406, %464 : vector<32x512xf32>
    %c448 = arith.constant 448 : index
    %c0_281 = arith.constant 0 : index
    %466 = vector.load %arg20[%c448, %c0_281] : memref<512x512xf32, #tpu.memory_space<vmem>>, vector<32x512xf32>
    tpu.vector_store %arg20[%c448, %c0_281], %465 {strides = array<i32>} : memref<512x512xf32, #tpu.memory_space<vmem>>, vector<32x512xf32>,
    %c15_282 = arith.constant 15 : index
    %c0_283 = arith.constant 0 : index
    %467 = vector.load %arg3[%c15_282, %c0_283] : memref<16x512xf32, #tpu.memory_space<vmem>>, vector<1x512xf32>
    %468 = vector.broadcast %467 : vector<1x512xf32> to vector<32x512xf32>
    %469 = arith.mulf %406, %468 : vector<32x512xf32>
    %c480 = arith.constant 480 : index
    %c0_284 = arith.constant 0 : index
    %470 = vector.load %arg20[%c480, %c0_284] : memref<512x512xf32, #tpu.memory_space<vmem>>, vector<32x512xf32>
    tpu.vector_store %arg20[%c480, %c0_284], %469 {strides = array<i32>} : memref<512x512xf32, #tpu.memory_space<vmem>>, vector<32x512xf32>,
    %c0_285 = arith.constant 0 : index
    %c0_286 = arith.constant 0 : index
    %471 = vector.load %arg17[%c0_285, %c0_286] : memref<32x512xf32, #tpu.memory_space<vmem>>, vector<32x512xf32>
    %c0_287 = arith.constant 0 : index
    %c0_288 = arith.constant 0 : index
    %472 = vector.load %arg20[%c0_287, %c0_288] : memref<512x512xf32, #tpu.memory_space<vmem>>, vector<512x512xf32>
    %cst = arith.constant dense<0.000000e+00> : vector<32x512xf32>
    %473 = tpu.matmul %471, %472, %cst {dimension_numbers = #tpu.dot_dimension_numbers<[1], [0], [0], [1], [0, 0, 1, 1], [], []>} : vector<32x512xf32>, vector<512x512xf32>, vector<32x512xf32> -> vector<32x512xf32>
    %474 = vector.broadcast %81 : vector<1x512xf32> to vector<32x512xf32>
    %475 = arith.addf %473, %474 : vector<32x512xf32>
    %c0_289 = arith.constant 0 : index
    %c0_290 = arith.constant 0 : index
    %476 = vector.load %arg16[%c0_289, %c0_290] : memref<32x512xf32, #tpu.memory_space<vmem>>, vector<32x512xf32>
    %477 = arith.addf %475, %476 : vector<32x512xf32>
    %cst_291 = arith.constant dense<0.000000e+00> : vector<512xf32>
    %478 = vector.multi_reduction <add>, %477, %cst_291 [0] : vector<32x512xf32> to vector<512xf32>
    %479 = vector.shape_cast %478 : vector<512xf32> to vector<1x512xf32>
    %480 = arith.mulf %477, %477 : vector<32x512xf32>
    %cst_292 = arith.constant dense<0.000000e+00> : vector<512xf32>
    %481 = vector.multi_reduction <add>, %480, %cst_292 [0] : vector<32x512xf32> to vector<512xf32>
    %482 = vector.shape_cast %481 : vector<512xf32> to vector<1x512xf32>
    %c32_i32_293 = arith.constant 32 : i32
    %483 = tpu.dynamic_rotate %479 by %c32_i32_293 dim 1 : vector<1x512xf32>, i32 -> vector<1x512xf32>
    %484 = arith.addf %479, %483 : vector<1x512xf32>
    %c32_i32_294 = arith.constant 32 : i32
    %485 = tpu.dynamic_rotate %482 by %c32_i32_294 dim 1 : vector<1x512xf32>, i32 -> vector<1x512xf32>
    %486 = arith.addf %482, %485 : vector<1x512xf32>
    %c64_i32_295 = arith.constant 64 : i32
    %487 = tpu.dynamic_rotate %484 by %c64_i32_295 dim 1 : vector<1x512xf32>, i32 -> vector<1x512xf32>
    %488 = arith.addf %484, %487 : vector<1x512xf32>
    %c64_i32_296 = arith.constant 64 : i32
    %489 = tpu.dynamic_rotate %486 by %c64_i32_296 dim 1 : vector<1x512xf32>, i32 -> vector<1x512xf32>
    %490 = arith.addf %486, %489 : vector<1x512xf32>
    %c128_i32 = arith.constant 128 : i32
    %491 = tpu.dynamic_rotate %488 by %c128_i32 dim 1 : vector<1x512xf32>, i32 -> vector<1x512xf32>
    %492 = arith.addf %488, %491 : vector<1x512xf32>
    %c128_i32_297 = arith.constant 128 : i32
    %493 = tpu.dynamic_rotate %490 by %c128_i32_297 dim 1 : vector<1x512xf32>, i32 -> vector<1x512xf32>
    %494 = arith.addf %490, %493 : vector<1x512xf32>
    %c256_i32 = arith.constant 256 : i32
    %495 = tpu.dynamic_rotate %492 by %c256_i32 dim 1 : vector<1x512xf32>, i32 -> vector<1x512xf32>
    %496 = arith.addf %492, %495 : vector<1x512xf32>
    %c256_i32_298 = arith.constant 256 : i32
    %497 = tpu.dynamic_rotate %494 by %c256_i32_298 dim 1 : vector<1x512xf32>, i32 -> vector<1x512xf32>
    %498 = arith.addf %494, %497 : vector<1x512xf32>
    %cst_299 = arith.constant 0.001953125 : f32
    %499 = vector.broadcast %cst_299 : f32 to vector<1x512xf32>
    %500 = arith.mulf %496, %499 : vector<1x512xf32>
    %cst_300 = arith.constant 0.001953125 : f32
    %501 = vector.broadcast %cst_300 : f32 to vector<1x512xf32>
    %502 = arith.mulf %498, %501 : vector<1x512xf32>
    %503 = arith.mulf %500, %500 : vector<1x512xf32>
    %504 = arith.subf %502, %503 : vector<1x512xf32>
    %cst_301 = arith.constant 0.000000e+00 : f32
    %505 = vector.broadcast %cst_301 : f32 to vector<1x512xf32>
    %506 = arith.maximumf %504, %505 : vector<1x512xf32>
    %507 = vector.broadcast %500 : vector<1x512xf32> to vector<32x512xf32>
    %508 = arith.subf %477, %507 : vector<32x512xf32>
    %cst_302 = arith.constant 9.99999974E-6 : f32
    %509 = vector.broadcast %cst_302 : f32 to vector<1x512xf32>
    %510 = arith.addf %506, %509 : vector<1x512xf32>
    %511 = math.rsqrt %510 : vector<1x512xf32>
    %512 = vector.broadcast %511 : vector<1x512xf32> to vector<32x512xf32>
    %513 = arith.mulf %508, %512 : vector<32x512xf32>
    %514 = vector.broadcast %83 : vector<1x512xf32> to vector<32x512xf32>
    %515 = arith.mulf %513, %514 : vector<32x512xf32>
    %516 = vector.broadcast %85 : vector<1x512xf32> to vector<32x512xf32>
    %517 = arith.addf %515, %516 : vector<32x512xf32>
    %cst_303 = arith.constant 5.000000e-01 : f32
    %518 = vector.broadcast %cst_303 : f32 to vector<32x512xf32>
    %519 = arith.mulf %518, %517 : vector<32x512xf32>
    %cst_304 = arith.constant 0.707106769 : f32
    %520 = vector.broadcast %cst_304 : f32 to vector<32x512xf32>
    %521 = arith.mulf %517, %520 : vector<32x512xf32>
    %522 = math.erf %521 : vector<32x512xf32>
    %cst_305 = arith.constant 1.000000e+00 : f32
    %523 = vector.broadcast %cst_305 : f32 to vector<32x512xf32>
    %524 = arith.addf %523, %522 : vector<32x512xf32>
    %525 = arith.mulf %519, %524 : vector<32x512xf32>
    %c0_306 = arith.constant 0 : index
    %c0_307 = arith.constant 0 : index
    %526 = vector.load %arg16[%c0_306, %c0_307] : memref<32x512xf32, #tpu.memory_space<vmem>>, vector<32x512xf32>
    tpu.vector_store %arg16[%c0_306, %c0_307], %525 {strides = array<i32>} : memref<32x512xf32, #tpu.memory_space<vmem>>, vector<32x512xf32>,
    %c1_i32_308 = arith.constant 1 : i32
    %527 = arith.cmpi eq, %arg0, %c1_i32_308 : i32
    %528 = arith.extui %527 : i1 to i32
    %c0_i32_309 = arith.constant 0 : i32
    %529 = arith.cmpi ne, %528, %c0_i32_309 : i32
    scf.if %529 {
      %c0_310 = arith.constant 0 : index
      %c0_311 = arith.constant 0 : index
      %530 = vector.load %arg16[%c0_310, %c0_311] : memref<32x512xf32, #tpu.memory_space<vmem>>, vector<32x512xf32>
      %c0_312 = arith.constant 0 : index
      %c0_313 = arith.constant 0 : index
      %531 = vector.load %arg5[%c0_312, %c0_313] : memref<32x128xf32, #tpu.memory_space<vmem>>, vector<32x128xf32>
      %c0_314 = arith.constant 0 : index
      %c0_315 = arith.constant 0 : index
      %532 = vector.load %arg4[%c0_314, %c0_315] : memref<16x128xf32, #tpu.memory_space<vmem>>, vector<1x128xf32>
      %533 = vector.broadcast %532 : vector<1x128xf32> to vector<32x128xf32>
      %534 = arith.mulf %531, %533 : vector<32x128xf32>
      %c0_316 = arith.constant 0 : index
      %c0_317 = arith.constant 0 : index
      %535 = vector.load %arg21[%c0_316, %c0_317] : memref<512x128xf32, #tpu.memory_space<vmem>>, vector<32x128xf32>
      tpu.vector_store %arg21[%c0_316, %c0_317], %534 {strides = array<i32>} : memref<512x128xf32, #tpu.memory_space<vmem>>, vector<32x128xf32>,
      %c1_318 = arith.constant 1 : index
      %c0_319 = arith.constant 0 : index
      %536 = vector.load %arg4[%c1_318, %c0_319] : memref<16x128xf32, #tpu.memory_space<vmem>>, vector<1x128xf32>
      %537 = vector.broadcast %536 : vector<1x128xf32> to vector<32x128xf32>
      %538 = arith.mulf %531, %537 : vector<32x128xf32>
      %c32_320 = arith.constant 32 : index
      %c0_321 = arith.constant 0 : index
      %539 = vector.load %arg21[%c32_320, %c0_321] : memref<512x128xf32, #tpu.memory_space<vmem>>, vector<32x128xf32>
      tpu.vector_store %arg21[%c32_320, %c0_321], %538 {strides = array<i32>} : memref<512x128xf32, #tpu.memory_space<vmem>>, vector<32x128xf32>,
      %c2_322 = arith.constant 2 : index
      %c0_323 = arith.constant 0 : index
      %540 = vector.load %arg4[%c2_322, %c0_323] : memref<16x128xf32, #tpu.memory_space<vmem>>, vector<1x128xf32>
      %541 = vector.broadcast %540 : vector<1x128xf32> to vector<32x128xf32>
      %542 = arith.mulf %531, %541 : vector<32x128xf32>
      %c64_324 = arith.constant 64 : index
      %c0_325 = arith.constant 0 : index
      %543 = vector.load %arg21[%c64_324, %c0_325] : memref<512x128xf32, #tpu.memory_space<vmem>>, vector<32x128xf32>
      tpu.vector_store %arg21[%c64_324, %c0_325], %542 {strides = array<i32>} : memref<512x128xf32, #tpu.memory_space<vmem>>, vector<32x128xf32>,
      %c3_326 = arith.constant 3 : index
      %c0_327 = arith.constant 0 : index
      %544 = vector.load %arg4[%c3_326, %c0_327] : memref<16x128xf32, #tpu.memory_space<vmem>>, vector<1x128xf32>
      %545 = vector.broadcast %544 : vector<1x128xf32> to vector<32x128xf32>
      %546 = arith.mulf %531, %545 : vector<32x128xf32>
      %c96_328 = arith.constant 96 : index
      %c0_329 = arith.constant 0 : index
      %547 = vector.load %arg21[%c96_328, %c0_329] : memref<512x128xf32, #tpu.memory_space<vmem>>, vector<32x128xf32>
      tpu.vector_store %arg21[%c96_328, %c0_329], %546 {strides = array<i32>} : memref<512x128xf32, #tpu.memory_space<vmem>>, vector<32x128xf32>,
      %c4_330 = arith.constant 4 : index
      %c0_331 = arith.constant 0 : index
      %548 = vector.load %arg4[%c4_330, %c0_331] : memref<16x128xf32, #tpu.memory_space<vmem>>, vector<1x128xf32>
      %549 = vector.broadcast %548 : vector<1x128xf32> to vector<32x128xf32>
      %550 = arith.mulf %531, %549 : vector<32x128xf32>
      %c128_332 = arith.constant 128 : index
      %c0_333 = arith.constant 0 : index
      %551 = vector.load %arg21[%c128_332, %c0_333] : memref<512x128xf32, #tpu.memory_space<vmem>>, vector<32x128xf32>
      tpu.vector_store %arg21[%c128_332, %c0_333], %550 {strides = array<i32>} : memref<512x128xf32, #tpu.memory_space<vmem>>, vector<32x128xf32>,
      %c5_334 = arith.constant 5 : index
      %c0_335 = arith.constant 0 : index
      %552 = vector.load %arg4[%c5_334, %c0_335] : memref<16x128xf32, #tpu.memory_space<vmem>>, vector<1x128xf32>
      %553 = vector.broadcast %552 : vector<1x128xf32> to vector<32x128xf32>
      %554 = arith.mulf %531, %553 : vector<32x128xf32>
      %c160_336 = arith.constant 160 : index
      %c0_337 = arith.constant 0 : index
      %555 = vector.load %arg21[%c160_336, %c0_337] : memref<512x128xf32, #tpu.memory_space<vmem>>, vector<32x128xf32>
      tpu.vector_store %arg21[%c160_336, %c0_337], %554 {strides = array<i32>} : memref<512x128xf32, #tpu.memory_space<vmem>>, vector<32x128xf32>,
      %c6_338 = arith.constant 6 : index
      %c0_339 = arith.constant 0 : index
      %556 = vector.load %arg4[%c6_338, %c0_339] : memref<16x128xf32, #tpu.memory_space<vmem>>, vector<1x128xf32>
      %557 = vector.broadcast %556 : vector<1x128xf32> to vector<32x128xf32>
      %558 = arith.mulf %531, %557 : vector<32x128xf32>
      %c192_340 = arith.constant 192 : index
      %c0_341 = arith.constant 0 : index
      %559 = vector.load %arg21[%c192_340, %c0_341] : memref<512x128xf32, #tpu.memory_space<vmem>>, vector<32x128xf32>
      tpu.vector_store %arg21[%c192_340, %c0_341], %558 {strides = array<i32>} : memref<512x128xf32, #tpu.memory_space<vmem>>, vector<32x128xf32>,
      %c7_342 = arith.constant 7 : index
      %c0_343 = arith.constant 0 : index
      %560 = vector.load %arg4[%c7_342, %c0_343] : memref<16x128xf32, #tpu.memory_space<vmem>>, vector<1x128xf32>
      %561 = vector.broadcast %560 : vector<1x128xf32> to vector<32x128xf32>
      %562 = arith.mulf %531, %561 : vector<32x128xf32>
      %c224_344 = arith.constant 224 : index
      %c0_345 = arith.constant 0 : index
      %563 = vector.load %arg21[%c224_344, %c0_345] : memref<512x128xf32, #tpu.memory_space<vmem>>, vector<32x128xf32>
      tpu.vector_store %arg21[%c224_344, %c0_345], %562 {strides = array<i32>} : memref<512x128xf32, #tpu.memory_space<vmem>>, vector<32x128xf32>,
      %c8_346 = arith.constant 8 : index
      %c0_347 = arith.constant 0 : index
      %564 = vector.load %arg4[%c8_346, %c0_347] : memref<16x128xf32, #tpu.memory_space<vmem>>, vector<1x128xf32>
      %565 = vector.broadcast %564 : vector<1x128xf32> to vector<32x128xf32>
      %566 = arith.mulf %531, %565 : vector<32x128xf32>
      %c256_348 = arith.constant 256 : index
      %c0_349 = arith.constant 0 : index
      %567 = vector.load %arg21[%c256_348, %c0_349] : memref<512x128xf32, #tpu.memory_space<vmem>>, vector<32x128xf32>
      tpu.vector_store %arg21[%c256_348, %c0_349], %566 {strides = array<i32>} : memref<512x128xf32, #tpu.memory_space<vmem>>, vector<32x128xf32>,
      %c9_350 = arith.constant 9 : index
      %c0_351 = arith.constant 0 : index
      %568 = vector.load %arg4[%c9_350, %c0_351] : memref<16x128xf32, #tpu.memory_space<vmem>>, vector<1x128xf32>
      %569 = vector.broadcast %568 : vector<1x128xf32> to vector<32x128xf32>
      %570 = arith.mulf %531, %569 : vector<32x128xf32>
      %c288_352 = arith.constant 288 : index
      %c0_353 = arith.constant 0 : index
      %571 = vector.load %arg21[%c288_352, %c0_353] : memref<512x128xf32, #tpu.memory_space<vmem>>, vector<32x128xf32>
      tpu.vector_store %arg21[%c288_352, %c0_353], %570 {strides = array<i32>} : memref<512x128xf32, #tpu.memory_space<vmem>>, vector<32x128xf32>,
      %c10_354 = arith.constant 10 : index
      %c0_355 = arith.constant 0 : index
      %572 = vector.load %arg4[%c10_354, %c0_355] : memref<16x128xf32, #tpu.memory_space<vmem>>, vector<1x128xf32>
      %573 = vector.broadcast %572 : vector<1x128xf32> to vector<32x128xf32>
      %574 = arith.mulf %531, %573 : vector<32x128xf32>
      %c320_356 = arith.constant 320 : index
      %c0_357 = arith.constant 0 : index
      %575 = vector.load %arg21[%c320_356, %c0_357] : memref<512x128xf32, #tpu.memory_space<vmem>>, vector<32x128xf32>
      tpu.vector_store %arg21[%c320_356, %c0_357], %574 {strides = array<i32>} : memref<512x128xf32, #tpu.memory_space<vmem>>, vector<32x128xf32>,
      %c11_358 = arith.constant 11 : index
      %c0_359 = arith.constant 0 : index
      %576 = vector.load %arg4[%c11_358, %c0_359] : memref<16x128xf32, #tpu.memory_space<vmem>>, vector<1x128xf32>
      %577 = vector.broadcast %576 : vector<1x128xf32> to vector<32x128xf32>
      %578 = arith.mulf %531, %577 : vector<32x128xf32>
      %c352_360 = arith.constant 352 : index
      %c0_361 = arith.constant 0 : index
      %579 = vector.load %arg21[%c352_360, %c0_361] : memref<512x128xf32, #tpu.memory_space<vmem>>, vector<32x128xf32>
      tpu.vector_store %arg21[%c352_360, %c0_361], %578 {strides = array<i32>} : memref<512x128xf32, #tpu.memory_space<vmem>>, vector<32x128xf32>,
      %c12_362 = arith.constant 12 : index
      %c0_363 = arith.constant 0 : index
      %580 = vector.load %arg4[%c12_362, %c0_363] : memref<16x128xf32, #tpu.memory_space<vmem>>, vector<1x128xf32>
      %581 = vector.broadcast %580 : vector<1x128xf32> to vector<32x128xf32>
      %582 = arith.mulf %531, %581 : vector<32x128xf32>
      %c384_364 = arith.constant 384 : index
      %c0_365 = arith.constant 0 : index
      %583 = vector.load %arg21[%c384_364, %c0_365] : memref<512x128xf32, #tpu.memory_space<vmem>>, vector<32x128xf32>
      tpu.vector_store %arg21[%c384_364, %c0_365], %582 {strides = array<i32>} : memref<512x128xf32, #tpu.memory_space<vmem>>, vector<32x128xf32>,
      %c13_366 = arith.constant 13 : index
      %c0_367 = arith.constant 0 : index
      %584 = vector.load %arg4[%c13_366, %c0_367] : memref<16x128xf32, #tpu.memory_space<vmem>>, vector<1x128xf32>
      %585 = vector.broadcast %584 : vector<1x128xf32> to vector<32x128xf32>
      %586 = arith.mulf %531, %585 : vector<32x128xf32>
      %c416_368 = arith.constant 416 : index
      %c0_369 = arith.constant 0 : index
      %587 = vector.load %arg21[%c416_368, %c0_369] : memref<512x128xf32, #tpu.memory_space<vmem>>, vector<32x128xf32>
      tpu.vector_store %arg21[%c416_368, %c0_369], %586 {strides = array<i32>} : memref<512x128xf32, #tpu.memory_space<vmem>>, vector<32x128xf32>,
      %c14_370 = arith.constant 14 : index
      %c0_371 = arith.constant 0 : index
      %588 = vector.load %arg4[%c14_370, %c0_371] : memref<16x128xf32, #tpu.memory_space<vmem>>, vector<1x128xf32>
      %589 = vector.broadcast %588 : vector<1x128xf32> to vector<32x128xf32>
      %590 = arith.mulf %531, %589 : vector<32x128xf32>
      %c448_372 = arith.constant 448 : index
      %c0_373 = arith.constant 0 : index
      %591 = vector.load %arg21[%c448_372, %c0_373] : memref<512x128xf32, #tpu.memory_space<vmem>>, vector<32x128xf32>
      tpu.vector_store %arg21[%c448_372, %c0_373], %590 {strides = array<i32>} : memref<512x128xf32, #tpu.memory_space<vmem>>, vector<32x128xf32>,
      %c15_374 = arith.constant 15 : index
      %c0_375 = arith.constant 0 : index
      %592 = vector.load %arg4[%c15_374, %c0_375] : memref<16x128xf32, #tpu.memory_space<vmem>>, vector<1x128xf32>
      %593 = vector.broadcast %592 : vector<1x128xf32> to vector<32x128xf32>
      %594 = arith.mulf %531, %593 : vector<32x128xf32>
      %c480_376 = arith.constant 480 : index
      %c0_377 = arith.constant 0 : index
      %595 = vector.load %arg21[%c480_376, %c0_377] : memref<512x128xf32, #tpu.memory_space<vmem>>, vector<32x128xf32>
      tpu.vector_store %arg21[%c480_376, %c0_377], %594 {strides = array<i32>} : memref<512x128xf32, #tpu.memory_space<vmem>>, vector<32x128xf32>,
      %c0_378 = arith.constant 0 : index
      %c0_379 = arith.constant 0 : index
      %596 = vector.load %arg21[%c0_378, %c0_379] : memref<512x128xf32, #tpu.memory_space<vmem>>, vector<512x128xf32>
      %cst_380 = arith.constant dense<0.000000e+00> : vector<32x128xf32>
      %597 = tpu.matmul %530, %596, %cst_380 {dimension_numbers = #tpu.dot_dimension_numbers<[1], [0], [0], [1], [0, 0, 1, 1], [], []>} : vector<32x512xf32>, vector<512x128xf32>, vector<32x128xf32> -> vector<32x128xf32>
      %c0_381 = arith.constant 0 : index
      %c0_382 = arith.constant 0 : index
      %598 = vector.load %arg6[%c0_381, %c0_382] : memref<1x128xf32, #tpu.memory_space<vmem>>, vector<1x128xf32>
      %599 = vector.broadcast %598 : vector<1x128xf32> to vector<32x128xf32>
      %600 = arith.addf %597, %599 : vector<32x128xf32>
      %c0_383 = arith.constant 0 : index
      %c0_384 = arith.constant 0 : index
      %601 = vector.load %arg14[%c0_383, %c0_384] : memref<32x128xf32, #tpu.memory_space<vmem>>, vector<32x128xf32>
      tpu.vector_store %arg14[%c0_383, %c0_384], %600 {strides = array<i32>} : memref<32x128xf32, #tpu.memory_space<vmem>>, vector<32x128xf32>,
      %c0_385 = arith.constant 0 : index
      %c0_386 = arith.constant 0 : index
      %602 = vector.load %arg1[%c0_385, %c0_386] : memref<32x512xf32, #tpu.memory_space<vmem>>, vector<32x512xf32>
      %603 = arith.addf %530, %602 : vector<32x512xf32>
      %c0_387 = arith.constant 0 : index
      %c0_388 = arith.constant 0 : index
      %604 = vector.load %arg15[%c0_387, %c0_388] : memref<32x512xf32, #tpu.memory_space<vmem>>, vector<32x512xf32>
      tpu.vector_store %arg15[%c0_387, %c0_388], %603 {strides = array<i32>} : memref<32x512xf32, #tpu.memory_space<vmem>>, vector<32x512xf32>,
    } else {
    }
    return
  }
  func.func @transform_0(%arg0: i32) -> (i32, i32) {
    %c0_i32 = arith.constant 0 : i32
    %c0_i32_0 = arith.constant 0 : i32
    %c0_i32_1 = arith.constant 0 : i32
    return %c0_i32, %c0_i32_0 : i32, i32
  }
  func.func @transform_1(%arg0: i32) -> (i32, i32) {
    %c0_i32 = arith.constant 0 : i32
    %c0_i32_0 = arith.constant 0 : i32
    %c0_i32_1 = arith.constant 0 : i32
    return %c0_i32, %c0_i32_0 : i32, i32
  }
  func.func @transform_2(%arg0: i32) -> (i32, i32) {
    %c0_i32 = arith.constant 0 : i32
    %c0_i32_0 = arith.constant 0 : i32
    %c0_i32_1 = arith.constant 0 : i32
    return %c0_i32, %c0_i32_0 : i32, i32
  }
  func.func @transform_3(%arg0: i32) -> (i32, i32) {
    %c0_i32 = arith.constant 0 : i32
    %c0_i32_0 = arith.constant 0 : i32
    %c0_i32_1 = arith.constant 0 : i32
    return %c0_i32, %c0_i32_0 : i32, i32
  }
  func.func @transform_4(%arg0: i32) -> (i32, i32) {
    %c0_i32 = arith.constant 0 : i32
    %c0_i32_0 = arith.constant 0 : i32
    %c0_i32_1 = arith.constant 0 : i32
    return %c0_i32, %c0_i32_0 : i32, i32
  }
  func.func @transform_5(%arg0: i32) -> (i32, i32) {
    %c0_i32 = arith.constant 0 : i32
    %c0_i32_0 = arith.constant 0 : i32
    %c0_i32_1 = arith.constant 0 : i32
    return %c0_i32, %c0_i32_0 : i32, i32
  }
  func.func @transform_6(%arg0: i32) -> (i32, i32, i32) {
    %c0_i32 = arith.constant 0 : i32
    %c0_i32_0 = arith.constant 0 : i32
    %c0_i32_1 = arith.constant 0 : i32
    return %arg0, %c0_i32, %c0_i32_0 : i32, i32, i32
  }
  func.func @transform_7(%arg0: i32) -> (i32, i32, i32) {
    %c0_i32 = arith.constant 0 : i32
    %c0_i32_0 = arith.constant 0 : i32
    %c0_i32_1 = arith.constant 0 : i32
    return %arg0, %c0_i32, %c0_i32_0 : i32, i32, i32
  }
  func.func @transform_8(%arg0: i32) -> (i32, i32, i32) {
    %c0_i32 = arith.constant 0 : i32
    %c0_i32_0 = arith.constant 0 : i32
    %c0_i32_1 = arith.constant 0 : i32
    return %arg0, %c0_i32, %c0_i32_0 : i32, i32, i32
  }
  func.func @transform_9(%arg0: i32) -> (i32, i32, i32) {
    %c0_i32 = arith.constant 0 : i32
    %c0_i32_0 = arith.constant 0 : i32
    %c0_i32_1 = arith.constant 0 : i32
    return %arg0, %c0_i32, %c0_i32_0 : i32, i32, i32
  }
  func.func @transform_10(%arg0: i32) -> (i32, i32, i32) {
    %c0_i32 = arith.constant 0 : i32
    %c0_i32_0 = arith.constant 0 : i32
    %c0_i32_1 = arith.constant 0 : i32
    return %arg0, %c0_i32, %c0_i32_0 : i32, i32, i32
  }
  func.func @transform_11(%arg0: i32) -> (i32, i32, i32) {
    %c0_i32 = arith.constant 0 : i32
    %c0_i32_0 = arith.constant 0 : i32
    %c0_i32_1 = arith.constant 0 : i32
    return %arg0, %c0_i32, %c0_i32_0 : i32, i32, i32
  }
  func.func @transform_12(%arg0: i32) -> (i32, i32, i32) {
    %c0_i32 = arith.constant 0 : i32
    %c0_i32_0 = arith.constant 0 : i32
    %c0_i32_1 = arith.constant 0 : i32
    return %arg0, %c0_i32, %c0_i32_0 : i32, i32, i32
  }
  func.func @transform_13(%arg0: i32) -> (i32, i32) {
    %c0_i32 = arith.constant 0 : i32
    %c0_i32_0 = arith.constant 0 : i32
    %c0_i32_1 = arith.constant 0 : i32
    return %c0_i32, %c0_i32_0 : i32, i32
  }
  func.func @transform_14(%arg0: i32) -> (i32, i32) {
    %c0_i32 = arith.constant 0 : i32
    %c0_i32_0 = arith.constant 0 : i32
    %c0_i32_1 = arith.constant 0 : i32
    return %c0_i32, %c0_i32_0 : i32, i32
  }
}

</mosaic_0001>

<llo_original>
// kernel: boundary_branch.1
$region0: #{boundary_branch.1}
  #allocation0 [shape = 'u32[]', space=smem, size = 0x4, offset = 0x4, fixed_abs, tag = 'smem constant byte address 0x4 - core index']
  #allocation1 [shape = 'u32[144,128]{1,0:T(1,128)}', space=vmem, size = 0x12000, scoped, tag = 'internal scratch']
  #allocation2 [shape = 'f32[32,512]{1,0:T(8,128)}', space=vmem, size = 0x10000, scoped, tag = 'scratch operand']
  #allocation3 [shape = 'f32[32,512]{1,0:T(8,128)}', space=vmem, size = 0x10000, scoped, tag = 'scratch operand']
  #allocation4 [shape = 'f32[32,512]{1,0:T(8,128)}', space=vmem, size = 0x10000, scoped, tag = 'scratch operand']
  #allocation5 [shape = 'f32[32,512]{1,0:T(8,128)}', space=vmem, size = 0x10000, scoped, tag = 'scratch operand']
  #allocation6 [shape = 'f32[512,512]{1,0:T(8,128)}', space=vmem, size = 0x100000, scoped, tag = 'scratch operand']
  #allocation7 [shape = 'f32[512,128]{1,0:T(8,128)}', space=vmem, size = 0x40000, scoped, tag = 'scratch operand']
  %s0 = inlined_call_operand.vmem [shape: f32[32,512], index: 0, kind: input, shape index: {}]
  %s1 = inlined_call_operand.vmem [shape: s32[32,1], index: 1, kind: input, shape index: {}]
  %s2 = inlined_call_operand.vmem [shape: f32[16,512], index: 2, kind: input, shape index: {}]
  %s3 = inlined_call_operand.vmem [shape: f32[16,128], index: 3, kind: input, shape index: {}]
  %s4 = inlined_call_operand.vmem [shape: f32[32,128], index: 4, kind: input, shape index: {}]
  %s5 = inlined_call_operand.vmem [shape: f32[1,128], index: 5, kind: input, shape index: {}]
  %s6 = inlined_call_operand.vmem [shape: f32[2,25,512], index: 6, kind: input, shape index: {}]
  %s7 = inlined_call_operand.vmem [shape: f32[2,3,512], index: 7, kind: input, shape index: {}]
  %s8 = inlined_call_operand.vmem [shape: f32[2,3,512], index: 8, kind: input, shape index: {}]
  %s9 = inlined_call_operand.vmem [shape: f32[2,7,512], index: 9, kind: input, shape index: {}]
  %s10 = inlined_call_operand.vmem [shape: f32[2,7,512], index: 10, kind: input, shape index: {}]
  %s11 = inlined_call_operand.vmem [shape: f32[2,8,512], index: 11, kind: input, shape index: {}]
  %s12 = inlined_call_operand.vmem [shape: f32[2,32,512], index: 12, kind: input, shape index: {}]
  %s13 = inlined_call_operand.vmem [shape: f32[32,128], index: 13, kind: output, shape index: {0}]
  %s14 = inlined_call_operand.vmem [shape: f32[32,512], index: 14, kind: output, shape index: {1}]
  %15 = xla_tuple %s13, %s14
  %s16 = sld [smem:[#allocation0]]
  $region101: #{boundary_branch.1} parent=0
    _
  %s18 = ssub.s32 1, %s16
  %s19 = scalar_select 0, %s18, %s16
  loop: start=0, step=1, limit=4
  $region2: #{boundary_branch.1} parent=0 // loop_pre_header
    _
  $region3: #{boundary_branch.1} parent=0 // loop_header
    %s21 = sphi 0, %s25
    %p22 = scmp.ge.s32.totalorder %s21, 4
    %s29 = sphi 0, %s29
    %s31 = sphi 0, %s29
    %s32 = sphi 0, %s31
    %s46 = sphi 0, %s32
    %s50 = sphi 0, %s50
    %s52 = sphi 0, %s50
    %s53 = sphi 0, %s52
    %s67 = sphi 0, %s53
    %s71 = sphi 0, %s71
    %s73 = sphi 0, %s71
    %s74 = sphi 0, %s73
    %s88 = sphi 0, %s74
    %s92 = sphi 0, %s92
    %s94 = sphi 0, %s92
    %s95 = sphi 0, %s94
    %s109 = sphi 0, %s95
    %s113 = sphi 0, %s113
    %s115 = sphi 0, %s113
    %s116 = sphi 0, %s115
    %s130 = sphi 0, %s116
    %s134 = sphi 0, %s134
    %s136 = sphi 0, %s134
    %s137 = sphi 0, %s136
    %s151 = sphi 0, %s137
    %s157 = sphi 0, %s159
    %s160 = sphi 0, %s157
    %s161 = sphi 0, %s160
    %s177 = sphi 0, %s161
    %s183 = sphi 0, %s185
    %s186 = sphi 0, %s183
    %s187 = sphi 0, %s186
    %s203 = sphi 0, %s187
    %s209 = sphi 0, %s211
    %s212 = sphi 0, %s209
    %s213 = sphi 0, %s212
    %s229 = sphi 0, %s213
    %s235 = sphi 0, %s237
    %s238 = sphi 0, %s235
    %s239 = sphi 0, %s238
    %s255 = sphi 0, %s239
    %s261 = sphi 0, %s263
    %s264 = sphi 0, %s261
    %s265 = sphi 0, %s264
    %s281 = sphi 0, %s265
    %s287 = sphi 0, %s289
    %s290 = sphi 0, %s287
    %s291 = sphi 0, %s290
    %s307 = sphi 0, %s291
    %s313 = sphi 0, %s315
    %s316 = sphi 0, %s313
    %s317 = sphi 0, %s316
    %s333 = sphi 0, %s317
    %s337 = sphi 0, %s337
    %s339 = sphi 0, %s337
    %s340 = sphi 0, %s339
    %s354 = sphi 0, %s340
    %s358 = sphi 0, %s358
    %s360 = sphi 0, %s358
    %s361 = sphi 0, %s360
    %s375 = sphi 0, %s361
  $region4: #{boundary_branch.1} parent=0 // loop_header_branch
    %24 = sbr.rel (%p22) target = $region8
  $region5: #{boundary_branch.1} parent=0 // loop_body
    %s26 = ssub.s32 %s21, 1
    %s27 = ssub.s32 %s21, 2
    %s28 = sadd.s32 %s21, 1
    %s30 = sadd.s32 %s29, 1
    %p33 = scmp.eq.s32.totalorder %s21, 1
    %p34 = scmp.ne.s32.totalorder %s29, %s31
    %p35 = scmp.eq.s32.totalorder %s21, 0
    %p36 = por %p34, %p35
    %p37 = scmp.ne.s32.totalorder %s29, %s31
    %p38 = scmp.eq.s32.totalorder %s26, 1
    %p39 = por %p37, %p38
    %p40 = scmp.ne.s32.totalorder %s31, %s32
    %p41 = scmp.eq.s32.totalorder %s26, 0
    %p42 = por %p40, %p41
    %p43 = scmp.ne.s32.totalorder %s31, %s32
    %p44 = scmp.eq.s32.totalorder %s27, 1
    %p45 = por %p43, %p44
    %p47 = scmp.ne.s32.totalorder %s32, %s46
    %p48 = scmp.eq.s32.totalorder %s27, 0
    %p49 = por %p47, %p48
    %s51 = sadd.s32 %s50, 1
    %p54 = scmp.eq.s32.totalorder %s21, 1
    %p55 = scmp.ne.s32.totalorder %s50, %s52
    %p56 = scmp.eq.s32.totalorder %s21, 0
    %p57 = por %p55, %p56
    %p58 = scmp.ne.s32.totalorder %s50, %s52
    %p59 = scmp.eq.s32.totalorder %s26, 1
    %p60 = por %p58, %p59
    %p61 = scmp.ne.s32.totalorder %s52, %s53
    %p62 = scmp.eq.s32.totalorder %s26, 0
    %p63 = por %p61, %p62
    %p64 = scmp.ne.s32.totalorder %s52, %s53
    %p65 = scmp.eq.s32.totalorder %s27, 1
    %p66 = por %p64, %p65
    %p68 = scmp.ne.s32.totalorder %s53, %s67
    %p69 = scmp.eq.s32.totalorder %s27, 0
    %p70 = por %p68, %p69
    %s72 = sadd.s32 %s71, 1
    %p75 = scmp.eq.s32.totalorder %s21, 1
    %p76 = scmp.ne.s32.totalorder %s71, %s73
    %p77 = scmp.eq.s32.totalorder %s21, 0
    %p78 = por %p76, %p77
    %p79 = scmp.ne.s32.totalorder %s71, %s73
    %p80 = scmp.eq.s32.totalorder %s26, 1
    %p81 = por %p79, %p80
    %p82 = scmp.ne.s32.totalorder %s73, %s74
    %p83 = scmp.eq.s32.totalorder %s26, 0
    %p84 = por %p82, %p83
    %p85 = scmp.ne.s32.totalorder %s73, %s74
    %p86 = scmp.eq.s32.totalorder %s27, 1
    %p87 = por %p85, %p86
    %p89 = scmp.ne.s32.totalorder %s74, %s88
    %p90 = scmp.eq.s32.totalorder %s27, 0
    %p91 = por %p89, %p90
    %s93 = sadd.s32 %s92, 1
    %p96 = scmp.eq.s32.totalorder %s21, 1
    %p97 = scmp.ne.s32.totalorder %s92, %s94
    %p98 = scmp.eq.s32.totalorder %s21, 0
    %p99 = por %p97, %p98
    %p100 = scmp.ne.s32.totalorder %s92, %s94
    %p101 = scmp.eq.s32.totalorder %s26, 1
    %p102 = por %p100, %p101
    %p103 = scmp.ne.s32.totalorder %s94, %s95
    %p104 = scmp.eq.s32.totalorder %s26, 0
    %p105 = por %p103, %p104
    %p106 = scmp.ne.s32.totalorder %s94, %s95
    %p107 = scmp.eq.s32.totalorder %s27, 1
    %p108 = por %p106, %p107
    %p110 = scmp.ne.s32.totalorder %s95, %s109
    %p111 = scmp.eq.s32.totalorder %s27, 0
    %p112 = por %p110, %p111
    %s114 = sadd.s32 %s113, 1
    %p117 = scmp.eq.s32.totalorder %s21, 1
    %p118 = scmp.ne.s32.totalorder %s113, %s115
    %p119 = scmp.eq.s32.totalorder %s21, 0
    %p120 = por %p118, %p119
    %p121 = scmp.ne.s32.totalorder %s113, %s115
    %p122 = scmp.eq.s32.totalorder %s26, 1
    %p123 = por %p121, %p122
    %p124 = scmp.ne.s32.totalorder %s115, %s116
    %p125 = scmp.eq.s32.totalorder %s26, 0
    %p126 = por %p124, %p125
    %p127 = scmp.ne.s32.totalorder %s115, %s116
    %p128 = scmp.eq.s32.totalorder %s27, 1
    %p129 = por %p127, %p128
    %p131 = scmp.ne.s32.totalorder %s116, %s130
    %p132 = scmp.eq.s32.totalorder %s27, 0
    %p133 = por %p131, %p132
    %s135 = sadd.s32 %s134, 1
    %p138 = scmp.eq.s32.totalorder %s21, 1
    %p139 = scmp.ne.s32.totalorder %s134, %s136
    %p140 = scmp.eq.s32.totalorder %s21, 0
    %p141 = por %p139, %p140
    %p142 = scmp.ne.s32.totalorder %s134, %s136
    %p143 = scmp.eq.s32.totalorder %s26, 1
    %p144 = por %p142, %p143
    %p145 = scmp.ne.s32.totalorder %s136, %s137
    %p146 = scmp.eq.s32.totalorder %s26, 0
    %p147 = por %p145, %p146
    %p148 = scmp.ne.s32.totalorder %s136, %s137
    %p149 = scmp.eq.s32.totalorder %s27, 1
    %p150 = por %p148, %p149
    %p152 = scmp.ne.s32.totalorder %s137, %s151
    %p153 = scmp.eq.s32.totalorder %s27, 0
    %p154 = por %p152, %p153
    %s155 = ssub.s32 %s21, %s28
    %p156 = scmp.eq.s32.totalorder %s155, 0
    %s158 = sadd.s32 %s157, 1
    %s159 = scalar_select %p156, %s157, %s158
    %p162 = pneg %p156
    %p163 = scmp.eq.s32.totalorder %s21, 1
    %p164 = por %p162, %p163
    %p165 = scmp.ne.s32.totalorder %s157, %s160
    %p166 = scmp.eq.s32.totalorder %s21, 0
    %p167 = por %p165, %p166
    %p168 = scmp.ne.s32.totalorder %s157, %s160
    %p169 = scmp.eq.s32.totalorder %s26, 1
    %p170 = por %p168, %p169
    %p171 = scmp.ne.s32.totalorder %s160, %s161
    %p172 = scmp.eq.s32.totalorder %s26, 0
    %p173 = por %p171, %p172
    %p174 = scmp.ne.s32.totalorder %s160, %s161
    %p175 = scmp.eq.s32.totalorder %s27, 1
    %p176 = por %p174, %p175
    %p178 = scmp.ne.s32.totalorder %s161, %s177
    %p179 = scmp.eq.s32.totalorder %s27, 0
    %p180 = por %p178, %p179
    %s181 = ssub.s32 %s21, %s28
    %p182 = scmp.eq.s32.totalorder %s181, 0
    %s184 = sadd.s32 %s183, 1
    %s185 = scalar_select %p182, %s183, %s184
    %p188 = pneg %p182
    %p189 = scmp.eq.s32.totalorder %s21, 1
    %p190 = por %p188, %p189
    %p191 = scmp.ne.s32.totalorder %s183, %s186
    %p192 = scmp.eq.s32.totalorder %s21, 0
    %p193 = por %p191, %p192
    %p194 = scmp.ne.s32.totalorder %s183, %s186
    %p195 = scmp.eq.s32.totalorder %s26, 1
    %p196 = por %p194, %p195
    %p197 = scmp.ne.s32.totalorder %s186, %s187
    %p198 = scmp.eq.s32.totalorder %s26, 0
    %p199 = por %p197, %p198
    %p200 = scmp.ne.s32.totalorder %s186, %s187
    %p201 = scmp.eq.s32.totalorder %s27, 1
    %p202 = por %p200, %p201
    %p204 = scmp.ne.s32.totalorder %s187, %s203
    %p205 = scmp.eq.s32.totalorder %s27, 0
    %p206 = por %p204, %p205
    %s207 = ssub.s32 %s21, %s28
    %p208 = scmp.eq.s32.totalorder %s207, 0
    %s210 = sadd.s32 %s209, 1
    %s211 = scalar_select %p208, %s209, %s210
    %p214 = pneg %p208
    %p215 = scmp.eq.s32.totalorder %s21, 1
    %p216 = por %p214, %p215
    %p217 = scmp.ne.s32.totalorder %s209, %s212
    %p218 = scmp.eq.s32.totalorder %s21, 0
    %p219 = por %p217, %p218
    %p220 = scmp.ne.s32.totalorder %s209, %s212
    %p221 = scmp.eq.s32.totalorder %s26, 1
    %p222 = por %p220, %p221
    %p223 = scmp.ne.s32.totalorder %s212, %s213
    %p224 = scmp.eq.s32.totalorder %s26, 0
    %p225 = por %p223, %p224
    %p226 = scmp.ne.s32.totalorder %s212, %s213
    %p227 = scmp.eq.s32.totalorder %s27, 1
    %p228 = por %p226, %p227
    %p230 = scmp.ne.s32.totalorder %s213, %s229
    %p231 = scmp.eq.s32.totalorder %s27, 0
    %p232 = por %p230, %p231
    %s233 = ssub.s32 %s21, %s28
    %p234 = scmp.eq.s32.totalorder %s233, 0
    %s236 = sadd.s32 %s235, 1
    %s237 = scalar_select %p234, %s235, %s236
    %p240 = pneg %p234
    %p241 = scmp.eq.s32.totalorder %s21, 1
    %p242 = por %p240, %p241
    %p243 = scmp.ne.s32.totalorder %s235, %s238
    %p244 = scmp.eq.s32.totalorder %s21, 0
    %p245 = por %p243, %p244
    %p246 = scmp.ne.s32.totalorder %s235, %s238
    %p247 = scmp.eq.s32.totalorder %s26, 1
    %p248 = por %p246, %p247
    %p249 = scmp.ne.s32.totalorder %s238, %s239
    %p250 = scmp.eq.s32.totalorder %s26, 0
    %p251 = por %p249, %p250
    %p252 = scmp.ne.s32.totalorder %s238, %s239
    %p253 = scmp.eq.s32.totalorder %s27, 1
    %p254 = por %p252, %p253
    %p256 = scmp.ne.s32.totalorder %s239, %s255
    %p257 = scmp.eq.s32.totalorder %s27, 0
    %p258 = por %p256, %p257
    %s259 = ssub.s32 %s21, %s28
    %p260 = scmp.eq.s32.totalorder %s259, 0
    %s262 = sadd.s32 %s261, 1
    %s263 = scalar_select %p260, %s261, %s262
    %p266 = pneg %p260
    %p267 = scmp.eq.s32.totalorder %s21, 1
    %p268 = por %p266, %p267
    %p269 = scmp.ne.s32.totalorder %s261, %s264
    %p270 = scmp.eq.s32.totalorder %s21, 0
    %p271 = por %p269, %p270
    %p272 = scmp.ne.s32.totalorder %s261, %s264
    %p273 = scmp.eq.s32.totalorder %s26, 1
    %p274 = por %p272, %p273
    %p275 = scmp.ne.s32.totalorder %s264, %s265
    %p276 = scmp.eq.s32.totalorder %s26, 0
    %p277 = por %p275, %p276
    %p278 = scmp.ne.s32.totalorder %s264, %s265
    %p279 = scmp.eq.s32.totalorder %s27, 1
    %p280 = por %p278, %p279
    %p282 = scmp.ne.s32.totalorder %s265, %s281
    %p283 = scmp.eq.s32.totalorder %s27, 0
    %p284 = por %p282, %p283
    %s285 = ssub.s32 %s21, %s28
    %p286 = scmp.eq.s32.totalorder %s285, 0
    %s288 = sadd.s32 %s287, 1
    %s289 = scalar_select %p286, %s287, %s288
    %p292 = pneg %p286
    %p293 = scmp.eq.s32.totalorder %s21, 1
    %p294 = por %p292, %p293
    %p295 = scmp.ne.s32.totalorder %s287, %s290
    %p296 = scmp.eq.s32.totalorder %s21, 0
    %p297 = por %p295, %p296
    %p298 = scmp.ne.s32.totalorder %s287, %s290
    %p299 = scmp.eq.s32.totalorder %s26, 1
    %p300 = por %p298, %p299
    %p301 = scmp.ne.s32.totalorder %s290, %s291
    %p302 = scmp.eq.s32.totalorder %s26, 0
    %p303 = por %p301, %p302
    %p304 = scmp.ne.s32.totalorder %s290, %s291
    %p305 = scmp.eq.s32.totalorder %s27, 1
    %p306 = por %p304, %p305
    %p308 = scmp.ne.s32.totalorder %s291, %s307
    %p309 = scmp.eq.s32.totalorder %s27, 0
    %p310 = por %p308, %p309
    %s311 = ssub.s32 %s21, %s28
    %p312 = scmp.eq.s32.totalorder %s311, 0
    %s314 = sadd.s32 %s313, 1
    %s315 = scalar_select %p312, %s313, %s314
    %p318 = pneg %p312
    %p319 = scmp.eq.s32.totalorder %s21, 1
    %p320 = por %p318, %p319
    %p321 = scmp.ne.s32.totalorder %s313, %s316
    %p322 = scmp.eq.s32.totalorder %s21, 0
    %p323 = por %p321, %p322
    %p324 = scmp.ne.s32.totalorder %s313, %s316
    %p325 = scmp.eq.s32.totalorder %s26, 1
    %p326 = por %p324, %p325
    %p327 = scmp.ne.s32.totalorder %s316, %s317
    %p328 = scmp.eq.s32.totalorder %s26, 0
    %p329 = por %p327, %p328
    %p330 = scmp.ne.s32.totalorder %s316, %s317
    %p331 = scmp.eq.s32.totalorder %s27, 1
    %p332 = por %p330, %p331
    %p334 = scmp.ne.s32.totalorder %s317, %s333
    %p335 = scmp.eq.s32.totalorder %s27, 0
    %p336 = por %p334, %p335
    %s338 = sadd.s32 %s337, 1
    %p341 = scmp.eq.s32.totalorder %s21, 1
    %p342 = scmp.ne.s32.totalorder %s337, %s339
    %p343 = scmp.eq.s32.totalorder %s21, 0
    %p344 = por %p342, %p343
    %p345 = scmp.ne.s32.totalorder %s337, %s339
    %p346 = scmp.eq.s32.totalorder %s26, 1
    %p347 = por %p345, %p346
    %p348 = scmp.ne.s32.totalorder %s339, %s340
    %p349 = scmp.eq.s32.totalorder %s26, 0
    %p350 = por %p348, %p349
    %p351 = scmp.ne.s32.totalorder %s339, %s340
    %p352 = scmp.eq.s32.totalorder %s27, 1
    %p353 = por %p351, %p352
    %p355 = scmp.ne.s32.totalorder %s340, %s354
    %p356 = scmp.eq.s32.totalorder %s27, 0
    %p357 = por %p355, %p356
    %s359 = sadd.s32 %s358, 1
    %p362 = scmp.eq.s32.totalorder %s21, 1
    %p363 = scmp.ne.s32.totalorder %s358, %s360
    %p364 = scmp.eq.s32.totalorder %s21, 0
    %p365 = por %p363, %p364
    %p366 = scmp.ne.s32.totalorder %s358, %s360
    %p367 = scmp.eq.s32.totalorder %s26, 1
    %p368 = por %p366, %p367
    %p369 = scmp.ne.s32.totalorder %s360, %s361
    %p370 = scmp.eq.s32.totalorder %s26, 0
    %p371 = por %p369, %p370
    %p372 = scmp.ne.s32.totalorder %s360, %s361
    %p373 = scmp.eq.s32.totalorder %s27, 1
    %p374 = por %p372, %p373
    %p376 = scmp.ne.s32.totalorder %s361, %s375
    %p377 = scmp.eq.s32.totalorder %s27, 0
    %p378 = por %p376, %p377
    %p379 = scmp.le.s32.totalorder 1, %s21
    %p380 = scmp.lt.s32.totalorder %s21, 3
    %p381 = pnand %p379, %p380
    %p382 = pneg %p381
    // Predicated region
    $region9: #{boundary_branch.1} parent=5 // pred_check
      _
    $region10: #{boundary_branch.1} parent=5 // pred_check_branch
      %384 = sbr.rel (%p381) target = $region12
    $region11: #{boundary_branch.1} parent=5 // pred_region
      %s385 = ssub.s32 %s21, 1
      // Predicated region
      $region13: #{boundary_branch.1} parent=11 // pred_check
        %p386 = pneg %p42
      $region14: #{boundary_branch.1} parent=11 // pred_check_branch
        %388 = sbr.rel (%p386) target = $region16
      $region15: #{boundary_branch.1} parent=11 // pred_region
        _
      $region16: #{boundary_branch.1} parent=11 // pred_fallthru
        _
      // Predicated region
      $region17: #{boundary_branch.1} parent=11 // pred_check
        %p389 = pneg %p63
      $region18: #{boundary_branch.1} parent=11 // pred_check_branch
        %391 = sbr.rel (%p389) target = $region20
      $region19: #{boundary_branch.1} parent=11 // pred_region
        _
      $region20: #{boundary_branch.1} parent=11 // pred_fallthru
        _
      // Predicated region
      $region21: #{boundary_branch.1} parent=11 // pred_check
        %p392 = pneg %p84
      $region22: #{boundary_branch.1} parent=11 // pred_check_branch
        %394 = sbr.rel (%p392) target = $region24
      $region23: #{boundary_branch.1} parent=11 // pred_region
        _
      $region24: #{boundary_branch.1} parent=11 // pred_fallthru
        _
      // Predicated region
      $region25: #{boundary_branch.1} parent=11 // pred_check
        %p395 = pneg %p105
      $region26: #{boundary_branch.1} parent=11 // pred_check_branch
        %397 = sbr.rel (%p395) target = $region28
      $region27: #{boundary_branch.1} parent=11 // pred_region
        _
      $region28: #{boundary_branch.1} parent=11 // pred_fallthru
        _
      // Predicated region
      $region29: #{boundary_branch.1} parent=11 // pred_check
        %p398 = pneg %p126
      $region30: #{boundary_branch.1} parent=11 // pred_check_branch
        %400 = sbr.rel (%p398) target = $region32
      $region31: #{boundary_branch.1} parent=11 // pred_region
        _
      $region32: #{boundary_branch.1} parent=11 // pred_fallthru
        _
      // Predicated region
      $region33: #{boundary_branch.1} parent=11 // pred_check
        %p401 = pneg %p147
      $region34: #{boundary_branch.1} parent=11 // pred_check_branch
        %403 = sbr.rel (%p401) target = $region36
      $region35: #{boundary_branch.1} parent=11 // pred_region
        _
      $region36: #{boundary_branch.1} parent=11 // pred_fallthru
        _
    $region12: #{boundary_branch.1} parent=5 // pred_fallthru
      _
    %p404 = scmp.lt.s32.totalorder %s21, 2
    // Predicated region
    $region37: #{boundary_branch.1} parent=5 // pred_check
      %p405 = pneg %p404
    $region38: #{boundary_branch.1} parent=5 // pred_check_branch
      %407 = sbr.rel (%p405) target = $region40
    $region39: #{boundary_branch.1} parent=5 // pred_region
      // Predicated region
      $region41: #{boundary_branch.1} parent=39 // pred_check
        %p408 = pneg %p167
      $region42: #{boundary_branch.1} parent=39 // pred_check_branch
        %410 = sbr.rel (%p408) target = $region44
      $region43: #{boundary_branch.1} parent=39 // pred_region
        %p411 = scmp.lt.s32.totalorder %s21, 1
        %s412 = scalar_select %p411, %s21, 1
        %s413 = smul.addr %s412, 16
        %s414 = smul.addr %s413, 8
        %s415 = scalar_lea.vmem %s6, %s414
      $region44: #{boundary_branch.1} parent=39 // pred_fallthru
        _
      // Predicated region
      $region45: #{boundary_branch.1} parent=39 // pred_check
        %p416 = pneg %p193
      $region46: #{boundary_branch.1} parent=39 // pred_check_branch
        %418 = sbr.rel (%p416) target = $region48
      $region47: #{boundary_branch.1} parent=39 // pred_region
        %p419 = scmp.lt.s32.totalorder %s21, 1
        %s420 = scalar_select %p419, %s21, 1
        %s421 = smul.addr %s420, 4
        %s422 = smul.addr %s421, 4
        %s423 = scalar_lea.vmem %s7, %s422
      $region48: #{boundary_branch.1} parent=39 // pred_fallthru
        _
      // Predicated region
      $region49: #{boundary_branch.1} parent=39 // pred_check
        %p424 = pneg %p219
      $region50: #{boundary_branch.1} parent=39 // pred_check_branch
        %426 = sbr.rel (%p424) target = $region52
      $region51: #{boundary_branch.1} parent=39 // pred_region
        %p427 = scmp.lt.s32.totalorder %s21, 1
        %s428 = scalar_select %p427, %s21, 1
        %s429 = smul.addr %s428, 4
        %s430 = smul.addr %s429, 4
        %s431 = scalar_lea.vmem %s8, %s430
      $region52: #{boundary_branch.1} parent=39 // pred_fallthru
        _
      // Predicated region
      $region53: #{boundary_branch.1} parent=39 // pred_check
        %p432 = pneg %p245
      $region54: #{boundary_branch.1} parent=39 // pred_check_branch
        %434 = sbr.rel (%p432) target = $region56
      $region55: #{boundary_branch.1} parent=39 // pred_region
        %p435 = scmp.lt.s32.totalorder %s21, 1
        %s436 = scalar_select %p435, %s21, 1
        %s437 = smul.addr %s436, 4
        %s438 = smul.addr %s437, 8
        %s439 = scalar_lea.vmem %s9, %s438
      $region56: #{boundary_branch.1} parent=39 // pred_fallthru
        _
      // Predicated region
      $region57: #{boundary_branch.1} parent=39 // pred_check
        %p440 = pneg %p271
      $region58: #{boundary_branch.1} parent=39 // pred_check_branch
        %442 = sbr.rel (%p440) target = $region60
      $region59: #{boundary_branch.1} parent=39 // pred_region
        %p443 = scmp.lt.s32.totalorder %s21, 1
        %s444 = scalar_select %p443, %s21, 1
        %s445 = smul.addr %s444, 4
        %s446 = smul.addr %s445, 8
        %s447 = scalar_lea.vmem %s10, %s446
      $region60: #{boundary_branch.1} parent=39 // pred_fallthru
        _
      // Predicated region
      $region61: #{boundary_branch.1} parent=39 // pred_check
        %p448 = pneg %p297
      $region62: #{boundary_branch.1} parent=39 // pred_check_branch
        %450 = sbr.rel (%p448) target = $region64
      $region63: #{boundary_branch.1} parent=39 // pred_region
        %p451 = scmp.lt.s32.totalorder %s21, 1
        %s452 = scalar_select %p451, %s21, 1
        %s453 = smul.addr %s452, 4
        %s454 = smul.addr %s453, 8
        %s455 = scalar_lea.vmem %s11, %s454
      $region64: #{boundary_branch.1} parent=39 // pred_fallthru
        _
      // Predicated region
      $region65: #{boundary_branch.1} parent=39 // pred_check
        %p456 = pneg %p323
      $region66: #{boundary_branch.1} parent=39 // pred_check_branch
        %458 = sbr.rel (%p456) target = $region68
      $region67: #{boundary_branch.1} parent=39 // pred_region
        %p459 = scmp.lt.s32.totalorder %s21, 1
        %s460 = scalar_select %p459, %s21, 1
        %s461 = smul.addr %s460, 16
        %s462 = smul.addr %s461, 8
        %s463 = scalar_lea.vmem %s12, %s462
      $region68: #{boundary_branch.1} parent=39 // pred_fallthru
        _
    $region40: #{boundary_branch.1} parent=5 // pred_fallthru
      _
    %p464 = scmp.le.s32.totalorder 1, %s21
    %p465 = scmp.lt.s32.totalorder %s21, 3
    %p466 = pnand %p464, %p465
    %p467 = pneg %p466
    // Predicated region
    $region69: #{boundary_branch.1} parent=5 // pred_check
      _
    $region70: #{boundary_branch.1} parent=5 // pred_check_branch
      %469 = sbr.rel (%p466) target = $region72
    $region71: #{boundary_branch.1} parent=5 // pred_region
      %s470 = ssub.s32 %s21, 1
      %p471 = pneg %p42
      %p472 = pneg %p39
      %p473 = pneg %p63
      %p474 = pneg %p60
      %p475 = pneg %p84
      %p476 = pneg %p81
      %p477 = pneg %p105
      %p478 = pneg %p102
      %p479 = pneg %p126
      %p480 = pneg %p123
      %p481 = pneg %p147
      %p482 = pneg %p144
      %p483 = scmp.lt.s32.totalorder %s26, 1
      %s484 = scalar_select %p483, %s26, 1
      %s485 = smul.addr %s484, 16
      %s486 = smul.addr %s485, 8
      %s487 = scalar_lea.vmem %s6, %s486
      %p488 = pneg %p173
      %p489 = pneg %p170
      %p490 = scmp.lt.s32.totalorder %s26, 1
      %s491 = scalar_select %p490, %s26, 1
      %s492 = smul.addr %s491, 4
      %s493 = smul.addr %s492, 4
      %s494 = scalar_lea.vmem %s7, %s493
      %p495 = pneg %p199
      %p496 = pneg %p196
      %p497 = scmp.lt.s32.totalorder %s26, 1
      %s498 = scalar_select %p497, %s26, 1
      %s499 = smul.addr %s498, 4
      %s500 = smul.addr %s499, 4
      %s501 = scalar_lea.vmem %s8, %s500
      %p502 = pneg %p225
      %p503 = pneg %p222
      %p504 = scmp.lt.s32.totalorder %s26, 1
      %s505 = scalar_select %p504, %s26, 1
      %s506 = smul.addr %s505, 4
      %s507 = smul.addr %s506, 8
      %s508 = scalar_lea.vmem %s9, %s507
      %p509 = pneg %p251
      %p510 = pneg %p248
      %p511 = scmp.lt.s32.totalorder %s26, 1
      %s512 = scalar_select %p511, %s26, 1
      %s513 = smul.addr %s512, 4
      %s514 = smul.addr %s513, 8
      %s515 = scalar_lea.vmem %s10, %s514
      %p516 = pneg %p277
      %p517 = pneg %p274
      %p518 = scmp.lt.s32.totalorder %s26, 1
      %s519 = scalar_select %p518, %s26, 1
      %s520 = smul.addr %s519, 4
      %s521 = smul.addr %s520, 8
      %s522 = scalar_lea.vmem %s11, %s521
      %p523 = pneg %p303
      %p524 = pneg %p300
      %p525 = scmp.lt.s32.totalorder %s26, 1
      %s526 = scalar_select %p525, %s26, 1
      %s527 = smul.addr %s526, 16
      %s528 = smul.addr %s527, 8
      %s529 = scalar_lea.vmem %s12, %s528
      %p530 = pneg %p329
      %p531 = pneg %p326
      %p532 = pneg %p350
      %p533 = pneg %p347
      %p534 = pneg %p371
      %p535 = pneg %p368
      %p536 = scmp.lt.s32.totalorder %s26, 1
      %s537 = scalar_select %p536, %s26, 1
      %s538 = smul.addr %s537, 16
      %s539 = smul.addr %s538, 8
      %s540 = scalar_lea.vmem %s6, %s539
      %p541 = scmp.lt.s32.totalorder %s26, 1
      %s542 = scalar_select %p541, %s26, 1
      %s543 = smul.addr %s542, 4
      %s544 = smul.addr %s543, 4
      %s545 = scalar_lea.vmem %s7, %s544
      %p546 = scmp.lt.s32.totalorder %s26, 1
      %s547 = scalar_select %p546, %s26, 1
      %s548 = smul.addr %s547, 4
      %s549 = smul.addr %s548, 4
      %s550 = scalar_lea.vmem %s8, %s549
      %p551 = scmp.lt.s32.totalorder %s26, 1
      %s552 = scalar_select %p551, %s26, 1
      %s553 = smul.addr %s552, 4
      %s554 = smul.addr %s553, 8
      %s555 = scalar_lea.vmem %s9, %s554
      %p556 = scmp.lt.s32.totalorder %s26, 1
      %s557 = scalar_select %p556, %s26, 1
      %s558 = smul.addr %s557, 4
      %s559 = smul.addr %s558, 8
      %s560 = scalar_lea.vmem %s10, %s559
      %p561 = scmp.lt.s32.totalorder %s26, 1
      %s562 = scalar_select %p561, %s26, 1
      %s563 = smul.addr %s562, 4
      %s564 = smul.addr %s563, 8
      %s565 = scalar_lea.vmem %s11, %s564
      %p566 = scmp.lt.s32.totalorder %s26, 1
      %s567 = scalar_select %p566, %s26, 1
      %s568 = smul.addr %s567, 16
      %s569 = smul.addr %s568, 8
      %s570 = scalar_lea.vmem %s12, %s569
      %p571 = scmp.eq.s32.totalorder %s26, 0
      // Predicated region
      $region73: #{boundary_branch.1} parent=71 // pred_check
        %p572 = pneg %p571
      $region74: #{boundary_branch.1} parent=71 // pred_check_branch
        %574 = sbr.rel (%p572) target = $region76
      $region75: #{boundary_branch.1} parent=71 // pred_region
        %v575 = vld [vmem:[%s0] sm:$0xff]
        %v576 = vld [vmem:[%s0 + $0x8] sm:$0xff]
        %v577 = vld [vmem:[%s0 + $0x10] sm:$0xff]
        %v578 = vld [vmem:[%s0 + $0x18] sm:$0xff]
        %v579 = vld [vmem:[%s0 + $0x20] sm:$0xff]
        %v580 = vld [vmem:[%s0 + $0x28] sm:$0xff]
        %v581 = vld [vmem:[%s0 + $0x30] sm:$0xff]
        %v582 = vld [vmem:[%s0 + $0x38] sm:$0xff]
        %v583 = vld [vmem:[%s0 + $0x40] sm:$0xff]
        %v584 = vld [vmem:[%s0 + $0x48] sm:$0xff]
        %v585 = vld [vmem:[%s0 + $0x50] sm:$0xff]
        %v586 = vld [vmem:[%s0 + $0x58] sm:$0xff]
        %v587 = vld [vmem:[%s0 + $0x60] sm:$0xff]
        %v588 = vld [vmem:[%s0 + $0x68] sm:$0xff]
        %v589 = vld [vmem:[%s0 + $0x70] sm:$0xff]
        %v590 = vld [vmem:[%s0 + $0x78] sm:$0xff]
        %591 = vst [vmem:[#allocation2] sm:$0xff] %v575
        %592 = vst [vmem:[#allocation2 + $0x8] sm:$0xff] %v576
        %593 = vst [vmem:[#allocation2 + $0x10] sm:$0xff] %v577
        %594 = vst [vmem:[#allocation2 + $0x18] sm:$0xff] %v578
        %595 = vst [vmem:[#allocation2 + $0x20] sm:$0xff] %v579
        %596 = vst [vmem:[#allocation2 + $0x28] sm:$0xff] %v580
        %597 = vst [vmem:[#allocation2 + $0x30] sm:$0xff] %v581
        %598 = vst [vmem:[#allocation2 + $0x38] sm:$0xff] %v582
        %599 = vst [vmem:[#allocation2 + $0x40] sm:$0xff] %v583
        %600 = vst [vmem:[#allocation2 + $0x48] sm:$0xff] %v584
        %601 = vst [vmem:[#allocation2 + $0x50] sm:$0xff] %v585
        %602 = vst [vmem:[#allocation2 + $0x58] sm:$0xff] %v586
        %603 = vst [vmem:[#allocation2 + $0x60] sm:$0xff] %v587
        %604 = vst [vmem:[#allocation2 + $0x68] sm:$0xff] %v588
        %605 = vst [vmem:[#allocation2 + $0x70] sm:$0xff] %v589
        %606 = vst [vmem:[#allocation2 + $0x78] sm:$0xff] %v590
      $region76: #{boundary_branch.1} parent=71 // pred_fallthru
        _
      %v607 = vld [vmem:[%s1] sm:$0xff]
      %v608 = vld [vmem:[%s1 + $0x8] sm:$0xff]
      %v609 = vld [vmem:[%s1 + $0x10] sm:$0xff]
      %v610 = vld [vmem:[%s1 + $0x18] sm:$0xff]
      %v611 = vadd.s32 %v607, 4294967293
      %v612 = vadd.s32 %v608, 4294967293
      %v613 = vadd.s32 %v609, 4294967293
      %v614 = vadd.s32 %v610, 4294967293
      %vm615 = vcmp.ge.s32.totalorder %v611, 0
      %vm616 = vcmp.ge.s32.totalorder %v612, 0
      %vm617 = vcmp.ge.s32.totalorder %v613, 0
      %vm618 = vcmp.ge.s32.totalorder %v614, 0
      %vm619 = vcmp.lt.s32.totalorder %v611, 16
      %vm620 = vcmp.lt.s32.totalorder %v612, 16
      %vm621 = vcmp.lt.s32.totalorder %v613, 16
      %vm622 = vcmp.lt.s32.totalorder %v614, 16
      %vm623 = vmand %vm615, %vm619
      %vm624 = vmand %vm616, %vm620
      %vm625 = vmand %vm617, %vm621
      %vm626 = vmand %vm618, %vm622
      %v627 = vsel %vm623, 1, 0
      %v628 = vsel %vm624, 1, 0
      %v629 = vsel %vm625, 1, 0
      %v630 = vsel %vm626, 1, 0
      %v631 = vcvt.s32.f32 %v627
      %v632 = vcvt.s32.f32 %v628
      %v633 = vcvt.s32.f32 %v629
      %v634 = vcvt.s32.f32 %v630
      %v635 = vadd.s32 %v607, 4294967294
      %v636 = vadd.s32 %v608, 4294967294
      %v637 = vadd.s32 %v609, 4294967294
      %v638 = vadd.s32 %v610, 4294967294
      %vm639 = vcmp.ge.s32.totalorder %v635, 0
      %vm640 = vcmp.ge.s32.totalorder %v636, 0
      %vm641 = vcmp.ge.s32.totalorder %v637, 0
      %vm642 = vcmp.ge.s32.totalorder %v638, 0
      %vm643 = vcmp.lt.s32.totalorder %v635, 16
      %vm644 = vcmp.lt.s32.totalorder %v636, 16
      %vm645 = vcmp.lt.s32.totalorder %v637, 16
      %vm646 = vcmp.lt.s32.totalorder %v638, 16
      %vm647 = vmand %vm639, %vm643
      %vm648 = vmand %vm640, %vm644
      %vm649 = vmand %vm641, %vm645
      %vm650 = vmand %vm642, %vm646
      %v651 = vsel %vm647, 1, 0
      %v652 = vsel %vm648, 1, 0
      %v653 = vsel %vm649, 1, 0
      %v654 = vsel %vm650, 1, 0
      %v655 = vcvt.s32.f32 %v651
      %v656 = vcvt.s32.f32 %v652
      %v657 = vcvt.s32.f32 %v653
      %v658 = vcvt.s32.f32 %v654
      %v659 = vadd.s32 %v607, 4294967295
      %v660 = vadd.s32 %v608, 4294967295
      %v661 = vadd.s32 %v609, 4294967295
      %v662 = vadd.s32 %v610, 4294967295
      %vm663 = vcmp.ge.s32.totalorder %v659, 0
      %vm664 = vcmp.ge.s32.totalorder %v660, 0
      %vm665 = vcmp.ge.s32.totalorder %v661, 0
      %vm666 = vcmp.ge.s32.totalorder %v662, 0
      %vm667 = vcmp.lt.s32.totalorder %v659, 16
      %vm668 = vcmp.lt.s32.totalorder %v660, 16
      %vm669 = vcmp.lt.s32.totalorder %v661, 16
      %vm670 = vcmp.lt.s32.totalorder %v662, 16
      %vm671 = vmand %vm663, %vm667
      %vm672 = vmand %vm664, %vm668
      %vm673 = vmand %vm665, %vm669
      %vm674 = vmand %vm666, %vm670
      %v675 = vsel %vm671, 1, 0
      %v676 = vsel %vm672, 1, 0
      %v677 = vsel %vm673, 1, 0
      %v678 = vsel %vm674, 1, 0
      %v679 = vcvt.s32.f32 %v675
      %v680 = vcvt.s32.f32 %v676
      %v681 = vcvt.s32.f32 %v677
      %v682 = vcvt.s32.f32 %v678
      %v683 = vadd.s32 %v607, 1
      %v684 = vadd.s32 %v608, 1
      %v685 = vadd.s32 %v609, 1
      %v686 = vadd.s32 %v610, 1
      %vm687 = vcmp.ge.s32.totalorder %v683, 0
      %vm688 = vcmp.ge.s32.totalorder %v684, 0
      %vm689 = vcmp.ge.s32.totalorder %v685, 0
      %vm690 = vcmp.ge.s32.totalorder %v686, 0
      %vm691 = vcmp.lt.s32.totalorder %v683, 16
      %vm692 = vcmp.lt.s32.totalorder %v684, 16
      %vm693 = vcmp.lt.s32.totalorder %v685, 16
      %vm694 = vcmp.lt.s32.totalorder %v686, 16
      %vm695 = vmand %vm687, %vm691
      %vm696 = vmand %vm688, %vm692
      %vm697 = vmand %vm689, %vm693
      %vm698 = vmand %vm690, %vm694
      %v699 = vsel %vm695, 1, 0
      %v700 = vsel %vm696, 1, 0
      %v701 = vsel %vm697, 1, 0
      %v702 = vsel %vm698, 1, 0
      %v703 = vcvt.s32.f32 %v699
      %v704 = vcvt.s32.f32 %v700
      %v705 = vcvt.s32.f32 %v701
      %v706 = vcvt.s32.f32 %v702
      %v707 = vadd.s32 %v607, 2
      %v708 = vadd.s32 %v608, 2
      %v709 = vadd.s32 %v609, 2
      %v710 = vadd.s32 %v610, 2
      %vm711 = vcmp.ge.s32.totalorder %v707, 0
      %vm712 = vcmp.ge.s32.totalorder %v708, 0
      %vm713 = vcmp.ge.s32.totalorder %v709, 0
      %vm714 = vcmp.ge.s32.totalorder %v710, 0
      %vm715 = vcmp.lt.s32.totalorder %v707, 16
      %vm716 = vcmp.lt.s32.totalorder %v708, 16
      %vm717 = vcmp.lt.s32.totalorder %v709, 16
      %vm718 = vcmp.lt.s32.totalorder %v710, 16
      %vm719 = vmand %vm711, %vm715
      %vm720 = vmand %vm712, %vm716
      %vm721 = vmand %vm713, %vm717
      %vm722 = vmand %vm714, %vm718
      %v723 = vsel %vm719, 1, 0
      %v724 = vsel %vm720, 1, 0
      %v725 = vsel %vm721, 1, 0
      %v726 = vsel %vm722, 1, 0
      %v727 = vcvt.s32.f32 %v723
      %v728 = vcvt.s32.f32 %v724
      %v729 = vcvt.s32.f32 %v725
      %v730 = vcvt.s32.f32 %v726
      %v731 = vadd.s32 %v607, 3
      %v732 = vadd.s32 %v608, 3
      %v733 = vadd.s32 %v609, 3
      %v734 = vadd.s32 %v610, 3
      %vm735 = vcmp.ge.s32.totalorder %v731, 0
      %vm736 = vcmp.ge.s32.totalorder %v732, 0
      %vm737 = vcmp.ge.s32.totalorder %v733, 0
      %vm738 = vcmp.ge.s32.totalorder %v734, 0
      %vm739 = vcmp.lt.s32.totalorder %v731, 16
      %vm740 = vcmp.lt.s32.totalorder %v732, 16
      %vm741 = vcmp.lt.s32.totalorder %v733, 16
      %vm742 = vcmp.lt.s32.totalorder %v734, 16
      %vm743 = vmand %vm735, %vm739
      %vm744 = vmand %vm736, %vm740
      %vm745 = vmand %vm737, %vm741
      %vm746 = vmand %vm738, %vm742
      %v747 = vsel %vm743, 1, 0
      %v748 = vsel %vm744, 1, 0
      %v749 = vsel %vm745, 1, 0
      %v750 = vsel %vm746, 1, 0
      %v751 = vcvt.s32.f32 %v747
      %v752 = vcvt.s32.f32 %v748
      %v753 = vcvt.s32.f32 %v749
      %v754 = vcvt.s32.f32 %v750
      %v755 = vld [vmem:[%s565] ss:$8 sm:$0xf]
      %s756 = scalar_lea.vmem %s565, 1
      %v757 = vld [vmem:[%s756] ss:$8 sm:$0xf]
      %s758 = scalar_lea.vmem %s565, 2
      %v759 = vld [vmem:[%s758] ss:$8 sm:$0xf]
      %s760 = scalar_lea.vmem %s565, 3
      %v761 = vld [vmem:[%s760] ss:$8 sm:$0xf]
      %s762 = scalar_lea.vmem %s565, 4
      %v763 = vld [vmem:[%s762] ss:$8 sm:$0xf]
      %s764 = scalar_lea.vmem %s565, 5
      %v765 = vld [vmem:[%s764] ss:$8 sm:$0xf]
      %s766 = scalar_lea.vmem %s565, 6
      %v767 = vld [vmem:[%s766] ss:$8 sm:$0xf]
      %s768 = scalar_lea.vmem %s565, 7
      %v769 = vld [vmem:[%s768] ss:$8 sm:$0xf]
      %v770 = vld [vmem:[#allocation2] sm:$0xff]
      %v771 = vld [vmem:[#allocation2 + $0x8] sm:$0xff]
      %v772 = vld [vmem:[#allocation2 + $0x10] sm:$0xff]
      %v773 = vld [vmem:[#allocation2 + $0x18] sm:$0xff]
      %v774 = vld [vmem:[#allocation2 + $0x20] sm:$0xff]
      %v775 = vld [vmem:[#allocation2 + $0x28] sm:$0xff]
      %v776 = vld [vmem:[#allocation2 + $0x30] sm:$0xff]
      %v777 = vld [vmem:[#allocation2 + $0x38] sm:$0xff]
      %v778 = vld [vmem:[#allocation2 + $0x40] sm:$0xff]
      %v779 = vld [vmem:[#allocation2 + $0x48] sm:$0xff]
      %v780 = vld [vmem:[#allocation2 + $0x50] sm:$0xff]
      %v781 = vld [vmem:[#allocation2 + $0x58] sm:$0xff]
      %v782 = vld [vmem:[#allocation2 + $0x60] sm:$0xff]
      %v783 = vld [vmem:[#allocation2 + $0x68] sm:$0xff]
      %v784 = vld [vmem:[#allocation2 + $0x70] sm:$0xff]
      %v785 = vld [vmem:[#allocation2 + $0x78] sm:$0xff]
      %v786 = vrot.slane %v770, 6
      %v787 = vrot.slane %v771, 6
      %v788 = vrot.slane %v772, 6
      %v789 = vrot.slane %v773, 6
      %v790 = vrot.slane %v774, 6
      %v791 = vrot.slane %v775, 6
      %v792 = vrot.slane %v776, 6
      %v793 = vrot.slane %v777, 6
      %v794 = vrot.slane %v778, 6
      %v795 = vrot.slane %v779, 6
      %v796 = vrot.slane %v780, 6
      %v797 = vrot.slane %v781, 6
      %v798 = vrot.slane %v782, 6
      %v799 = vrot.slane %v783, 6
      %v800 = vrot.slane %v784, 6
      %v801 = vrot.slane %v785, 6
      %v802 = vlaneseq
      %v803 = vshrl.u32 %v802, 7
      %vm804 = vcmp.lt.s32.totalorder %v803, 2
      %v805 = vsel %vm804, %v794, %v798
      %v806 = vsel %vm804, %v795, %v799
      %v807 = vsel %vm804, %v796, %v800
      %v808 = vsel %vm804, %v797, %v801
      %v809 = vsel %vm804, %v790, %v794
      %v810 = vsel %vm804, %v791, %v795
      %v811 = vsel %vm804, %v792, %v796
      %v812 = vsel %vm804, %v793, %v797
      %v813 = vsel %vm804, %v786, %v790
      %v814 = vsel %vm804, %v787, %v791
      %v815 = vsel %vm804, %v788, %v792
      %v816 = vsel %vm804, %v789, %v793
      %v817 = vsel %vm804, %v798, %v786
      %v818 = vsel %vm804, %v799, %v787
      %v819 = vsel %vm804, %v800, %v788
      %v820 = vsel %vm804, %v801, %v789
      %822 = vset.pattern.permute.xlu0 0
      %823 = vperm.xlu0 %822, %v655
      %v824 = vpop.permute.xlu0 %823
      %827 = vset.pattern.permute.xlu0 0
      %828 = vperm.xlu0 %827, %v656
      %v829 = vpop.permute.xlu0 %828
      %832 = vset.pattern.permute.xlu0 0
      %833 = vperm.xlu0 %832, %v657
      %v834 = vpop.permute.xlu0 %833
      %837 = vset.pattern.permute.xlu0 0
      %838 = vperm.xlu0 %837, %v658
      %v839 = vpop.permute.xlu0 %838
      %v841 = vmul.f32 %v817, %v824
      %v842 = vmul.f32 %v818, %v824
      %v843 = vmul.f32 %v819, %v824
      %v844 = vmul.f32 %v820, %v824
      %v845 = vmul.f32 %v813, %v829
      %v846 = vmul.f32 %v814, %v829
      %v847 = vmul.f32 %v815, %v829
      %v848 = vmul.f32 %v816, %v829
      %v849 = vmul.f32 %v809, %v834
      %v850 = vmul.f32 %v810, %v834
      %v851 = vmul.f32 %v811, %v834
      %v852 = vmul.f32 %v812, %v834
      %v853 = vmul.f32 %v805, %v839
      %v854 = vmul.f32 %v806, %v839
      %v855 = vmul.f32 %v807, %v839
      %v856 = vmul.f32 %v808, %v839
      %857 = vrot.lane.b32.xlu0 %v841, 64
      %v858 = vpop.permute.xlu0 %857
      %859 = vrot.lane.b32.xlu0 %v845, 64
      %v860 = vpop.permute.xlu0 %859
      %861 = vrot.lane.b32.xlu0 %v849, 64
      %v862 = vpop.permute.xlu0 %861
      %863 = vrot.lane.b32.xlu0 %v853, 64
      %v864 = vpop.permute.xlu0 %863
      %865 = vrot.lane.b32.xlu0 %v842, 64
      %v866 = vpop.permute.xlu0 %865
      %867 = vrot.lane.b32.xlu0 %v846, 64
      %v868 = vpop.permute.xlu0 %867
      %869 = vrot.lane.b32.xlu0 %v850, 64
      %v870 = vpop.permute.xlu0 %869
      %871 = vrot.lane.b32.xlu0 %v854, 64
      %v872 = vpop.permute.xlu0 %871
      %873 = vrot.lane.b32.xlu0 %v843, 64
      %v874 = vpop.permute.xlu0 %873
      %875 = vrot.lane.b32.xlu0 %v847, 64
      %v876 = vpop.permute.xlu0 %875
      %877 = vrot.lane.b32.xlu0 %v851, 64
      %v878 = vpop.permute.xlu0 %877
      %879 = vrot.lane.b32.xlu0 %v855, 64
      %v880 = vpop.permute.xlu0 %879
      %881 = vrot.lane.b32.xlu0 %v844, 64
      %v882 = vpop.permute.xlu0 %881
      %883 = vrot.lane.b32.xlu0 %v848, 64
      %v884 = vpop.permute.xlu0 %883
      %885 = vrot.lane.b32.xlu0 %v852, 64
      %v886 = vpop.permute.xlu0 %885
      %887 = vrot.lane.b32.xlu0 %v856, 64
      %v888 = vpop.permute.xlu0 %887
      %v889 = vlaneseq
      %v890 = vand.u32 %v889, 127
      %vm891 = vcmp.lt.s32.totalorder %v890, 64
      %v892 = vsel %vm891, %v874, %v882
      %v893 = vsel %vm891, %v876, %v884
      %v894 = vsel %vm891, %v878, %v886
      %v895 = vsel %vm891, %v880, %v888
      %v896 = vsel %vm891, %v866, %v874
      %v897 = vsel %vm891, %v868, %v876
      %v898 = vsel %vm891, %v870, %v878
      %v899 = vsel %vm891, %v872, %v880
      %v900 = vsel %vm891, %v858, %v866
      %v901 = vsel %vm891, %v860, %v868
      %v902 = vsel %vm891, %v862, %v870
      %v903 = vsel %vm891, %v864, %v872
      %v904 = vsel %vm891, %v882, %v858
      %v905 = vsel %vm891, %v884, %v860
      %v906 = vsel %vm891, %v886, %v862
      %v907 = vsel %vm891, %v888, %v864
      %v908 = vld [vmem:[%s540] ss:$8 sm:$0xf]
      %v910 = vlaneseq
      %v911 = vshrl.u32 %v910, 7
      %v912 = vsub.s32 0, %v911
      %v913 = vrot.slane %v908, %v912
      %v914 = vlaneseq
      %v915 = vshrl.u32 %v914, 7
      %v916 = vsub.s32 1, %v915
      %v917 = vrot.slane %v908, %v916
      %v918 = vlaneseq
      %v919 = vshrl.u32 %v918, 7
      %v920 = vsub.s32 2, %v919
      %v921 = vrot.slane %v908, %v920
      %v922 = vlaneseq
      %v923 = vshrl.u32 %v922, 7
      %v924 = vsub.s32 3, %v923
      %v925 = vrot.slane %v908, %v924
      %v930 = vmul.f32 %v904, %v913
      %v931 = vmul.f32 %v900, %v917
      %v932 = vmul.f32 %v896, %v921
      %v933 = vmul.f32 %v892, %v925
      %v934 = vmul.f32 %v905, %v913
      %v935 = vmul.f32 %v901, %v917
      %v936 = vmul.f32 %v897, %v921
      %v937 = vmul.f32 %v893, %v925
      %v938 = vmul.f32 %v906, %v913
      %v939 = vmul.f32 %v902, %v917
      %v940 = vmul.f32 %v898, %v921
      %v941 = vmul.f32 %v894, %v925
      %v942 = vmul.f32 %v907, %v913
      %v943 = vmul.f32 %v903, %v917
      %v944 = vmul.f32 %v899, %v921
      %v945 = vmul.f32 %v895, %v925
      %946 = vrot.lane.b32.xlu0 %v841, 32
      %v947 = vpop.permute.xlu0 %946
      %948 = vrot.lane.b32.xlu0 %v845, 32
      %v949 = vpop.permute.xlu0 %948
      %950 = vrot.lane.b32.xlu0 %v849, 32
      %v951 = vpop.permute.xlu0 %950
      %952 = vrot.lane.b32.xlu0 %v853, 32
      %v953 = vpop.permute.xlu0 %952
      %954 = vrot.lane.b32.xlu0 %v842, 32
      %v955 = vpop.permute.xlu0 %954
      %956 = vrot.lane.b32.xlu0 %v846, 32
      %v957 = vpop.permute.xlu0 %956
      %958 = vrot.lane.b32.xlu0 %v850, 32
      %v959 = vpop.permute.xlu0 %958
      %960 = vrot.lane.b32.xlu0 %v854, 32
      %v961 = vpop.permute.xlu0 %960
      %962 = vrot.lane.b32.xlu0 %v843, 32
      %v963 = vpop.permute.xlu0 %962
      %964 = vrot.lane.b32.xlu0 %v847, 32
      %v965 = vpop.permute.xlu0 %964
      %966 = vrot.lane.b32.xlu0 %v851, 32
      %v967 = vpop.permute.xlu0 %966
      %968 = vrot.lane.b32.xlu0 %v855, 32
      %v969 = vpop.permute.xlu0 %968
      %970 = vrot.lane.b32.xlu0 %v844, 32
      %v971 = vpop.permute.xlu0 %970
      %972 = vrot.lane.b32.xlu0 %v848, 32
      %v973 = vpop.permute.xlu0 %972
      %974 = vrot.lane.b32.xlu0 %v852, 32
      %v975 = vpop.permute.xlu0 %974
      %976 = vrot.lane.b32.xlu0 %v856, 32
      %v977 = vpop.permute.xlu0 %976
      %vm978 = vcmp.lt.s32.totalorder %v890, 32
      %v979 = vsel %vm978, %v963, %v971
      %v980 = vsel %vm978, %v965, %v973
      %v981 = vsel %vm978, %v967, %v975
      %v982 = vsel %vm978, %v969, %v977
      %v983 = vsel %vm978, %v955, %v963
      %v984 = vsel %vm978, %v957, %v965
      %v985 = vsel %vm978, %v959, %v967
      %v986 = vsel %vm978, %v961, %v969
      %v987 = vsel %vm978, %v947, %v955
      %v988 = vsel %vm978, %v949, %v957
      %v989 = vsel %vm978, %v951, %v959
      %v990 = vsel %vm978, %v953, %v961
      %v991 = vsel %vm978, %v971, %v947
      %v992 = vsel %vm978, %v973, %v949
      %v993 = vsel %vm978, %v975, %v951
      %v994 = vsel %vm978, %v977, %v953
      %s995 = scalar_lea.vmem %s540, 1
      %v996 = vld [vmem:[%s995] ss:$8 sm:$0xf]
      %v998 = vlaneseq
      %v999 = vshrl.u32 %v998, 7
      %v1000 = vsub.s32 0, %v999
      %v1001 = vrot.slane %v996, %v1000
      %v1002 = vlaneseq
      %v1003 = vshrl.u32 %v1002, 7
      %v1004 = vsub.s32 1, %v1003
      %v1005 = vrot.slane %v996, %v1004
      %v1006 = vlaneseq
      %v1007 = vshrl.u32 %v1006, 7
      %v1008 = vsub.s32 2, %v1007
      %v1009 = vrot.slane %v996, %v1008
      %v1010 = vlaneseq
      %v1011 = vshrl.u32 %v1010, 7
      %v1012 = vsub.s32 3, %v1011
      %v1013 = vrot.slane %v996, %v1012
      %v1018 = vmul.f32 %v991, %v1001
      %v1019 = vmul.f32 %v987, %v1005
      %v1020 = vmul.f32 %v983, %v1009
      %v1021 = vmul.f32 %v979, %v1013
      %v1022 = vmul.f32 %v992, %v1001
      %v1023 = vmul.f32 %v988, %v1005
      %v1024 = vmul.f32 %v984, %v1009
      %v1025 = vmul.f32 %v980, %v1013
      %v1026 = vmul.f32 %v993, %v1001
      %v1027 = vmul.f32 %v989, %v1005
      %v1028 = vmul.f32 %v985, %v1009
      %v1029 = vmul.f32 %v981, %v1013
      %v1030 = vmul.f32 %v994, %v1001
      %v1031 = vmul.f32 %v990, %v1005
      %v1032 = vmul.f32 %v986, %v1009
      %v1033 = vmul.f32 %v982, %v1013
      %v1034 = vadd.f32 %v930, %v1018
      %v1035 = vadd.f32 %v931, %v1019
      %v1036 = vadd.f32 %v932, %v1020
      %v1037 = vadd.f32 %v933, %v1021
      %v1038 = vadd.f32 %v934, %v1022
      %v1039 = vadd.f32 %v935, %v1023
      %v1040 = vadd.f32 %v936, %v1024
      %v1041 = vadd.f32 %v937, %v1025
      %v1042 = vadd.f32 %v938, %v1026
      %v1043 = vadd.f32 %v939, %v1027
      %v1044 = vadd.f32 %v940, %v1028
      %v1045 = vadd.f32 %v941, %v1029
      %v1046 = vadd.f32 %v942, %v1030
      %v1047 = vadd.f32 %v943, %v1031
      %v1048 = vadd.f32 %v944, %v1032
      %v1049 = vadd.f32 %v945, %v1033
      %s1050 = scalar_lea.vmem %s540, 2
      %v1051 = vld [vmem:[%s1050] ss:$8 sm:$0xf]
      %v1053 = vlaneseq
      %v1054 = vshrl.u32 %v1053, 7
      %v1055 = vsub.s32 0, %v1054
      %v1056 = vrot.slane %v1051, %v1055
      %v1057 = vlaneseq
      %v1058 = vshrl.u32 %v1057, 7
      %v1059 = vsub.s32 1, %v1058
      %v1060 = vrot.slane %v1051, %v1059
      %v1061 = vlaneseq
      %v1062 = vshrl.u32 %v1061, 7
      %v1063 = vsub.s32 2, %v1062
      %v1064 = vrot.slane %v1051, %v1063
      %v1065 = vlaneseq
      %v1066 = vshrl.u32 %v1065, 7
      %v1067 = vsub.s32 3, %v1066
      %v1068 = vrot.slane %v1051, %v1067
      %v1073 = vmul.f32 %v841, %v1056
      %v1074 = vmul.f32 %v842, %v1060
      %v1075 = vmul.f32 %v843, %v1064
      %v1076 = vmul.f32 %v844, %v1068
      %v1077 = vmul.f32 %v845, %v1056
      %v1078 = vmul.f32 %v846, %v1060
      %v1079 = vmul.f32 %v847, %v1064
      %v1080 = vmul.f32 %v848, %v1068
      %v1081 = vmul.f32 %v849, %v1056
      %v1082 = vmul.f32 %v850, %v1060
      %v1083 = vmul.f32 %v851, %v1064
      %v1084 = vmul.f32 %v852, %v1068
      %v1085 = vmul.f32 %v853, %v1056
      %v1086 = vmul.f32 %v854, %v1060
      %v1087 = vmul.f32 %v855, %v1064
      %v1088 = vmul.f32 %v856, %v1068
      %v1089 = vadd.f32 %v1034, %v1073
      %v1090 = vadd.f32 %v1035, %v1074
      %v1091 = vadd.f32 %v1036, %v1075
      %v1092 = vadd.f32 %v1037, %v1076
      %v1093 = vadd.f32 %v1038, %v1077
      %v1094 = vadd.f32 %v1039, %v1078
      %v1095 = vadd.f32 %v1040, %v1079
      %v1096 = vadd.f32 %v1041, %v1080
      %v1097 = vadd.f32 %v1042, %v1081
      %v1098 = vadd.f32 %v1043, %v1082
      %v1099 = vadd.f32 %v1044, %v1083
      %v1100 = vadd.f32 %v1045, %v1084
      %v1101 = vadd.f32 %v1046, %v1085
      %v1102 = vadd.f32 %v1047, %v1086
      %v1103 = vadd.f32 %v1048, %v1087
      %v1104 = vadd.f32 %v1049, %v1088
      %1105 = vrot.lane.b32.xlu0 %v841, 96
      %v1106 = vpop.permute.xlu0 %1105
      %1107 = vrot.lane.b32.xlu0 %v845, 96
      %v1108 = vpop.permute.xlu0 %1107
      %1109 = vrot.lane.b32.xlu0 %v849, 96
      %v1110 = vpop.permute.xlu0 %1109
      %1111 = vrot.lane.b32.xlu0 %v853, 96
      %v1112 = vpop.permute.xlu0 %1111
      %1113 = vrot.lane.b32.xlu0 %v842, 96
      %v1114 = vpop.permute.xlu0 %1113
      %1115 = vrot.lane.b32.xlu0 %v846, 96
      %v1116 = vpop.permute.xlu0 %1115
      %1117 = vrot.lane.b32.xlu0 %v850, 96
      %v1118 = vpop.permute.xlu0 %1117
      %1119 = vrot.lane.b32.xlu0 %v854, 96
      %v1120 = vpop.permute.xlu0 %1119
      %1121 = vrot.lane.b32.xlu0 %v843, 96
      %v1122 = vpop.permute.xlu0 %1121
      %1123 = vrot.lane.b32.xlu0 %v847, 96
      %v1124 = vpop.permute.xlu0 %1123
      %1125 = vrot.lane.b32.xlu0 %v851, 96
      %v1126 = vpop.permute.xlu0 %1125
      %1127 = vrot.lane.b32.xlu0 %v855, 96
      %v1128 = vpop.permute.xlu0 %1127
      %1129 = vrot.lane.b32.xlu0 %v844, 96
      %v1130 = vpop.permute.xlu0 %1129
      %1131 = vrot.lane.b32.xlu0 %v848, 96
      %v1132 = vpop.permute.xlu0 %1131
      %1133 = vrot.lane.b32.xlu0 %v852, 96
      %v1134 = vpop.permute.xlu0 %1133
      %1135 = vrot.lane.b32.xlu0 %v856, 96
      %v1136 = vpop.permute.xlu0 %1135
      %vm1137 = vcmp.lt.s32.totalorder %v890, 96
      %v1138 = vsel %vm1137, %v1122, %v1130
      %v1139 = vsel %vm1137, %v1124, %v1132
      %v1140 = vsel %vm1137, %v1126, %v1134
      %v1141 = vsel %vm1137, %v1128, %v1136
      %v1142 = vsel %vm1137, %v1114, %v1122
      %v1143 = vsel %vm1137, %v1116, %v1124
      %v1144 = vsel %vm1137, %v1118, %v1126
      %v1145 = vsel %vm1137, %v1120, %v1128
      %v1146 = vsel %vm1137, %v1106, %v1114
      %v1147 = vsel %vm1137, %v1108, %v1116
      %v1148 = vsel %vm1137, %v1110, %v1118
      %v1149 = vsel %vm1137, %v1112, %v1120
      %v1150 = vsel %vm1137, %v1130, %v1106
      %v1151 = vsel %vm1137, %v1132, %v1108
      %v1152 = vsel %vm1137, %v1134, %v1110
      %v1153 = vsel %vm1137, %v1136, %v1112
      %s1154 = scalar_lea.vmem %s540, 3
      %v1155 = vld [vmem:[%s1154] ss:$8 sm:$0xf]
      %v1157 = vlaneseq
      %v1158 = vshrl.u32 %v1157, 7
      %v1159 = vsub.s32 0, %v1158
      %v1160 = vrot.slane %v1155, %v1159
      %v1161 = vlaneseq
      %v1162 = vshrl.u32 %v1161, 7
      %v1163 = vsub.s32 1, %v1162
      %v1164 = vrot.slane %v1155, %v1163
      %v1165 = vlaneseq
      %v1166 = vshrl.u32 %v1165, 7
      %v1167 = vsub.s32 2, %v1166
      %v1168 = vrot.slane %v1155, %v1167
      %v1169 = vlaneseq
      %v1170 = vshrl.u32 %v1169, 7
      %v1171 = vsub.s32 3, %v1170
      %v1172 = vrot.slane %v1155, %v1171
      %v1177 = vmul.f32 %v1146, %v1160
      %v1178 = vmul.f32 %v1142, %v1164
      %v1179 = vmul.f32 %v1138, %v1168
      %v1180 = vmul.f32 %v1150, %v1172
      %v1181 = vmul.f32 %v1147, %v1160
      %v1182 = vmul.f32 %v1143, %v1164
      %v1183 = vmul.f32 %v1139, %v1168
      %v1184 = vmul.f32 %v1151, %v1172
      %v1185 = vmul.f32 %v1148, %v1160
      %v1186 = vmul.f32 %v1144, %v1164
      %v1187 = vmul.f32 %v1140, %v1168
      %v1188 = vmul.f32 %v1152, %v1172
      %v1189 = vmul.f32 %v1149, %v1160
      %v1190 = vmul.f32 %v1145, %v1164
      %v1191 = vmul.f32 %v1141, %v1168
      %v1192 = vmul.f32 %v1153, %v1172
      %v1193 = vadd.f32 %v1089, %v1177
      %v1194 = vadd.f32 %v1090, %v1178
      %v1195 = vadd.f32 %v1091, %v1179
      %v1196 = vadd.f32 %v1092, %v1180
      %v1197 = vadd.f32 %v1093, %v1181
      %v1198 = vadd.f32 %v1094, %v1182
      %v1199 = vadd.f32 %v1095, %v1183
      %v1200 = vadd.f32 %v1096, %v1184
      %v1201 = vadd.f32 %v1097, %v1185
      %v1202 = vadd.f32 %v1098, %v1186
      %v1203 = vadd.f32 %v1099, %v1187
      %v1204 = vadd.f32 %v1100, %v1188
      %v1205 = vadd.f32 %v1101, %v1189
      %v1206 = vadd.f32 %v1102, %v1190
      %v1207 = vadd.f32 %v1103, %v1191
      %v1208 = vadd.f32 %v1104, %v1192
      %s1209 = scalar_lea.vmem %s540, 4
      %v1210 = vld [vmem:[%s1209] ss:$8 sm:$0xf]
      %v1212 = vlaneseq
      %v1213 = vshrl.u32 %v1212, 7
      %v1214 = vsub.s32 0, %v1213
      %v1215 = vrot.slane %v1210, %v1214
      %v1216 = vlaneseq
      %v1217 = vshrl.u32 %v1216, 7
      %v1218 = vsub.s32 1, %v1217
      %v1219 = vrot.slane %v1210, %v1218
      %v1220 = vlaneseq
      %v1221 = vshrl.u32 %v1220, 7
      %v1222 = vsub.s32 2, %v1221
      %v1223 = vrot.slane %v1210, %v1222
      %v1224 = vlaneseq
      %v1225 = vshrl.u32 %v1224, 7
      %v1226 = vsub.s32 3, %v1225
      %v1227 = vrot.slane %v1210, %v1226
      %v1232 = vmul.f32 %v900, %v1215
      %v1233 = vmul.f32 %v896, %v1219
      %v1234 = vmul.f32 %v892, %v1223
      %v1235 = vmul.f32 %v904, %v1227
      %v1236 = vmul.f32 %v901, %v1215
      %v1237 = vmul.f32 %v897, %v1219
      %v1238 = vmul.f32 %v893, %v1223
      %v1239 = vmul.f32 %v905, %v1227
      %v1240 = vmul.f32 %v902, %v1215
      %v1241 = vmul.f32 %v898, %v1219
      %v1242 = vmul.f32 %v894, %v1223
      %v1243 = vmul.f32 %v906, %v1227
      %v1244 = vmul.f32 %v903, %v1215
      %v1245 = vmul.f32 %v899, %v1219
      %v1246 = vmul.f32 %v895, %v1223
      %v1247 = vmul.f32 %v907, %v1227
      %v1248 = vadd.f32 %v1193, %v1232
      %v1249 = vadd.f32 %v1194, %v1233
      %v1250 = vadd.f32 %v1195, %v1234
      %v1251 = vadd.f32 %v1196, %v1235
      %v1252 = vadd.f32 %v1197, %v1236
      %v1253 = vadd.f32 %v1198, %v1237
      %v1254 = vadd.f32 %v1199, %v1238
      %v1255 = vadd.f32 %v1200, %v1239
      %v1256 = vadd.f32 %v1201, %v1240
      %v1257 = vadd.f32 %v1202, %v1241
      %v1258 = vadd.f32 %v1203, %v1242
      %v1259 = vadd.f32 %v1204, %v1243
      %v1260 = vadd.f32 %v1205, %v1244
      %v1261 = vadd.f32 %v1206, %v1245
      %v1262 = vadd.f32 %v1207, %v1246
      %v1263 = vadd.f32 %v1208, %v1247
      %v1264 = vrot.slane %v770, 7
      %v1265 = vrot.slane %v771, 7
      %v1266 = vrot.slane %v772, 7
      %v1267 = vrot.slane %v773, 7
      %v1268 = vrot.slane %v774, 7
      %v1269 = vrot.slane %v775, 7
      %v1270 = vrot.slane %v776, 7
      %v1271 = vrot.slane %v777, 7
      %v1272 = vrot.slane %v778, 7
      %v1273 = vrot.slane %v779, 7
      %v1274 = vrot.slane %v780, 7
      %v1275 = vrot.slane %v781, 7
      %v1276 = vrot.slane %v782, 7
      %v1277 = vrot.slane %v783, 7
      %v1278 = vrot.slane %v784, 7
      %v1279 = vrot.slane %v785, 7
      %vm1280 = vcmp.lt.s32.totalorder %v803, 1
      %v1281 = vsel %vm1280, %v1272, %v1276
      %v1282 = vsel %vm1280, %v1273, %v1277
      %v1283 = vsel %vm1280, %v1274, %v1278
      %v1284 = vsel %vm1280, %v1275, %v1279
      %v1285 = vsel %vm1280, %v1268, %v1272
      %v1286 = vsel %vm1280, %v1269, %v1273
      %v1287 = vsel %vm1280, %v1270, %v1274
      %v1288 = vsel %vm1280, %v1271, %v1275
      %v1289 = vsel %vm1280, %v1264, %v1268
      %v1290 = vsel %vm1280, %v1265, %v1269
      %v1291 = vsel %vm1280, %v1266, %v1270
      %v1292 = vsel %vm1280, %v1267, %v1271
      %v1293 = vsel %vm1280, %v1276, %v1264
      %v1294 = vsel %vm1280, %v1277, %v1265
      %v1295 = vsel %vm1280, %v1278, %v1266
      %v1296 = vsel %vm1280, %v1279, %v1267
      %1298 = vset.pattern.permute.xlu0 0
      %1299 = vperm.xlu0 %1298, %v679
      %v1300 = vpop.permute.xlu0 %1299
      %1303 = vset.pattern.permute.xlu0 0
      %1304 = vperm.xlu0 %1303, %v680
      %v1305 = vpop.permute.xlu0 %1304
      %1308 = vset.pattern.permute.xlu0 0
      %1309 = vperm.xlu0 %1308, %v681
      %v1310 = vpop.permute.xlu0 %1309
      %1313 = vset.pattern.permute.xlu0 0
      %1314 = vperm.xlu0 %1313, %v682
      %v1315 = vpop.permute.xlu0 %1314
      %v1317 = vmul.f32 %v1293, %v1300
      %v1318 = vmul.f32 %v1294, %v1300
      %v1319 = vmul.f32 %v1295, %v1300
      %v1320 = vmul.f32 %v1296, %v1300
      %v1321 = vmul.f32 %v1289, %v1305
      %v1322 = vmul.f32 %v1290, %v1305
      %v1323 = vmul.f32 %v1291, %v1305
      %v1324 = vmul.f32 %v1292, %v1305
      %v1325 = vmul.f32 %v1285, %v1310
      %v1326 = vmul.f32 %v1286, %v1310
      %v1327 = vmul.f32 %v1287, %v1310
      %v1328 = vmul.f32 %v1288, %v1310
      %v1329 = vmul.f32 %v1281, %v1315
      %v1330 = vmul.f32 %v1282, %v1315
      %v1331 = vmul.f32 %v1283, %v1315
      %v1332 = vmul.f32 %v1284, %v1315
      %1333 = vrot.lane.b32.xlu0 %v1317, 64
      %v1334 = vpop.permute.xlu0 %1333
      %1335 = vrot.lane.b32.xlu0 %v1321, 64
      %v1336 = vpop.permute.xlu0 %1335
      %1337 = vrot.lane.b32.xlu0 %v1325, 64
      %v1338 = vpop.permute.xlu0 %1337
      %1339 = vrot.lane.b32.xlu0 %v1329, 64
      %v1340 = vpop.permute.xlu0 %1339
      %1341 = vrot.lane.b32.xlu0 %v1318, 64
      %v1342 = vpop.permute.xlu0 %1341
      %1343 = vrot.lane.b32.xlu0 %v1322, 64
      %v1344 = vpop.permute.xlu0 %1343
      %1345 = vrot.lane.b32.xlu0 %v1326, 64
      %v1346 = vpop.permute.xlu0 %1345
      %1347 = vrot.lane.b32.xlu0 %v1330, 64
      %v1348 = vpop.permute.xlu0 %1347
      %1349 = vrot.lane.b32.xlu0 %v1319, 64
      %v1350 = vpop.permute.xlu0 %1349
      %1351 = vrot.lane.b32.xlu0 %v1323, 64
      %v1352 = vpop.permute.xlu0 %1351
      %1353 = vrot.lane.b32.xlu0 %v1327, 64
      %v1354 = vpop.permute.xlu0 %1353
      %1355 = vrot.lane.b32.xlu0 %v1331, 64
      %v1356 = vpop.permute.xlu0 %1355
      %1357 = vrot.lane.b32.xlu0 %v1320, 64
      %v1358 = vpop.permute.xlu0 %1357
      %1359 = vrot.lane.b32.xlu0 %v1324, 64
      %v1360 = vpop.permute.xlu0 %1359
      %1361 = vrot.lane.b32.xlu0 %v1328, 64
      %v1362 = vpop.permute.xlu0 %1361
      %1363 = vrot.lane.b32.xlu0 %v1332, 64
      %v1364 = vpop.permute.xlu0 %1363
      %v1365 = vsel %vm891, %v1350, %v1358
      %v1366 = vsel %vm891, %v1352, %v1360
      %v1367 = vsel %vm891, %v1354, %v1362
      %v1368 = vsel %vm891, %v1356, %v1364
      %v1369 = vsel %vm891, %v1342, %v1350
      %v1370 = vsel %vm891, %v1344, %v1352
      %v1371 = vsel %vm891, %v1346, %v1354
      %v1372 = vsel %vm891, %v1348, %v1356
      %v1373 = vsel %vm891, %v1334, %v1342
      %v1374 = vsel %vm891, %v1336, %v1344
      %v1375 = vsel %vm891, %v1338, %v1346
      %v1376 = vsel %vm891, %v1340, %v1348
      %v1377 = vsel %vm891, %v1358, %v1334
      %v1378 = vsel %vm891, %v1360, %v1336
      %v1379 = vsel %vm891, %v1362, %v1338
      %v1380 = vsel %vm891, %v1364, %v1340
      %s1381 = scalar_lea.vmem %s540, 5
      %v1382 = vld [vmem:[%s1381] ss:$8 sm:$0xf]
      %v1384 = vlaneseq
      %v1385 = vshrl.u32 %v1384, 7
      %v1386 = vsub.s32 0, %v1385
      %v1387 = vrot.slane %v1382, %v1386
      %v1388 = vlaneseq
      %v1389 = vshrl.u32 %v1388, 7
      %v1390 = vsub.s32 1, %v1389
      %v1391 = vrot.slane %v1382, %v1390
      %v1392 = vlaneseq
      %v1393 = vshrl.u32 %v1392, 7
      %v1394 = vsub.s32 2, %v1393
      %v1395 = vrot.slane %v1382, %v1394
      %v1396 = vlaneseq
      %v1397 = vshrl.u32 %v1396, 7
      %v1398 = vsub.s32 3, %v1397
      %v1399 = vrot.slane %v1382, %v1398
      %v1404 = vmul.f32 %v1377, %v1387
      %v1405 = vmul.f32 %v1373, %v1391
      %v1406 = vmul.f32 %v1369, %v1395
      %v1407 = vmul.f32 %v1365, %v1399
      %v1408 = vmul.f32 %v1378, %v1387
      %v1409 = vmul.f32 %v1374, %v1391
      %v1410 = vmul.f32 %v1370, %v1395
      %v1411 = vmul.f32 %v1366, %v1399
      %v1412 = vmul.f32 %v1379, %v1387
      %v1413 = vmul.f32 %v1375, %v1391
      %v1414 = vmul.f32 %v1371, %v1395
      %v1415 = vmul.f32 %v1367, %v1399
      %v1416 = vmul.f32 %v1380, %v1387
      %v1417 = vmul.f32 %v1376, %v1391
      %v1418 = vmul.f32 %v1372, %v1395
      %v1419 = vmul.f32 %v1368, %v1399
      %v1420 = vadd.f32 %v1248, %v1404
      %v1421 = vadd.f32 %v1249, %v1405
      %v1422 = vadd.f32 %v1250, %v1406
      %v1423 = vadd.f32 %v1251, %v1407
      %v1424 = vadd.f32 %v1252, %v1408
      %v1425 = vadd.f32 %v1253, %v1409
      %v1426 = vadd.f32 %v1254, %v1410
      %v1427 = vadd.f32 %v1255, %v1411
      %v1428 = vadd.f32 %v1256, %v1412
      %v1429 = vadd.f32 %v1257, %v1413
      %v1430 = vadd.f32 %v1258, %v1414
      %v1431 = vadd.f32 %v1259, %v1415
      %v1432 = vadd.f32 %v1260, %v1416
      %v1433 = vadd.f32 %v1261, %v1417
      %v1434 = vadd.f32 %v1262, %v1418
      %v1435 = vadd.f32 %v1263, %v1419
      %1436 = vrot.lane.b32.xlu0 %v1317, 32
      %v1437 = vpop.permute.xlu0 %1436
      %1438 = vrot.lane.b32.xlu0 %v1321, 32
      %v1439 = vpop.permute.xlu0 %1438
      %1440 = vrot.lane.b32.xlu0 %v1325, 32
      %v1441 = vpop.permute.xlu0 %1440
      %1442 = vrot.lane.b32.xlu0 %v1329, 32
      %v1443 = vpop.permute.xlu0 %1442
      %1444 = vrot.lane.b32.xlu0 %v1318, 32
      %v1445 = vpop.permute.xlu0 %1444
      %1446 = vrot.lane.b32.xlu0 %v1322, 32
      %v1447 = vpop.permute.xlu0 %1446
      %1448 = vrot.lane.b32.xlu0 %v1326, 32
      %v1449 = vpop.permute.xlu0 %1448
      %1450 = vrot.lane.b32.xlu0 %v1330, 32
      %v1451 = vpop.permute.xlu0 %1450
      %1452 = vrot.lane.b32.xlu0 %v1319, 32
      %v1453 = vpop.permute.xlu0 %1452
      %1454 = vrot.lane.b32.xlu0 %v1323, 32
      %v1455 = vpop.permute.xlu0 %1454
      %1456 = vrot.lane.b32.xlu0 %v1327, 32
      %v1457 = vpop.permute.xlu0 %1456
      %1458 = vrot.lane.b32.xlu0 %v1331, 32
      %v1459 = vpop.permute.xlu0 %1458
      %1460 = vrot.lane.b32.xlu0 %v1320, 32
      %v1461 = vpop.permute.xlu0 %1460
      %1462 = vrot.lane.b32.xlu0 %v1324, 32
      %v1463 = vpop.permute.xlu0 %1462
      %1464 = vrot.lane.b32.xlu0 %v1328, 32
      %v1465 = vpop.permute.xlu0 %1464
      %1466 = vrot.lane.b32.xlu0 %v1332, 32
      %v1467 = vpop.permute.xlu0 %1466
      %v1468 = vsel %vm978, %v1453, %v1461
      %v1469 = vsel %vm978, %v1455, %v1463
      %v1470 = vsel %vm978, %v1457, %v1465
      %v1471 = vsel %vm978, %v1459, %v1467
      %v1472 = vsel %vm978, %v1445, %v1453
      %v1473 = vsel %vm978, %v1447, %v1455
      %v1474 = vsel %vm978, %v1449, %v1457
      %v1475 = vsel %vm978, %v1451, %v1459
      %v1476 = vsel %vm978, %v1437, %v1445
      %v1477 = vsel %vm978, %v1439, %v1447
      %v1478 = vsel %vm978, %v1441, %v1449
      %v1479 = vsel %vm978, %v1443, %v1451
      %v1480 = vsel %vm978, %v1461, %v1437
      %v1481 = vsel %vm978, %v1463, %v1439
      %v1482 = vsel %vm978, %v1465, %v1441
      %v1483 = vsel %vm978, %v1467, %v1443
      %s1484 = scalar_lea.vmem %s540, 6
      %v1485 = vld [vmem:[%s1484] ss:$8 sm:$0xf]
      %v1487 = vlaneseq
      %v1488 = vshrl.u32 %v1487, 7
      %v1489 = vsub.s32 0, %v1488
      %v1490 = vrot.slane %v1485, %v1489
      %v1491 = vlaneseq
      %v1492 = vshrl.u32 %v1491, 7
      %v1493 = vsub.s32 1, %v1492
      %v1494 = vrot.slane %v1485, %v1493
      %v1495 = vlaneseq
      %v1496 = vshrl.u32 %v1495, 7
      %v1497 = vsub.s32 2, %v1496
      %v1498 = vrot.slane %v1485, %v1497
      %v1499 = vlaneseq
      %v1500 = vshrl.u32 %v1499, 7
      %v1501 = vsub.s32 3, %v1500
      %v1502 = vrot.slane %v1485, %v1501
      %v1507 = vmul.f32 %v1480, %v1490
      %v1508 = vmul.f32 %v1476, %v1494
      %v1509 = vmul.f32 %v1472, %v1498
      %v1510 = vmul.f32 %v1468, %v1502
      %v1511 = vmul.f32 %v1481, %v1490
      %v1512 = vmul.f32 %v1477, %v1494
      %v1513 = vmul.f32 %v1473, %v1498
      %v1514 = vmul.f32 %v1469, %v1502
      %v1515 = vmul.f32 %v1482, %v1490
      %v1516 = vmul.f32 %v1478, %v1494
      %v1517 = vmul.f32 %v1474, %v1498
      %v1518 = vmul.f32 %v1470, %v1502
      %v1519 = vmul.f32 %v1483, %v1490
      %v1520 = vmul.f32 %v1479, %v1494
      %v1521 = vmul.f32 %v1475, %v1498
      %v1522 = vmul.f32 %v1471, %v1502
      %v1523 = vadd.f32 %v1420, %v1507
      %v1524 = vadd.f32 %v1421, %v1508
      %v1525 = vadd.f32 %v1422, %v1509
      %v1526 = vadd.f32 %v1423, %v1510
      %v1527 = vadd.f32 %v1424, %v1511
      %v1528 = vadd.f32 %v1425, %v1512
      %v1529 = vadd.f32 %v1426, %v1513
      %v1530 = vadd.f32 %v1427, %v1514
      %v1531 = vadd.f32 %v1428, %v1515
      %v1532 = vadd.f32 %v1429, %v1516
      %v1533 = vadd.f32 %v1430, %v1517
      %v1534 = vadd.f32 %v1431, %v1518
      %v1535 = vadd.f32 %v1432, %v1519
      %v1536 = vadd.f32 %v1433, %v1520
      %v1537 = vadd.f32 %v1434, %v1521
      %v1538 = vadd.f32 %v1435, %v1522
      %s1539 = scalar_lea.vmem %s540, 7
      %v1540 = vld [vmem:[%s1539] ss:$8 sm:$0xf]
      %v1542 = vlaneseq
      %v1543 = vshrl.u32 %v1542, 7
      %v1544 = vsub.s32 0, %v1543
      %v1545 = vrot.slane %v1540, %v1544
      %v1546 = vlaneseq
      %v1547 = vshrl.u32 %v1546, 7
      %v1548 = vsub.s32 1, %v1547
      %v1549 = vrot.slane %v1540, %v1548
      %v1550 = vlaneseq
      %v1551 = vshrl.u32 %v1550, 7
      %v1552 = vsub.s32 2, %v1551
      %v1553 = vrot.slane %v1540, %v1552
      %v1554 = vlaneseq
      %v1555 = vshrl.u32 %v1554, 7
      %v1556 = vsub.s32 3, %v1555
      %v1557 = vrot.slane %v1540, %v1556
      %v1562 = vmul.f32 %v1317, %v1545
      %v1563 = vmul.f32 %v1318, %v1549
      %v1564 = vmul.f32 %v1319, %v1553
      %v1565 = vmul.f32 %v1320, %v1557
      %v1566 = vmul.f32 %v1321, %v1545
      %v1567 = vmul.f32 %v1322, %v1549
      %v1568 = vmul.f32 %v1323, %v1553
      %v1569 = vmul.f32 %v1324, %v1557
      %v1570 = vmul.f32 %v1325, %v1545
      %v1571 = vmul.f32 %v1326, %v1549
      %v1572 = vmul.f32 %v1327, %v1553
      %v1573 = vmul.f32 %v1328, %v1557
      %v1574 = vmul.f32 %v1329, %v1545
      %v1575 = vmul.f32 %v1330, %v1549
      %v1576 = vmul.f32 %v1331, %v1553
      %v1577 = vmul.f32 %v1332, %v1557
      %v1578 = vadd.f32 %v1523, %v1562
      %v1579 = vadd.f32 %v1524, %v1563
      %v1580 = vadd.f32 %v1525, %v1564
      %v1581 = vadd.f32 %v1526, %v1565
      %v1582 = vadd.f32 %v1527, %v1566
      %v1583 = vadd.f32 %v1528, %v1567
      %v1584 = vadd.f32 %v1529, %v1568
      %v1585 = vadd.f32 %v1530, %v1569
      %v1586 = vadd.f32 %v1531, %v1570
      %v1587 = vadd.f32 %v1532, %v1571
      %v1588 = vadd.f32 %v1533, %v1572
      %v1589 = vadd.f32 %v1534, %v1573
      %v1590 = vadd.f32 %v1535, %v1574
      %v1591 = vadd.f32 %v1536, %v1575
      %v1592 = vadd.f32 %v1537, %v1576
      %v1593 = vadd.f32 %v1538, %v1577
      %1594 = vrot.lane.b32.xlu0 %v1317, 96
      %v1595 = vpop.permute.xlu0 %1594
      %1596 = vrot.lane.b32.xlu0 %v1321, 96
      %v1597 = vpop.permute.xlu0 %1596
      %1598 = vrot.lane.b32.xlu0 %v1325, 96
      %v1599 = vpop.permute.xlu0 %1598
      %1600 = vrot.lane.b32.xlu0 %v1329, 96
      %v1601 = vpop.permute.xlu0 %1600
      %1602 = vrot.lane.b32.xlu0 %v1318, 96
      %v1603 = vpop.permute.xlu0 %1602
      %1604 = vrot.lane.b32.xlu0 %v1322, 96
      %v1605 = vpop.permute.xlu0 %1604
      %1606 = vrot.lane.b32.xlu0 %v1326, 96
      %v1607 = vpop.permute.xlu0 %1606
      %1608 = vrot.lane.b32.xlu0 %v1330, 96
      %v1609 = vpop.permute.xlu0 %1608
      %1610 = vrot.lane.b32.xlu0 %v1319, 96
      %v1611 = vpop.permute.xlu0 %1610
      %1612 = vrot.lane.b32.xlu0 %v1323, 96
      %v1613 = vpop.permute.xlu0 %1612
      %1614 = vrot.lane.b32.xlu0 %v1327, 96
      %v1615 = vpop.permute.xlu0 %1614
      %1616 = vrot.lane.b32.xlu0 %v1331, 96
      %v1617 = vpop.permute.xlu0 %1616
      %1618 = vrot.lane.b32.xlu0 %v1320, 96
      %v1619 = vpop.permute.xlu0 %1618
      %1620 = vrot.lane.b32.xlu0 %v1324, 96
      %v1621 = vpop.permute.xlu0 %1620
      %1622 = vrot.lane.b32.xlu0 %v1328, 96
      %v1623 = vpop.permute.xlu0 %1622
      %1624 = vrot.lane.b32.xlu0 %v1332, 96
      %v1625 = vpop.permute.xlu0 %1624
      %v1626 = vsel %vm1137, %v1611, %v1619
      %v1627 = vsel %vm1137, %v1613, %v1621
      %v1628 = vsel %vm1137, %v1615, %v1623
      %v1629 = vsel %vm1137, %v1617, %v1625
      %v1630 = vsel %vm1137, %v1603, %v1611
      %v1631 = vsel %vm1137, %v1605, %v1613
      %v1632 = vsel %vm1137, %v1607, %v1615
      %v1633 = vsel %vm1137, %v1609, %v1617
      %v1634 = vsel %vm1137, %v1595, %v1603
      %v1635 = vsel %vm1137, %v1597, %v1605
      %v1636 = vsel %vm1137, %v1599, %v1607
      %v1637 = vsel %vm1137, %v1601, %v1609
      %v1638 = vsel %vm1137, %v1619, %v1595
      %v1639 = vsel %vm1137, %v1621, %v1597
      %v1640 = vsel %vm1137, %v1623, %v1599
      %v1641 = vsel %vm1137, %v1625, %v1601
      %s1642 = scalar_lea.vmem %s540, 32
      %v1643 = vld [vmem:[%s1642] ss:$8 sm:$0xf]
      %v1645 = vlaneseq
      %v1646 = vshrl.u32 %v1645, 7
      %v1647 = vsub.s32 0, %v1646
      %v1648 = vrot.slane %v1643, %v1647
      %v1649 = vlaneseq
      %v1650 = vshrl.u32 %v1649, 7
      %v1651 = vsub.s32 1, %v1650
      %v1652 = vrot.slane %v1643, %v1651
      %v1653 = vlaneseq
      %v1654 = vshrl.u32 %v1653, 7
      %v1655 = vsub.s32 2, %v1654
      %v1656 = vrot.slane %v1643, %v1655
      %v1657 = vlaneseq
      %v1658 = vshrl.u32 %v1657, 7
      %v1659 = vsub.s32 3, %v1658
      %v1660 = vrot.slane %v1643, %v1659
      %v1665 = vmul.f32 %v1634, %v1648
      %v1666 = vmul.f32 %v1630, %v1652
      %v1667 = vmul.f32 %v1626, %v1656
      %v1668 = vmul.f32 %v1638, %v1660
      %v1669 = vmul.f32 %v1635, %v1648
      %v1670 = vmul.f32 %v1631, %v1652
      %v1671 = vmul.f32 %v1627, %v1656
      %v1672 = vmul.f32 %v1639, %v1660
      %v1673 = vmul.f32 %v1636, %v1648
      %v1674 = vmul.f32 %v1632, %v1652
      %v1675 = vmul.f32 %v1628, %v1656
      %v1676 = vmul.f32 %v1640, %v1660
      %v1677 = vmul.f32 %v1637, %v1648
      %v1678 = vmul.f32 %v1633, %v1652
      %v1679 = vmul.f32 %v1629, %v1656
      %v1680 = vmul.f32 %v1641, %v1660
      %v1681 = vadd.f32 %v1578, %v1665
      %v1682 = vadd.f32 %v1579, %v1666
      %v1683 = vadd.f32 %v1580, %v1667
      %v1684 = vadd.f32 %v1581, %v1668
      %v1685 = vadd.f32 %v1582, %v1669
      %v1686 = vadd.f32 %v1583, %v1670
      %v1687 = vadd.f32 %v1584, %v1671
      %v1688 = vadd.f32 %v1585, %v1672
      %v1689 = vadd.f32 %v1586, %v1673
      %v1690 = vadd.f32 %v1587, %v1674
      %v1691 = vadd.f32 %v1588, %v1675
      %v1692 = vadd.f32 %v1589, %v1676
      %v1693 = vadd.f32 %v1590, %v1677
      %v1694 = vadd.f32 %v1591, %v1678
      %v1695 = vadd.f32 %v1592, %v1679
      %v1696 = vadd.f32 %v1593, %v1680
      %s1697 = scalar_lea.vmem %s540, 33
      %v1698 = vld [vmem:[%s1697] ss:$8 sm:$0xf]
      %v1700 = vlaneseq
      %v1701 = vshrl.u32 %v1700, 7
      %v1702 = vsub.s32 0, %v1701
      %v1703 = vrot.slane %v1698, %v1702
      %v1704 = vlaneseq
      %v1705 = vshrl.u32 %v1704, 7
      %v1706 = vsub.s32 1, %v1705
      %v1707 = vrot.slane %v1698, %v1706
      %v1708 = vlaneseq
      %v1709 = vshrl.u32 %v1708, 7
      %v1710 = vsub.s32 2, %v1709
      %v1711 = vrot.slane %v1698, %v1710
      %v1712 = vlaneseq
      %v1713 = vshrl.u32 %v1712, 7
      %v1714 = vsub.s32 3, %v1713
      %v1715 = vrot.slane %v1698, %v1714
      %v1720 = vmul.f32 %v1373, %v1703
      %v1721 = vmul.f32 %v1369, %v1707
      %v1722 = vmul.f32 %v1365, %v1711
      %v1723 = vmul.f32 %v1377, %v1715
      %v1724 = vmul.f32 %v1374, %v1703
      %v1725 = vmul.f32 %v1370, %v1707
      %v1726 = vmul.f32 %v1366, %v1711
      %v1727 = vmul.f32 %v1378, %v1715
      %v1728 = vmul.f32 %v1375, %v1703
      %v1729 = vmul.f32 %v1371, %v1707
      %v1730 = vmul.f32 %v1367, %v1711
      %v1731 = vmul.f32 %v1379, %v1715
      %v1732 = vmul.f32 %v1376, %v1703
      %v1733 = vmul.f32 %v1372, %v1707
      %v1734 = vmul.f32 %v1368, %v1711
      %v1735 = vmul.f32 %v1380, %v1715
      %v1736 = vadd.f32 %v1681, %v1720
      %v1737 = vadd.f32 %v1682, %v1721
      %v1738 = vadd.f32 %v1683, %v1722
      %v1739 = vadd.f32 %v1684, %v1723
      %v1740 = vadd.f32 %v1685, %v1724
      %v1741 = vadd.f32 %v1686, %v1725
      %v1742 = vadd.f32 %v1687, %v1726
      %v1743 = vadd.f32 %v1688, %v1727
      %v1744 = vadd.f32 %v1689, %v1728
      %v1745 = vadd.f32 %v1690, %v1729
      %v1746 = vadd.f32 %v1691, %v1730
      %v1747 = vadd.f32 %v1692, %v1731
      %v1748 = vadd.f32 %v1693, %v1732
      %v1749 = vadd.f32 %v1694, %v1733
      %v1750 = vadd.f32 %v1695, %v1734
      %v1751 = vadd.f32 %v1696, %v1735
      %1752 = vrot.lane.b32.xlu0 %v770, 64
      %v1753 = vpop.permute.xlu0 %1752
      %1754 = vrot.lane.b32.xlu0 %v774, 64
      %v1755 = vpop.permute.xlu0 %1754
      %1756 = vrot.lane.b32.xlu0 %v778, 64
      %v1757 = vpop.permute.xlu0 %1756
      %1758 = vrot.lane.b32.xlu0 %v782, 64
      %v1759 = vpop.permute.xlu0 %1758
      %1760 = vrot.lane.b32.xlu0 %v771, 64
      %v1761 = vpop.permute.xlu0 %1760
      %1762 = vrot.lane.b32.xlu0 %v775, 64
      %v1763 = vpop.permute.xlu0 %1762
      %1764 = vrot.lane.b32.xlu0 %v779, 64
      %v1765 = vpop.permute.xlu0 %1764
      %1766 = vrot.lane.b32.xlu0 %v783, 64
      %v1767 = vpop.permute.xlu0 %1766
      %1768 = vrot.lane.b32.xlu0 %v772, 64
      %v1769 = vpop.permute.xlu0 %1768
      %1770 = vrot.lane.b32.xlu0 %v776, 64
      %v1771 = vpop.permute.xlu0 %1770
      %1772 = vrot.lane.b32.xlu0 %v780, 64
      %v1773 = vpop.permute.xlu0 %1772
      %1774 = vrot.lane.b32.xlu0 %v784, 64
      %v1775 = vpop.permute.xlu0 %1774
      %1776 = vrot.lane.b32.xlu0 %v773, 64
      %v1777 = vpop.permute.xlu0 %1776
      %1778 = vrot.lane.b32.xlu0 %v777, 64
      %v1779 = vpop.permute.xlu0 %1778
      %1780 = vrot.lane.b32.xlu0 %v781, 64
      %v1781 = vpop.permute.xlu0 %1780
      %1782 = vrot.lane.b32.xlu0 %v785, 64
      %v1783 = vpop.permute.xlu0 %1782
      %v1784 = vsel %vm891, %v1769, %v1777
      %v1785 = vsel %vm891, %v1771, %v1779
      %v1786 = vsel %vm891, %v1773, %v1781
      %v1787 = vsel %vm891, %v1775, %v1783
      %v1788 = vsel %vm891, %v1761, %v1769
      %v1789 = vsel %vm891, %v1763, %v1771
      %v1790 = vsel %vm891, %v1765, %v1773
      %v1791 = vsel %vm891, %v1767, %v1775
      %v1792 = vsel %vm891, %v1753, %v1761
      %v1793 = vsel %vm891, %v1755, %v1763
      %v1794 = vsel %vm891, %v1757, %v1765
      %v1795 = vsel %vm891, %v1759, %v1767
      %v1796 = vsel %vm891, %v1777, %v1753
      %v1797 = vsel %vm891, %v1779, %v1755
      %v1798 = vsel %vm891, %v1781, %v1757
      %v1799 = vsel %vm891, %v1783, %v1759
      %s1800 = scalar_lea.vmem %s540, 34
      %v1801 = vld [vmem:[%s1800] ss:$8 sm:$0xf]
      %v1803 = vlaneseq
      %v1804 = vshrl.u32 %v1803, 7
      %v1805 = vsub.s32 0, %v1804
      %v1806 = vrot.slane %v1801, %v1805
      %v1807 = vlaneseq
      %v1808 = vshrl.u32 %v1807, 7
      %v1809 = vsub.s32 1, %v1808
      %v1810 = vrot.slane %v1801, %v1809
      %v1811 = vlaneseq
      %v1812 = vshrl.u32 %v1811, 7
      %v1813 = vsub.s32 2, %v1812
      %v1814 = vrot.slane %v1801, %v1813
      %v1815 = vlaneseq
      %v1816 = vshrl.u32 %v1815, 7
      %v1817 = vsub.s32 3, %v1816
      %v1818 = vrot.slane %v1801, %v1817
      %v1823 = vmul.f32 %v1796, %v1806
      %v1824 = vmul.f32 %v1792, %v1810
      %v1825 = vmul.f32 %v1788, %v1814
      %v1826 = vmul.f32 %v1784, %v1818
      %v1827 = vmul.f32 %v1797, %v1806
      %v1828 = vmul.f32 %v1793, %v1810
      %v1829 = vmul.f32 %v1789, %v1814
      %v1830 = vmul.f32 %v1785, %v1818
      %v1831 = vmul.f32 %v1798, %v1806
      %v1832 = vmul.f32 %v1794, %v1810
      %v1833 = vmul.f32 %v1790, %v1814
      %v1834 = vmul.f32 %v1786, %v1818
      %v1835 = vmul.f32 %v1799, %v1806
      %v1836 = vmul.f32 %v1795, %v1810
      %v1837 = vmul.f32 %v1791, %v1814
      %v1838 = vmul.f32 %v1787, %v1818
      %v1839 = vadd.f32 %v1736, %v1823
      %v1840 = vadd.f32 %v1737, %v1824
      %v1841 = vadd.f32 %v1738, %v1825
      %v1842 = vadd.f32 %v1739, %v1826
      %v1843 = vadd.f32 %v1740, %v1827
      %v1844 = vadd.f32 %v1741, %v1828
      %v1845 = vadd.f32 %v1742, %v1829
      %v1846 = vadd.f32 %v1743, %v1830
      %v1847 = vadd.f32 %v1744, %v1831
      %v1848 = vadd.f32 %v1745, %v1832
      %v1849 = vadd.f32 %v1746, %v1833
      %v1850 = vadd.f32 %v1747, %v1834
      %v1851 = vadd.f32 %v1748, %v1835
      %v1852 = vadd.f32 %v1749, %v1836
      %v1853 = vadd.f32 %v1750, %v1837
      %v1854 = vadd.f32 %v1751, %v1838
      %1855 = vrot.lane.b32.xlu0 %v770, 32
      %v1856 = vpop.permute.xlu0 %1855
      %1857 = vrot.lane.b32.xlu0 %v774, 32
      %v1858 = vpop.permute.xlu0 %1857
      %1859 = vrot.lane.b32.xlu0 %v778, 32
      %v1860 = vpop.permute.xlu0 %1859
      %1861 = vrot.lane.b32.xlu0 %v782, 32
      %v1862 = vpop.permute.xlu0 %1861
      %1863 = vrot.lane.b32.xlu0 %v771, 32
      %v1864 = vpop.permute.xlu0 %1863
      %1865 = vrot.lane.b32.xlu0 %v775, 32
      %v1866 = vpop.permute.xlu0 %1865
      %1867 = vrot.lane.b32.xlu0 %v779, 32
      %v1868 = vpop.permute.xlu0 %1867
      %1869 = vrot.lane.b32.xlu0 %v783, 32
      %v1870 = vpop.permute.xlu0 %1869
      %1871 = vrot.lane.b32.xlu0 %v772, 32
      %v1872 = vpop.permute.xlu0 %1871
      %1873 = vrot.lane.b32.xlu0 %v776, 32
      %v1874 = vpop.permute.xlu0 %1873
      %1875 = vrot.lane.b32.xlu0 %v780, 32
      %v1876 = vpop.permute.xlu0 %1875
      %1877 = vrot.lane.b32.xlu0 %v784, 32
      %v1878 = vpop.permute.xlu0 %1877
      %1879 = vrot.lane.b32.xlu0 %v773, 32
      %v1880 = vpop.permute.xlu0 %1879
      %1881 = vrot.lane.b32.xlu0 %v777, 32
      %v1882 = vpop.permute.xlu0 %1881
      %1883 = vrot.lane.b32.xlu0 %v781, 32
      %v1884 = vpop.permute.xlu0 %1883
      %1885 = vrot.lane.b32.xlu0 %v785, 32
      %v1886 = vpop.permute.xlu0 %1885
      %v1887 = vsel %vm978, %v1872, %v1880
      %v1888 = vsel %vm978, %v1874, %v1882
      %v1889 = vsel %vm978, %v1876, %v1884
      %v1890 = vsel %vm978, %v1878, %v1886
      %v1891 = vsel %vm978, %v1864, %v1872
      %v1892 = vsel %vm978, %v1866, %v1874
      %v1893 = vsel %vm978, %v1868, %v1876
      %v1894 = vsel %vm978, %v1870, %v1878
      %v1895 = vsel %vm978, %v1856, %v1864
      %v1896 = vsel %vm978, %v1858, %v1866
      %v1897 = vsel %vm978, %v1860, %v1868
      %v1898 = vsel %vm978, %v1862, %v1870
      %v1899 = vsel %vm978, %v1880, %v1856
      %v1900 = vsel %vm978, %v1882, %v1858
      %v1901 = vsel %vm978, %v1884, %v1860
      %v1902 = vsel %vm978, %v1886, %v1862
      %s1903 = scalar_lea.vmem %s540, 35
      %v1904 = vld [vmem:[%s1903] ss:$8 sm:$0xf]
      %v1906 = vlaneseq
      %v1907 = vshrl.u32 %v1906, 7
      %v1908 = vsub.s32 0, %v1907
      %v1909 = vrot.slane %v1904, %v1908
      %v1910 = vlaneseq
      %v1911 = vshrl.u32 %v1910, 7
      %v1912 = vsub.s32 1, %v1911
      %v1913 = vrot.slane %v1904, %v1912
      %v1914 = vlaneseq
      %v1915 = vshrl.u32 %v1914, 7
      %v1916 = vsub.s32 2, %v1915
      %v1917 = vrot.slane %v1904, %v1916
      %v1918 = vlaneseq
      %v1919 = vshrl.u32 %v1918, 7
      %v1920 = vsub.s32 3, %v1919
      %v1921 = vrot.slane %v1904, %v1920
      %v1926 = vmul.f32 %v1899, %v1909
      %v1927 = vmul.f32 %v1895, %v1913
      %v1928 = vmul.f32 %v1891, %v1917
      %v1929 = vmul.f32 %v1887, %v1921
      %v1930 = vmul.f32 %v1900, %v1909
      %v1931 = vmul.f32 %v1896, %v1913
      %v1932 = vmul.f32 %v1892, %v1917
      %v1933 = vmul.f32 %v1888, %v1921
      %v1934 = vmul.f32 %v1901, %v1909
      %v1935 = vmul.f32 %v1897, %v1913
      %v1936 = vmul.f32 %v1893, %v1917
      %v1937 = vmul.f32 %v1889, %v1921
      %v1938 = vmul.f32 %v1902, %v1909
      %v1939 = vmul.f32 %v1898, %v1913
      %v1940 = vmul.f32 %v1894, %v1917
      %v1941 = vmul.f32 %v1890, %v1921
      %v1942 = vadd.f32 %v1839, %v1926
      %v1943 = vadd.f32 %v1840, %v1927
      %v1944 = vadd.f32 %v1841, %v1928
      %v1945 = vadd.f32 %v1842, %v1929
      %v1946 = vadd.f32 %v1843, %v1930
      %v1947 = vadd.f32 %v1844, %v1931
      %v1948 = vadd.f32 %v1845, %v1932
      %v1949 = vadd.f32 %v1846, %v1933
      %v1950 = vadd.f32 %v1847, %v1934
      %v1951 = vadd.f32 %v1848, %v1935
      %v1952 = vadd.f32 %v1849, %v1936
      %v1953 = vadd.f32 %v1850, %v1937
      %v1954 = vadd.f32 %v1851, %v1938
      %v1955 = vadd.f32 %v1852, %v1939
      %v1956 = vadd.f32 %v1853, %v1940
      %v1957 = vadd.f32 %v1854, %v1941
      %s1958 = scalar_lea.vmem %s540, 36
      %v1959 = vld [vmem:[%s1958] ss:$8 sm:$0xf]
      %v1961 = vlaneseq
      %v1962 = vshrl.u32 %v1961, 7
      %v1963 = vsub.s32 0, %v1962
      %v1964 = vrot.slane %v1959, %v1963
      %v1965 = vlaneseq
      %v1966 = vshrl.u32 %v1965, 7
      %v1967 = vsub.s32 1, %v1966
      %v1968 = vrot.slane %v1959, %v1967
      %v1969 = vlaneseq
      %v1970 = vshrl.u32 %v1969, 7
      %v1971 = vsub.s32 2, %v1970
      %v1972 = vrot.slane %v1959, %v1971
      %v1973 = vlaneseq
      %v1974 = vshrl.u32 %v1973, 7
      %v1975 = vsub.s32 3, %v1974
      %v1976 = vrot.slane %v1959, %v1975
      %v1981 = vmul.f32 %v770, %v1964
      %v1982 = vmul.f32 %v771, %v1968
      %v1983 = vmul.f32 %v772, %v1972
      %v1984 = vmul.f32 %v773, %v1976
      %v1985 = vmul.f32 %v774, %v1964
      %v1986 = vmul.f32 %v775, %v1968
      %v1987 = vmul.f32 %v776, %v1972
      %v1988 = vmul.f32 %v777, %v1976
      %v1989 = vmul.f32 %v778, %v1964
      %v1990 = vmul.f32 %v779, %v1968
      %v1991 = vmul.f32 %v780, %v1972
      %v1992 = vmul.f32 %v781, %v1976
      %v1993 = vmul.f32 %v782, %v1964
      %v1994 = vmul.f32 %v783, %v1968
      %v1995 = vmul.f32 %v784, %v1972
      %v1996 = vmul.f32 %v785, %v1976
      %v1997 = vadd.f32 %v1942, %v1981
      %v1998 = vadd.f32 %v1943, %v1982
      %v1999 = vadd.f32 %v1944, %v1983
      %v2000 = vadd.f32 %v1945, %v1984
      %v2001 = vadd.f32 %v1946, %v1985
      %v2002 = vadd.f32 %v1947, %v1986
      %v2003 = vadd.f32 %v1948, %v1987
      %v2004 = vadd.f32 %v1949, %v1988
      %v2005 = vadd.f32 %v1950, %v1989
      %v2006 = vadd.f32 %v1951, %v1990
      %v2007 = vadd.f32 %v1952, %v1991
      %v2008 = vadd.f32 %v1953, %v1992
      %v2009 = vadd.f32 %v1954, %v1993
      %v2010 = vadd.f32 %v1955, %v1994
      %v2011 = vadd.f32 %v1956, %v1995
      %v2012 = vadd.f32 %v1957, %v1996
      %2013 = vrot.lane.b32.xlu0 %v770, 96
      %v2014 = vpop.permute.xlu0 %2013
      %2015 = vrot.lane.b32.xlu0 %v774, 96
      %v2016 = vpop.permute.xlu0 %2015
      %2017 = vrot.lane.b32.xlu0 %v778, 96
      %v2018 = vpop.permute.xlu0 %2017
      %2019 = vrot.lane.b32.xlu0 %v782, 96
      %v2020 = vpop.permute.xlu0 %2019
      %2021 = vrot.lane.b32.xlu0 %v771, 96
      %v2022 = vpop.permute.xlu0 %2021
      %2023 = vrot.lane.b32.xlu0 %v775, 96
      %v2024 = vpop.permute.xlu0 %2023
      %2025 = vrot.lane.b32.xlu0 %v779, 96
      %v2026 = vpop.permute.xlu0 %2025
      %2027 = vrot.lane.b32.xlu0 %v783, 96
      %v2028 = vpop.permute.xlu0 %2027
      %2029 = vrot.lane.b32.xlu0 %v772, 96
      %v2030 = vpop.permute.xlu0 %2029
      %2031 = vrot.lane.b32.xlu0 %v776, 96
      %v2032 = vpop.permute.xlu0 %2031
      %2033 = vrot.lane.b32.xlu0 %v780, 96
      %v2034 = vpop.permute.xlu0 %2033
      %2035 = vrot.lane.b32.xlu0 %v784, 96
      %v2036 = vpop.permute.xlu0 %2035
      %2037 = vrot.lane.b32.xlu0 %v773, 96
      %v2038 = vpop.permute.xlu0 %2037
      %2039 = vrot.lane.b32.xlu0 %v777, 96
      %v2040 = vpop.permute.xlu0 %2039
      %2041 = vrot.lane.b32.xlu0 %v781, 96
      %v2042 = vpop.permute.xlu0 %2041
      %2043 = vrot.lane.b32.xlu0 %v785, 96
      %v2044 = vpop.permute.xlu0 %2043
      %v2045 = vsel %vm1137, %v2030, %v2038
      %v2046 = vsel %vm1137, %v2032, %v2040
      %v2047 = vsel %vm1137, %v2034, %v2042
      %v2048 = vsel %vm1137, %v2036, %v2044
      %v2049 = vsel %vm1137, %v2022, %v2030
      %v2050 = vsel %vm1137, %v2024, %v2032
      %v2051 = vsel %vm1137, %v2026, %v2034
      %v2052 = vsel %vm1137, %v2028, %v2036
      %v2053 = vsel %vm1137, %v2014, %v2022
      %v2054 = vsel %vm1137, %v2016, %v2024
      %v2055 = vsel %vm1137, %v2018, %v2026
      %v2056 = vsel %vm1137, %v2020, %v2028
      %v2057 = vsel %vm1137, %v2038, %v2014
      %v2058 = vsel %vm1137, %v2040, %v2016
      %v2059 = vsel %vm1137, %v2042, %v2018
      %v2060 = vsel %vm1137, %v2044, %v2020
      %s2061 = scalar_lea.vmem %s540, 37
      %v2062 = vld [vmem:[%s2061] ss:$8 sm:$0xf]
      %v2064 = vlaneseq
      %v2065 = vshrl.u32 %v2064, 7
      %v2066 = vsub.s32 0, %v2065
      %v2067 = vrot.slane %v2062, %v2066
      %v2068 = vlaneseq
      %v2069 = vshrl.u32 %v2068, 7
      %v2070 = vsub.s32 1, %v2069
      %v2071 = vrot.slane %v2062, %v2070
      %v2072 = vlaneseq
      %v2073 = vshrl.u32 %v2072, 7
      %v2074 = vsub.s32 2, %v2073
      %v2075 = vrot.slane %v2062, %v2074
      %v2076 = vlaneseq
      %v2077 = vshrl.u32 %v2076, 7
      %v2078 = vsub.s32 3, %v2077
      %v2079 = vrot.slane %v2062, %v2078
      %v2084 = vmul.f32 %v2053, %v2067
      %v2085 = vmul.f32 %v2049, %v2071
      %v2086 = vmul.f32 %v2045, %v2075
      %v2087 = vmul.f32 %v2057, %v2079
      %v2088 = vmul.f32 %v2054, %v2067
      %v2089 = vmul.f32 %v2050, %v2071
      %v2090 = vmul.f32 %v2046, %v2075
      %v2091 = vmul.f32 %v2058, %v2079
      %v2092 = vmul.f32 %v2055, %v2067
      %v2093 = vmul.f32 %v2051, %v2071
      %v2094 = vmul.f32 %v2047, %v2075
      %v2095 = vmul.f32 %v2059, %v2079
      %v2096 = vmul.f32 %v2056, %v2067
      %v2097 = vmul.f32 %v2052, %v2071
      %v2098 = vmul.f32 %v2048, %v2075
      %v2099 = vmul.f32 %v2060, %v2079
      %v2100 = vadd.f32 %v1997, %v2084
      %v2101 = vadd.f32 %v1998, %v2085
      %v2102 = vadd.f32 %v1999, %v2086
      %v2103 = vadd.f32 %v2000, %v2087
      %v2104 = vadd.f32 %v2001, %v2088
      %v2105 = vadd.f32 %v2002, %v2089
      %v2106 = vadd.f32 %v2003, %v2090
      %v2107 = vadd.f32 %v2004, %v2091
      %v2108 = vadd.f32 %v2005, %v2092
      %v2109 = vadd.f32 %v2006, %v2093
      %v2110 = vadd.f32 %v2007, %v2094
      %v2111 = vadd.f32 %v2008, %v2095
      %v2112 = vadd.f32 %v2009, %v2096
      %v2113 = vadd.f32 %v2010, %v2097
      %v2114 = vadd.f32 %v2011, %v2098
      %v2115 = vadd.f32 %v2012, %v2099
      %s2116 = scalar_lea.vmem %s540, 38
      %v2117 = vld [vmem:[%s2116] ss:$8 sm:$0xf]
      %v2119 = vlaneseq
      %v2120 = vshrl.u32 %v2119, 7
      %v2121 = vsub.s32 0, %v2120
      %v2122 = vrot.slane %v2117, %v2121
      %v2123 = vlaneseq
      %v2124 = vshrl.u32 %v2123, 7
      %v2125 = vsub.s32 1, %v2124
      %v2126 = vrot.slane %v2117, %v2125
      %v2127 = vlaneseq
      %v2128 = vshrl.u32 %v2127, 7
      %v2129 = vsub.s32 2, %v2128
      %v2130 = vrot.slane %v2117, %v2129
      %v2131 = vlaneseq
      %v2132 = vshrl.u32 %v2131, 7
      %v2133 = vsub.s32 3, %v2132
      %v2134 = vrot.slane %v2117, %v2133
      %v2139 = vmul.f32 %v1792, %v2122
      %v2140 = vmul.f32 %v1788, %v2126
      %v2141 = vmul.f32 %v1784, %v2130
      %v2142 = vmul.f32 %v1796, %v2134
      %v2143 = vmul.f32 %v1793, %v2122
      %v2144 = vmul.f32 %v1789, %v2126
      %v2145 = vmul.f32 %v1785, %v2130
      %v2146 = vmul.f32 %v1797, %v2134
      %v2147 = vmul.f32 %v1794, %v2122
      %v2148 = vmul.f32 %v1790, %v2126
      %v2149 = vmul.f32 %v1786, %v2130
      %v2150 = vmul.f32 %v1798, %v2134
      %v2151 = vmul.f32 %v1795, %v2122
      %v2152 = vmul.f32 %v1791, %v2126
      %v2153 = vmul.f32 %v1787, %v2130
      %v2154 = vmul.f32 %v1799, %v2134
      %v2155 = vadd.f32 %v2100, %v2139
      %v2156 = vadd.f32 %v2101, %v2140
      %v2157 = vadd.f32 %v2102, %v2141
      %v2158 = vadd.f32 %v2103, %v2142
      %v2159 = vadd.f32 %v2104, %v2143
      %v2160 = vadd.f32 %v2105, %v2144
      %v2161 = vadd.f32 %v2106, %v2145
      %v2162 = vadd.f32 %v2107, %v2146
      %v2163 = vadd.f32 %v2108, %v2147
      %v2164 = vadd.f32 %v2109, %v2148
      %v2165 = vadd.f32 %v2110, %v2149
      %v2166 = vadd.f32 %v2111, %v2150
      %v2167 = vadd.f32 %v2112, %v2151
      %v2168 = vadd.f32 %v2113, %v2152
      %v2169 = vadd.f32 %v2114, %v2153
      %v2170 = vadd.f32 %v2115, %v2154
      %v2171 = vrot.slane %v770, 1
      %v2172 = vrot.slane %v771, 1
      %v2173 = vrot.slane %v772, 1
      %v2174 = vrot.slane %v773, 1
      %v2175 = vrot.slane %v774, 1
      %v2176 = vrot.slane %v775, 1
      %v2177 = vrot.slane %v776, 1
      %v2178 = vrot.slane %v777, 1
      %v2179 = vrot.slane %v778, 1
      %v2180 = vrot.slane %v779, 1
      %v2181 = vrot.slane %v780, 1
      %v2182 = vrot.slane %v781, 1
      %v2183 = vrot.slane %v782, 1
      %v2184 = vrot.slane %v783, 1
      %v2185 = vrot.slane %v784, 1
      %v2186 = vrot.slane %v785, 1
      %vm2187 = vcmp.lt.s32.totalorder %v803, 7
      %v2188 = vsel %vm2187, %v2179, %v2183
      %v2189 = vsel %vm2187, %v2180, %v2184
      %v2190 = vsel %vm2187, %v2181, %v2185
      %v2191 = vsel %vm2187, %v2182, %v2186
      %v2192 = vsel %vm2187, %v2175, %v2179
      %v2193 = vsel %vm2187, %v2176, %v2180
      %v2194 = vsel %vm2187, %v2177, %v2181
      %v2195 = vsel %vm2187, %v2178, %v2182
      %v2196 = vsel %vm2187, %v2171, %v2175
      %v2197 = vsel %vm2187, %v2172, %v2176
      %v2198 = vsel %vm2187, %v2173, %v2177
      %v2199 = vsel %vm2187, %v2174, %v2178
      %v2200 = vsel %vm2187, %v2183, %v2171
      %v2201 = vsel %vm2187, %v2184, %v2172
      %v2202 = vsel %vm2187, %v2185, %v2173
      %v2203 = vsel %vm2187, %v2186, %v2174
      %2205 = vset.pattern.permute.xlu0 0
      %2206 = vperm.xlu0 %2205, %v703
      %v2207 = vpop.permute.xlu0 %2206
      %2210 = vset.pattern.permute.xlu0 0
      %2211 = vperm.xlu0 %2210, %v704
      %v2212 = vpop.permute.xlu0 %2211
      %2215 = vset.pattern.permute.xlu0 0
      %2216 = vperm.xlu0 %2215, %v705
      %v2217 = vpop.permute.xlu0 %2216
      %2220 = vset.pattern.permute.xlu0 0
      %2221 = vperm.xlu0 %2220, %v706
      %v2222 = vpop.permute.xlu0 %2221
      %v2224 = vmul.f32 %v2196, %v2207
      %v2225 = vmul.f32 %v2197, %v2207
      %v2226 = vmul.f32 %v2198, %v2207
      %v2227 = vmul.f32 %v2199, %v2207
      %v2228 = vmul.f32 %v2192, %v2212
      %v2229 = vmul.f32 %v2193, %v2212
      %v2230 = vmul.f32 %v2194, %v2212
      %v2231 = vmul.f32 %v2195, %v2212
      %v2232 = vmul.f32 %v2188, %v2217
      %v2233 = vmul.f32 %v2189, %v2217
      %v2234 = vmul.f32 %v2190, %v2217
      %v2235 = vmul.f32 %v2191, %v2217
      %v2236 = vmul.f32 %v2200, %v2222
      %v2237 = vmul.f32 %v2201, %v2222
      %v2238 = vmul.f32 %v2202, %v2222
      %v2239 = vmul.f32 %v2203, %v2222
      %2240 = vrot.lane.b32.xlu0 %v2224, 64
      %v2241 = vpop.permute.xlu0 %2240
      %2242 = vrot.lane.b32.xlu0 %v2228, 64
      %v2243 = vpop.permute.xlu0 %2242
      %2244 = vrot.lane.b32.xlu0 %v2232, 64
      %v2245 = vpop.permute.xlu0 %2244
      %2246 = vrot.lane.b32.xlu0 %v2236, 64
      %v2247 = vpop.permute.xlu0 %2246
      %2248 = vrot.lane.b32.xlu0 %v2225, 64
      %v2249 = vpop.permute.xlu0 %2248
      %2250 = vrot.lane.b32.xlu0 %v2229, 64
      %v2251 = vpop.permute.xlu0 %2250
      %2252 = vrot.lane.b32.xlu0 %v2233, 64
      %v2253 = vpop.permute.xlu0 %2252
      %2254 = vrot.lane.b32.xlu0 %v2237, 64
      %v2255 = vpop.permute.xlu0 %2254
      %2256 = vrot.lane.b32.xlu0 %v2226, 64
      %v2257 = vpop.permute.xlu0 %2256
      %2258 = vrot.lane.b32.xlu0 %v2230, 64
      %v2259 = vpop.permute.xlu0 %2258
      %2260 = vrot.lane.b32.xlu0 %v2234, 64
      %v2261 = vpop.permute.xlu0 %2260
      %2262 = vrot.lane.b32.xlu0 %v2238, 64
      %v2263 = vpop.permute.xlu0 %2262
      %2264 = vrot.lane.b32.xlu0 %v2227, 64
      %v2265 = vpop.permute.xlu0 %2264
      %2266 = vrot.lane.b32.xlu0 %v2231, 64
      %v2267 = vpop.permute.xlu0 %2266
      %2268 = vrot.lane.b32.xlu0 %v2235, 64
      %v2269 = vpop.permute.xlu0 %2268
      %2270 = vrot.lane.b32.xlu0 %v2239, 64
      %v2271 = vpop.permute.xlu0 %2270
      %v2272 = vsel %vm891, %v2257, %v2265
      %v2273 = vsel %vm891, %v2259, %v2267
      %v2274 = vsel %vm891, %v2261, %v2269
      %v2275 = vsel %vm891, %v2263, %v2271
      %v2276 = vsel %vm891, %v2249, %v2257
      %v2277 = vsel %vm891, %v2251, %v2259
      %v2278 = vsel %vm891, %v2253, %v2261
      %v2279 = vsel %vm891, %v2255, %v2263
      %v2280 = vsel %vm891, %v2241, %v2249
      %v2281 = vsel %vm891, %v2243, %v2251
      %v2282 = vsel %vm891, %v2245, %v2253
      %v2283 = vsel %vm891, %v2247, %v2255
      %v2284 = vsel %vm891, %v2265, %v2241
      %v2285 = vsel %vm891, %v2267, %v2243
      %v2286 = vsel %vm891, %v2269, %v2245
      %v2287 = vsel %vm891, %v2271, %v2247
      %s2288 = scalar_lea.vmem %s540, 39
      %v2289 = vld [vmem:[%s2288] ss:$8 sm:$0xf]
      %v2291 = vlaneseq
      %v2292 = vshrl.u32 %v2291, 7
      %v2293 = vsub.s32 0, %v2292
      %v2294 = vrot.slane %v2289, %v2293
      %v2295 = vlaneseq
      %v2296 = vshrl.u32 %v2295, 7
      %v2297 = vsub.s32 1, %v2296
      %v2298 = vrot.slane %v2289, %v2297
      %v2299 = vlaneseq
      %v2300 = vshrl.u32 %v2299, 7
      %v2301 = vsub.s32 2, %v2300
      %v2302 = vrot.slane %v2289, %v2301
      %v2303 = vlaneseq
      %v2304 = vshrl.u32 %v2303, 7
      %v2305 = vsub.s32 3, %v2304
      %v2306 = vrot.slane %v2289, %v2305
      %v2311 = vmul.f32 %v2284, %v2294
      %v2312 = vmul.f32 %v2280, %v2298
      %v2313 = vmul.f32 %v2276, %v2302
      %v2314 = vmul.f32 %v2272, %v2306
      %v2315 = vmul.f32 %v2285, %v2294
      %v2316 = vmul.f32 %v2281, %v2298
      %v2317 = vmul.f32 %v2277, %v2302
      %v2318 = vmul.f32 %v2273, %v2306
      %v2319 = vmul.f32 %v2286, %v2294
      %v2320 = vmul.f32 %v2282, %v2298
      %v2321 = vmul.f32 %v2278, %v2302
      %v2322 = vmul.f32 %v2274, %v2306
      %v2323 = vmul.f32 %v2287, %v2294
      %v2324 = vmul.f32 %v2283, %v2298
      %v2325 = vmul.f32 %v2279, %v2302
      %v2326 = vmul.f32 %v2275, %v2306
      %v2327 = vadd.f32 %v2155, %v2311
      %v2328 = vadd.f32 %v2156, %v2312
      %v2329 = vadd.f32 %v2157, %v2313
      %v2330 = vadd.f32 %v2158, %v2314
      %v2331 = vadd.f32 %v2159, %v2315
      %v2332 = vadd.f32 %v2160, %v2316
      %v2333 = vadd.f32 %v2161, %v2317
      %v2334 = vadd.f32 %v2162, %v2318
      %v2335 = vadd.f32 %v2163, %v2319
      %v2336 = vadd.f32 %v2164, %v2320
      %v2337 = vadd.f32 %v2165, %v2321
      %v2338 = vadd.f32 %v2166, %v2322
      %v2339 = vadd.f32 %v2167, %v2323
      %v2340 = vadd.f32 %v2168, %v2324
      %v2341 = vadd.f32 %v2169, %v2325
      %v2342 = vadd.f32 %v2170, %v2326
      %2343 = vrot.lane.b32.xlu0 %v2224, 32
      %v2344 = vpop.permute.xlu0 %2343
      %2345 = vrot.lane.b32.xlu0 %v2228, 32
      %v2346 = vpop.permute.xlu0 %2345
      %2347 = vrot.lane.b32.xlu0 %v2232, 32
      %v2348 = vpop.permute.xlu0 %2347
      %2349 = vrot.lane.b32.xlu0 %v2236, 32
      %v2350 = vpop.permute.xlu0 %2349
      %2351 = vrot.lane.b32.xlu0 %v2225, 32
      %v2352 = vpop.permute.xlu0 %2351
      %2353 = vrot.lane.b32.xlu0 %v2229, 32
      %v2354 = vpop.permute.xlu0 %2353
      %2355 = vrot.lane.b32.xlu0 %v2233, 32
      %v2356 = vpop.permute.xlu0 %2355
      %2357 = vrot.lane.b32.xlu0 %v2237, 32
      %v2358 = vpop.permute.xlu0 %2357
      %2359 = vrot.lane.b32.xlu0 %v2226, 32
      %v2360 = vpop.permute.xlu0 %2359
      %2361 = vrot.lane.b32.xlu0 %v2230, 32
      %v2362 = vpop.permute.xlu0 %2361
      %2363 = vrot.lane.b32.xlu0 %v2234, 32
      %v2364 = vpop.permute.xlu0 %2363
      %2365 = vrot.lane.b32.xlu0 %v2238, 32
      %v2366 = vpop.permute.xlu0 %2365
      %2367 = vrot.lane.b32.xlu0 %v2227, 32
      %v2368 = vpop.permute.xlu0 %2367
      %2369 = vrot.lane.b32.xlu0 %v2231, 32
      %v2370 = vpop.permute.xlu0 %2369
      %2371 = vrot.lane.b32.xlu0 %v2235, 32
      %v2372 = vpop.permute.xlu0 %2371
      %2373 = vrot.lane.b32.xlu0 %v2239, 32
      %v2374 = vpop.permute.xlu0 %2373
      %v2375 = vsel %vm978, %v2360, %v2368
      %v2376 = vsel %vm978, %v2362, %v2370
      %v2377 = vsel %vm978, %v2364, %v2372
      %v2378 = vsel %vm978, %v2366, %v2374
      %v2379 = vsel %vm978, %v2352, %v2360
      %v2380 = vsel %vm978, %v2354, %v2362
      %v2381 = vsel %vm978, %v2356, %v2364
      %v2382 = vsel %vm978, %v2358, %v2366
      %v2383 = vsel %vm978, %v2344, %v2352
      %v2384 = vsel %vm978, %v2346, %v2354
      %v2385 = vsel %vm978, %v2348, %v2356
      %v2386 = vsel %vm978, %v2350, %v2358
      %v2387 = vsel %vm978, %v2368, %v2344
      %v2388 = vsel %vm978, %v2370, %v2346
      %v2389 = vsel %vm978, %v2372, %v2348
      %v2390 = vsel %vm978, %v2374, %v2350
      %s2391 = scalar_lea.vmem %s540, 64
      %v2392 = vld [vmem:[%s2391] ss:$8 sm:$0xf]
      %v2394 = vlaneseq
      %v2395 = vshrl.u32 %v2394, 7
      %v2396 = vsub.s32 0, %v2395
      %v2397 = vrot.slane %v2392, %v2396
      %v2398 = vlaneseq
      %v2399 = vshrl.u32 %v2398, 7
      %v2400 = vsub.s32 1, %v2399
      %v2401 = vrot.slane %v2392, %v2400
      %v2402 = vlaneseq
      %v2403 = vshrl.u32 %v2402, 7
      %v2404 = vsub.s32 2, %v2403
      %v2405 = vrot.slane %v2392, %v2404
      %v2406 = vlaneseq
      %v2407 = vshrl.u32 %v2406, 7
      %v2408 = vsub.s32 3, %v2407
      %v2409 = vrot.slane %v2392, %v2408
      %v2414 = vmul.f32 %v2387, %v2397
      %v2415 = vmul.f32 %v2383, %v2401
      %v2416 = vmul.f32 %v2379, %v2405
      %v2417 = vmul.f32 %v2375, %v2409
      %v2418 = vmul.f32 %v2388, %v2397
      %v2419 = vmul.f32 %v2384, %v2401
      %v2420 = vmul.f32 %v2380, %v2405
      %v2421 = vmul.f32 %v2376, %v2409
      %v2422 = vmul.f32 %v2389, %v2397
      %v2423 = vmul.f32 %v2385, %v2401
      %v2424 = vmul.f32 %v2381, %v2405
      %v2425 = vmul.f32 %v2377, %v2409
      %v2426 = vmul.f32 %v2390, %v2397
      %v2427 = vmul.f32 %v2386, %v2401
      %v2428 = vmul.f32 %v2382, %v2405
      %v2429 = vmul.f32 %v2378, %v2409
      %v2430 = vadd.f32 %v2327, %v2414
      %v2431 = vadd.f32 %v2328, %v2415
      %v2432 = vadd.f32 %v2329, %v2416
      %v2433 = vadd.f32 %v2330, %v2417
      %v2434 = vadd.f32 %v2331, %v2418
      %v2435 = vadd.f32 %v2332, %v2419
      %v2436 = vadd.f32 %v2333, %v2420
      %v2437 = vadd.f32 %v2334, %v2421
      %v2438 = vadd.f32 %v2335, %v2422
      %v2439 = vadd.f32 %v2336, %v2423
      %v2440 = vadd.f32 %v2337, %v2424
      %v2441 = vadd.f32 %v2338, %v2425
      %v2442 = vadd.f32 %v2339, %v2426
      %v2443 = vadd.f32 %v2340, %v2427
      %v2444 = vadd.f32 %v2341, %v2428
      %v2445 = vadd.f32 %v2342, %v2429
      %s2446 = scalar_lea.vmem %s540, 65
      %v2447 = vld [vmem:[%s2446] ss:$8 sm:$0xf]
      %v2449 = vlaneseq
      %v2450 = vshrl.u32 %v2449, 7
      %v2451 = vsub.s32 0, %v2450
      %v2452 = vrot.slane %v2447, %v2451
      %v2453 = vlaneseq
      %v2454 = vshrl.u32 %v2453, 7
      %v2455 = vsub.s32 1, %v2454
      %v2456 = vrot.slane %v2447, %v2455
      %v2457 = vlaneseq
      %v2458 = vshrl.u32 %v2457, 7
      %v2459 = vsub.s32 2, %v2458
      %v2460 = vrot.slane %v2447, %v2459
      %v2461 = vlaneseq
      %v2462 = vshrl.u32 %v2461, 7
      %v2463 = vsub.s32 3, %v2462
      %v2464 = vrot.slane %v2447, %v2463
      %v2469 = vmul.f32 %v2224, %v2452
      %v2470 = vmul.f32 %v2225, %v2456
      %v2471 = vmul.f32 %v2226, %v2460
      %v2472 = vmul.f32 %v2227, %v2464
      %v2473 = vmul.f32 %v2228, %v2452
      %v2474 = vmul.f32 %v2229, %v2456
      %v2475 = vmul.f32 %v2230, %v2460
      %v2476 = vmul.f32 %v2231, %v2464
      %v2477 = vmul.f32 %v2232, %v2452
      %v2478 = vmul.f32 %v2233, %v2456
      %v2479 = vmul.f32 %v2234, %v2460
      %v2480 = vmul.f32 %v2235, %v2464
      %v2481 = vmul.f32 %v2236, %v2452
      %v2482 = vmul.f32 %v2237, %v2456
      %v2483 = vmul.f32 %v2238, %v2460
      %v2484 = vmul.f32 %v2239, %v2464
      %v2485 = vadd.f32 %v2430, %v2469
      %v2486 = vadd.f32 %v2431, %v2470
      %v2487 = vadd.f32 %v2432, %v2471
      %v2488 = vadd.f32 %v2433, %v2472
      %v2489 = vadd.f32 %v2434, %v2473
      %v2490 = vadd.f32 %v2435, %v2474
      %v2491 = vadd.f32 %v2436, %v2475
      %v2492 = vadd.f32 %v2437, %v2476
      %v2493 = vadd.f32 %v2438, %v2477
      %v2494 = vadd.f32 %v2439, %v2478
      %v2495 = vadd.f32 %v2440, %v2479
      %v2496 = vadd.f32 %v2441, %v2480
      %v2497 = vadd.f32 %v2442, %v2481
      %v2498 = vadd.f32 %v2443, %v2482
      %v2499 = vadd.f32 %v2444, %v2483
      %v2500 = vadd.f32 %v2445, %v2484
      %2501 = vrot.lane.b32.xlu0 %v2224, 96
      %v2502 = vpop.permute.xlu0 %2501
      %2503 = vrot.lane.b32.xlu0 %v2228, 96
      %v2504 = vpop.permute.xlu0 %2503
      %2505 = vrot.lane.b32.xlu0 %v2232, 96
      %v2506 = vpop.permute.xlu0 %2505
      %2507 = vrot.lane.b32.xlu0 %v2236, 96
      %v2508 = vpop.permute.xlu0 %2507
      %2509 = vrot.lane.b32.xlu0 %v2225, 96
      %v2510 = vpop.permute.xlu0 %2509
      %2511 = vrot.lane.b32.xlu0 %v2229, 96
      %v2512 = vpop.permute.xlu0 %2511
      %2513 = vrot.lane.b32.xlu0 %v2233, 96
      %v2514 = vpop.permute.xlu0 %2513
      %2515 = vrot.lane.b32.xlu0 %v2237, 96
      %v2516 = vpop.permute.xlu0 %2515
      %2517 = vrot.lane.b32.xlu0 %v2226, 96
      %v2518 = vpop.permute.xlu0 %2517
      %2519 = vrot.lane.b32.xlu0 %v2230, 96
      %v2520 = vpop.permute.xlu0 %2519
      %2521 = vrot.lane.b32.xlu0 %v2234, 96
      %v2522 = vpop.permute.xlu0 %2521
      %2523 = vrot.lane.b32.xlu0 %v2238, 96
      %v2524 = vpop.permute.xlu0 %2523
      %2525 = vrot.lane.b32.xlu0 %v2227, 96
      %v2526 = vpop.permute.xlu0 %2525
      %2527 = vrot.lane.b32.xlu0 %v2231, 96
      %v2528 = vpop.permute.xlu0 %2527
      %2529 = vrot.lane.b32.xlu0 %v2235, 96
      %v2530 = vpop.permute.xlu0 %2529
      %2531 = vrot.lane.b32.xlu0 %v2239, 96
      %v2532 = vpop.permute.xlu0 %2531
      %v2533 = vsel %vm1137, %v2518, %v2526
      %v2534 = vsel %vm1137, %v2520, %v2528
      %v2535 = vsel %vm1137, %v2522, %v2530
      %v2536 = vsel %vm1137, %v2524, %v2532
      %v2537 = vsel %vm1137, %v2510, %v2518
      %v2538 = vsel %vm1137, %v2512, %v2520
      %v2539 = vsel %vm1137, %v2514, %v2522
      %v2540 = vsel %vm1137, %v2516, %v2524
      %v2541 = vsel %vm1137, %v2502, %v2510
      %v2542 = vsel %vm1137, %v2504, %v2512
      %v2543 = vsel %vm1137, %v2506, %v2514
      %v2544 = vsel %vm1137, %v2508, %v2516
      %v2545 = vsel %vm1137, %v2526, %v2502
      %v2546 = vsel %vm1137, %v2528, %v2504
      %v2547 = vsel %vm1137, %v2530, %v2506
      %v2548 = vsel %vm1137, %v2532, %v2508
      %s2549 = scalar_lea.vmem %s540, 66
      %v2550 = vld [vmem:[%s2549] ss:$8 sm:$0xf]
      %v2552 = vlaneseq
      %v2553 = vshrl.u32 %v2552, 7
      %v2554 = vsub.s32 0, %v2553
      %v2555 = vrot.slane %v2550, %v2554
      %v2556 = vlaneseq
      %v2557 = vshrl.u32 %v2556, 7
      %v2558 = vsub.s32 1, %v2557
      %v2559 = vrot.slane %v2550, %v2558
      %v2560 = vlaneseq
      %v2561 = vshrl.u32 %v2560, 7
      %v2562 = vsub.s32 2, %v2561
      %v2563 = vrot.slane %v2550, %v2562
      %v2564 = vlaneseq
      %v2565 = vshrl.u32 %v2564, 7
      %v2566 = vsub.s32 3, %v2565
      %v2567 = vrot.slane %v2550, %v2566
      %v2572 = vmul.f32 %v2541, %v2555
      %v2573 = vmul.f32 %v2537, %v2559
      %v2574 = vmul.f32 %v2533, %v2563
      %v2575 = vmul.f32 %v2545, %v2567
      %v2576 = vmul.f32 %v2542, %v2555
      %v2577 = vmul.f32 %v2538, %v2559
      %v2578 = vmul.f32 %v2534, %v2563
      %v2579 = vmul.f32 %v2546, %v2567
      %v2580 = vmul.f32 %v2543, %v2555
      %v2581 = vmul.f32 %v2539, %v2559
      %v2582 = vmul.f32 %v2535, %v2563
      %v2583 = vmul.f32 %v2547, %v2567
      %v2584 = vmul.f32 %v2544, %v2555
      %v2585 = vmul.f32 %v2540, %v2559
      %v2586 = vmul.f32 %v2536, %v2563
      %v2587 = vmul.f32 %v2548, %v2567
      %v2588 = vadd.f32 %v2485, %v2572
      %v2589 = vadd.f32 %v2486, %v2573
      %v2590 = vadd.f32 %v2487, %v2574
      %v2591 = vadd.f32 %v2488, %v2575
      %v2592 = vadd.f32 %v2489, %v2576
      %v2593 = vadd.f32 %v2490, %v2577
      %v2594 = vadd.f32 %v2491, %v2578
      %v2595 = vadd.f32 %v2492, %v2579
      %v2596 = vadd.f32 %v2493, %v2580
      %v2597 = vadd.f32 %v2494, %v2581
      %v2598 = vadd.f32 %v2495, %v2582
      %v2599 = vadd.f32 %v2496, %v2583
      %v2600 = vadd.f32 %v2497, %v2584
      %v2601 = vadd.f32 %v2498, %v2585
      %v2602 = vadd.f32 %v2499, %v2586
      %v2603 = vadd.f32 %v2500, %v2587
      %s2604 = scalar_lea.vmem %s540, 67
      %v2605 = vld [vmem:[%s2604] ss:$8 sm:$0xf]
      %v2607 = vlaneseq
      %v2608 = vshrl.u32 %v2607, 7
      %v2609 = vsub.s32 0, %v2608
      %v2610 = vrot.slane %v2605, %v2609
      %v2611 = vlaneseq
      %v2612 = vshrl.u32 %v2611, 7
      %v2613 = vsub.s32 1, %v2612
      %v2614 = vrot.slane %v2605, %v2613
      %v2615 = vlaneseq
      %v2616 = vshrl.u32 %v2615, 7
      %v2617 = vsub.s32 2, %v2616
      %v2618 = vrot.slane %v2605, %v2617
      %v2619 = vlaneseq
      %v2620 = vshrl.u32 %v2619, 7
      %v2621 = vsub.s32 3, %v2620
      %v2622 = vrot.slane %v2605, %v2621
      %v2627 = vmul.f32 %v2280, %v2610
      %v2628 = vmul.f32 %v2276, %v2614
      %v2629 = vmul.f32 %v2272, %v2618
      %v2630 = vmul.f32 %v2284, %v2622
      %v2631 = vmul.f32 %v2281, %v2610
      %v2632 = vmul.f32 %v2277, %v2614
      %v2633 = vmul.f32 %v2273, %v2618
      %v2634 = vmul.f32 %v2285, %v2622
      %v2635 = vmul.f32 %v2282, %v2610
      %v2636 = vmul.f32 %v2278, %v2614
      %v2637 = vmul.f32 %v2274, %v2618
      %v2638 = vmul.f32 %v2286, %v2622
      %v2639 = vmul.f32 %v2283, %v2610
      %v2640 = vmul.f32 %v2279, %v2614
      %v2641 = vmul.f32 %v2275, %v2618
      %v2642 = vmul.f32 %v2287, %v2622
      %v2643 = vadd.f32 %v2588, %v2627
      %v2644 = vadd.f32 %v2589, %v2628
      %v2645 = vadd.f32 %v2590, %v2629
      %v2646 = vadd.f32 %v2591, %v2630
      %v2647 = vadd.f32 %v2592, %v2631
      %v2648 = vadd.f32 %v2593, %v2632
      %v2649 = vadd.f32 %v2594, %v2633
      %v2650 = vadd.f32 %v2595, %v2634
      %v2651 = vadd.f32 %v2596, %v2635
      %v2652 = vadd.f32 %v2597, %v2636
      %v2653 = vadd.f32 %v2598, %v2637
      %v2654 = vadd.f32 %v2599, %v2638
      %v2655 = vadd.f32 %v2600, %v2639
      %v2656 = vadd.f32 %v2601, %v2640
      %v2657 = vadd.f32 %v2602, %v2641
      %v2658 = vadd.f32 %v2603, %v2642
      %v2659 = vrot.slane %v770, 2
      %v2660 = vrot.slane %v771, 2
      %v2661 = vrot.slane %v772, 2
      %v2662 = vrot.slane %v773, 2
      %v2663 = vrot.slane %v774, 2
      %v2664 = vrot.slane %v775, 2
      %v2665 = vrot.slane %v776, 2
      %v2666 = vrot.slane %v777, 2
      %v2667 = vrot.slane %v778, 2
      %v2668 = vrot.slane %v779, 2
      %v2669 = vrot.slane %v780, 2
      %v2670 = vrot.slane %v781, 2
      %v2671 = vrot.slane %v782, 2
      %v2672 = vrot.slane %v783, 2
      %v2673 = vrot.slane %v784, 2
      %v2674 = vrot.slane %v785, 2
      %vm2675 = vcmp.lt.s32.totalorder %v803, 6
      %v2676 = vsel %vm2675, %v2667, %v2671
      %v2677 = vsel %vm2675, %v2668, %v2672
      %v2678 = vsel %vm2675, %v2669, %v2673
      %v2679 = vsel %vm2675, %v2670, %v2674
      %v2680 = vsel %vm2675, %v2663, %v2667
      %v2681 = vsel %vm2675, %v2664, %v2668
      %v2682 = vsel %vm2675, %v2665, %v2669
      %v2683 = vsel %vm2675, %v2666, %v2670
      %v2684 = vsel %vm2675, %v2659, %v2663
      %v2685 = vsel %vm2675, %v2660, %v2664
      %v2686 = vsel %vm2675, %v2661, %v2665
      %v2687 = vsel %vm2675, %v2662, %v2666
      %v2688 = vsel %vm2675, %v2671, %v2659
      %v2689 = vsel %vm2675, %v2672, %v2660
      %v2690 = vsel %vm2675, %v2673, %v2661
      %v2691 = vsel %vm2675, %v2674, %v2662
      %2693 = vset.pattern.permute.xlu0 0
      %2694 = vperm.xlu0 %2693, %v727
      %v2695 = vpop.permute.xlu0 %2694
      %2698 = vset.pattern.permute.xlu0 0
      %2699 = vperm.xlu0 %2698, %v728
      %v2700 = vpop.permute.xlu0 %2699
      %2703 = vset.pattern.permute.xlu0 0
      %2704 = vperm.xlu0 %2703, %v729
      %v2705 = vpop.permute.xlu0 %2704
      %2708 = vset.pattern.permute.xlu0 0
      %2709 = vperm.xlu0 %2708, %v730
      %v2710 = vpop.permute.xlu0 %2709
      %v2712 = vmul.f32 %v2684, %v2695
      %v2713 = vmul.f32 %v2685, %v2695
      %v2714 = vmul.f32 %v2686, %v2695
      %v2715 = vmul.f32 %v2687, %v2695
      %v2716 = vmul.f32 %v2680, %v2700
      %v2717 = vmul.f32 %v2681, %v2700
      %v2718 = vmul.f32 %v2682, %v2700
      %v2719 = vmul.f32 %v2683, %v2700
      %v2720 = vmul.f32 %v2676, %v2705
      %v2721 = vmul.f32 %v2677, %v2705
      %v2722 = vmul.f32 %v2678, %v2705
      %v2723 = vmul.f32 %v2679, %v2705
      %v2724 = vmul.f32 %v2688, %v2710
      %v2725 = vmul.f32 %v2689, %v2710
      %v2726 = vmul.f32 %v2690, %v2710
      %v2727 = vmul.f32 %v2691, %v2710
      %2728 = vrot.lane.b32.xlu0 %v2712, 64
      %v2729 = vpop.permute.xlu0 %2728
      %2730 = vrot.lane.b32.xlu0 %v2716, 64
      %v2731 = vpop.permute.xlu0 %2730
      %2732 = vrot.lane.b32.xlu0 %v2720, 64
      %v2733 = vpop.permute.xlu0 %2732
      %2734 = vrot.lane.b32.xlu0 %v2724, 64
      %v2735 = vpop.permute.xlu0 %2734
      %2736 = vrot.lane.b32.xlu0 %v2713, 64
      %v2737 = vpop.permute.xlu0 %2736
      %2738 = vrot.lane.b32.xlu0 %v2717, 64
      %v2739 = vpop.permute.xlu0 %2738
      %2740 = vrot.lane.b32.xlu0 %v2721, 64
      %v2741 = vpop.permute.xlu0 %2740
      %2742 = vrot.lane.b32.xlu0 %v2725, 64
      %v2743 = vpop.permute.xlu0 %2742
      %2744 = vrot.lane.b32.xlu0 %v2714, 64
      %v2745 = vpop.permute.xlu0 %2744
      %2746 = vrot.lane.b32.xlu0 %v2718, 64
      %v2747 = vpop.permute.xlu0 %2746
      %2748 = vrot.lane.b32.xlu0 %v2722, 64
      %v2749 = vpop.permute.xlu0 %2748
      %2750 = vrot.lane.b32.xlu0 %v2726, 64
      %v2751 = vpop.permute.xlu0 %2750
      %2752 = vrot.lane.b32.xlu0 %v2715, 64
      %v2753 = vpop.permute.xlu0 %2752
      %2754 = vrot.lane.b32.xlu0 %v2719, 64
      %v2755 = vpop.permute.xlu0 %2754
      %2756 = vrot.lane.b32.xlu0 %v2723, 64
      %v2757 = vpop.permute.xlu0 %2756
      %2758 = vrot.lane.b32.xlu0 %v2727, 64
      %v2759 = vpop.permute.xlu0 %2758
      %v2760 = vsel %vm891, %v2745, %v2753
      %v2761 = vsel %vm891, %v2747, %v2755
      %v2762 = vsel %vm891, %v2749, %v2757
      %v2763 = vsel %vm891, %v2751, %v2759
      %v2764 = vsel %vm891, %v2737, %v2745
      %v2765 = vsel %vm891, %v2739, %v2747
      %v2766 = vsel %vm891, %v2741, %v2749
      %v2767 = vsel %vm891, %v2743, %v2751
      %v2768 = vsel %vm891, %v2729, %v2737
      %v2769 = vsel %vm891, %v2731, %v2739
      %v2770 = vsel %vm891, %v2733, %v2741
      %v2771 = vsel %vm891, %v2735, %v2743
      %v2772 = vsel %vm891, %v2753, %v2729
      %v2773 = vsel %vm891, %v2755, %v2731
      %v2774 = vsel %vm891, %v2757, %v2733
      %v2775 = vsel %vm891, %v2759, %v2735
      %s2776 = scalar_lea.vmem %s540, 68
      %v2777 = vld [vmem:[%s2776] ss:$8 sm:$0xf]
      %v2779 = vlaneseq
      %v2780 = vshrl.u32 %v2779, 7
      %v2781 = vsub.s32 0, %v2780
      %v2782 = vrot.slane %v2777, %v2781
      %v2783 = vlaneseq
      %v2784 = vshrl.u32 %v2783, 7
      %v2785 = vsub.s32 1, %v2784
      %v2786 = vrot.slane %v2777, %v2785
      %v2787 = vlaneseq
      %v2788 = vshrl.u32 %v2787, 7
      %v2789 = vsub.s32 2, %v2788
      %v2790 = vrot.slane %v2777, %v2789
      %v2791 = vlaneseq
      %v2792 = vshrl.u32 %v2791, 7
      %v2793 = vsub.s32 3, %v2792
      %v2794 = vrot.slane %v2777, %v2793
      %v2799 = vmul.f32 %v2772, %v2782
      %v2800 = vmul.f32 %v2768, %v2786
      %v2801 = vmul.f32 %v2764, %v2790
      %v2802 = vmul.f32 %v2760, %v2794
      %v2803 = vmul.f32 %v2773, %v2782
      %v2804 = vmul.f32 %v2769, %v2786
      %v2805 = vmul.f32 %v2765, %v2790
      %v2806 = vmul.f32 %v2761, %v2794
      %v2807 = vmul.f32 %v2774, %v2782
      %v2808 = vmul.f32 %v2770, %v2786
      %v2809 = vmul.f32 %v2766, %v2790
      %v2810 = vmul.f32 %v2762, %v2794
      %v2811 = vmul.f32 %v2775, %v2782
      %v2812 = vmul.f32 %v2771, %v2786
      %v2813 = vmul.f32 %v2767, %v2790
      %v2814 = vmul.f32 %v2763, %v2794
      %v2815 = vadd.f32 %v2643, %v2799
      %v2816 = vadd.f32 %v2644, %v2800
      %v2817 = vadd.f32 %v2645, %v2801
      %v2818 = vadd.f32 %v2646, %v2802
      %v2819 = vadd.f32 %v2647, %v2803
      %v2820 = vadd.f32 %v2648, %v2804
      %v2821 = vadd.f32 %v2649, %v2805
      %v2822 = vadd.f32 %v2650, %v2806
      %v2823 = vadd.f32 %v2651, %v2807
      %v2824 = vadd.f32 %v2652, %v2808
      %v2825 = vadd.f32 %v2653, %v2809
      %v2826 = vadd.f32 %v2654, %v2810
      %v2827 = vadd.f32 %v2655, %v2811
      %v2828 = vadd.f32 %v2656, %v2812
      %v2829 = vadd.f32 %v2657, %v2813
      %v2830 = vadd.f32 %v2658, %v2814
      %2831 = vrot.lane.b32.xlu0 %v2712, 32
      %v2832 = vpop.permute.xlu0 %2831
      %2833 = vrot.lane.b32.xlu0 %v2716, 32
      %v2834 = vpop.permute.xlu0 %2833
      %2835 = vrot.lane.b32.xlu0 %v2720, 32
      %v2836 = vpop.permute.xlu0 %2835
      %2837 = vrot.lane.b32.xlu0 %v2724, 32
      %v2838 = vpop.permute.xlu0 %2837
      %2839 = vrot.lane.b32.xlu0 %v2713, 32
      %v2840 = vpop.permute.xlu0 %2839
      %2841 = vrot.lane.b32.xlu0 %v2717, 32
      %v2842 = vpop.permute.xlu0 %2841
      %2843 = vrot.lane.b32.xlu0 %v2721, 32
      %v2844 = vpop.permute.xlu0 %2843
      %2845 = vrot.lane.b32.xlu0 %v2725, 32
      %v2846 = vpop.permute.xlu0 %2845
      %2847 = vrot.lane.b32.xlu0 %v2714, 32
      %v2848 = vpop.permute.xlu0 %2847
      %2849 = vrot.lane.b32.xlu0 %v2718, 32
      %v2850 = vpop.permute.xlu0 %2849
      %2851 = vrot.lane.b32.xlu0 %v2722, 32
      %v2852 = vpop.permute.xlu0 %2851
      %2853 = vrot.lane.b32.xlu0 %v2726, 32
      %v2854 = vpop.permute.xlu0 %2853
      %2855 = vrot.lane.b32.xlu0 %v2715, 32
      %v2856 = vpop.permute.xlu0 %2855
      %2857 = vrot.lane.b32.xlu0 %v2719, 32
      %v2858 = vpop.permute.xlu0 %2857
      %2859 = vrot.lane.b32.xlu0 %v2723, 32
      %v2860 = vpop.permute.xlu0 %2859
      %2861 = vrot.lane.b32.xlu0 %v2727, 32
      %v2862 = vpop.permute.xlu0 %2861
      %v2863 = vsel %vm978, %v2848, %v2856
      %v2864 = vsel %vm978, %v2850, %v2858
      %v2865 = vsel %vm978, %v2852, %v2860
      %v2866 = vsel %vm978, %v2854, %v2862
      %v2867 = vsel %vm978, %v2840, %v2848
      %v2868 = vsel %vm978, %v2842, %v2850
      %v2869 = vsel %vm978, %v2844, %v2852
      %v2870 = vsel %vm978, %v2846, %v2854
      %v2871 = vsel %vm978, %v2832, %v2840
      %v2872 = vsel %vm978, %v2834, %v2842
      %v2873 = vsel %vm978, %v2836, %v2844
      %v2874 = vsel %vm978, %v2838, %v2846
      %v2875 = vsel %vm978, %v2856, %v2832
      %v2876 = vsel %vm978, %v2858, %v2834
      %v2877 = vsel %vm978, %v2860, %v2836
      %v2878 = vsel %vm978, %v2862, %v2838
      %s2879 = scalar_lea.vmem %s540, 69
      %v2880 = vld [vmem:[%s2879] ss:$8 sm:$0xf]
      %v2882 = vlaneseq
      %v2883 = vshrl.u32 %v2882, 7
      %v2884 = vsub.s32 0, %v2883
      %v2885 = vrot.slane %v2880, %v2884
      %v2886 = vlaneseq
      %v2887 = vshrl.u32 %v2886, 7
      %v2888 = vsub.s32 1, %v2887
      %v2889 = vrot.slane %v2880, %v2888
      %v2890 = vlaneseq
      %v2891 = vshrl.u32 %v2890, 7
      %v2892 = vsub.s32 2, %v2891
      %v2893 = vrot.slane %v2880, %v2892
      %v2894 = vlaneseq
      %v2895 = vshrl.u32 %v2894, 7
      %v2896 = vsub.s32 3, %v2895
      %v2897 = vrot.slane %v2880, %v2896
      %v2902 = vmul.f32 %v2875, %v2885
      %v2903 = vmul.f32 %v2871, %v2889
      %v2904 = vmul.f32 %v2867, %v2893
      %v2905 = vmul.f32 %v2863, %v2897
      %v2906 = vmul.f32 %v2876, %v2885
      %v2907 = vmul.f32 %v2872, %v2889
      %v2908 = vmul.f32 %v2868, %v2893
      %v2909 = vmul.f32 %v2864, %v2897
      %v2910 = vmul.f32 %v2877, %v2885
      %v2911 = vmul.f32 %v2873, %v2889
      %v2912 = vmul.f32 %v2869, %v2893
      %v2913 = vmul.f32 %v2865, %v2897
      %v2914 = vmul.f32 %v2878, %v2885
      %v2915 = vmul.f32 %v2874, %v2889
      %v2916 = vmul.f32 %v2870, %v2893
      %v2917 = vmul.f32 %v2866, %v2897
      %v2918 = vadd.f32 %v2815, %v2902
      %v2919 = vadd.f32 %v2816, %v2903
      %v2920 = vadd.f32 %v2817, %v2904
      %v2921 = vadd.f32 %v2818, %v2905
      %v2922 = vadd.f32 %v2819, %v2906
      %v2923 = vadd.f32 %v2820, %v2907
      %v2924 = vadd.f32 %v2821, %v2908
      %v2925 = vadd.f32 %v2822, %v2909
      %v2926 = vadd.f32 %v2823, %v2910
      %v2927 = vadd.f32 %v2824, %v2911
      %v2928 = vadd.f32 %v2825, %v2912
      %v2929 = vadd.f32 %v2826, %v2913
      %v2930 = vadd.f32 %v2827, %v2914
      %v2931 = vadd.f32 %v2828, %v2915
      %v2932 = vadd.f32 %v2829, %v2916
      %v2933 = vadd.f32 %v2830, %v2917
      %s2934 = scalar_lea.vmem %s540, 70
      %v2935 = vld [vmem:[%s2934] ss:$8 sm:$0xf]
      %v2937 = vlaneseq
      %v2938 = vshrl.u32 %v2937, 7
      %v2939 = vsub.s32 0, %v2938
      %v2940 = vrot.slane %v2935, %v2939
      %v2941 = vlaneseq
      %v2942 = vshrl.u32 %v2941, 7
      %v2943 = vsub.s32 1, %v2942
      %v2944 = vrot.slane %v2935, %v2943
      %v2945 = vlaneseq
      %v2946 = vshrl.u32 %v2945, 7
      %v2947 = vsub.s32 2, %v2946
      %v2948 = vrot.slane %v2935, %v2947
      %v2949 = vlaneseq
      %v2950 = vshrl.u32 %v2949, 7
      %v2951 = vsub.s32 3, %v2950
      %v2952 = vrot.slane %v2935, %v2951
      %v2957 = vmul.f32 %v2712, %v2940
      %v2958 = vmul.f32 %v2713, %v2944
      %v2959 = vmul.f32 %v2714, %v2948
      %v2960 = vmul.f32 %v2715, %v2952
      %v2961 = vmul.f32 %v2716, %v2940
      %v2962 = vmul.f32 %v2717, %v2944
      %v2963 = vmul.f32 %v2718, %v2948
      %v2964 = vmul.f32 %v2719, %v2952
      %v2965 = vmul.f32 %v2720, %v2940
      %v2966 = vmul.f32 %v2721, %v2944
      %v2967 = vmul.f32 %v2722, %v2948
      %v2968 = vmul.f32 %v2723, %v2952
      %v2969 = vmul.f32 %v2724, %v2940
      %v2970 = vmul.f32 %v2725, %v2944
      %v2971 = vmul.f32 %v2726, %v2948
      %v2972 = vmul.f32 %v2727, %v2952
      %v2973 = vadd.f32 %v2918, %v2957
      %v2974 = vadd.f32 %v2919, %v2958
      %v2975 = vadd.f32 %v2920, %v2959
      %v2976 = vadd.f32 %v2921, %v2960
      %v2977 = vadd.f32 %v2922, %v2961
      %v2978 = vadd.f32 %v2923, %v2962
      %v2979 = vadd.f32 %v2924, %v2963
      %v2980 = vadd.f32 %v2925, %v2964
      %v2981 = vadd.f32 %v2926, %v2965
      %v2982 = vadd.f32 %v2927, %v2966
      %v2983 = vadd.f32 %v2928, %v2967
      %v2984 = vadd.f32 %v2929, %v2968
      %v2985 = vadd.f32 %v2930, %v2969
      %v2986 = vadd.f32 %v2931, %v2970
      %v2987 = vadd.f32 %v2932, %v2971
      %v2988 = vadd.f32 %v2933, %v2972
      %2989 = vrot.lane.b32.xlu0 %v2712, 96
      %v2990 = vpop.permute.xlu0 %2989
      %2991 = vrot.lane.b32.xlu0 %v2716, 96
      %v2992 = vpop.permute.xlu0 %2991
      %2993 = vrot.lane.b32.xlu0 %v2720, 96
      %v2994 = vpop.permute.xlu0 %2993
      %2995 = vrot.lane.b32.xlu0 %v2724, 96
      %v2996 = vpop.permute.xlu0 %2995
      %2997 = vrot.lane.b32.xlu0 %v2713, 96
      %v2998 = vpop.permute.xlu0 %2997
      %2999 = vrot.lane.b32.xlu0 %v2717, 96
      %v3000 = vpop.permute.xlu0 %2999
      %3001 = vrot.lane.b32.xlu0 %v2721, 96
      %v3002 = vpop.permute.xlu0 %3001
      %3003 = vrot.lane.b32.xlu0 %v2725, 96
      %v3004 = vpop.permute.xlu0 %3003
      %3005 = vrot.lane.b32.xlu0 %v2714, 96
      %v3006 = vpop.permute.xlu0 %3005
      %3007 = vrot.lane.b32.xlu0 %v2718, 96
      %v3008 = vpop.permute.xlu0 %3007
      %3009 = vrot.lane.b32.xlu0 %v2722, 96
      %v3010 = vpop.permute.xlu0 %3009
      %3011 = vrot.lane.b32.xlu0 %v2726, 96
      %v3012 = vpop.permute.xlu0 %3011
      %3013 = vrot.lane.b32.xlu0 %v2715, 96
      %v3014 = vpop.permute.xlu0 %3013
      %3015 = vrot.lane.b32.xlu0 %v2719, 96
      %v3016 = vpop.permute.xlu0 %3015
      %3017 = vrot.lane.b32.xlu0 %v2723, 96
      %v3018 = vpop.permute.xlu0 %3017
      %3019 = vrot.lane.b32.xlu0 %v2727, 96
      %v3020 = vpop.permute.xlu0 %3019
      %v3021 = vsel %vm1137, %v3006, %v3014
      %v3022 = vsel %vm1137, %v3008, %v3016
      %v3023 = vsel %vm1137, %v3010, %v3018
      %v3024 = vsel %vm1137, %v3012, %v3020
      %v3025 = vsel %vm1137, %v2998, %v3006
      %v3026 = vsel %vm1137, %v3000, %v3008
      %v3027 = vsel %vm1137, %v3002, %v3010
      %v3028 = vsel %vm1137, %v3004, %v3012
      %v3029 = vsel %vm1137, %v2990, %v2998
      %v3030 = vsel %vm1137, %v2992, %v3000
      %v3031 = vsel %vm1137, %v2994, %v3002
      %v3032 = vsel %vm1137, %v2996, %v3004
      %v3033 = vsel %vm1137, %v3014, %v2990
      %v3034 = vsel %vm1137, %v3016, %v2992
      %v3035 = vsel %vm1137, %v3018, %v2994
      %v3036 = vsel %vm1137, %v3020, %v2996
      %s3037 = scalar_lea.vmem %s540, 71
      %v3038 = vld [vmem:[%s3037] ss:$8 sm:$0xf]
      %v3040 = vlaneseq
      %v3041 = vshrl.u32 %v3040, 7
      %v3042 = vsub.s32 0, %v3041
      %v3043 = vrot.slane %v3038, %v3042
      %v3044 = vlaneseq
      %v3045 = vshrl.u32 %v3044, 7
      %v3046 = vsub.s32 1, %v3045
      %v3047 = vrot.slane %v3038, %v3046
      %v3048 = vlaneseq
      %v3049 = vshrl.u32 %v3048, 7
      %v3050 = vsub.s32 2, %v3049
      %v3051 = vrot.slane %v3038, %v3050
      %v3052 = vlaneseq
      %v3053 = vshrl.u32 %v3052, 7
      %v3054 = vsub.s32 3, %v3053
      %v3055 = vrot.slane %v3038, %v3054
      %v3060 = vmul.f32 %v3029, %v3043
      %v3061 = vmul.f32 %v3025, %v3047
      %v3062 = vmul.f32 %v3021, %v3051
      %v3063 = vmul.f32 %v3033, %v3055
      %v3064 = vmul.f32 %v3030, %v3043
      %v3065 = vmul.f32 %v3026, %v3047
      %v3066 = vmul.f32 %v3022, %v3051
      %v3067 = vmul.f32 %v3034, %v3055
      %v3068 = vmul.f32 %v3031, %v3043
      %v3069 = vmul.f32 %v3027, %v3047
      %v3070 = vmul.f32 %v3023, %v3051
      %v3071 = vmul.f32 %v3035, %v3055
      %v3072 = vmul.f32 %v3032, %v3043
      %v3073 = vmul.f32 %v3028, %v3047
      %v3074 = vmul.f32 %v3024, %v3051
      %v3075 = vmul.f32 %v3036, %v3055
      %v3076 = vadd.f32 %v2973, %v3060
      %v3077 = vadd.f32 %v2974, %v3061
      %v3078 = vadd.f32 %v2975, %v3062
      %v3079 = vadd.f32 %v2976, %v3063
      %v3080 = vadd.f32 %v2977, %v3064
      %v3081 = vadd.f32 %v2978, %v3065
      %v3082 = vadd.f32 %v2979, %v3066
      %v3083 = vadd.f32 %v2980, %v3067
      %v3084 = vadd.f32 %v2981, %v3068
      %v3085 = vadd.f32 %v2982, %v3069
      %v3086 = vadd.f32 %v2983, %v3070
      %v3087 = vadd.f32 %v2984, %v3071
      %v3088 = vadd.f32 %v2985, %v3072
      %v3089 = vadd.f32 %v2986, %v3073
      %v3090 = vadd.f32 %v2987, %v3074
      %v3091 = vadd.f32 %v2988, %v3075
      %s3092 = scalar_lea.vmem %s540, 96
      %v3093 = vld [vmem:[%s3092] ss:$8 sm:$0xf]
      %v3095 = vlaneseq
      %v3096 = vshrl.u32 %v3095, 7
      %v3097 = vsub.s32 0, %v3096
      %v3098 = vrot.slane %v3093, %v3097
      %v3099 = vlaneseq
      %v3100 = vshrl.u32 %v3099, 7
      %v3101 = vsub.s32 1, %v3100
      %v3102 = vrot.slane %v3093, %v3101
      %v3103 = vlaneseq
      %v3104 = vshrl.u32 %v3103, 7
      %v3105 = vsub.s32 2, %v3104
      %v3106 = vrot.slane %v3093, %v3105
      %v3107 = vlaneseq
      %v3108 = vshrl.u32 %v3107, 7
      %v3109 = vsub.s32 3, %v3108
      %v3110 = vrot.slane %v3093, %v3109
      %v3115 = vmul.f32 %v2768, %v3098
      %v3116 = vmul.f32 %v2764, %v3102
      %v3117 = vmul.f32 %v2760, %v3106
      %v3118 = vmul.f32 %v2772, %v3110
      %v3119 = vmul.f32 %v2769, %v3098
      %v3120 = vmul.f32 %v2765, %v3102
      %v3121 = vmul.f32 %v2761, %v3106
      %v3122 = vmul.f32 %v2773, %v3110
      %v3123 = vmul.f32 %v2770, %v3098
      %v3124 = vmul.f32 %v2766, %v3102
      %v3125 = vmul.f32 %v2762, %v3106
      %v3126 = vmul.f32 %v2774, %v3110
      %v3127 = vmul.f32 %v2771, %v3098
      %v3128 = vmul.f32 %v2767, %v3102
      %v3129 = vmul.f32 %v2763, %v3106
      %v3130 = vmul.f32 %v2775, %v3110
      %v3131 = vadd.f32 %v3076, %v3115
      %v3132 = vadd.f32 %v3077, %v3116
      %v3133 = vadd.f32 %v3078, %v3117
      %v3134 = vadd.f32 %v3079, %v3118
      %v3135 = vadd.f32 %v3080, %v3119
      %v3136 = vadd.f32 %v3081, %v3120
      %v3137 = vadd.f32 %v3082, %v3121
      %v3138 = vadd.f32 %v3083, %v3122
      %v3139 = vadd.f32 %v3084, %v3123
      %v3140 = vadd.f32 %v3085, %v3124
      %v3141 = vadd.f32 %v3086, %v3125
      %v3142 = vadd.f32 %v3087, %v3126
      %v3143 = vadd.f32 %v3088, %v3127
      %v3144 = vadd.f32 %v3089, %v3128
      %v3145 = vadd.f32 %v3090, %v3129
      %v3146 = vadd.f32 %v3091, %v3130
      %v3148 = vlaneseq
      %v3149 = vshrl.u32 %v3148, 7
      %v3150 = vsub.s32 0, %v3149
      %v3151 = vrot.slane %v755, %v3150
      %v3152 = vlaneseq
      %v3153 = vshrl.u32 %v3152, 7
      %v3154 = vsub.s32 1, %v3153
      %v3155 = vrot.slane %v755, %v3154
      %v3156 = vlaneseq
      %v3157 = vshrl.u32 %v3156, 7
      %v3158 = vsub.s32 2, %v3157
      %v3159 = vrot.slane %v755, %v3158
      %v3160 = vlaneseq
      %v3161 = vshrl.u32 %v3160, 7
      %v3162 = vsub.s32 3, %v3161
      %v3163 = vrot.slane %v755, %v3162
      %v3168 = vadd.f32 %v3131, %v3151
      %v3169 = vadd.f32 %v3132, %v3155
      %v3170 = vadd.f32 %v3133, %v3159
      %v3171 = vadd.f32 %v3134, %v3163
      %v3172 = vadd.f32 %v3135, %v3151
      %v3173 = vadd.f32 %v3136, %v3155
      %v3174 = vadd.f32 %v3137, %v3159
      %v3175 = vadd.f32 %v3138, %v3163
      %v3176 = vadd.f32 %v3139, %v3151
      %v3177 = vadd.f32 %v3140, %v3155
      %v3178 = vadd.f32 %v3141, %v3159
      %v3179 = vadd.f32 %v3142, %v3163
      %v3180 = vadd.f32 %v3143, %v3151
      %v3181 = vadd.f32 %v3144, %v3155
      %v3182 = vadd.f32 %v3145, %v3159
      %v3183 = vadd.f32 %v3146, %v3163
      %3184 = vst [vmem:[#allocation3] sm:$0xff] %v3168
      %3185 = vst [vmem:[#allocation3 + $0x8] sm:$0xff] %v3169
      %3186 = vst [vmem:[#allocation3 + $0x10] sm:$0xff] %v3170
      %3187 = vst [vmem:[#allocation3 + $0x18] sm:$0xff] %v3171
      %3188 = vst [vmem:[#allocation3 + $0x20] sm:$0xff] %v3172
      %3189 = vst [vmem:[#allocation3 + $0x28] sm:$0xff] %v3173
      %3190 = vst [vmem:[#allocation3 + $0x30] sm:$0xff] %v3174
      %3191 = vst [vmem:[#allocation3 + $0x38] sm:$0xff] %v3175
      %3192 = vst [vmem:[#allocation3 + $0x40] sm:$0xff] %v3176
      %3193 = vst [vmem:[#allocation3 + $0x48] sm:$0xff] %v3177
      %3194 = vst [vmem:[#allocation3 + $0x50] sm:$0xff] %v3178
      %3195 = vst [vmem:[#allocation3 + $0x58] sm:$0xff] %v3179
      %3196 = vst [vmem:[#allocation3 + $0x60] sm:$0xff] %v3180
      %3197 = vst [vmem:[#allocation3 + $0x68] sm:$0xff] %v3181
      %3198 = vst [vmem:[#allocation3 + $0x70] sm:$0xff] %v3182
      %3199 = vst [vmem:[#allocation3 + $0x78] sm:$0xff] %v3183
      %v3200 = vld [vmem:[#allocation3] sm:$0xff]
      %v3201 = vld [vmem:[#allocation3 + $0x8] sm:$0xff]
      %v3202 = vld [vmem:[#allocation3 + $0x10] sm:$0xff]
      %v3203 = vld [vmem:[#allocation3 + $0x18] sm:$0xff]
      %v3204 = vld [vmem:[#allocation3 + $0x20] sm:$0xff]
      %v3205 = vld [vmem:[#allocation3 + $0x28] sm:$0xff]
      %v3206 = vld [vmem:[#allocation3 + $0x30] sm:$0xff]
      %v3207 = vld [vmem:[#allocation3 + $0x38] sm:$0xff]
      %v3208 = vld [vmem:[#allocation3 + $0x40] sm:$0xff]
      %v3209 = vld [vmem:[#allocation3 + $0x48] sm:$0xff]
      %v3210 = vld [vmem:[#allocation3 + $0x50] sm:$0xff]
      %v3211 = vld [vmem:[#allocation3 + $0x58] sm:$0xff]
      %v3212 = vld [vmem:[#allocation3 + $0x60] sm:$0xff]
      %v3213 = vld [vmem:[#allocation3 + $0x68] sm:$0xff]
      %v3214 = vld [vmem:[#allocation3 + $0x70] sm:$0xff]
      %v3215 = vld [vmem:[#allocation3 + $0x78] sm:$0xff]
      %3216 = vrot.lane.b32.xlu0 %v3200, 96
      %v3217 = vpop.permute.xlu0 %3216
      %3218 = vrot.lane.b32.xlu0 %v3204, 96
      %v3219 = vpop.permute.xlu0 %3218
      %3220 = vrot.lane.b32.xlu0 %v3208, 96
      %v3221 = vpop.permute.xlu0 %3220
      %3222 = vrot.lane.b32.xlu0 %v3212, 96
      %v3223 = vpop.permute.xlu0 %3222
      %3224 = vrot.lane.b32.xlu0 %v3201, 96
      %v3225 = vpop.permute.xlu0 %3224
      %3226 = vrot.lane.b32.xlu0 %v3205, 96
      %v3227 = vpop.permute.xlu0 %3226
      %3228 = vrot.lane.b32.xlu0 %v3209, 96
      %v3229 = vpop.permute.xlu0 %3228
      %3230 = vrot.lane.b32.xlu0 %v3213, 96
      %v3231 = vpop.permute.xlu0 %3230
      %3232 = vrot.lane.b32.xlu0 %v3202, 96
      %v3233 = vpop.permute.xlu0 %3232
      %3234 = vrot.lane.b32.xlu0 %v3206, 96
      %v3235 = vpop.permute.xlu0 %3234
      %3236 = vrot.lane.b32.xlu0 %v3210, 96
      %v3237 = vpop.permute.xlu0 %3236
      %3238 = vrot.lane.b32.xlu0 %v3214, 96
      %v3239 = vpop.permute.xlu0 %3238
      %3240 = vrot.lane.b32.xlu0 %v3203, 96
      %v3241 = vpop.permute.xlu0 %3240
      %3242 = vrot.lane.b32.xlu0 %v3207, 96
      %v3243 = vpop.permute.xlu0 %3242
      %3244 = vrot.lane.b32.xlu0 %v3211, 96
      %v3245 = vpop.permute.xlu0 %3244
      %3246 = vrot.lane.b32.xlu0 %v3215, 96
      %v3247 = vpop.permute.xlu0 %3246
      %v3248 = vsel %vm1137, %v3233, %v3241
      %v3249 = vsel %vm1137, %v3235, %v3243
      %v3250 = vsel %vm1137, %v3237, %v3245
      %v3251 = vsel %vm1137, %v3239, %v3247
      %v3252 = vsel %vm1137, %v3225, %v3233
      %v3253 = vsel %vm1137, %v3227, %v3235
      %v3254 = vsel %vm1137, %v3229, %v3237
      %v3255 = vsel %vm1137, %v3231, %v3239
      %v3256 = vsel %vm1137, %v3217, %v3225
      %v3257 = vsel %vm1137, %v3219, %v3227
      %v3258 = vsel %vm1137, %v3221, %v3229
      %v3259 = vsel %vm1137, %v3223, %v3231
      %v3260 = vsel %vm1137, %v3241, %v3217
      %v3261 = vsel %vm1137, %v3243, %v3219
      %v3262 = vsel %vm1137, %v3245, %v3221
      %v3263 = vsel %vm1137, %v3247, %v3223
      %v3264 = vld [vmem:[%s555] ss:$8 sm:$0xf]
      %v3266 = vlaneseq
      %v3267 = vshrl.u32 %v3266, 7
      %v3268 = vsub.s32 0, %v3267
      %v3269 = vrot.slane %v3264, %v3268
      %v3270 = vlaneseq
      %v3271 = vshrl.u32 %v3270, 7
      %v3272 = vsub.s32 1, %v3271
      %v3273 = vrot.slane %v3264, %v3272
      %v3274 = vlaneseq
      %v3275 = vshrl.u32 %v3274, 7
      %v3276 = vsub.s32 2, %v3275
      %v3277 = vrot.slane %v3264, %v3276
      %v3278 = vlaneseq
      %v3279 = vshrl.u32 %v3278, 7
      %v3280 = vsub.s32 3, %v3279
      %v3281 = vrot.slane %v3264, %v3280
      %v3286 = vmul.f32 %v3260, %v3269
      %v3287 = vmul.f32 %v3256, %v3273
      %v3288 = vmul.f32 %v3252, %v3277
      %v3289 = vmul.f32 %v3248, %v3281
      %v3290 = vmul.f32 %v3261, %v3269
      %v3291 = vmul.f32 %v3257, %v3273
      %v3292 = vmul.f32 %v3253, %v3277
      %v3293 = vmul.f32 %v3249, %v3281
      %v3294 = vmul.f32 %v3262, %v3269
      %v3295 = vmul.f32 %v3258, %v3273
      %v3296 = vmul.f32 %v3254, %v3277
      %v3297 = vmul.f32 %v3250, %v3281
      %v3298 = vmul.f32 %v3263, %v3269
      %v3299 = vmul.f32 %v3259, %v3273
      %v3300 = vmul.f32 %v3255, %v3277
      %v3301 = vmul.f32 %v3251, %v3281
      %3302 = vst [vmem:[#allocation5] sm:$0xff] %v3286
      %3303 = vst [vmem:[#allocation5 + $0x8] sm:$0xff] %v3287
      %3304 = vst [vmem:[#allocation5 + $0x10] sm:$0xff] %v3288
      %3305 = vst [vmem:[#allocation5 + $0x18] sm:$0xff] %v3289
      %3306 = vst [vmem:[#allocation5 + $0x20] sm:$0xff] %v3290
      %3307 = vst [vmem:[#allocation5 + $0x28] sm:$0xff] %v3291
      %3308 = vst [vmem:[#allocation5 + $0x30] sm:$0xff] %v3292
      %3309 = vst [vmem:[#allocation5 + $0x38] sm:$0xff] %v3293
      %3310 = vst [vmem:[#allocation5 + $0x40] sm:$0xff] %v3294
      %3311 = vst [vmem:[#allocation5 + $0x48] sm:$0xff] %v3295
      %3312 = vst [vmem:[#allocation5 + $0x50] sm:$0xff] %v3296
      %3313 = vst [vmem:[#allocation5 + $0x58] sm:$0xff] %v3297
      %3314 = vst [vmem:[#allocation5 + $0x60] sm:$0xff] %v3298
      %3315 = vst [vmem:[#allocation5 + $0x68] sm:$0xff] %v3299
      %3316 = vst [vmem:[#allocation5 + $0x70] sm:$0xff] %v3300
      %3317 = vst [vmem:[#allocation5 + $0x78] sm:$0xff] %v3301
      %3318 = vrot.lane.b32.xlu0 %v3200, 64
      %v3319 = vpop.permute.xlu0 %3318
      %3320 = vrot.lane.b32.xlu0 %v3204, 64
      %v3321 = vpop.permute.xlu0 %3320
      %3322 = vrot.lane.b32.xlu0 %v3208, 64
      %v3323 = vpop.permute.xlu0 %3322
      %3324 = vrot.lane.b32.xlu0 %v3212, 64
      %v3325 = vpop.permute.xlu0 %3324
      %3326 = vrot.lane.b32.xlu0 %v3201, 64
      %v3327 = vpop.permute.xlu0 %3326
      %3328 = vrot.lane.b32.xlu0 %v3205, 64
      %v3329 = vpop.permute.xlu0 %3328
      %3330 = vrot.lane.b32.xlu0 %v3209, 64
      %v3331 = vpop.permute.xlu0 %3330
      %3332 = vrot.lane.b32.xlu0 %v3213, 64
      %v3333 = vpop.permute.xlu0 %3332
      %3334 = vrot.lane.b32.xlu0 %v3202, 64
      %v3335 = vpop.permute.xlu0 %3334
      %3336 = vrot.lane.b32.xlu0 %v3206, 64
      %v3337 = vpop.permute.xlu0 %3336
      %3338 = vrot.lane.b32.xlu0 %v3210, 64
      %v3339 = vpop.permute.xlu0 %3338
      %3340 = vrot.lane.b32.xlu0 %v3214, 64
      %v3341 = vpop.permute.xlu0 %3340
      %3342 = vrot.lane.b32.xlu0 %v3203, 64
      %v3343 = vpop.permute.xlu0 %3342
      %3344 = vrot.lane.b32.xlu0 %v3207, 64
      %v3345 = vpop.permute.xlu0 %3344
      %3346 = vrot.lane.b32.xlu0 %v3211, 64
      %v3347 = vpop.permute.xlu0 %3346
      %3348 = vrot.lane.b32.xlu0 %v3215, 64
      %v3349 = vpop.permute.xlu0 %3348
      %v3350 = vsel %vm891, %v3335, %v3343
      %v3351 = vsel %vm891, %v3337, %v3345
      %v3352 = vsel %vm891, %v3339, %v3347
      %v3353 = vsel %vm891, %v3341, %v3349
      %v3354 = vsel %vm891, %v3327, %v3335
      %v3355 = vsel %vm891, %v3329, %v3337
      %v3356 = vsel %vm891, %v3331, %v3339
      %v3357 = vsel %vm891, %v3333, %v3341
      %v3358 = vsel %vm891, %v3319, %v3327
      %v3359 = vsel %vm891, %v3321, %v3329
      %v3360 = vsel %vm891, %v3323, %v3331
      %v3361 = vsel %vm891, %v3325, %v3333
      %v3362 = vsel %vm891, %v3343, %v3319
      %v3363 = vsel %vm891, %v3345, %v3321
      %v3364 = vsel %vm891, %v3347, %v3323
      %v3365 = vsel %vm891, %v3349, %v3325
      %s3366 = scalar_lea.vmem %s555, 1
      %v3367 = vld [vmem:[%s3366] ss:$8 sm:$0xf]
      %v3369 = vlaneseq
      %v3370 = vshrl.u32 %v3369, 7
      %v3371 = vsub.s32 0, %v3370
      %v3372 = vrot.slane %v3367, %v3371
      %v3373 = vlaneseq
      %v3374 = vshrl.u32 %v3373, 7
      %v3375 = vsub.s32 1, %v3374
      %v3376 = vrot.slane %v3367, %v3375
      %v3377 = vlaneseq
      %v3378 = vshrl.u32 %v3377, 7
      %v3379 = vsub.s32 2, %v3378
      %v3380 = vrot.slane %v3367, %v3379
      %v3381 = vlaneseq
      %v3382 = vshrl.u32 %v3381, 7
      %v3383 = vsub.s32 3, %v3382
      %v3384 = vrot.slane %v3367, %v3383
      %v3389 = vmul.f32 %v3362, %v3372
      %v3390 = vmul.f32 %v3358, %v3376
      %v3391 = vmul.f32 %v3354, %v3380
      %v3392 = vmul.f32 %v3350, %v3384
      %v3393 = vmul.f32 %v3363, %v3372
      %v3394 = vmul.f32 %v3359, %v3376
      %v3395 = vmul.f32 %v3355, %v3380
      %v3396 = vmul.f32 %v3351, %v3384
      %v3397 = vmul.f32 %v3364, %v3372
      %v3398 = vmul.f32 %v3360, %v3376
      %v3399 = vmul.f32 %v3356, %v3380
      %v3400 = vmul.f32 %v3352, %v3384
      %v3401 = vmul.f32 %v3365, %v3372
      %v3402 = vmul.f32 %v3361, %v3376
      %v3403 = vmul.f32 %v3357, %v3380
      %v3404 = vmul.f32 %v3353, %v3384
      %v3405 = vld [vmem:[#allocation5] sm:$0xff]
      %v3406 = vld [vmem:[#allocation5 + $0x8] sm:$0xff]
      %v3407 = vld [vmem:[#allocation5 + $0x10] sm:$0xff]
      %v3408 = vld [vmem:[#allocation5 + $0x18] sm:$0xff]
      %v3409 = vld [vmem:[#allocation5 + $0x20] sm:$0xff]
      %v3410 = vld [vmem:[#allocation5 + $0x28] sm:$0xff]
      %v3411 = vld [vmem:[#allocation5 + $0x30] sm:$0xff]
      %v3412 = vld [vmem:[#allocation5 + $0x38] sm:$0xff]
      %v3413 = vld [vmem:[#allocation5 + $0x40] sm:$0xff]
      %v3414 = vld [vmem:[#allocation5 + $0x48] sm:$0xff]
      %v3415 = vld [vmem:[#allocation5 + $0x50] sm:$0xff]
      %v3416 = vld [vmem:[#allocation5 + $0x58] sm:$0xff]
      %v3417 = vld [vmem:[#allocation5 + $0x60] sm:$0xff]
      %v3418 = vld [vmem:[#allocation5 + $0x68] sm:$0xff]
      %v3419 = vld [vmem:[#allocation5 + $0x70] sm:$0xff]
      %v3420 = vld [vmem:[#allocation5 + $0x78] sm:$0xff]
      %v3421 = vadd.f32 %v3405, %v3389
      %v3422 = vadd.f32 %v3406, %v3390
      %v3423 = vadd.f32 %v3407, %v3391
      %v3424 = vadd.f32 %v3408, %v3392
      %v3425 = vadd.f32 %v3409, %v3393
      %v3426 = vadd.f32 %v3410, %v3394
      %v3427 = vadd.f32 %v3411, %v3395
      %v3428 = vadd.f32 %v3412, %v3396
      %v3429 = vadd.f32 %v3413, %v3397
      %v3430 = vadd.f32 %v3414, %v3398
      %v3431 = vadd.f32 %v3415, %v3399
      %v3432 = vadd.f32 %v3416, %v3400
      %v3433 = vadd.f32 %v3417, %v3401
      %v3434 = vadd.f32 %v3418, %v3402
      %v3435 = vadd.f32 %v3419, %v3403
      %v3436 = vadd.f32 %v3420, %v3404
      %3437 = vst [vmem:[#allocation5] sm:$0xff] %v3421
      %3438 = vst [vmem:[#allocation5 + $0x8] sm:$0xff] %v3422
      %3439 = vst [vmem:[#allocation5 + $0x10] sm:$0xff] %v3423
      %3440 = vst [vmem:[#allocation5 + $0x18] sm:$0xff] %v3424
      %3441 = vst [vmem:[#allocation5 + $0x20] sm:$0xff] %v3425
      %3442 = vst [vmem:[#allocation5 + $0x28] sm:$0xff] %v3426
      %3443 = vst [vmem:[#allocation5 + $0x30] sm:$0xff] %v3427
      %3444 = vst [vmem:[#allocation5 + $0x38] sm:$0xff] %v3428
      %3445 = vst [vmem:[#allocation5 + $0x40] sm:$0xff] %v3429
      %3446 = vst [vmem:[#allocation5 + $0x48] sm:$0xff] %v3430
      %3447 = vst [vmem:[#allocation5 + $0x50] sm:$0xff] %v3431
      %3448 = vst [vmem:[#allocation5 + $0x58] sm:$0xff] %v3432
      %3449 = vst [vmem:[#allocation5 + $0x60] sm:$0xff] %v3433
      %3450 = vst [vmem:[#allocation5 + $0x68] sm:$0xff] %v3434
      %3451 = vst [vmem:[#allocation5 + $0x70] sm:$0xff] %v3435
      %3452 = vst [vmem:[#allocation5 + $0x78] sm:$0xff] %v3436
      %3453 = vrot.lane.b32.xlu0 %v3200, 32
      %v3454 = vpop.permute.xlu0 %3453
      %3455 = vrot.lane.b32.xlu0 %v3204, 32
      %v3456 = vpop.permute.xlu0 %3455
      %3457 = vrot.lane.b32.xlu0 %v3208, 32
      %v3458 = vpop.permute.xlu0 %3457
      %3459 = vrot.lane.b32.xlu0 %v3212, 32
      %v3460 = vpop.permute.xlu0 %3459
      %3461 = vrot.lane.b32.xlu0 %v3201, 32
      %v3462 = vpop.permute.xlu0 %3461
      %3463 = vrot.lane.b32.xlu0 %v3205, 32
      %v3464 = vpop.permute.xlu0 %3463
      %3465 = vrot.lane.b32.xlu0 %v3209, 32
      %v3466 = vpop.permute.xlu0 %3465
      %3467 = vrot.lane.b32.xlu0 %v3213, 32
      %v3468 = vpop.permute.xlu0 %3467
      %3469 = vrot.lane.b32.xlu0 %v3202, 32
      %v3470 = vpop.permute.xlu0 %3469
      %3471 = vrot.lane.b32.xlu0 %v3206, 32
      %v3472 = vpop.permute.xlu0 %3471
      %3473 = vrot.lane.b32.xlu0 %v3210, 32
      %v3474 = vpop.permute.xlu0 %3473
      %3475 = vrot.lane.b32.xlu0 %v3214, 32
      %v3476 = vpop.permute.xlu0 %3475
      %3477 = vrot.lane.b32.xlu0 %v3203, 32
      %v3478 = vpop.permute.xlu0 %3477
      %3479 = vrot.lane.b32.xlu0 %v3207, 32
      %v3480 = vpop.permute.xlu0 %3479
      %3481 = vrot.lane.b32.xlu0 %v3211, 32
      %v3482 = vpop.permute.xlu0 %3481
      %3483 = vrot.lane.b32.xlu0 %v3215, 32
      %v3484 = vpop.permute.xlu0 %3483
      %v3485 = vsel %vm978, %v3470, %v3478
      %v3486 = vsel %vm978, %v3472, %v3480
      %v3487 = vsel %vm978, %v3474, %v3482
      %v3488 = vsel %vm978, %v3476, %v3484
      %v3489 = vsel %vm978, %v3462, %v3470
      %v3490 = vsel %vm978, %v3464, %v3472
      %v3491 = vsel %vm978, %v3466, %v3474
      %v3492 = vsel %vm978, %v3468, %v3476
      %v3493 = vsel %vm978, %v3454, %v3462
      %v3494 = vsel %vm978, %v3456, %v3464
      %v3495 = vsel %vm978, %v3458, %v3466
      %v3496 = vsel %vm978, %v3460, %v3468
      %v3497 = vsel %vm978, %v3478, %v3454
      %v3498 = vsel %vm978, %v3480, %v3456
      %v3499 = vsel %vm978, %v3482, %v3458
      %v3500 = vsel %vm978, %v3484, %v3460
      %s3501 = scalar_lea.vmem %s555, 2
      %v3502 = vld [vmem:[%s3501] ss:$8 sm:$0xf]
      %v3504 = vlaneseq
      %v3505 = vshrl.u32 %v3504, 7
      %v3506 = vsub.s32 0, %v3505
      %v3507 = vrot.slane %v3502, %v3506
      %v3508 = vlaneseq
      %v3509 = vshrl.u32 %v3508, 7
      %v3510 = vsub.s32 1, %v3509
      %v3511 = vrot.slane %v3502, %v3510
      %v3512 = vlaneseq
      %v3513 = vshrl.u32 %v3512, 7
      %v3514 = vsub.s32 2, %v3513
      %v3515 = vrot.slane %v3502, %v3514
      %v3516 = vlaneseq
      %v3517 = vshrl.u32 %v3516, 7
      %v3518 = vsub.s32 3, %v3517
      %v3519 = vrot.slane %v3502, %v3518
      %v3524 = vmul.f32 %v3497, %v3507
      %v3525 = vmul.f32 %v3493, %v3511
      %v3526 = vmul.f32 %v3489, %v3515
      %v3527 = vmul.f32 %v3485, %v3519
      %v3528 = vmul.f32 %v3498, %v3507
      %v3529 = vmul.f32 %v3494, %v3511
      %v3530 = vmul.f32 %v3490, %v3515
      %v3531 = vmul.f32 %v3486, %v3519
      %v3532 = vmul.f32 %v3499, %v3507
      %v3533 = vmul.f32 %v3495, %v3511
      %v3534 = vmul.f32 %v3491, %v3515
      %v3535 = vmul.f32 %v3487, %v3519
      %v3536 = vmul.f32 %v3500, %v3507
      %v3537 = vmul.f32 %v3496, %v3511
      %v3538 = vmul.f32 %v3492, %v3515
      %v3539 = vmul.f32 %v3488, %v3519
      %v3540 = vld [vmem:[#allocation5] sm:$0xff]
      %v3541 = vld [vmem:[#allocation5 + $0x8] sm:$0xff]
      %v3542 = vld [vmem:[#allocation5 + $0x10] sm:$0xff]
      %v3543 = vld [vmem:[#allocation5 + $0x18] sm:$0xff]
      %v3544 = vld [vmem:[#allocation5 + $0x20] sm:$0xff]
      %v3545 = vld [vmem:[#allocation5 + $0x28] sm:$0xff]
      %v3546 = vld [vmem:[#allocation5 + $0x30] sm:$0xff]
      %v3547 = vld [vmem:[#allocation5 + $0x38] sm:$0xff]
      %v3548 = vld [vmem:[#allocation5 + $0x40] sm:$0xff]
      %v3549 = vld [vmem:[#allocation5 + $0x48] sm:$0xff]
      %v3550 = vld [vmem:[#allocation5 + $0x50] sm:$0xff]
      %v3551 = vld [vmem:[#allocation5 + $0x58] sm:$0xff]
      %v3552 = vld [vmem:[#allocation5 + $0x60] sm:$0xff]
      %v3553 = vld [vmem:[#allocation5 + $0x68] sm:$0xff]
      %v3554 = vld [vmem:[#allocation5 + $0x70] sm:$0xff]
      %v3555 = vld [vmem:[#allocation5 + $0x78] sm:$0xff]
      %v3556 = vadd.f32 %v3540, %v3524
      %v3557 = vadd.f32 %v3541, %v3525
      %v3558 = vadd.f32 %v3542, %v3526
      %v3559 = vadd.f32 %v3543, %v3527
      %v3560 = vadd.f32 %v3544, %v3528
      %v3561 = vadd.f32 %v3545, %v3529
      %v3562 = vadd.f32 %v3546, %v3530
      %v3563 = vadd.f32 %v3547, %v3531
      %v3564 = vadd.f32 %v3548, %v3532
      %v3565 = vadd.f32 %v3549, %v3533
      %v3566 = vadd.f32 %v3550, %v3534
      %v3567 = vadd.f32 %v3551, %v3535
      %v3568 = vadd.f32 %v3552, %v3536
      %v3569 = vadd.f32 %v3553, %v3537
      %v3570 = vadd.f32 %v3554, %v3538
      %v3571 = vadd.f32 %v3555, %v3539
      %3572 = vst [vmem:[#allocation5] sm:$0xff] %v3556
      %3573 = vst [vmem:[#allocation5 + $0x8] sm:$0xff] %v3557
      %3574 = vst [vmem:[#allocation5 + $0x10] sm:$0xff] %v3558
      %3575 = vst [vmem:[#allocation5 + $0x18] sm:$0xff] %v3559
      %3576 = vst [vmem:[#allocation5 + $0x20] sm:$0xff] %v3560
      %3577 = vst [vmem:[#allocation5 + $0x28] sm:$0xff] %v3561
      %3578 = vst [vmem:[#allocation5 + $0x30] sm:$0xff] %v3562
      %3579 = vst [vmem:[#allocation5 + $0x38] sm:$0xff] %v3563
      %3580 = vst [vmem:[#allocation5 + $0x40] sm:$0xff] %v3564
      %3581 = vst [vmem:[#allocation5 + $0x48] sm:$0xff] %v3565
      %3582 = vst [vmem:[#allocation5 + $0x50] sm:$0xff] %v3566
      %3583 = vst [vmem:[#allocation5 + $0x58] sm:$0xff] %v3567
      %3584 = vst [vmem:[#allocation5 + $0x60] sm:$0xff] %v3568
      %3585 = vst [vmem:[#allocation5 + $0x68] sm:$0xff] %v3569
      %3586 = vst [vmem:[#allocation5 + $0x70] sm:$0xff] %v3570
      %3587 = vst [vmem:[#allocation5 + $0x78] sm:$0xff] %v3571
      %v3588 = vld [vmem:[%s545] ss:$4 sm:$0xf]
      %v3590 = vlaneseq
      %v3591 = vshrl.u32 %v3590, 7
      %v3592 = vsub.s32 0, %v3591
      %v3593 = vrot.slane %v3588, %v3592
      %v3594 = vlaneseq
      %v3595 = vshrl.u32 %v3594, 7
      %v3596 = vsub.s32 1, %v3595
      %v3597 = vrot.slane %v3588, %v3596
      %v3598 = vlaneseq
      %v3599 = vshrl.u32 %v3598, 7
      %v3600 = vsub.s32 2, %v3599
      %v3601 = vrot.slane %v3588, %v3600
      %v3602 = vlaneseq
      %v3603 = vshrl.u32 %v3602, 7
      %v3604 = vsub.s32 3, %v3603
      %v3605 = vrot.slane %v3588, %v3604
      %v3610 = vmul.f32 %v3497, %v3593
      %v3611 = vmul.f32 %v3493, %v3597
      %v3612 = vmul.f32 %v3489, %v3601
      %v3613 = vmul.f32 %v3485, %v3605
      %v3614 = vmul.f32 %v3498, %v3593
      %v3615 = vmul.f32 %v3494, %v3597
      %v3616 = vmul.f32 %v3490, %v3601
      %v3617 = vmul.f32 %v3486, %v3605
      %v3618 = vmul.f32 %v3499, %v3593
      %v3619 = vmul.f32 %v3495, %v3597
      %v3620 = vmul.f32 %v3491, %v3601
      %v3621 = vmul.f32 %v3487, %v3605
      %v3622 = vmul.f32 %v3500, %v3593
      %v3623 = vmul.f32 %v3496, %v3597
      %v3624 = vmul.f32 %v3492, %v3601
      %v3625 = vmul.f32 %v3488, %v3605
      %3626 = vst [vmem:[#allocation4] sm:$0xff] %v3610
      %3627 = vst [vmem:[#allocation4 + $0x8] sm:$0xff] %v3611
      %3628 = vst [vmem:[#allocation4 + $0x10] sm:$0xff] %v3612
      %3629 = vst [vmem:[#allocation4 + $0x18] sm:$0xff] %v3613
      %3630 = vst [vmem:[#allocation4 + $0x20] sm:$0xff] %v3614
      %3631 = vst [vmem:[#allocation4 + $0x28] sm:$0xff] %v3615
      %3632 = vst [vmem:[#allocation4 + $0x30] sm:$0xff] %v3616
      %3633 = vst [vmem:[#allocation4 + $0x38] sm:$0xff] %v3617
      %3634 = vst [vmem:[#allocation4 + $0x40] sm:$0xff] %v3618
      %3635 = vst [vmem:[#allocation4 + $0x48] sm:$0xff] %v3619
      %3636 = vst [vmem:[#allocation4 + $0x50] sm:$0xff] %v3620
      %3637 = vst [vmem:[#allocation4 + $0x58] sm:$0xff] %v3621
      %3638 = vst [vmem:[#allocation4 + $0x60] sm:$0xff] %v3622
      %3639 = vst [vmem:[#allocation4 + $0x68] sm:$0xff] %v3623
      %3640 = vst [vmem:[#allocation4 + $0x70] sm:$0xff] %v3624
      %3641 = vst [vmem:[#allocation4 + $0x78] sm:$0xff] %v3625
      %s3642 = scalar_lea.vmem %s555, 3
      %v3643 = vld [vmem:[%s3642] ss:$8 sm:$0xf]
      %v3645 = vlaneseq
      %v3646 = vshrl.u32 %v3645, 7
      %v3647 = vsub.s32 0, %v3646
      %v3648 = vrot.slane %v3643, %v3647
      %v3649 = vlaneseq
      %v3650 = vshrl.u32 %v3649, 7
      %v3651 = vsub.s32 1, %v3650
      %v3652 = vrot.slane %v3643, %v3651
      %v3653 = vlaneseq
      %v3654 = vshrl.u32 %v3653, 7
      %v3655 = vsub.s32 2, %v3654
      %v3656 = vrot.slane %v3643, %v3655
      %v3657 = vlaneseq
      %v3658 = vshrl.u32 %v3657, 7
      %v3659 = vsub.s32 3, %v3658
      %v3660 = vrot.slane %v3643, %v3659
      %v3665 = vmul.f32 %v3200, %v3648
      %v3666 = vmul.f32 %v3201, %v3652
      %v3667 = vmul.f32 %v3202, %v3656
      %v3668 = vmul.f32 %v3203, %v3660
      %v3669 = vmul.f32 %v3204, %v3648
      %v3670 = vmul.f32 %v3205, %v3652
      %v3671 = vmul.f32 %v3206, %v3656
      %v3672 = vmul.f32 %v3207, %v3660
      %v3673 = vmul.f32 %v3208, %v3648
      %v3674 = vmul.f32 %v3209, %v3652
      %v3675 = vmul.f32 %v3210, %v3656
      %v3676 = vmul.f32 %v3211, %v3660
      %v3677 = vmul.f32 %v3212, %v3648
      %v3678 = vmul.f32 %v3213, %v3652
      %v3679 = vmul.f32 %v3214, %v3656
      %v3680 = vmul.f32 %v3215, %v3660
      %v3681 = vld [vmem:[#allocation5] sm:$0xff]
      %v3682 = vld [vmem:[#allocation5 + $0x8] sm:$0xff]
      %v3683 = vld [vmem:[#allocation5 + $0x10] sm:$0xff]
      %v3684 = vld [vmem:[#allocation5 + $0x18] sm:$0xff]
      %v3685 = vld [vmem:[#allocation5 + $0x20] sm:$0xff]
      %v3686 = vld [vmem:[#allocation5 + $0x28] sm:$0xff]
      %v3687 = vld [vmem:[#allocation5 + $0x30] sm:$0xff]
      %v3688 = vld [vmem:[#allocation5 + $0x38] sm:$0xff]
      %v3689 = vld [vmem:[#allocation5 + $0x40] sm:$0xff]
      %v3690 = vld [vmem:[#allocation5 + $0x48] sm:$0xff]
      %v3691 = vld [vmem:[#allocation5 + $0x50] sm:$0xff]
      %v3692 = vld [vmem:[#allocation5 + $0x58] sm:$0xff]
      %v3693 = vld [vmem:[#allocation5 + $0x60] sm:$0xff]
      %v3694 = vld [vmem:[#allocation5 + $0x68] sm:$0xff]
      %v3695 = vld [vmem:[#allocation5 + $0x70] sm:$0xff]
      %v3696 = vld [vmem:[#allocation5 + $0x78] sm:$0xff]
      %v3697 = vadd.f32 %v3681, %v3665
      %v3698 = vadd.f32 %v3682, %v3666
      %v3699 = vadd.f32 %v3683, %v3667
      %v3700 = vadd.f32 %v3684, %v3668
      %v3701 = vadd.f32 %v3685, %v3669
      %v3702 = vadd.f32 %v3686, %v3670
      %v3703 = vadd.f32 %v3687, %v3671
      %v3704 = vadd.f32 %v3688, %v3672
      %v3705 = vadd.f32 %v3689, %v3673
      %v3706 = vadd.f32 %v3690, %v3674
      %v3707 = vadd.f32 %v3691, %v3675
      %v3708 = vadd.f32 %v3692, %v3676
      %v3709 = vadd.f32 %v3693, %v3677
      %v3710 = vadd.f32 %v3694, %v3678
      %v3711 = vadd.f32 %v3695, %v3679
      %v3712 = vadd.f32 %v3696, %v3680
      %3713 = vst [vmem:[#allocation5] sm:$0xff] %v3697
      %3714 = vst [vmem:[#allocation5 + $0x8] sm:$0xff] %v3698
      %3715 = vst [vmem:[#allocation5 + $0x10] sm:$0xff] %v3699
      %3716 = vst [vmem:[#allocation5 + $0x18] sm:$0xff] %v3700
      %3717 = vst [vmem:[#allocation5 + $0x20] sm:$0xff] %v3701
      %3718 = vst [vmem:[#allocation5 + $0x28] sm:$0xff] %v3702
      %3719 = vst [vmem:[#allocation5 + $0x30] sm:$0xff] %v3703
      %3720 = vst [vmem:[#allocation5 + $0x38] sm:$0xff] %v3704
      %3721 = vst [vmem:[#allocation5 + $0x40] sm:$0xff] %v3705
      %3722 = vst [vmem:[#allocation5 + $0x48] sm:$0xff] %v3706
      %3723 = vst [vmem:[#allocation5 + $0x50] sm:$0xff] %v3707
      %3724 = vst [vmem:[#allocation5 + $0x58] sm:$0xff] %v3708
      %3725 = vst [vmem:[#allocation5 + $0x60] sm:$0xff] %v3709
      %3726 = vst [vmem:[#allocation5 + $0x68] sm:$0xff] %v3710
      %3727 = vst [vmem:[#allocation5 + $0x70] sm:$0xff] %v3711
      %3728 = vst [vmem:[#allocation5 + $0x78] sm:$0xff] %v3712
      %s3729 = scalar_lea.vmem %s545, 1
      %v3730 = vld [vmem:[%s3729] ss:$4 sm:$0xf]
      %v3732 = vlaneseq
      %v3733 = vshrl.u32 %v3732, 7
      %v3734 = vsub.s32 0, %v3733
      %v3735 = vrot.slane %v3730, %v3734
      %v3736 = vlaneseq
      %v3737 = vshrl.u32 %v3736, 7
      %v3738 = vsub.s32 1, %v3737
      %v3739 = vrot.slane %v3730, %v3738
      %v3740 = vlaneseq
      %v3741 = vshrl.u32 %v3740, 7
      %v3742 = vsub.s32 2, %v3741
      %v3743 = vrot.slane %v3730, %v3742
      %v3744 = vlaneseq
      %v3745 = vshrl.u32 %v3744, 7
      %v3746 = vsub.s32 3, %v3745
      %v3747 = vrot.slane %v3730, %v3746
      %v3752 = vmul.f32 %v3200, %v3735
      %v3753 = vmul.f32 %v3201, %v3739
      %v3754 = vmul.f32 %v3202, %v3743
      %v3755 = vmul.f32 %v3203, %v3747
      %v3756 = vmul.f32 %v3204, %v3735
      %v3757 = vmul.f32 %v3205, %v3739
      %v3758 = vmul.f32 %v3206, %v3743
      %v3759 = vmul.f32 %v3207, %v3747
      %v3760 = vmul.f32 %v3208, %v3735
      %v3761 = vmul.f32 %v3209, %v3739
      %v3762 = vmul.f32 %v3210, %v3743
      %v3763 = vmul.f32 %v3211, %v3747
      %v3764 = vmul.f32 %v3212, %v3735
      %v3765 = vmul.f32 %v3213, %v3739
      %v3766 = vmul.f32 %v3214, %v3743
      %v3767 = vmul.f32 %v3215, %v3747
      %v3768 = vld [vmem:[#allocation4] sm:$0xff]
      %v3769 = vld [vmem:[#allocation4 + $0x8] sm:$0xff]
      %v3770 = vld [vmem:[#allocation4 + $0x10] sm:$0xff]
      %v3771 = vld [vmem:[#allocation4 + $0x18] sm:$0xff]
      %v3772 = vld [vmem:[#allocation4 + $0x20] sm:$0xff]
      %v3773 = vld [vmem:[#allocation4 + $0x28] sm:$0xff]
      %v3774 = vld [vmem:[#allocation4 + $0x30] sm:$0xff]
      %v3775 = vld [vmem:[#allocation4 + $0x38] sm:$0xff]
      %v3776 = vld [vmem:[#allocation4 + $0x40] sm:$0xff]
      %v3777 = vld [vmem:[#allocation4 + $0x48] sm:$0xff]
      %v3778 = vld [vmem:[#allocation4 + $0x50] sm:$0xff]
      %v3779 = vld [vmem:[#allocation4 + $0x58] sm:$0xff]
      %v3780 = vld [vmem:[#allocation4 + $0x60] sm:$0xff]
      %v3781 = vld [vmem:[#allocation4 + $0x68] sm:$0xff]
      %v3782 = vld [vmem:[#allocation4 + $0x70] sm:$0xff]
      %v3783 = vld [vmem:[#allocation4 + $0x78] sm:$0xff]
      %v3784 = vadd.f32 %v3768, %v3752
      %v3785 = vadd.f32 %v3769, %v3753
      %v3786 = vadd.f32 %v3770, %v3754
      %v3787 = vadd.f32 %v3771, %v3755
      %v3788 = vadd.f32 %v3772, %v3756
      %v3789 = vadd.f32 %v3773, %v3757
      %v3790 = vadd.f32 %v3774, %v3758
      %v3791 = vadd.f32 %v3775, %v3759
      %v3792 = vadd.f32 %v3776, %v3760
      %v3793 = vadd.f32 %v3777, %v3761
      %v3794 = vadd.f32 %v3778, %v3762
      %v3795 = vadd.f32 %v3779, %v3763
      %v3796 = vadd.f32 %v3780, %v3764
      %v3797 = vadd.f32 %v3781, %v3765
      %v3798 = vadd.f32 %v3782, %v3766
      %v3799 = vadd.f32 %v3783, %v3767
      %3800 = vst [vmem:[#allocation4] sm:$0xff] %v3784
      %3801 = vst [vmem:[#allocation4 + $0x8] sm:$0xff] %v3785
      %3802 = vst [vmem:[#allocation4 + $0x10] sm:$0xff] %v3786
      %3803 = vst [vmem:[#allocation4 + $0x18] sm:$0xff] %v3787
      %3804 = vst [vmem:[#allocation4 + $0x20] sm:$0xff] %v3788
      %3805 = vst [vmem:[#allocation4 + $0x28] sm:$0xff] %v3789
      %3806 = vst [vmem:[#allocation4 + $0x30] sm:$0xff] %v3790
      %3807 = vst [vmem:[#allocation4 + $0x38] sm:$0xff] %v3791
      %3808 = vst [vmem:[#allocation4 + $0x40] sm:$0xff] %v3792
      %3809 = vst [vmem:[#allocation4 + $0x48] sm:$0xff] %v3793
      %3810 = vst [vmem:[#allocation4 + $0x50] sm:$0xff] %v3794
      %3811 = vst [vmem:[#allocation4 + $0x58] sm:$0xff] %v3795
      %3812 = vst [vmem:[#allocation4 + $0x60] sm:$0xff] %v3796
      %3813 = vst [vmem:[#allocation4 + $0x68] sm:$0xff] %v3797
      %3814 = vst [vmem:[#allocation4 + $0x70] sm:$0xff] %v3798
      %3815 = vst [vmem:[#allocation4 + $0x78] sm:$0xff] %v3799
      %s3816 = scalar_lea.vmem %s555, 4
      %v3817 = vld [vmem:[%s3816] ss:$8 sm:$0xf]
      %v3819 = vlaneseq
      %v3820 = vshrl.u32 %v3819, 7
      %v3821 = vsub.s32 0, %v3820
      %v3822 = vrot.slane %v3817, %v3821
      %v3823 = vlaneseq
      %v3824 = vshrl.u32 %v3823, 7
      %v3825 = vsub.s32 1, %v3824
      %v3826 = vrot.slane %v3817, %v3825
      %v3827 = vlaneseq
      %v3828 = vshrl.u32 %v3827, 7
      %v3829 = vsub.s32 2, %v3828
      %v3830 = vrot.slane %v3817, %v3829
      %v3831 = vlaneseq
      %v3832 = vshrl.u32 %v3831, 7
      %v3833 = vsub.s32 3, %v3832
      %v3834 = vrot.slane %v3817, %v3833
      %v3839 = vmul.f32 %v3256, %v3822
      %v3840 = vmul.f32 %v3252, %v3826
      %v3841 = vmul.f32 %v3248, %v3830
      %v3842 = vmul.f32 %v3260, %v3834
      %v3843 = vmul.f32 %v3257, %v3822
      %v3844 = vmul.f32 %v3253, %v3826
      %v3845 = vmul.f32 %v3249, %v3830
      %v3846 = vmul.f32 %v3261, %v3834
      %v3847 = vmul.f32 %v3258, %v3822
      %v3848 = vmul.f32 %v3254, %v3826
      %v3849 = vmul.f32 %v3250, %v3830
      %v3850 = vmul.f32 %v3262, %v3834
      %v3851 = vmul.f32 %v3259, %v3822
      %v3852 = vmul.f32 %v3255, %v3826
      %v3853 = vmul.f32 %v3251, %v3830
      %v3854 = vmul.f32 %v3263, %v3834
      %v3855 = vld [vmem:[#allocation5] sm:$0xff]
      %v3856 = vld [vmem:[#allocation5 + $0x8] sm:$0xff]
      %v3857 = vld [vmem:[#allocation5 + $0x10] sm:$0xff]
      %v3858 = vld [vmem:[#allocation5 + $0x18] sm:$0xff]
      %v3859 = vld [vmem:[#allocation5 + $0x20] sm:$0xff]
      %v3860 = vld [vmem:[#allocation5 + $0x28] sm:$0xff]
      %v3861 = vld [vmem:[#allocation5 + $0x30] sm:$0xff]
      %v3862 = vld [vmem:[#allocation5 + $0x38] sm:$0xff]
      %v3863 = vld [vmem:[#allocation5 + $0x40] sm:$0xff]
      %v3864 = vld [vmem:[#allocation5 + $0x48] sm:$0xff]
      %v3865 = vld [vmem:[#allocation5 + $0x50] sm:$0xff]
      %v3866 = vld [vmem:[#allocation5 + $0x58] sm:$0xff]
      %v3867 = vld [vmem:[#allocation5 + $0x60] sm:$0xff]
      %v3868 = vld [vmem:[#allocation5 + $0x68] sm:$0xff]
      %v3869 = vld [vmem:[#allocation5 + $0x70] sm:$0xff]
      %v3870 = vld [vmem:[#allocation5 + $0x78] sm:$0xff]
      %v3871 = vadd.f32 %v3855, %v3839
      %v3872 = vadd.f32 %v3856, %v3840
      %v3873 = vadd.f32 %v3857, %v3841
      %v3874 = vadd.f32 %v3858, %v3842
      %v3875 = vadd.f32 %v3859, %v3843
      %v3876 = vadd.f32 %v3860, %v3844
      %v3877 = vadd.f32 %v3861, %v3845
      %v3878 = vadd.f32 %v3862, %v3846
      %v3879 = vadd.f32 %v3863, %v3847
      %v3880 = vadd.f32 %v3864, %v3848
      %v3881 = vadd.f32 %v3865, %v3849
      %v3882 = vadd.f32 %v3866, %v3850
      %v3883 = vadd.f32 %v3867, %v3851
      %v3884 = vadd.f32 %v3868, %v3852
      %v3885 = vadd.f32 %v3869, %v3853
      %v3886 = vadd.f32 %v3870, %v3854
      %3887 = vst [vmem:[#allocation5] sm:$0xff] %v3871
      %3888 = vst [vmem:[#allocation5 + $0x8] sm:$0xff] %v3872
      %3889 = vst [vmem:[#allocation5 + $0x10] sm:$0xff] %v3873
      %3890 = vst [vmem:[#allocation5 + $0x18] sm:$0xff] %v3874
      %3891 = vst [vmem:[#allocation5 + $0x20] sm:$0xff] %v3875
      %3892 = vst [vmem:[#allocation5 + $0x28] sm:$0xff] %v3876
      %3893 = vst [vmem:[#allocation5 + $0x30] sm:$0xff] %v3877
      %3894 = vst [vmem:[#allocation5 + $0x38] sm:$0xff] %v3878
      %3895 = vst [vmem:[#allocation5 + $0x40] sm:$0xff] %v3879
      %3896 = vst [vmem:[#allocation5 + $0x48] sm:$0xff] %v3880
      %3897 = vst [vmem:[#allocation5 + $0x50] sm:$0xff] %v3881
      %3898 = vst [vmem:[#allocation5 + $0x58] sm:$0xff] %v3882
      %3899 = vst [vmem:[#allocation5 + $0x60] sm:$0xff] %v3883
      %3900 = vst [vmem:[#allocation5 + $0x68] sm:$0xff] %v3884
      %3901 = vst [vmem:[#allocation5 + $0x70] sm:$0xff] %v3885
      %3902 = vst [vmem:[#allocation5 + $0x78] sm:$0xff] %v3886
      %s3903 = scalar_lea.vmem %s545, 2
      %v3904 = vld [vmem:[%s3903] ss:$4 sm:$0xf]
      %v3906 = vlaneseq
      %v3907 = vshrl.u32 %v3906, 7
      %v3908 = vsub.s32 0, %v3907
      %v3909 = vrot.slane %v3904, %v3908
      %v3910 = vlaneseq
      %v3911 = vshrl.u32 %v3910, 7
      %v3912 = vsub.s32 1, %v3911
      %v3913 = vrot.slane %v3904, %v3912
      %v3914 = vlaneseq
      %v3915 = vshrl.u32 %v3914, 7
      %v3916 = vsub.s32 2, %v3915
      %v3917 = vrot.slane %v3904, %v3916
      %v3918 = vlaneseq
      %v3919 = vshrl.u32 %v3918, 7
      %v3920 = vsub.s32 3, %v3919
      %v3921 = vrot.slane %v3904, %v3920
      %v3926 = vmul.f32 %v3256, %v3909
      %v3927 = vmul.f32 %v3252, %v3913
      %v3928 = vmul.f32 %v3248, %v3917
      %v3929 = vmul.f32 %v3260, %v3921
      %v3930 = vmul.f32 %v3257, %v3909
      %v3931 = vmul.f32 %v3253, %v3913
      %v3932 = vmul.f32 %v3249, %v3917
      %v3933 = vmul.f32 %v3261, %v3921
      %v3934 = vmul.f32 %v3258, %v3909
      %v3935 = vmul.f32 %v3254, %v3913
      %v3936 = vmul.f32 %v3250, %v3917
      %v3937 = vmul.f32 %v3262, %v3921
      %v3938 = vmul.f32 %v3259, %v3909
      %v3939 = vmul.f32 %v3255, %v3913
      %v3940 = vmul.f32 %v3251, %v3917
      %v3941 = vmul.f32 %v3263, %v3921
      %v3942 = vld [vmem:[#allocation4] sm:$0xff]
      %v3943 = vld [vmem:[#allocation4 + $0x8] sm:$0xff]
      %v3944 = vld [vmem:[#allocation4 + $0x10] sm:$0xff]
      %v3945 = vld [vmem:[#allocation4 + $0x18] sm:$0xff]
      %v3946 = vld [vmem:[#allocation4 + $0x20] sm:$0xff]
      %v3947 = vld [vmem:[#allocation4 + $0x28] sm:$0xff]
      %v3948 = vld [vmem:[#allocation4 + $0x30] sm:$0xff]
      %v3949 = vld [vmem:[#allocation4 + $0x38] sm:$0xff]
      %v3950 = vld [vmem:[#allocation4 + $0x40] sm:$0xff]
      %v3951 = vld [vmem:[#allocation4 + $0x48] sm:$0xff]
      %v3952 = vld [vmem:[#allocation4 + $0x50] sm:$0xff]
      %v3953 = vld [vmem:[#allocation4 + $0x58] sm:$0xff]
      %v3954 = vld [vmem:[#allocation4 + $0x60] sm:$0xff]
      %v3955 = vld [vmem:[#allocation4 + $0x68] sm:$0xff]
      %v3956 = vld [vmem:[#allocation4 + $0x70] sm:$0xff]
      %v3957 = vld [vmem:[#allocation4 + $0x78] sm:$0xff]
      %v3958 = vadd.f32 %v3942, %v3926
      %v3959 = vadd.f32 %v3943, %v3927
      %v3960 = vadd.f32 %v3944, %v3928
      %v3961 = vadd.f32 %v3945, %v3929
      %v3962 = vadd.f32 %v3946, %v3930
      %v3963 = vadd.f32 %v3947, %v3931
      %v3964 = vadd.f32 %v3948, %v3932
      %v3965 = vadd.f32 %v3949, %v3933
      %v3966 = vadd.f32 %v3950, %v3934
      %v3967 = vadd.f32 %v3951, %v3935
      %v3968 = vadd.f32 %v3952, %v3936
      %v3969 = vadd.f32 %v3953, %v3937
      %v3970 = vadd.f32 %v3954, %v3938
      %v3971 = vadd.f32 %v3955, %v3939
      %v3972 = vadd.f32 %v3956, %v3940
      %v3973 = vadd.f32 %v3957, %v3941
      %3974 = vst [vmem:[#allocation4] sm:$0xff] %v3958
      %3975 = vst [vmem:[#allocation4 + $0x8] sm:$0xff] %v3959
      %3976 = vst [vmem:[#allocation4 + $0x10] sm:$0xff] %v3960
      %3977 = vst [vmem:[#allocation4 + $0x18] sm:$0xff] %v3961
      %3978 = vst [vmem:[#allocation4 + $0x20] sm:$0xff] %v3962
      %3979 = vst [vmem:[#allocation4 + $0x28] sm:$0xff] %v3963
      %3980 = vst [vmem:[#allocation4 + $0x30] sm:$0xff] %v3964
      %3981 = vst [vmem:[#allocation4 + $0x38] sm:$0xff] %v3965
      %3982 = vst [vmem:[#allocation4 + $0x40] sm:$0xff] %v3966
      %3983 = vst [vmem:[#allocation4 + $0x48] sm:$0xff] %v3967
      %3984 = vst [vmem:[#allocation4 + $0x50] sm:$0xff] %v3968
      %3985 = vst [vmem:[#allocation4 + $0x58] sm:$0xff] %v3969
      %3986 = vst [vmem:[#allocation4 + $0x60] sm:$0xff] %v3970
      %3987 = vst [vmem:[#allocation4 + $0x68] sm:$0xff] %v3971
      %3988 = vst [vmem:[#allocation4 + $0x70] sm:$0xff] %v3972
      %3989 = vst [vmem:[#allocation4 + $0x78] sm:$0xff] %v3973
      %s3990 = scalar_lea.vmem %s555, 5
      %v3991 = vld [vmem:[%s3990] ss:$8 sm:$0xf]
      %v3993 = vlaneseq
      %v3994 = vshrl.u32 %v3993, 7
      %v3995 = vsub.s32 0, %v3994
      %v3996 = vrot.slane %v3991, %v3995
      %v3997 = vlaneseq
      %v3998 = vshrl.u32 %v3997, 7
      %v3999 = vsub.s32 1, %v3998
      %v4000 = vrot.slane %v3991, %v3999
      %v4001 = vlaneseq
      %v4002 = vshrl.u32 %v4001, 7
      %v4003 = vsub.s32 2, %v4002
      %v4004 = vrot.slane %v3991, %v4003
      %v4005 = vlaneseq
      %v4006 = vshrl.u32 %v4005, 7
      %v4007 = vsub.s32 3, %v4006
      %v4008 = vrot.slane %v3991, %v4007
      %v4013 = vmul.f32 %v3358, %v3996
      %v4014 = vmul.f32 %v3354, %v4000
      %v4015 = vmul.f32 %v3350, %v4004
      %v4016 = vmul.f32 %v3362, %v4008
      %v4017 = vmul.f32 %v3359, %v3996
      %v4018 = vmul.f32 %v3355, %v4000
      %v4019 = vmul.f32 %v3351, %v4004
      %v4020 = vmul.f32 %v3363, %v4008
      %v4021 = vmul.f32 %v3360, %v3996
      %v4022 = vmul.f32 %v3356, %v4000
      %v4023 = vmul.f32 %v3352, %v4004
      %v4024 = vmul.f32 %v3364, %v4008
      %v4025 = vmul.f32 %v3361, %v3996
      %v4026 = vmul.f32 %v3357, %v4000
      %v4027 = vmul.f32 %v3353, %v4004
      %v4028 = vmul.f32 %v3365, %v4008
      %v4029 = vld [vmem:[#allocation5] sm:$0xff]
      %v4030 = vld [vmem:[#allocation5 + $0x8] sm:$0xff]
      %v4031 = vld [vmem:[#allocation5 + $0x10] sm:$0xff]
      %v4032 = vld [vmem:[#allocation5 + $0x18] sm:$0xff]
      %v4033 = vld [vmem:[#allocation5 + $0x20] sm:$0xff]
      %v4034 = vld [vmem:[#allocation5 + $0x28] sm:$0xff]
      %v4035 = vld [vmem:[#allocation5 + $0x30] sm:$0xff]
      %v4036 = vld [vmem:[#allocation5 + $0x38] sm:$0xff]
      %v4037 = vld [vmem:[#allocation5 + $0x40] sm:$0xff]
      %v4038 = vld [vmem:[#allocation5 + $0x48] sm:$0xff]
      %v4039 = vld [vmem:[#allocation5 + $0x50] sm:$0xff]
      %v4040 = vld [vmem:[#allocation5 + $0x58] sm:$0xff]
      %v4041 = vld [vmem:[#allocation5 + $0x60] sm:$0xff]
      %v4042 = vld [vmem:[#allocation5 + $0x68] sm:$0xff]
      %v4043 = vld [vmem:[#allocation5 + $0x70] sm:$0xff]
      %v4044 = vld [vmem:[#allocation5 + $0x78] sm:$0xff]
      %v4045 = vadd.f32 %v4029, %v4013
      %v4046 = vadd.f32 %v4030, %v4014
      %v4047 = vadd.f32 %v4031, %v4015
      %v4048 = vadd.f32 %v4032, %v4016
      %v4049 = vadd.f32 %v4033, %v4017
      %v4050 = vadd.f32 %v4034, %v4018
      %v4051 = vadd.f32 %v4035, %v4019
      %v4052 = vadd.f32 %v4036, %v4020
      %v4053 = vadd.f32 %v4037, %v4021
      %v4054 = vadd.f32 %v4038, %v4022
      %v4055 = vadd.f32 %v4039, %v4023
      %v4056 = vadd.f32 %v4040, %v4024
      %v4057 = vadd.f32 %v4041, %v4025
      %v4058 = vadd.f32 %v4042, %v4026
      %v4059 = vadd.f32 %v4043, %v4027
      %v4060 = vadd.f32 %v4044, %v4028
      %4061 = vst [vmem:[#allocation5] sm:$0xff] %v4045
      %4062 = vst [vmem:[#allocation5 + $0x8] sm:$0xff] %v4046
      %4063 = vst [vmem:[#allocation5 + $0x10] sm:$0xff] %v4047
      %4064 = vst [vmem:[#allocation5 + $0x18] sm:$0xff] %v4048
      %4065 = vst [vmem:[#allocation5 + $0x20] sm:$0xff] %v4049
      %4066 = vst [vmem:[#allocation5 + $0x28] sm:$0xff] %v4050
      %4067 = vst [vmem:[#allocation5 + $0x30] sm:$0xff] %v4051
      %4068 = vst [vmem:[#allocation5 + $0x38] sm:$0xff] %v4052
      %4069 = vst [vmem:[#allocation5 + $0x40] sm:$0xff] %v4053
      %4070 = vst [vmem:[#allocation5 + $0x48] sm:$0xff] %v4054
      %4071 = vst [vmem:[#allocation5 + $0x50] sm:$0xff] %v4055
      %4072 = vst [vmem:[#allocation5 + $0x58] sm:$0xff] %v4056
      %4073 = vst [vmem:[#allocation5 + $0x60] sm:$0xff] %v4057
      %4074 = vst [vmem:[#allocation5 + $0x68] sm:$0xff] %v4058
      %4075 = vst [vmem:[#allocation5 + $0x70] sm:$0xff] %v4059
      %4076 = vst [vmem:[#allocation5 + $0x78] sm:$0xff] %v4060
      %s4077 = scalar_lea.vmem %s555, 6
      %v4078 = vld [vmem:[%s4077] ss:$8 sm:$0xf]
      %v4080 = vlaneseq
      %v4081 = vshrl.u32 %v4080, 7
      %v4082 = vsub.s32 0, %v4081
      %v4083 = vrot.slane %v4078, %v4082
      %v4084 = vlaneseq
      %v4085 = vshrl.u32 %v4084, 7
      %v4086 = vsub.s32 1, %v4085
      %v4087 = vrot.slane %v4078, %v4086
      %v4088 = vlaneseq
      %v4089 = vshrl.u32 %v4088, 7
      %v4090 = vsub.s32 2, %v4089
      %v4091 = vrot.slane %v4078, %v4090
      %v4092 = vlaneseq
      %v4093 = vshrl.u32 %v4092, 7
      %v4094 = vsub.s32 3, %v4093
      %v4095 = vrot.slane %v4078, %v4094
      %v4100 = vmul.f32 %v3493, %v4083
      %v4101 = vmul.f32 %v3489, %v4087
      %v4102 = vmul.f32 %v3485, %v4091
      %v4103 = vmul.f32 %v3497, %v4095
      %v4104 = vmul.f32 %v3494, %v4083
      %v4105 = vmul.f32 %v3490, %v4087
      %v4106 = vmul.f32 %v3486, %v4091
      %v4107 = vmul.f32 %v3498, %v4095
      %v4108 = vmul.f32 %v3495, %v4083
      %v4109 = vmul.f32 %v3491, %v4087
      %v4110 = vmul.f32 %v3487, %v4091
      %v4111 = vmul.f32 %v3499, %v4095
      %v4112 = vmul.f32 %v3496, %v4083
      %v4113 = vmul.f32 %v3492, %v4087
      %v4114 = vmul.f32 %v3488, %v4091
      %v4115 = vmul.f32 %v3500, %v4095
      %v4116 = vld [vmem:[#allocation5] sm:$0xff]
      %v4117 = vld [vmem:[#allocation5 + $0x8] sm:$0xff]
      %v4118 = vld [vmem:[#allocation5 + $0x10] sm:$0xff]
      %v4119 = vld [vmem:[#allocation5 + $0x18] sm:$0xff]
      %v4120 = vld [vmem:[#allocation5 + $0x20] sm:$0xff]
      %v4121 = vld [vmem:[#allocation5 + $0x28] sm:$0xff]
      %v4122 = vld [vmem:[#allocation5 + $0x30] sm:$0xff]
      %v4123 = vld [vmem:[#allocation5 + $0x38] sm:$0xff]
      %v4124 = vld [vmem:[#allocation5 + $0x40] sm:$0xff]
      %v4125 = vld [vmem:[#allocation5 + $0x48] sm:$0xff]
      %v4126 = vld [vmem:[#allocation5 + $0x50] sm:$0xff]
      %v4127 = vld [vmem:[#allocation5 + $0x58] sm:$0xff]
      %v4128 = vld [vmem:[#allocation5 + $0x60] sm:$0xff]
      %v4129 = vld [vmem:[#allocation5 + $0x68] sm:$0xff]
      %v4130 = vld [vmem:[#allocation5 + $0x70] sm:$0xff]
      %v4131 = vld [vmem:[#allocation5 + $0x78] sm:$0xff]
      %v4132 = vadd.f32 %v4116, %v4100
      %v4133 = vadd.f32 %v4117, %v4101
      %v4134 = vadd.f32 %v4118, %v4102
      %v4135 = vadd.f32 %v4119, %v4103
      %v4136 = vadd.f32 %v4120, %v4104
      %v4137 = vadd.f32 %v4121, %v4105
      %v4138 = vadd.f32 %v4122, %v4106
      %v4139 = vadd.f32 %v4123, %v4107
      %v4140 = vadd.f32 %v4124, %v4108
      %v4141 = vadd.f32 %v4125, %v4109
      %v4142 = vadd.f32 %v4126, %v4110
      %v4143 = vadd.f32 %v4127, %v4111
      %v4144 = vadd.f32 %v4128, %v4112
      %v4145 = vadd.f32 %v4129, %v4113
      %v4146 = vadd.f32 %v4130, %v4114
      %v4147 = vadd.f32 %v4131, %v4115
      %4148 = vst [vmem:[#allocation5] sm:$0xff] %v4132
      %4149 = vst [vmem:[#allocation5 + $0x8] sm:$0xff] %v4133
      %4150 = vst [vmem:[#allocation5 + $0x10] sm:$0xff] %v4134
      %4151 = vst [vmem:[#allocation5 + $0x18] sm:$0xff] %v4135
      %4152 = vst [vmem:[#allocation5 + $0x20] sm:$0xff] %v4136
      %4153 = vst [vmem:[#allocation5 + $0x28] sm:$0xff] %v4137
      %4154 = vst [vmem:[#allocation5 + $0x30] sm:$0xff] %v4138
      %4155 = vst [vmem:[#allocation5 + $0x38] sm:$0xff] %v4139
      %4156 = vst [vmem:[#allocation5 + $0x40] sm:$0xff] %v4140
      %4157 = vst [vmem:[#allocation5 + $0x48] sm:$0xff] %v4141
      %4158 = vst [vmem:[#allocation5 + $0x50] sm:$0xff] %v4142
      %4159 = vst [vmem:[#allocation5 + $0x58] sm:$0xff] %v4143
      %4160 = vst [vmem:[#allocation5 + $0x60] sm:$0xff] %v4144
      %4161 = vst [vmem:[#allocation5 + $0x68] sm:$0xff] %v4145
      %4162 = vst [vmem:[#allocation5 + $0x70] sm:$0xff] %v4146
      %4163 = vst [vmem:[#allocation5 + $0x78] sm:$0xff] %v4147
      %v4164 = vld [vmem:[#allocation5] sm:$0xff]
      %v4165 = vld [vmem:[#allocation5 + $0x8] sm:$0xff]
      %v4166 = vld [vmem:[#allocation5 + $0x10] sm:$0xff]
      %v4167 = vld [vmem:[#allocation5 + $0x18] sm:$0xff]
      %v4168 = vld [vmem:[#allocation5 + $0x20] sm:$0xff]
      %v4169 = vld [vmem:[#allocation5 + $0x28] sm:$0xff]
      %v4170 = vld [vmem:[#allocation5 + $0x30] sm:$0xff]
      %v4171 = vld [vmem:[#allocation5 + $0x38] sm:$0xff]
      %v4172 = vld [vmem:[#allocation5 + $0x40] sm:$0xff]
      %v4173 = vld [vmem:[#allocation5 + $0x48] sm:$0xff]
      %v4174 = vld [vmem:[#allocation5 + $0x50] sm:$0xff]
      %v4175 = vld [vmem:[#allocation5 + $0x58] sm:$0xff]
      %v4176 = vld [vmem:[#allocation5 + $0x60] sm:$0xff]
      %v4177 = vld [vmem:[#allocation5 + $0x68] sm:$0xff]
      %v4178 = vld [vmem:[#allocation5 + $0x70] sm:$0xff]
      %v4179 = vld [vmem:[#allocation5 + $0x78] sm:$0xff]
      %v4181 = vlaneseq
      %v4182 = vshrl.u32 %v4181, 7
      %v4183 = vsub.s32 0, %v4182
      %v4184 = vrot.slane %v761, %v4183
      %v4185 = vlaneseq
      %v4186 = vshrl.u32 %v4185, 7
      %v4187 = vsub.s32 1, %v4186
      %v4188 = vrot.slane %v761, %v4187
      %v4189 = vlaneseq
      %v4190 = vshrl.u32 %v4189, 7
      %v4191 = vsub.s32 2, %v4190
      %v4192 = vrot.slane %v761, %v4191
      %v4193 = vlaneseq
      %v4194 = vshrl.u32 %v4193, 7
      %v4195 = vsub.s32 3, %v4194
      %v4196 = vrot.slane %v761, %v4195
      %v4201 = vadd.f32 %v4164, %v4184
      %v4202 = vadd.f32 %v4165, %v4188
      %v4203 = vadd.f32 %v4166, %v4192
      %v4204 = vadd.f32 %v4167, %v4196
      %v4205 = vadd.f32 %v4168, %v4184
      %v4206 = vadd.f32 %v4169, %v4188
      %v4207 = vadd.f32 %v4170, %v4192
      %v4208 = vadd.f32 %v4171, %v4196
      %v4209 = vadd.f32 %v4172, %v4184
      %v4210 = vadd.f32 %v4173, %v4188
      %v4211 = vadd.f32 %v4174, %v4192
      %v4212 = vadd.f32 %v4175, %v4196
      %v4213 = vadd.f32 %v4176, %v4184
      %v4214 = vadd.f32 %v4177, %v4188
      %v4215 = vadd.f32 %v4178, %v4192
      %v4216 = vadd.f32 %v4179, %v4196
      %v4217 = vrot.slane %v4201, 5
      %v4218 = vrot.slane %v4202, 5
      %v4219 = vrot.slane %v4203, 5
      %v4220 = vrot.slane %v4204, 5
      %v4221 = vrot.slane %v4205, 5
      %v4222 = vrot.slane %v4206, 5
      %v4223 = vrot.slane %v4207, 5
      %v4224 = vrot.slane %v4208, 5
      %v4225 = vrot.slane %v4209, 5
      %v4226 = vrot.slane %v4210, 5
      %v4227 = vrot.slane %v4211, 5
      %v4228 = vrot.slane %v4212, 5
      %v4229 = vrot.slane %v4213, 5
      %v4230 = vrot.slane %v4214, 5
      %v4231 = vrot.slane %v4215, 5
      %v4232 = vrot.slane %v4216, 5
      %vm4233 = vcmp.lt.s32.totalorder %v803, 3
      %v4234 = vsel %vm4233, %v4225, %v4229
      %v4235 = vsel %vm4233, %v4226, %v4230
      %v4236 = vsel %vm4233, %v4227, %v4231
      %v4237 = vsel %vm4233, %v4228, %v4232
      %v4238 = vsel %vm4233, %v4221, %v4225
      %v4239 = vsel %vm4233, %v4222, %v4226
      %v4240 = vsel %vm4233, %v4223, %v4227
      %v4241 = vsel %vm4233, %v4224, %v4228
      %v4242 = vsel %vm4233, %v4217, %v4221
      %v4243 = vsel %vm4233, %v4218, %v4222
      %v4244 = vsel %vm4233, %v4219, %v4223
      %v4245 = vsel %vm4233, %v4220, %v4224
      %v4246 = vsel %vm4233, %v4229, %v4217
      %v4247 = vsel %vm4233, %v4230, %v4218
      %v4248 = vsel %vm4233, %v4231, %v4219
      %v4249 = vsel %vm4233, %v4232, %v4220
      %4251 = vset.pattern.permute.xlu0 0
      %4252 = vperm.xlu0 %4251, %v631
      %v4253 = vpop.permute.xlu0 %4252
      %4256 = vset.pattern.permute.xlu0 0
      %4257 = vperm.xlu0 %4256, %v632
      %v4258 = vpop.permute.xlu0 %4257
      %4261 = vset.pattern.permute.xlu0 0
      %4262 = vperm.xlu0 %4261, %v633
      %v4263 = vpop.permute.xlu0 %4262
      %4266 = vset.pattern.permute.xlu0 0
      %4267 = vperm.xlu0 %4266, %v634
      %v4268 = vpop.permute.xlu0 %4267
      %v4270 = vmul.f32 %v4246, %v4253
      %v4271 = vmul.f32 %v4247, %v4253
      %v4272 = vmul.f32 %v4248, %v4253
      %v4273 = vmul.f32 %v4249, %v4253
      %v4274 = vmul.f32 %v4242, %v4258
      %v4275 = vmul.f32 %v4243, %v4258
      %v4276 = vmul.f32 %v4244, %v4258
      %v4277 = vmul.f32 %v4245, %v4258
      %v4278 = vmul.f32 %v4238, %v4263
      %v4279 = vmul.f32 %v4239, %v4263
      %v4280 = vmul.f32 %v4240, %v4263
      %v4281 = vmul.f32 %v4241, %v4263
      %v4282 = vmul.f32 %v4234, %v4268
      %v4283 = vmul.f32 %v4235, %v4268
      %v4284 = vmul.f32 %v4236, %v4268
      %v4285 = vmul.f32 %v4237, %v4268
      %v4286 = vld [vmem:[%s560] ss:$8 sm:$0xf]
      %v4288 = vlaneseq
      %v4289 = vshrl.u32 %v4288, 7
      %v4290 = vsub.s32 0, %v4289
      %v4291 = vrot.slane %v4286, %v4290
      %v4292 = vlaneseq
      %v4293 = vshrl.u32 %v4292, 7
      %v4294 = vsub.s32 1, %v4293
      %v4295 = vrot.slane %v4286, %v4294
      %v4296 = vlaneseq
      %v4297 = vshrl.u32 %v4296, 7
      %v4298 = vsub.s32 2, %v4297
      %v4299 = vrot.slane %v4286, %v4298
      %v4300 = vlaneseq
      %v4301 = vshrl.u32 %v4300, 7
      %v4302 = vsub.s32 3, %v4301
      %v4303 = vrot.slane %v4286, %v4302
      %v4308 = vmul.f32 %v4270, %v4291
      %v4309 = vmul.f32 %v4271, %v4295
      %v4310 = vmul.f32 %v4272, %v4299
      %v4311 = vmul.f32 %v4273, %v4303
      %v4312 = vmul.f32 %v4274, %v4291
      %v4313 = vmul.f32 %v4275, %v4295
      %v4314 = vmul.f32 %v4276, %v4299
      %v4315 = vmul.f32 %v4277, %v4303
      %v4316 = vmul.f32 %v4278, %v4291
      %v4317 = vmul.f32 %v4279, %v4295
      %v4318 = vmul.f32 %v4280, %v4299
      %v4319 = vmul.f32 %v4281, %v4303
      %v4320 = vmul.f32 %v4282, %v4291
      %v4321 = vmul.f32 %v4283, %v4295
      %v4322 = vmul.f32 %v4284, %v4299
      %v4323 = vmul.f32 %v4285, %v4303
      %v4324 = vrot.slane %v4201, 6
      %v4325 = vrot.slane %v4202, 6
      %v4326 = vrot.slane %v4203, 6
      %v4327 = vrot.slane %v4204, 6
      %v4328 = vrot.slane %v4205, 6
      %v4329 = vrot.slane %v4206, 6
      %v4330 = vrot.slane %v4207, 6
      %v4331 = vrot.slane %v4208, 6
      %v4332 = vrot.slane %v4209, 6
      %v4333 = vrot.slane %v4210, 6
      %v4334 = vrot.slane %v4211, 6
      %v4335 = vrot.slane %v4212, 6
      %v4336 = vrot.slane %v4213, 6
      %v4337 = vrot.slane %v4214, 6
      %v4338 = vrot.slane %v4215, 6
      %v4339 = vrot.slane %v4216, 6
      %v4340 = vsel %vm804, %v4332, %v4336
      %v4341 = vsel %vm804, %v4333, %v4337
      %v4342 = vsel %vm804, %v4334, %v4338
      %v4343 = vsel %vm804, %v4335, %v4339
      %v4344 = vsel %vm804, %v4328, %v4332
      %v4345 = vsel %vm804, %v4329, %v4333
      %v4346 = vsel %vm804, %v4330, %v4334
      %v4347 = vsel %vm804, %v4331, %v4335
      %v4348 = vsel %vm804, %v4324, %v4328
      %v4349 = vsel %vm804, %v4325, %v4329
      %v4350 = vsel %vm804, %v4326, %v4330
      %v4351 = vsel %vm804, %v4327, %v4331
      %v4352 = vsel %vm804, %v4336, %v4324
      %v4353 = vsel %vm804, %v4337, %v4325
      %v4354 = vsel %vm804, %v4338, %v4326
      %v4355 = vsel %vm804, %v4339, %v4327
      %v4356 = vmul.f32 %v4352, %v824
      %v4357 = vmul.f32 %v4353, %v824
      %v4358 = vmul.f32 %v4354, %v824
      %v4359 = vmul.f32 %v4355, %v824
      %v4360 = vmul.f32 %v4348, %v829
      %v4361 = vmul.f32 %v4349, %v829
      %v4362 = vmul.f32 %v4350, %v829
      %v4363 = vmul.f32 %v4351, %v829
      %v4364 = vmul.f32 %v4344, %v834
      %v4365 = vmul.f32 %v4345, %v834
      %v4366 = vmul.f32 %v4346, %v834
      %v4367 = vmul.f32 %v4347, %v834
      %v4368 = vmul.f32 %v4340, %v839
      %v4369 = vmul.f32 %v4341, %v839
      %v4370 = vmul.f32 %v4342, %v839
      %v4371 = vmul.f32 %v4343, %v839
      %s4372 = scalar_lea.vmem %s560, 1
      %v4373 = vld [vmem:[%s4372] ss:$8 sm:$0xf]
      %v4375 = vlaneseq
      %v4376 = vshrl.u32 %v4375, 7
      %v4377 = vsub.s32 0, %v4376
      %v4378 = vrot.slane %v4373, %v4377
      %v4379 = vlaneseq
      %v4380 = vshrl.u32 %v4379, 7
      %v4381 = vsub.s32 1, %v4380
      %v4382 = vrot.slane %v4373, %v4381
      %v4383 = vlaneseq
      %v4384 = vshrl.u32 %v4383, 7
      %v4385 = vsub.s32 2, %v4384
      %v4386 = vrot.slane %v4373, %v4385
      %v4387 = vlaneseq
      %v4388 = vshrl.u32 %v4387, 7
      %v4389 = vsub.s32 3, %v4388
      %v4390 = vrot.slane %v4373, %v4389
      %v4395 = vmul.f32 %v4356, %v4378
      %v4396 = vmul.f32 %v4357, %v4382
      %v4397 = vmul.f32 %v4358, %v4386
      %v4398 = vmul.f32 %v4359, %v4390
      %v4399 = vmul.f32 %v4360, %v4378
      %v4400 = vmul.f32 %v4361, %v4382
      %v4401 = vmul.f32 %v4362, %v4386
      %v4402 = vmul.f32 %v4363, %v4390
      %v4403 = vmul.f32 %v4364, %v4378
      %v4404 = vmul.f32 %v4365, %v4382
      %v4405 = vmul.f32 %v4366, %v4386
      %v4406 = vmul.f32 %v4367, %v4390
      %v4407 = vmul.f32 %v4368, %v4378
      %v4408 = vmul.f32 %v4369, %v4382
      %v4409 = vmul.f32 %v4370, %v4386
      %v4410 = vmul.f32 %v4371, %v4390
      %v4411 = vadd.f32 %v4308, %v4395
      %v4412 = vadd.f32 %v4309, %v4396
      %v4413 = vadd.f32 %v4310, %v4397
      %v4414 = vadd.f32 %v4311, %v4398
      %v4415 = vadd.f32 %v4312, %v4399
      %v4416 = vadd.f32 %v4313, %v4400
      %v4417 = vadd.f32 %v4314, %v4401
      %v4418 = vadd.f32 %v4315, %v4402
      %v4419 = vadd.f32 %v4316, %v4403
      %v4420 = vadd.f32 %v4317, %v4404
      %v4421 = vadd.f32 %v4318, %v4405
      %v4422 = vadd.f32 %v4319, %v4406
      %v4423 = vadd.f32 %v4320, %v4407
      %v4424 = vadd.f32 %v4321, %v4408
      %v4425 = vadd.f32 %v4322, %v4409
      %v4426 = vadd.f32 %v4323, %v4410
      %v4427 = vrot.slane %v4201, 7
      %v4428 = vrot.slane %v4202, 7
      %v4429 = vrot.slane %v4203, 7
      %v4430 = vrot.slane %v4204, 7
      %v4431 = vrot.slane %v4205, 7
      %v4432 = vrot.slane %v4206, 7
      %v4433 = vrot.slane %v4207, 7
      %v4434 = vrot.slane %v4208, 7
      %v4435 = vrot.slane %v4209, 7
      %v4436 = vrot.slane %v4210, 7
      %v4437 = vrot.slane %v4211, 7
      %v4438 = vrot.slane %v4212, 7
      %v4439 = vrot.slane %v4213, 7
      %v4440 = vrot.slane %v4214, 7
      %v4441 = vrot.slane %v4215, 7
      %v4442 = vrot.slane %v4216, 7
      %v4443 = vsel %vm1280, %v4435, %v4439
      %v4444 = vsel %vm1280, %v4436, %v4440
      %v4445 = vsel %vm1280, %v4437, %v4441
      %v4446 = vsel %vm1280, %v4438, %v4442
      %v4447 = vsel %vm1280, %v4431, %v4435
      %v4448 = vsel %vm1280, %v4432, %v4436
      %v4449 = vsel %vm1280, %v4433, %v4437
      %v4450 = vsel %vm1280, %v4434, %v4438
      %v4451 = vsel %vm1280, %v4427, %v4431
      %v4452 = vsel %vm1280, %v4428, %v4432
      %v4453 = vsel %vm1280, %v4429, %v4433
      %v4454 = vsel %vm1280, %v4430, %v4434
      %v4455 = vsel %vm1280, %v4439, %v4427
      %v4456 = vsel %vm1280, %v4440, %v4428
      %v4457 = vsel %vm1280, %v4441, %v4429
      %v4458 = vsel %vm1280, %v4442, %v4430
      %v4459 = vmul.f32 %v4455, %v1300
      %v4460 = vmul.f32 %v4456, %v1300
      %v4461 = vmul.f32 %v4457, %v1300
      %v4462 = vmul.f32 %v4458, %v1300
      %v4463 = vmul.f32 %v4451, %v1305
      %v4464 = vmul.f32 %v4452, %v1305
      %v4465 = vmul.f32 %v4453, %v1305
      %v4466 = vmul.f32 %v4454, %v1305
      %v4467 = vmul.f32 %v4447, %v1310
      %v4468 = vmul.f32 %v4448, %v1310
      %v4469 = vmul.f32 %v4449, %v1310
      %v4470 = vmul.f32 %v4450, %v1310
      %v4471 = vmul.f32 %v4443, %v1315
      %v4472 = vmul.f32 %v4444, %v1315
      %v4473 = vmul.f32 %v4445, %v1315
      %v4474 = vmul.f32 %v4446, %v1315
      %s4475 = scalar_lea.vmem %s560, 2
      %v4476 = vld [vmem:[%s4475] ss:$8 sm:$0xf]
      %v4478 = vlaneseq
      %v4479 = vshrl.u32 %v4478, 7
      %v4480 = vsub.s32 0, %v4479
      %v4481 = vrot.slane %v4476, %v4480
      %v4482 = vlaneseq
      %v4483 = vshrl.u32 %v4482, 7
      %v4484 = vsub.s32 1, %v4483
      %v4485 = vrot.slane %v4476, %v4484
      %v4486 = vlaneseq
      %v4487 = vshrl.u32 %v4486, 7
      %v4488 = vsub.s32 2, %v4487
      %v4489 = vrot.slane %v4476, %v4488
      %v4490 = vlaneseq
      %v4491 = vshrl.u32 %v4490, 7
      %v4492 = vsub.s32 3, %v4491
      %v4493 = vrot.slane %v4476, %v4492
      %v4498 = vmul.f32 %v4459, %v4481
      %v4499 = vmul.f32 %v4460, %v4485
      %v4500 = vmul.f32 %v4461, %v4489
      %v4501 = vmul.f32 %v4462, %v4493
      %v4502 = vmul.f32 %v4463, %v4481
      %v4503 = vmul.f32 %v4464, %v4485
      %v4504 = vmul.f32 %v4465, %v4489
      %v4505 = vmul.f32 %v4466, %v4493
      %v4506 = vmul.f32 %v4467, %v4481
      %v4507 = vmul.f32 %v4468, %v4485
      %v4508 = vmul.f32 %v4469, %v4489
      %v4509 = vmul.f32 %v4470, %v4493
      %v4510 = vmul.f32 %v4471, %v4481
      %v4511 = vmul.f32 %v4472, %v4485
      %v4512 = vmul.f32 %v4473, %v4489
      %v4513 = vmul.f32 %v4474, %v4493
      %v4514 = vadd.f32 %v4411, %v4498
      %v4515 = vadd.f32 %v4412, %v4499
      %v4516 = vadd.f32 %v4413, %v4500
      %v4517 = vadd.f32 %v4414, %v4501
      %v4518 = vadd.f32 %v4415, %v4502
      %v4519 = vadd.f32 %v4416, %v4503
      %v4520 = vadd.f32 %v4417, %v4504
      %v4521 = vadd.f32 %v4418, %v4505
      %v4522 = vadd.f32 %v4419, %v4506
      %v4523 = vadd.f32 %v4420, %v4507
      %v4524 = vadd.f32 %v4421, %v4508
      %v4525 = vadd.f32 %v4422, %v4509
      %v4526 = vadd.f32 %v4423, %v4510
      %v4527 = vadd.f32 %v4424, %v4511
      %v4528 = vadd.f32 %v4425, %v4512
      %v4529 = vadd.f32 %v4426, %v4513
      %s4530 = scalar_lea.vmem %s560, 3
      %v4531 = vld [vmem:[%s4530] ss:$8 sm:$0xf]
      %v4533 = vlaneseq
      %v4534 = vshrl.u32 %v4533, 7
      %v4535 = vsub.s32 0, %v4534
      %v4536 = vrot.slane %v4531, %v4535
      %v4537 = vlaneseq
      %v4538 = vshrl.u32 %v4537, 7
      %v4539 = vsub.s32 1, %v4538
      %v4540 = vrot.slane %v4531, %v4539
      %v4541 = vlaneseq
      %v4542 = vshrl.u32 %v4541, 7
      %v4543 = vsub.s32 2, %v4542
      %v4544 = vrot.slane %v4531, %v4543
      %v4545 = vlaneseq
      %v4546 = vshrl.u32 %v4545, 7
      %v4547 = vsub.s32 3, %v4546
      %v4548 = vrot.slane %v4531, %v4547
      %v4553 = vmul.f32 %v4201, %v4536
      %v4554 = vmul.f32 %v4202, %v4540
      %v4555 = vmul.f32 %v4203, %v4544
      %v4556 = vmul.f32 %v4204, %v4548
      %v4557 = vmul.f32 %v4205, %v4536
      %v4558 = vmul.f32 %v4206, %v4540
      %v4559 = vmul.f32 %v4207, %v4544
      %v4560 = vmul.f32 %v4208, %v4548
      %v4561 = vmul.f32 %v4209, %v4536
      %v4562 = vmul.f32 %v4210, %v4540
      %v4563 = vmul.f32 %v4211, %v4544
      %v4564 = vmul.f32 %v4212, %v4548
      %v4565 = vmul.f32 %v4213, %v4536
      %v4566 = vmul.f32 %v4214, %v4540
      %v4567 = vmul.f32 %v4215, %v4544
      %v4568 = vmul.f32 %v4216, %v4548
      %v4569 = vadd.f32 %v4514, %v4553
      %v4570 = vadd.f32 %v4515, %v4554
      %v4571 = vadd.f32 %v4516, %v4555
      %v4572 = vadd.f32 %v4517, %v4556
      %v4573 = vadd.f32 %v4518, %v4557
      %v4574 = vadd.f32 %v4519, %v4558
      %v4575 = vadd.f32 %v4520, %v4559
      %v4576 = vadd.f32 %v4521, %v4560
      %v4577 = vadd.f32 %v4522, %v4561
      %v4578 = vadd.f32 %v4523, %v4562
      %v4579 = vadd.f32 %v4524, %v4563
      %v4580 = vadd.f32 %v4525, %v4564
      %v4581 = vadd.f32 %v4526, %v4565
      %v4582 = vadd.f32 %v4527, %v4566
      %v4583 = vadd.f32 %v4528, %v4567
      %v4584 = vadd.f32 %v4529, %v4568
      %v4585 = vrot.slane %v4201, 1
      %v4586 = vrot.slane %v4202, 1
      %v4587 = vrot.slane %v4203, 1
      %v4588 = vrot.slane %v4204, 1
      %v4589 = vrot.slane %v4205, 1
      %v4590 = vrot.slane %v4206, 1
      %v4591 = vrot.slane %v4207, 1
      %v4592 = vrot.slane %v4208, 1
      %v4593 = vrot.slane %v4209, 1
      %v4594 = vrot.slane %v4210, 1
      %v4595 = vrot.slane %v4211, 1
      %v4596 = vrot.slane %v4212, 1
      %v4597 = vrot.slane %v4213, 1
      %v4598 = vrot.slane %v4214, 1
      %v4599 = vrot.slane %v4215, 1
      %v4600 = vrot.slane %v4216, 1
      %v4601 = vsel %vm2187, %v4593, %v4597
      %v4602 = vsel %vm2187, %v4594, %v4598
      %v4603 = vsel %vm2187, %v4595, %v4599
      %v4604 = vsel %vm2187, %v4596, %v4600
      %v4605 = vsel %vm2187, %v4589, %v4593
      %v4606 = vsel %vm2187, %v4590, %v4594
      %v4607 = vsel %vm2187, %v4591, %v4595
      %v4608 = vsel %vm2187, %v4592, %v4596
      %v4609 = vsel %vm2187, %v4585, %v4589
      %v4610 = vsel %vm2187, %v4586, %v4590
      %v4611 = vsel %vm2187, %v4587, %v4591
      %v4612 = vsel %vm2187, %v4588, %v4592
      %v4613 = vsel %vm2187, %v4597, %v4585
      %v4614 = vsel %vm2187, %v4598, %v4586
      %v4615 = vsel %vm2187, %v4599, %v4587
      %v4616 = vsel %vm2187, %v4600, %v4588
      %v4617 = vmul.f32 %v4609, %v2207
      %v4618 = vmul.f32 %v4610, %v2207
      %v4619 = vmul.f32 %v4611, %v2207
      %v4620 = vmul.f32 %v4612, %v2207
      %v4621 = vmul.f32 %v4605, %v2212
      %v4622 = vmul.f32 %v4606, %v2212
      %v4623 = vmul.f32 %v4607, %v2212
      %v4624 = vmul.f32 %v4608, %v2212
      %v4625 = vmul.f32 %v4601, %v2217
      %v4626 = vmul.f32 %v4602, %v2217
      %v4627 = vmul.f32 %v4603, %v2217
      %v4628 = vmul.f32 %v4604, %v2217
      %v4629 = vmul.f32 %v4613, %v2222
      %v4630 = vmul.f32 %v4614, %v2222
      %v4631 = vmul.f32 %v4615, %v2222
      %v4632 = vmul.f32 %v4616, %v2222
      %s4633 = scalar_lea.vmem %s560, 4
      %v4634 = vld [vmem:[%s4633] ss:$8 sm:$0xf]
      %v4636 = vlaneseq
      %v4637 = vshrl.u32 %v4636, 7
      %v4638 = vsub.s32 0, %v4637
      %v4639 = vrot.slane %v4634, %v4638
      %v4640 = vlaneseq
      %v4641 = vshrl.u32 %v4640, 7
      %v4642 = vsub.s32 1, %v4641
      %v4643 = vrot.slane %v4634, %v4642
      %v4644 = vlaneseq
      %v4645 = vshrl.u32 %v4644, 7
      %v4646 = vsub.s32 2, %v4645
      %v4647 = vrot.slane %v4634, %v4646
      %v4648 = vlaneseq
      %v4649 = vshrl.u32 %v4648, 7
      %v4650 = vsub.s32 3, %v4649
      %v4651 = vrot.slane %v4634, %v4650
      %v4656 = vmul.f32 %v4617, %v4639
      %v4657 = vmul.f32 %v4618, %v4643
      %v4658 = vmul.f32 %v4619, %v4647
      %v4659 = vmul.f32 %v4620, %v4651
      %v4660 = vmul.f32 %v4621, %v4639
      %v4661 = vmul.f32 %v4622, %v4643
      %v4662 = vmul.f32 %v4623, %v4647
      %v4663 = vmul.f32 %v4624, %v4651
      %v4664 = vmul.f32 %v4625, %v4639
      %v4665 = vmul.f32 %v4626, %v4643
      %v4666 = vmul.f32 %v4627, %v4647
      %v4667 = vmul.f32 %v4628, %v4651
      %v4668 = vmul.f32 %v4629, %v4639
      %v4669 = vmul.f32 %v4630, %v4643
      %v4670 = vmul.f32 %v4631, %v4647
      %v4671 = vmul.f32 %v4632, %v4651
      %v4672 = vadd.f32 %v4569, %v4656
      %v4673 = vadd.f32 %v4570, %v4657
      %v4674 = vadd.f32 %v4571, %v4658
      %v4675 = vadd.f32 %v4572, %v4659
      %v4676 = vadd.f32 %v4573, %v4660
      %v4677 = vadd.f32 %v4574, %v4661
      %v4678 = vadd.f32 %v4575, %v4662
      %v4679 = vadd.f32 %v4576, %v4663
      %v4680 = vadd.f32 %v4577, %v4664
      %v4681 = vadd.f32 %v4578, %v4665
      %v4682 = vadd.f32 %v4579, %v4666
      %v4683 = vadd.f32 %v4580, %v4667
      %v4684 = vadd.f32 %v4581, %v4668
      %v4685 = vadd.f32 %v4582, %v4669
      %v4686 = vadd.f32 %v4583, %v4670
      %v4687 = vadd.f32 %v4584, %v4671
      %v4688 = vrot.slane %v4201, 2
      %v4689 = vrot.slane %v4202, 2
      %v4690 = vrot.slane %v4203, 2
      %v4691 = vrot.slane %v4204, 2
      %v4692 = vrot.slane %v4205, 2
      %v4693 = vrot.slane %v4206, 2
      %v4694 = vrot.slane %v4207, 2
      %v4695 = vrot.slane %v4208, 2
      %v4696 = vrot.slane %v4209, 2
      %v4697 = vrot.slane %v4210, 2
      %v4698 = vrot.slane %v4211, 2
      %v4699 = vrot.slane %v4212, 2
      %v4700 = vrot.slane %v4213, 2
      %v4701 = vrot.slane %v4214, 2
      %v4702 = vrot.slane %v4215, 2
      %v4703 = vrot.slane %v4216, 2
      %v4704 = vsel %vm2675, %v4696, %v4700
      %v4705 = vsel %vm2675, %v4697, %v4701
      %v4706 = vsel %vm2675, %v4698, %v4702
      %v4707 = vsel %vm2675, %v4699, %v4703
      %v4708 = vsel %vm2675, %v4692, %v4696
      %v4709 = vsel %vm2675, %v4693, %v4697
      %v4710 = vsel %vm2675, %v4694, %v4698
      %v4711 = vsel %vm2675, %v4695, %v4699
      %v4712 = vsel %vm2675, %v4688, %v4692
      %v4713 = vsel %vm2675, %v4689, %v4693
      %v4714 = vsel %vm2675, %v4690, %v4694
      %v4715 = vsel %vm2675, %v4691, %v4695
      %v4716 = vsel %vm2675, %v4700, %v4688
      %v4717 = vsel %vm2675, %v4701, %v4689
      %v4718 = vsel %vm2675, %v4702, %v4690
      %v4719 = vsel %vm2675, %v4703, %v4691
      %v4720 = vmul.f32 %v4712, %v2695
      %v4721 = vmul.f32 %v4713, %v2695
      %v4722 = vmul.f32 %v4714, %v2695
      %v4723 = vmul.f32 %v4715, %v2695
      %v4724 = vmul.f32 %v4708, %v2700
      %v4725 = vmul.f32 %v4709, %v2700
      %v4726 = vmul.f32 %v4710, %v2700
      %v4727 = vmul.f32 %v4711, %v2700
      %v4728 = vmul.f32 %v4704, %v2705
      %v4729 = vmul.f32 %v4705, %v2705
      %v4730 = vmul.f32 %v4706, %v2705
      %v4731 = vmul.f32 %v4707, %v2705
      %v4732 = vmul.f32 %v4716, %v2710
      %v4733 = vmul.f32 %v4717, %v2710
      %v4734 = vmul.f32 %v4718, %v2710
      %v4735 = vmul.f32 %v4719, %v2710
      %s4736 = scalar_lea.vmem %s560, 5
      %v4737 = vld [vmem:[%s4736] ss:$8 sm:$0xf]
      %v4739 = vlaneseq
      %v4740 = vshrl.u32 %v4739, 7
      %v4741 = vsub.s32 0, %v4740
      %v4742 = vrot.slane %v4737, %v4741
      %v4743 = vlaneseq
      %v4744 = vshrl.u32 %v4743, 7
      %v4745 = vsub.s32 1, %v4744
      %v4746 = vrot.slane %v4737, %v4745
      %v4747 = vlaneseq
      %v4748 = vshrl.u32 %v4747, 7
      %v4749 = vsub.s32 2, %v4748
      %v4750 = vrot.slane %v4737, %v4749
      %v4751 = vlaneseq
      %v4752 = vshrl.u32 %v4751, 7
      %v4753 = vsub.s32 3, %v4752
      %v4754 = vrot.slane %v4737, %v4753
      %v4759 = vmul.f32 %v4720, %v4742
      %v4760 = vmul.f32 %v4721, %v4746
      %v4761 = vmul.f32 %v4722, %v4750
      %v4762 = vmul.f32 %v4723, %v4754
      %v4763 = vmul.f32 %v4724, %v4742
      %v4764 = vmul.f32 %v4725, %v4746
      %v4765 = vmul.f32 %v4726, %v4750
      %v4766 = vmul.f32 %v4727, %v4754
      %v4767 = vmul.f32 %v4728, %v4742
      %v4768 = vmul.f32 %v4729, %v4746
      %v4769 = vmul.f32 %v4730, %v4750
      %v4770 = vmul.f32 %v4731, %v4754
      %v4771 = vmul.f32 %v4732, %v4742
      %v4772 = vmul.f32 %v4733, %v4746
      %v4773 = vmul.f32 %v4734, %v4750
      %v4774 = vmul.f32 %v4735, %v4754
      %v4775 = vadd.f32 %v4672, %v4759
      %v4776 = vadd.f32 %v4673, %v4760
      %v4777 = vadd.f32 %v4674, %v4761
      %v4778 = vadd.f32 %v4675, %v4762
      %v4779 = vadd.f32 %v4676, %v4763
      %v4780 = vadd.f32 %v4677, %v4764
      %v4781 = vadd.f32 %v4678, %v4765
      %v4782 = vadd.f32 %v4679, %v4766
      %v4783 = vadd.f32 %v4680, %v4767
      %v4784 = vadd.f32 %v4681, %v4768
      %v4785 = vadd.f32 %v4682, %v4769
      %v4786 = vadd.f32 %v4683, %v4770
      %v4787 = vadd.f32 %v4684, %v4771
      %v4788 = vadd.f32 %v4685, %v4772
      %v4789 = vadd.f32 %v4686, %v4773
      %v4790 = vadd.f32 %v4687, %v4774
      %v4791 = vrot.slane %v4201, 3
      %v4792 = vrot.slane %v4202, 3
      %v4793 = vrot.slane %v4203, 3
      %v4794 = vrot.slane %v4204, 3
      %v4795 = vrot.slane %v4205, 3
      %v4796 = vrot.slane %v4206, 3
      %v4797 = vrot.slane %v4207, 3
      %v4798 = vrot.slane %v4208, 3
      %v4799 = vrot.slane %v4209, 3
      %v4800 = vrot.slane %v4210, 3
      %v4801 = vrot.slane %v4211, 3
      %v4802 = vrot.slane %v4212, 3
      %v4803 = vrot.slane %v4213, 3
      %v4804 = vrot.slane %v4214, 3
      %v4805 = vrot.slane %v4215, 3
      %v4806 = vrot.slane %v4216, 3
      %vm4807 = vcmp.lt.s32.totalorder %v803, 5
      %v4808 = vsel %vm4807, %v4799, %v4803
      %v4809 = vsel %vm4807, %v4800, %v4804
      %v4810 = vsel %vm4807, %v4801, %v4805
      %v4811 = vsel %vm4807, %v4802, %v4806
      %v4812 = vsel %vm4807, %v4795, %v4799
      %v4813 = vsel %vm4807, %v4796, %v4800
      %v4814 = vsel %vm4807, %v4797, %v4801
      %v4815 = vsel %vm4807, %v4798, %v4802
      %v4816 = vsel %vm4807, %v4791, %v4795
      %v4817 = vsel %vm4807, %v4792, %v4796
      %v4818 = vsel %vm4807, %v4793, %v4797
      %v4819 = vsel %vm4807, %v4794, %v4798
      %v4820 = vsel %vm4807, %v4803, %v4791
      %v4821 = vsel %vm4807, %v4804, %v4792
      %v4822 = vsel %vm4807, %v4805, %v4793
      %v4823 = vsel %vm4807, %v4806, %v4794
      %4825 = vset.pattern.permute.xlu0 0
      %4826 = vperm.xlu0 %4825, %v751
      %v4827 = vpop.permute.xlu0 %4826
      %4830 = vset.pattern.permute.xlu0 0
      %4831 = vperm.xlu0 %4830, %v752
      %v4832 = vpop.permute.xlu0 %4831
      %4835 = vset.pattern.permute.xlu0 0
      %4836 = vperm.xlu0 %4835, %v753
      %v4837 = vpop.permute.xlu0 %4836
      %4840 = vset.pattern.permute.xlu0 0
      %4841 = vperm.xlu0 %4840, %v754
      %v4842 = vpop.permute.xlu0 %4841
      %v4844 = vmul.f32 %v4816, %v4827
      %v4845 = vmul.f32 %v4817, %v4827
      %v4846 = vmul.f32 %v4818, %v4827
      %v4847 = vmul.f32 %v4819, %v4827
      %v4848 = vmul.f32 %v4812, %v4832
      %v4849 = vmul.f32 %v4813, %v4832
      %v4850 = vmul.f32 %v4814, %v4832
      %v4851 = vmul.f32 %v4815, %v4832
      %v4852 = vmul.f32 %v4808, %v4837
      %v4853 = vmul.f32 %v4809, %v4837
      %v4854 = vmul.f32 %v4810, %v4837
      %v4855 = vmul.f32 %v4811, %v4837
      %v4856 = vmul.f32 %v4820, %v4842
      %v4857 = vmul.f32 %v4821, %v4842
      %v4858 = vmul.f32 %v4822, %v4842
      %v4859 = vmul.f32 %v4823, %v4842
      %s4860 = scalar_lea.vmem %s560, 6
      %v4861 = vld [vmem:[%s4860] ss:$8 sm:$0xf]
      %v4863 = vlaneseq
      %v4864 = vshrl.u32 %v4863, 7
      %v4865 = vsub.s32 0, %v4864
      %v4866 = vrot.slane %v4861, %v4865
      %v4867 = vlaneseq
      %v4868 = vshrl.u32 %v4867, 7
      %v4869 = vsub.s32 1, %v4868
      %v4870 = vrot.slane %v4861, %v4869
      %v4871 = vlaneseq
      %v4872 = vshrl.u32 %v4871, 7
      %v4873 = vsub.s32 2, %v4872
      %v4874 = vrot.slane %v4861, %v4873
      %v4875 = vlaneseq
      %v4876 = vshrl.u32 %v4875, 7
      %v4877 = vsub.s32 3, %v4876
      %v4878 = vrot.slane %v4861, %v4877
      %v4883 = vmul.f32 %v4844, %v4866
      %v4884 = vmul.f32 %v4845, %v4870
      %v4885 = vmul.f32 %v4846, %v4874
      %v4886 = vmul.f32 %v4847, %v4878
      %v4887 = vmul.f32 %v4848, %v4866
      %v4888 = vmul.f32 %v4849, %v4870
      %v4889 = vmul.f32 %v4850, %v4874
      %v4890 = vmul.f32 %v4851, %v4878
      %v4891 = vmul.f32 %v4852, %v4866
      %v4892 = vmul.f32 %v4853, %v4870
      %v4893 = vmul.f32 %v4854, %v4874
      %v4894 = vmul.f32 %v4855, %v4878
      %v4895 = vmul.f32 %v4856, %v4866
      %v4896 = vmul.f32 %v4857, %v4870
      %v4897 = vmul.f32 %v4858, %v4874
      %v4898 = vmul.f32 %v4859, %v4878
      %v4899 = vadd.f32 %v4775, %v4883
      %v4900 = vadd.f32 %v4776, %v4884
      %v4901 = vadd.f32 %v4777, %v4885
      %v4902 = vadd.f32 %v4778, %v4886
      %v4903 = vadd.f32 %v4779, %v4887
      %v4904 = vadd.f32 %v4780, %v4888
      %v4905 = vadd.f32 %v4781, %v4889
      %v4906 = vadd.f32 %v4782, %v4890
      %v4907 = vadd.f32 %v4783, %v4891
      %v4908 = vadd.f32 %v4784, %v4892
      %v4909 = vadd.f32 %v4785, %v4893
      %v4910 = vadd.f32 %v4786, %v4894
      %v4911 = vadd.f32 %v4787, %v4895
      %v4912 = vadd.f32 %v4788, %v4896
      %v4913 = vadd.f32 %v4789, %v4897
      %v4914 = vadd.f32 %v4790, %v4898
      %v4916 = vlaneseq
      %v4917 = vshrl.u32 %v4916, 7
      %v4918 = vsub.s32 0, %v4917
      %v4919 = vrot.slane %v763, %v4918
      %v4920 = vlaneseq
      %v4921 = vshrl.u32 %v4920, 7
      %v4922 = vsub.s32 1, %v4921
      %v4923 = vrot.slane %v763, %v4922
      %v4924 = vlaneseq
      %v4925 = vshrl.u32 %v4924, 7
      %v4926 = vsub.s32 2, %v4925
      %v4927 = vrot.slane %v763, %v4926
      %v4928 = vlaneseq
      %v4929 = vshrl.u32 %v4928, 7
      %v4930 = vsub.s32 3, %v4929
      %v4931 = vrot.slane %v763, %v4930
      %v4936 = vadd.f32 %v4899, %v4919
      %v4937 = vadd.f32 %v4900, %v4923
      %v4938 = vadd.f32 %v4901, %v4927
      %v4939 = vadd.f32 %v4902, %v4931
      %v4940 = vadd.f32 %v4903, %v4919
      %v4941 = vadd.f32 %v4904, %v4923
      %v4942 = vadd.f32 %v4905, %v4927
      %v4943 = vadd.f32 %v4906, %v4931
      %v4944 = vadd.f32 %v4907, %v4919
      %v4945 = vadd.f32 %v4908, %v4923
      %v4946 = vadd.f32 %v4909, %v4927
      %v4947 = vadd.f32 %v4910, %v4931
      %v4948 = vadd.f32 %v4911, %v4919
      %v4949 = vadd.f32 %v4912, %v4923
      %v4950 = vadd.f32 %v4913, %v4927
      %v4951 = vadd.f32 %v4914, %v4931
      %v4952 = vld [vmem:[#allocation4] sm:$0xff]
      %v4953 = vld [vmem:[#allocation4 + $0x8] sm:$0xff]
      %v4954 = vld [vmem:[#allocation4 + $0x10] sm:$0xff]
      %v4955 = vld [vmem:[#allocation4 + $0x18] sm:$0xff]
      %v4956 = vld [vmem:[#allocation4 + $0x20] sm:$0xff]
      %v4957 = vld [vmem:[#allocation4 + $0x28] sm:$0xff]
      %v4958 = vld [vmem:[#allocation4 + $0x30] sm:$0xff]
      %v4959 = vld [vmem:[#allocation4 + $0x38] sm:$0xff]
      %v4960 = vld [vmem:[#allocation4 + $0x40] sm:$0xff]
      %v4961 = vld [vmem:[#allocation4 + $0x48] sm:$0xff]
      %v4962 = vld [vmem:[#allocation4 + $0x50] sm:$0xff]
      %v4963 = vld [vmem:[#allocation4 + $0x58] sm:$0xff]
      %v4964 = vld [vmem:[#allocation4 + $0x60] sm:$0xff]
      %v4965 = vld [vmem:[#allocation4 + $0x68] sm:$0xff]
      %v4966 = vld [vmem:[#allocation4 + $0x70] sm:$0xff]
      %v4967 = vld [vmem:[#allocation4 + $0x78] sm:$0xff]
      %v4969 = vlaneseq
      %v4970 = vshrl.u32 %v4969, 7
      %v4971 = vsub.s32 0, %v4970
      %v4972 = vrot.slane %v757, %v4971
      %v4973 = vlaneseq
      %v4974 = vshrl.u32 %v4973, 7
      %v4975 = vsub.s32 1, %v4974
      %v4976 = vrot.slane %v757, %v4975
      %v4977 = vlaneseq
      %v4978 = vshrl.u32 %v4977, 7
      %v4979 = vsub.s32 2, %v4978
      %v4980 = vrot.slane %v757, %v4979
      %v4981 = vlaneseq
      %v4982 = vshrl.u32 %v4981, 7
      %v4983 = vsub.s32 3, %v4982
      %v4984 = vrot.slane %v757, %v4983
      %v4989 = vadd.f32 %v4952, %v4972
      %v4990 = vadd.f32 %v4953, %v4976
      %v4991 = vadd.f32 %v4954, %v4980
      %v4992 = vadd.f32 %v4955, %v4984
      %v4993 = vadd.f32 %v4956, %v4972
      %v4994 = vadd.f32 %v4957, %v4976
      %v4995 = vadd.f32 %v4958, %v4980
      %v4996 = vadd.f32 %v4959, %v4984
      %v4997 = vadd.f32 %v4960, %v4972
      %v4998 = vadd.f32 %v4961, %v4976
      %v4999 = vadd.f32 %v4962, %v4980
      %v5000 = vadd.f32 %v4963, %v4984
      %v5001 = vadd.f32 %v4964, %v4972
      %v5002 = vadd.f32 %v4965, %v4976
      %v5003 = vadd.f32 %v4966, %v4980
      %v5004 = vadd.f32 %v4967, %v4984
      %v5005 = vrot.slane %v4989, 7
      %v5006 = vrot.slane %v4990, 7
      %v5007 = vrot.slane %v4991, 7
      %v5008 = vrot.slane %v4992, 7
      %v5009 = vrot.slane %v4993, 7
      %v5010 = vrot.slane %v4994, 7
      %v5011 = vrot.slane %v4995, 7
      %v5012 = vrot.slane %v4996, 7
      %v5013 = vrot.slane %v4997, 7
      %v5014 = vrot.slane %v4998, 7
      %v5015 = vrot.slane %v4999, 7
      %v5016 = vrot.slane %v5000, 7
      %v5017 = vrot.slane %v5001, 7
      %v5018 = vrot.slane %v5002, 7
      %v5019 = vrot.slane %v5003, 7
      %v5020 = vrot.slane %v5004, 7
      %v5021 = vsel %vm1280, %v5013, %v5017
      %v5022 = vsel %vm1280, %v5014, %v5018
      %v5023 = vsel %vm1280, %v5015, %v5019
      %v5024 = vsel %vm1280, %v5016, %v5020
      %v5025 = vsel %vm1280, %v5009, %v5013
      %v5026 = vsel %vm1280, %v5010, %v5014
      %v5027 = vsel %vm1280, %v5011, %v5015
      %v5028 = vsel %vm1280, %v5012, %v5016
      %v5029 = vsel %vm1280, %v5005, %v5009
      %v5030 = vsel %vm1280, %v5006, %v5010
      %v5031 = vsel %vm1280, %v5007, %v5011
      %v5032 = vsel %vm1280, %v5008, %v5012
      %v5033 = vsel %vm1280, %v5017, %v5005
      %v5034 = vsel %vm1280, %v5018, %v5006
      %v5035 = vsel %vm1280, %v5019, %v5007
      %v5036 = vsel %vm1280, %v5020, %v5008
      %v5037 = vmul.f32 %v5033, %v1300
      %v5038 = vmul.f32 %v5034, %v1300
      %v5039 = vmul.f32 %v5035, %v1300
      %v5040 = vmul.f32 %v5036, %v1300
      %v5041 = vmul.f32 %v5029, %v1305
      %v5042 = vmul.f32 %v5030, %v1305
      %v5043 = vmul.f32 %v5031, %v1305
      %v5044 = vmul.f32 %v5032, %v1305
      %v5045 = vmul.f32 %v5025, %v1310
      %v5046 = vmul.f32 %v5026, %v1310
      %v5047 = vmul.f32 %v5027, %v1310
      %v5048 = vmul.f32 %v5028, %v1310
      %v5049 = vmul.f32 %v5021, %v1315
      %v5050 = vmul.f32 %v5022, %v1315
      %v5051 = vmul.f32 %v5023, %v1315
      %v5052 = vmul.f32 %v5024, %v1315
      %v5053 = vld [vmem:[%s550] ss:$4 sm:$0xf]
      %v5055 = vlaneseq
      %v5056 = vshrl.u32 %v5055, 7
      %v5057 = vsub.s32 0, %v5056
      %v5058 = vrot.slane %v5053, %v5057
      %v5059 = vlaneseq
      %v5060 = vshrl.u32 %v5059, 7
      %v5061 = vsub.s32 1, %v5060
      %v5062 = vrot.slane %v5053, %v5061
      %v5063 = vlaneseq
      %v5064 = vshrl.u32 %v5063, 7
      %v5065 = vsub.s32 2, %v5064
      %v5066 = vrot.slane %v5053, %v5065
      %v5067 = vlaneseq
      %v5068 = vshrl.u32 %v5067, 7
      %v5069 = vsub.s32 3, %v5068
      %v5070 = vrot.slane %v5053, %v5069
      %v5075 = vmul.f32 %v5037, %v5058
      %v5076 = vmul.f32 %v5038, %v5062
      %v5077 = vmul.f32 %v5039, %v5066
      %v5078 = vmul.f32 %v5040, %v5070
      %v5079 = vmul.f32 %v5041, %v5058
      %v5080 = vmul.f32 %v5042, %v5062
      %v5081 = vmul.f32 %v5043, %v5066
      %v5082 = vmul.f32 %v5044, %v5070
      %v5083 = vmul.f32 %v5045, %v5058
      %v5084 = vmul.f32 %v5046, %v5062
      %v5085 = vmul.f32 %v5047, %v5066
      %v5086 = vmul.f32 %v5048, %v5070
      %v5087 = vmul.f32 %v5049, %v5058
      %v5088 = vmul.f32 %v5050, %v5062
      %v5089 = vmul.f32 %v5051, %v5066
      %v5090 = vmul.f32 %v5052, %v5070
      %v5091 = vadd.f32 %v4936, %v5075
      %v5092 = vadd.f32 %v4937, %v5076
      %v5093 = vadd.f32 %v4938, %v5077
      %v5094 = vadd.f32 %v4939, %v5078
      %v5095 = vadd.f32 %v4940, %v5079
      %v5096 = vadd.f32 %v4941, %v5080
      %v5097 = vadd.f32 %v4942, %v5081
      %v5098 = vadd.f32 %v4943, %v5082
      %v5099 = vadd.f32 %v4944, %v5083
      %v5100 = vadd.f32 %v4945, %v5084
      %v5101 = vadd.f32 %v4946, %v5085
      %v5102 = vadd.f32 %v4947, %v5086
      %v5103 = vadd.f32 %v4948, %v5087
      %v5104 = vadd.f32 %v4949, %v5088
      %v5105 = vadd.f32 %v4950, %v5089
      %v5106 = vadd.f32 %v4951, %v5090
      %s5107 = scalar_lea.vmem %s550, 1
      %v5108 = vld [vmem:[%s5107] ss:$4 sm:$0xf]
      %v5110 = vlaneseq
      %v5111 = vshrl.u32 %v5110, 7
      %v5112 = vsub.s32 0, %v5111
      %v5113 = vrot.slane %v5108, %v5112
      %v5114 = vlaneseq
      %v5115 = vshrl.u32 %v5114, 7
      %v5116 = vsub.s32 1, %v5115
      %v5117 = vrot.slane %v5108, %v5116
      %v5118 = vlaneseq
      %v5119 = vshrl.u32 %v5118, 7
      %v5120 = vsub.s32 2, %v5119
      %v5121 = vrot.slane %v5108, %v5120
      %v5122 = vlaneseq
      %v5123 = vshrl.u32 %v5122, 7
      %v5124 = vsub.s32 3, %v5123
      %v5125 = vrot.slane %v5108, %v5124
      %v5130 = vmul.f32 %v4989, %v5113
      %v5131 = vmul.f32 %v4990, %v5117
      %v5132 = vmul.f32 %v4991, %v5121
      %v5133 = vmul.f32 %v4992, %v5125
      %v5134 = vmul.f32 %v4993, %v5113
      %v5135 = vmul.f32 %v4994, %v5117
      %v5136 = vmul.f32 %v4995, %v5121
      %v5137 = vmul.f32 %v4996, %v5125
      %v5138 = vmul.f32 %v4997, %v5113
      %v5139 = vmul.f32 %v4998, %v5117
      %v5140 = vmul.f32 %v4999, %v5121
      %v5141 = vmul.f32 %v5000, %v5125
      %v5142 = vmul.f32 %v5001, %v5113
      %v5143 = vmul.f32 %v5002, %v5117
      %v5144 = vmul.f32 %v5003, %v5121
      %v5145 = vmul.f32 %v5004, %v5125
      %v5146 = vadd.f32 %v5091, %v5130
      %v5147 = vadd.f32 %v5092, %v5131
      %v5148 = vadd.f32 %v5093, %v5132
      %v5149 = vadd.f32 %v5094, %v5133
      %v5150 = vadd.f32 %v5095, %v5134
      %v5151 = vadd.f32 %v5096, %v5135
      %v5152 = vadd.f32 %v5097, %v5136
      %v5153 = vadd.f32 %v5098, %v5137
      %v5154 = vadd.f32 %v5099, %v5138
      %v5155 = vadd.f32 %v5100, %v5139
      %v5156 = vadd.f32 %v5101, %v5140
      %v5157 = vadd.f32 %v5102, %v5141
      %v5158 = vadd.f32 %v5103, %v5142
      %v5159 = vadd.f32 %v5104, %v5143
      %v5160 = vadd.f32 %v5105, %v5144
      %v5161 = vadd.f32 %v5106, %v5145
      %v5162 = vrot.slane %v4989, 1
      %v5163 = vrot.slane %v4990, 1
      %v5164 = vrot.slane %v4991, 1
      %v5165 = vrot.slane %v4992, 1
      %v5166 = vrot.slane %v4993, 1
      %v5167 = vrot.slane %v4994, 1
      %v5168 = vrot.slane %v4995, 1
      %v5169 = vrot.slane %v4996, 1
      %v5170 = vrot.slane %v4997, 1
      %v5171 = vrot.slane %v4998, 1
      %v5172 = vrot.slane %v4999, 1
      %v5173 = vrot.slane %v5000, 1
      %v5174 = vrot.slane %v5001, 1
      %v5175 = vrot.slane %v5002, 1
      %v5176 = vrot.slane %v5003, 1
      %v5177 = vrot.slane %v5004, 1
      %v5178 = vsel %vm2187, %v5170, %v5174
      %v5179 = vsel %vm2187, %v5171, %v5175
      %v5180 = vsel %vm2187, %v5172, %v5176
      %v5181 = vsel %vm2187, %v5173, %v5177
      %v5182 = vsel %vm2187, %v5166, %v5170
      %v5183 = vsel %vm2187, %v5167, %v5171
      %v5184 = vsel %vm2187, %v5168, %v5172
      %v5185 = vsel %vm2187, %v5169, %v5173
      %v5186 = vsel %vm2187, %v5162, %v5166
      %v5187 = vsel %vm2187, %v5163, %v5167
      %v5188 = vsel %vm2187, %v5164, %v5168
      %v5189 = vsel %vm2187, %v5165, %v5169
      %v5190 = vsel %vm2187, %v5174, %v5162
      %v5191 = vsel %vm2187, %v5175, %v5163
      %v5192 = vsel %vm2187, %v5176, %v5164
      %v5193 = vsel %vm2187, %v5177, %v5165
      %v5194 = vmul.f32 %v5186, %v2207
      %v5195 = vmul.f32 %v5187, %v2207
      %v5196 = vmul.f32 %v5188, %v2207
      %v5197 = vmul.f32 %v5189, %v2207
      %v5198 = vmul.f32 %v5182, %v2212
      %v5199 = vmul.f32 %v5183, %v2212
      %v5200 = vmul.f32 %v5184, %v2212
      %v5201 = vmul.f32 %v5185, %v2212
      %v5202 = vmul.f32 %v5178, %v2217
      %v5203 = vmul.f32 %v5179, %v2217
      %v5204 = vmul.f32 %v5180, %v2217
      %v5205 = vmul.f32 %v5181, %v2217
      %v5206 = vmul.f32 %v5190, %v2222
      %v5207 = vmul.f32 %v5191, %v2222
      %v5208 = vmul.f32 %v5192, %v2222
      %v5209 = vmul.f32 %v5193, %v2222
      %s5210 = scalar_lea.vmem %s550, 2
      %v5211 = vld [vmem:[%s5210] ss:$4 sm:$0xf]
      %v5213 = vlaneseq
      %v5214 = vshrl.u32 %v5213, 7
      %v5215 = vsub.s32 0, %v5214
      %v5216 = vrot.slane %v5211, %v5215
      %v5217 = vlaneseq
      %v5218 = vshrl.u32 %v5217, 7
      %v5219 = vsub.s32 1, %v5218
      %v5220 = vrot.slane %v5211, %v5219
      %v5221 = vlaneseq
      %v5222 = vshrl.u32 %v5221, 7
      %v5223 = vsub.s32 2, %v5222
      %v5224 = vrot.slane %v5211, %v5223
      %v5225 = vlaneseq
      %v5226 = vshrl.u32 %v5225, 7
      %v5227 = vsub.s32 3, %v5226
      %v5228 = vrot.slane %v5211, %v5227
      %v5233 = vmul.f32 %v5194, %v5216
      %v5234 = vmul.f32 %v5195, %v5220
      %v5235 = vmul.f32 %v5196, %v5224
      %v5236 = vmul.f32 %v5197, %v5228
      %v5237 = vmul.f32 %v5198, %v5216
      %v5238 = vmul.f32 %v5199, %v5220
      %v5239 = vmul.f32 %v5200, %v5224
      %v5240 = vmul.f32 %v5201, %v5228
      %v5241 = vmul.f32 %v5202, %v5216
      %v5242 = vmul.f32 %v5203, %v5220
      %v5243 = vmul.f32 %v5204, %v5224
      %v5244 = vmul.f32 %v5205, %v5228
      %v5245 = vmul.f32 %v5206, %v5216
      %v5246 = vmul.f32 %v5207, %v5220
      %v5247 = vmul.f32 %v5208, %v5224
      %v5248 = vmul.f32 %v5209, %v5228
      %v5249 = vadd.f32 %v5146, %v5233
      %v5250 = vadd.f32 %v5147, %v5234
      %v5251 = vadd.f32 %v5148, %v5235
      %v5252 = vadd.f32 %v5149, %v5236
      %v5253 = vadd.f32 %v5150, %v5237
      %v5254 = vadd.f32 %v5151, %v5238
      %v5255 = vadd.f32 %v5152, %v5239
      %v5256 = vadd.f32 %v5153, %v5240
      %v5257 = vadd.f32 %v5154, %v5241
      %v5258 = vadd.f32 %v5155, %v5242
      %v5259 = vadd.f32 %v5156, %v5243
      %v5260 = vadd.f32 %v5157, %v5244
      %v5261 = vadd.f32 %v5158, %v5245
      %v5262 = vadd.f32 %v5159, %v5246
      %v5263 = vadd.f32 %v5160, %v5247
      %v5264 = vadd.f32 %v5161, %v5248
      %v5266 = vlaneseq
      %v5267 = vshrl.u32 %v5266, 7
      %v5268 = vsub.s32 0, %v5267
      %v5269 = vrot.slane %v759, %v5268
      %v5270 = vlaneseq
      %v5271 = vshrl.u32 %v5270, 7
      %v5272 = vsub.s32 1, %v5271
      %v5273 = vrot.slane %v759, %v5272
      %v5274 = vlaneseq
      %v5275 = vshrl.u32 %v5274, 7
      %v5276 = vsub.s32 2, %v5275
      %v5277 = vrot.slane %v759, %v5276
      %v5278 = vlaneseq
      %v5279 = vshrl.u32 %v5278, 7
      %v5280 = vsub.s32 3, %v5279
      %v5281 = vrot.slane %v759, %v5280
      %v5286 = vadd.f32 %v5249, %v5269
      %v5287 = vadd.f32 %v5250, %v5273
      %v5288 = vadd.f32 %v5251, %v5277
      %v5289 = vadd.f32 %v5252, %v5281
      %v5290 = vadd.f32 %v5253, %v5269
      %v5291 = vadd.f32 %v5254, %v5273
      %v5292 = vadd.f32 %v5255, %v5277
      %v5293 = vadd.f32 %v5256, %v5281
      %v5294 = vadd.f32 %v5257, %v5269
      %v5295 = vadd.f32 %v5258, %v5273
      %v5296 = vadd.f32 %v5259, %v5277
      %v5297 = vadd.f32 %v5260, %v5281
      %v5298 = vadd.f32 %v5261, %v5269
      %v5299 = vadd.f32 %v5262, %v5273
      %v5300 = vadd.f32 %v5263, %v5277
      %v5301 = vadd.f32 %v5264, %v5281
      %v5302 = vld [vmem:[#allocation3] sm:$0xff]
      %v5303 = vld [vmem:[#allocation3 + $0x8] sm:$0xff]
      %v5304 = vld [vmem:[#allocation3 + $0x10] sm:$0xff]
      %v5305 = vld [vmem:[#allocation3 + $0x18] sm:$0xff]
      %v5306 = vld [vmem:[#allocation3 + $0x20] sm:$0xff]
      %v5307 = vld [vmem:[#allocation3 + $0x28] sm:$0xff]
      %v5308 = vld [vmem:[#allocation3 + $0x30] sm:$0xff]
      %v5309 = vld [vmem:[#allocation3 + $0x38] sm:$0xff]
      %v5310 = vld [vmem:[#allocation3 + $0x40] sm:$0xff]
      %v5311 = vld [vmem:[#allocation3 + $0x48] sm:$0xff]
      %v5312 = vld [vmem:[#allocation3 + $0x50] sm:$0xff]
      %v5313 = vld [vmem:[#allocation3 + $0x58] sm:$0xff]
      %v5314 = vld [vmem:[#allocation3 + $0x60] sm:$0xff]
      %v5315 = vld [vmem:[#allocation3 + $0x68] sm:$0xff]
      %v5316 = vld [vmem:[#allocation3 + $0x70] sm:$0xff]
      %v5317 = vld [vmem:[#allocation3 + $0x78] sm:$0xff]
      %v5318 = vmul.f32 %v5302, %v5286
      %v5319 = vmul.f32 %v5303, %v5287
      %v5320 = vmul.f32 %v5304, %v5288
      %v5321 = vmul.f32 %v5305, %v5289
      %v5322 = vmul.f32 %v5306, %v5290
      %v5323 = vmul.f32 %v5307, %v5291
      %v5324 = vmul.f32 %v5308, %v5292
      %v5325 = vmul.f32 %v5309, %v5293
      %v5326 = vmul.f32 %v5310, %v5294
      %v5327 = vmul.f32 %v5311, %v5295
      %v5328 = vmul.f32 %v5312, %v5296
      %v5329 = vmul.f32 %v5313, %v5297
      %v5330 = vmul.f32 %v5314, %v5298
      %v5331 = vmul.f32 %v5315, %v5299
      %v5332 = vmul.f32 %v5316, %v5300
      %v5333 = vmul.f32 %v5317, %v5301
      %5334 = vst [vmem:[#allocation3] sm:$0xff] %v5318
      %5335 = vst [vmem:[#allocation3 + $0x8] sm:$0xff] %v5319
      %5336 = vst [vmem:[#allocation3 + $0x10] sm:$0xff] %v5320
      %5337 = vst [vmem:[#allocation3 + $0x18] sm:$0xff] %v5321
      %5338 = vst [vmem:[#allocation3 + $0x20] sm:$0xff] %v5322
      %5339 = vst [vmem:[#allocation3 + $0x28] sm:$0xff] %v5323
      %5340 = vst [vmem:[#allocation3 + $0x30] sm:$0xff] %v5324
      %5341 = vst [vmem:[#allocation3 + $0x38] sm:$0xff] %v5325
      %5342 = vst [vmem:[#allocation3 + $0x40] sm:$0xff] %v5326
      %5343 = vst [vmem:[#allocation3 + $0x48] sm:$0xff] %v5327
      %5344 = vst [vmem:[#allocation3 + $0x50] sm:$0xff] %v5328
      %5345 = vst [vmem:[#allocation3 + $0x58] sm:$0xff] %v5329
      %5346 = vst [vmem:[#allocation3 + $0x60] sm:$0xff] %v5330
      %5347 = vst [vmem:[#allocation3 + $0x68] sm:$0xff] %v5331
      %5348 = vst [vmem:[#allocation3 + $0x70] sm:$0xff] %v5332
      %5349 = vst [vmem:[#allocation3 + $0x78] sm:$0xff] %v5333
      %v5350 = vld [vmem:[%s570] sm:$0xff]
      %v5351 = vld [vmem:[%s570 + $0x8] sm:$0xff]
      %v5352 = vld [vmem:[%s570 + $0x10] sm:$0xff]
      %v5353 = vld [vmem:[%s570 + $0x18] sm:$0xff]
      %v5354 = vld [vmem:[%s570 + $0x20] sm:$0xff]
      %v5355 = vld [vmem:[%s570 + $0x28] sm:$0xff]
      %v5356 = vld [vmem:[%s570 + $0x30] sm:$0xff]
      %v5357 = vld [vmem:[%s570 + $0x38] sm:$0xff]
      %v5358 = vld [vmem:[%s570 + $0x40] sm:$0xff]
      %v5359 = vld [vmem:[%s570 + $0x48] sm:$0xff]
      %v5360 = vld [vmem:[%s570 + $0x50] sm:$0xff]
      %v5361 = vld [vmem:[%s570 + $0x58] sm:$0xff]
      %v5362 = vld [vmem:[%s570 + $0x60] sm:$0xff]
      %v5363 = vld [vmem:[%s570 + $0x68] sm:$0xff]
      %v5364 = vld [vmem:[%s570 + $0x70] sm:$0xff]
      %v5365 = vld [vmem:[%s570 + $0x78] sm:$0xff]
      %v5366 = vld [vmem:[%s2] ss:$8 sm:$0xf]
      %v5368 = vlaneseq
      %v5369 = vshrl.u32 %v5368, 7
      %v5370 = vsub.s32 0, %v5369
      %v5371 = vrot.slane %v5366, %v5370
      %v5372 = vlaneseq
      %v5373 = vshrl.u32 %v5372, 7
      %v5374 = vsub.s32 1, %v5373
      %v5375 = vrot.slane %v5366, %v5374
      %v5376 = vlaneseq
      %v5377 = vshrl.u32 %v5376, 7
      %v5378 = vsub.s32 2, %v5377
      %v5379 = vrot.slane %v5366, %v5378
      %v5380 = vlaneseq
      %v5381 = vshrl.u32 %v5380, 7
      %v5382 = vsub.s32 3, %v5381
      %v5383 = vrot.slane %v5366, %v5382
      %v5388 = vmul.f32 %v5350, %v5371
      %v5389 = vmul.f32 %v5351, %v5375
      %v5390 = vmul.f32 %v5352, %v5379
      %v5391 = vmul.f32 %v5353, %v5383
      %v5392 = vmul.f32 %v5354, %v5371
      %v5393 = vmul.f32 %v5355, %v5375
      %v5394 = vmul.f32 %v5356, %v5379
      %v5395 = vmul.f32 %v5357, %v5383
      %v5396 = vmul.f32 %v5358, %v5371
      %v5397 = vmul.f32 %v5359, %v5375
      %v5398 = vmul.f32 %v5360, %v5379
      %v5399 = vmul.f32 %v5361, %v5383
      %v5400 = vmul.f32 %v5362, %v5371
      %v5401 = vmul.f32 %v5363, %v5375
      %v5402 = vmul.f32 %v5364, %v5379
      %v5403 = vmul.f32 %v5365, %v5383
      %5404 = vst [vmem:[#allocation6] sm:$0xff] %v5388
      %5405 = vst [vmem:[#allocation6 + $0x8] sm:$0xff] %v5389
      %5406 = vst [vmem:[#allocation6 + $0x10] sm:$0xff] %v5390
      %5407 = vst [vmem:[#allocation6 + $0x18] sm:$0xff] %v5391
      %5408 = vst [vmem:[#allocation6 + $0x20] sm:$0xff] %v5392
      %5409 = vst [vmem:[#allocation6 + $0x28] sm:$0xff] %v5393
      %5410 = vst [vmem:[#allocation6 + $0x30] sm:$0xff] %v5394
      %5411 = vst [vmem:[#allocation6 + $0x38] sm:$0xff] %v5395
      %5412 = vst [vmem:[#allocation6 + $0x40] sm:$0xff] %v5396
      %5413 = vst [vmem:[#allocation6 + $0x48] sm:$0xff] %v5397
      %5414 = vst [vmem:[#allocation6 + $0x50] sm:$0xff] %v5398
      %5415 = vst [vmem:[#allocation6 + $0x58] sm:$0xff] %v5399
      %5416 = vst [vmem:[#allocation6 + $0x60] sm:$0xff] %v5400
      %5417 = vst [vmem:[#allocation6 + $0x68] sm:$0xff] %v5401
      %5418 = vst [vmem:[#allocation6 + $0x70] sm:$0xff] %v5402
      %5419 = vst [vmem:[#allocation6 + $0x78] sm:$0xff] %v5403
      %s5420 = scalar_lea.vmem %s2, 1
      %v5421 = vld [vmem:[%s5420] ss:$8 sm:$0xf]
      %v5423 = vlaneseq
      %v5424 = vshrl.u32 %v5423, 7
      %v5425 = vsub.s32 0, %v5424
      %v5426 = vrot.slane %v5421, %v5425
      %v5427 = vlaneseq
      %v5428 = vshrl.u32 %v5427, 7
      %v5429 = vsub.s32 1, %v5428
      %v5430 = vrot.slane %v5421, %v5429
      %v5431 = vlaneseq
      %v5432 = vshrl.u32 %v5431, 7
      %v5433 = vsub.s32 2, %v5432
      %v5434 = vrot.slane %v5421, %v5433
      %v5435 = vlaneseq
      %v5436 = vshrl.u32 %v5435, 7
      %v5437 = vsub.s32 3, %v5436
      %v5438 = vrot.slane %v5421, %v5437
      %v5443 = vmul.f32 %v5350, %v5426
      %v5444 = vmul.f32 %v5351, %v5430
      %v5445 = vmul.f32 %v5352, %v5434
      %v5446 = vmul.f32 %v5353, %v5438
      %v5447 = vmul.f32 %v5354, %v5426
      %v5448 = vmul.f32 %v5355, %v5430
      %v5449 = vmul.f32 %v5356, %v5434
      %v5450 = vmul.f32 %v5357, %v5438
      %v5451 = vmul.f32 %v5358, %v5426
      %v5452 = vmul.f32 %v5359, %v5430
      %v5453 = vmul.f32 %v5360, %v5434
      %v5454 = vmul.f32 %v5361, %v5438
      %v5455 = vmul.f32 %v5362, %v5426
      %v5456 = vmul.f32 %v5363, %v5430
      %v5457 = vmul.f32 %v5364, %v5434
      %v5458 = vmul.f32 %v5365, %v5438
      %5459 = vst [vmem:[#allocation6 + $0x80] sm:$0xff] %v5443
      %5460 = vst [vmem:[#allocation6 + $0x88] sm:$0xff] %v5444
      %5461 = vst [vmem:[#allocation6 + $0x90] sm:$0xff] %v5445
      %5462 = vst [vmem:[#allocation6 + $0x98] sm:$0xff] %v5446
      %5463 = vst [vmem:[#allocation6 + $0xa0] sm:$0xff] %v5447
      %5464 = vst [vmem:[#allocation6 + $0xa8] sm:$0xff] %v5448
      %5465 = vst [vmem:[#allocation6 + $0xb0] sm:$0xff] %v5449
      %5466 = vst [vmem:[#allocation6 + $0xb8] sm:$0xff] %v5450
      %5467 = vst [vmem:[#allocation6 + $0xc0] sm:$0xff] %v5451
      %5468 = vst [vmem:[#allocation6 + $0xc8] sm:$0xff] %v5452
      %5469 = vst [vmem:[#allocation6 + $0xd0] sm:$0xff] %v5453
      %5470 = vst [vmem:[#allocation6 + $0xd8] sm:$0xff] %v5454
      %5471 = vst [vmem:[#allocation6 + $0xe0] sm:$0xff] %v5455
      %5472 = vst [vmem:[#allocation6 + $0xe8] sm:$0xff] %v5456
      %5473 = vst [vmem:[#allocation6 + $0xf0] sm:$0xff] %v5457
      %5474 = vst [vmem:[#allocation6 + $0xf8] sm:$0xff] %v5458
      %s5475 = scalar_lea.vmem %s2, 2
      %v5476 = vld [vmem:[%s5475] ss:$8 sm:$0xf]
      %v5478 = vlaneseq
      %v5479 = vshrl.u32 %v5478, 7
      %v5480 = vsub.s32 0, %v5479
      %v5481 = vrot.slane %v5476, %v5480
      %v5482 = vlaneseq
      %v5483 = vshrl.u32 %v5482, 7
      %v5484 = vsub.s32 1, %v5483
      %v5485 = vrot.slane %v5476, %v5484
      %v5486 = vlaneseq
      %v5487 = vshrl.u32 %v5486, 7
      %v5488 = vsub.s32 2, %v5487
      %v5489 = vrot.slane %v5476, %v5488
      %v5490 = vlaneseq
      %v5491 = vshrl.u32 %v5490, 7
      %v5492 = vsub.s32 3, %v5491
      %v5493 = vrot.slane %v5476, %v5492
      %v5498 = vmul.f32 %v5350, %v5481
      %v5499 = vmul.f32 %v5351, %v5485
      %v5500 = vmul.f32 %v5352, %v5489
      %v5501 = vmul.f32 %v5353, %v5493
      %v5502 = vmul.f32 %v5354, %v5481
      %v5503 = vmul.f32 %v5355, %v5485
      %v5504 = vmul.f32 %v5356, %v5489
      %v5505 = vmul.f32 %v5357, %v5493
      %v5506 = vmul.f32 %v5358, %v5481
      %v5507 = vmul.f32 %v5359, %v5485
      %v5508 = vmul.f32 %v5360, %v5489
      %v5509 = vmul.f32 %v5361, %v5493
      %v5510 = vmul.f32 %v5362, %v5481
      %v5511 = vmul.f32 %v5363, %v5485
      %v5512 = vmul.f32 %v5364, %v5489
      %v5513 = vmul.f32 %v5365, %v5493
      %5514 = vst [vmem:[#allocation6 + $0x100] sm:$0xff] %v5498
      %5515 = vst [vmem:[#allocation6 + $0x108] sm:$0xff] %v5499
      %5516 = vst [vmem:[#allocation6 + $0x110] sm:$0xff] %v5500
      %5517 = vst [vmem:[#allocation6 + $0x118] sm:$0xff] %v5501
      %5518 = vst [vmem:[#allocation6 + $0x120] sm:$0xff] %v5502
      %5519 = vst [vmem:[#allocation6 + $0x128] sm:$0xff] %v5503
      %5520 = vst [vmem:[#allocation6 + $0x130] sm:$0xff] %v5504
      %5521 = vst [vmem:[#allocation6 + $0x138] sm:$0xff] %v5505
      %5522 = vst [vmem:[#allocation6 + $0x140] sm:$0xff] %v5506
      %5523 = vst [vmem:[#allocation6 + $0x148] sm:$0xff] %v5507
      %5524 = vst [vmem:[#allocation6 + $0x150] sm:$0xff] %v5508
      %5525 = vst [vmem:[#allocation6 + $0x158] sm:$0xff] %v5509
      %5526 = vst [vmem:[#allocation6 + $0x160] sm:$0xff] %v5510
      %5527 = vst [vmem:[#allocation6 + $0x168] sm:$0xff] %v5511
      %5528 = vst [vmem:[#allocation6 + $0x170] sm:$0xff] %v5512
      %5529 = vst [vmem:[#allocation6 + $0x178] sm:$0xff] %v5513
      %s5530 = scalar_lea.vmem %s2, 3
      %v5531 = vld [vmem:[%s5530] ss:$8 sm:$0xf]
      %v5533 = vlaneseq
      %v5534 = vshrl.u32 %v5533, 7
      %v5535 = vsub.s32 0, %v5534
      %v5536 = vrot.slane %v5531, %v5535
      %v5537 = vlaneseq
      %v5538 = vshrl.u32 %v5537, 7
      %v5539 = vsub.s32 1, %v5538
      %v5540 = vrot.slane %v5531, %v5539
      %v5541 = vlaneseq
      %v5542 = vshrl.u32 %v5541, 7
      %v5543 = vsub.s32 2, %v5542
      %v5544 = vrot.slane %v5531, %v5543
      %v5545 = vlaneseq
      %v5546 = vshrl.u32 %v5545, 7
      %v5547 = vsub.s32 3, %v5546
      %v5548 = vrot.slane %v5531, %v5547
      %v5553 = vmul.f32 %v5350, %v5536
      %v5554 = vmul.f32 %v5351, %v5540
      %v5555 = vmul.f32 %v5352, %v5544
      %v5556 = vmul.f32 %v5353, %v5548
      %v5557 = vmul.f32 %v5354, %v5536
      %v5558 = vmul.f32 %v5355, %v5540
      %v5559 = vmul.f32 %v5356, %v5544
      %v5560 = vmul.f32 %v5357, %v5548
      %v5561 = vmul.f32 %v5358, %v5536
      %v5562 = vmul.f32 %v5359, %v5540
      %v5563 = vmul.f32 %v5360, %v5544
      %v5564 = vmul.f32 %v5361, %v5548
      %v5565 = vmul.f32 %v5362, %v5536
      %v5566 = vmul.f32 %v5363, %v5540
      %v5567 = vmul.f32 %v5364, %v5544
      %v5568 = vmul.f32 %v5365, %v5548
      %5569 = vst [vmem:[#allocation6 + $0x180] sm:$0xff] %v5553
      %5570 = vst [vmem:[#allocation6 + $0x188] sm:$0xff] %v5554
      %5571 = vst [vmem:[#allocation6 + $0x190] sm:$0xff] %v5555
      %5572 = vst [vmem:[#allocation6 + $0x198] sm:$0xff] %v5556
      %5573 = vst [vmem:[#allocation6 + $0x1a0] sm:$0xff] %v5557
      %5574 = vst [vmem:[#allocation6 + $0x1a8] sm:$0xff] %v5558
      %5575 = vst [vmem:[#allocation6 + $0x1b0] sm:$0xff] %v5559
      %5576 = vst [vmem:[#allocation6 + $0x1b8] sm:$0xff] %v5560
      %5577 = vst [vmem:[#allocation6 + $0x1c0] sm:$0xff] %v5561
      %5578 = vst [vmem:[#allocation6 + $0x1c8] sm:$0xff] %v5562
      %5579 = vst [vmem:[#allocation6 + $0x1d0] sm:$0xff] %v5563
      %5580 = vst [vmem:[#allocation6 + $0x1d8] sm:$0xff] %v5564
      %5581 = vst [vmem:[#allocation6 + $0x1e0] sm:$0xff] %v5565
      %5582 = vst [vmem:[#allocation6 + $0x1e8] sm:$0xff] %v5566
      %5583 = vst [vmem:[#allocation6 + $0x1f0] sm:$0xff] %v5567
      %5584 = vst [vmem:[#allocation6 + $0x1f8] sm:$0xff] %v5568
      %s5585 = scalar_lea.vmem %s2, 4
      %v5586 = vld [vmem:[%s5585] ss:$8 sm:$0xf]
      %v5588 = vlaneseq
      %v5589 = vshrl.u32 %v5588, 7
      %v5590 = vsub.s32 0, %v5589
      %v5591 = vrot.slane %v5586, %v5590
      %v5592 = vlaneseq
      %v5593 = vshrl.u32 %v5592, 7
      %v5594 = vsub.s32 1, %v5593
      %v5595 = vrot.slane %v5586, %v5594
      %v5596 = vlaneseq
      %v5597 = vshrl.u32 %v5596, 7
      %v5598 = vsub.s32 2, %v5597
      %v5599 = vrot.slane %v5586, %v5598
      %v5600 = vlaneseq
      %v5601 = vshrl.u32 %v5600, 7
      %v5602 = vsub.s32 3, %v5601
      %v5603 = vrot.slane %v5586, %v5602
      %v5608 = vmul.f32 %v5350, %v5591
      %v5609 = vmul.f32 %v5351, %v5595
      %v5610 = vmul.f32 %v5352, %v5599
      %v5611 = vmul.f32 %v5353, %v5603
      %v5612 = vmul.f32 %v5354, %v5591
      %v5613 = vmul.f32 %v5355, %v5595
      %v5614 = vmul.f32 %v5356, %v5599
      %v5615 = vmul.f32 %v5357, %v5603
      %v5616 = vmul.f32 %v5358, %v5591
      %v5617 = vmul.f32 %v5359, %v5595
      %v5618 = vmul.f32 %v5360, %v5599
      %v5619 = vmul.f32 %v5361, %v5603
      %v5620 = vmul.f32 %v5362, %v5591
      %v5621 = vmul.f32 %v5363, %v5595
      %v5622 = vmul.f32 %v5364, %v5599
      %v5623 = vmul.f32 %v5365, %v5603
      %5624 = vst [vmem:[#allocation6 + $0x200] sm:$0xff] %v5608
      %5625 = vst [vmem:[#allocation6 + $0x208] sm:$0xff] %v5609
      %5626 = vst [vmem:[#allocation6 + $0x210] sm:$0xff] %v5610
      %5627 = vst [vmem:[#allocation6 + $0x218] sm:$0xff] %v5611
      %5628 = vst [vmem:[#allocation6 + $0x220] sm:$0xff] %v5612
      %5629 = vst [vmem:[#allocation6 + $0x228] sm:$0xff] %v5613
      %5630 = vst [vmem:[#allocation6 + $0x230] sm:$0xff] %v5614
      %5631 = vst [vmem:[#allocation6 + $0x238] sm:$0xff] %v5615
      %5632 = vst [vmem:[#allocation6 + $0x240] sm:$0xff] %v5616
      %5633 = vst [vmem:[#allocation6 + $0x248] sm:$0xff] %v5617
      %5634 = vst [vmem:[#allocation6 + $0x250] sm:$0xff] %v5618
      %5635 = vst [vmem:[#allocation6 + $0x258] sm:$0xff] %v5619
      %5636 = vst [vmem:[#allocation6 + $0x260] sm:$0xff] %v5620
      %5637 = vst [vmem:[#allocation6 + $0x268] sm:$0xff] %v5621
      %5638 = vst [vmem:[#allocation6 + $0x270] sm:$0xff] %v5622
      %5639 = vst [vmem:[#allocation6 + $0x278] sm:$0xff] %v5623
      %s5640 = scalar_lea.vmem %s2, 5
      %v5641 = vld [vmem:[%s5640] ss:$8 sm:$0xf]
      %v5643 = vlaneseq
      %v5644 = vshrl.u32 %v5643, 7
      %v5645 = vsub.s32 0, %v5644
      %v5646 = vrot.slane %v5641, %v5645
      %v5647 = vlaneseq
      %v5648 = vshrl.u32 %v5647, 7
      %v5649 = vsub.s32 1, %v5648
      %v5650 = vrot.slane %v5641, %v5649
      %v5651 = vlaneseq
      %v5652 = vshrl.u32 %v5651, 7
      %v5653 = vsub.s32 2, %v5652
      %v5654 = vrot.slane %v5641, %v5653
      %v5655 = vlaneseq
      %v5656 = vshrl.u32 %v5655, 7
      %v5657 = vsub.s32 3, %v5656
      %v5658 = vrot.slane %v5641, %v5657
      %v5663 = vmul.f32 %v5350, %v5646
      %v5664 = vmul.f32 %v5351, %v5650
      %v5665 = vmul.f32 %v5352, %v5654
      %v5666 = vmul.f32 %v5353, %v5658
      %v5667 = vmul.f32 %v5354, %v5646
      %v5668 = vmul.f32 %v5355, %v5650
      %v5669 = vmul.f32 %v5356, %v5654
      %v5670 = vmul.f32 %v5357, %v5658
      %v5671 = vmul.f32 %v5358, %v5646
      %v5672 = vmul.f32 %v5359, %v5650
      %v5673 = vmul.f32 %v5360, %v5654
      %v5674 = vmul.f32 %v5361, %v5658
      %v5675 = vmul.f32 %v5362, %v5646
      %v5676 = vmul.f32 %v5363, %v5650
      %v5677 = vmul.f32 %v5364, %v5654
      %v5678 = vmul.f32 %v5365, %v5658
      %5679 = vst [vmem:[#allocation6 + $0x280] sm:$0xff] %v5663
      %5680 = vst [vmem:[#allocation6 + $0x288] sm:$0xff] %v5664
      %5681 = vst [vmem:[#allocation6 + $0x290] sm:$0xff] %v5665
      %5682 = vst [vmem:[#allocation6 + $0x298] sm:$0xff] %v5666
      %5683 = vst [vmem:[#allocation6 + $0x2a0] sm:$0xff] %v5667
      %5684 = vst [vmem:[#allocation6 + $0x2a8] sm:$0xff] %v5668
      %5685 = vst [vmem:[#allocation6 + $0x2b0] sm:$0xff] %v5669
      %5686 = vst [vmem:[#allocation6 + $0x2b8] sm:$0xff] %v5670
      %5687 = vst [vmem:[#allocation6 + $0x2c0] sm:$0xff] %v5671
      %5688 = vst [vmem:[#allocation6 + $0x2c8] sm:$0xff] %v5672
      %5689 = vst [vmem:[#allocation6 + $0x2d0] sm:$0xff] %v5673
      %5690 = vst [vmem:[#allocation6 + $0x2d8] sm:$0xff] %v5674
      %5691 = vst [vmem:[#allocation6 + $0x2e0] sm:$0xff] %v5675
      %5692 = vst [vmem:[#allocation6 + $0x2e8] sm:$0xff] %v5676
      %5693 = vst [vmem:[#allocation6 + $0x2f0] sm:$0xff] %v5677
      %5694 = vst [vmem:[#allocation6 + $0x2f8] sm:$0xff] %v5678
      %s5695 = scalar_lea.vmem %s2, 6
      %v5696 = vld [vmem:[%s5695] ss:$8 sm:$0xf]
      %v5698 = vlaneseq
      %v5699 = vshrl.u32 %v5698, 7
      %v5700 = vsub.s32 0, %v5699
      %v5701 = vrot.slane %v5696, %v5700
      %v5702 = vlaneseq
      %v5703 = vshrl.u32 %v5702, 7
      %v5704 = vsub.s32 1, %v5703
      %v5705 = vrot.slane %v5696, %v5704
      %v5706 = vlaneseq
      %v5707 = vshrl.u32 %v5706, 7
      %v5708 = vsub.s32 2, %v5707
      %v5709 = vrot.slane %v5696, %v5708
      %v5710 = vlaneseq
      %v5711 = vshrl.u32 %v5710, 7
      %v5712 = vsub.s32 3, %v5711
      %v5713 = vrot.slane %v5696, %v5712
      %v5718 = vmul.f32 %v5350, %v5701
      %v5719 = vmul.f32 %v5351, %v5705
      %v5720 = vmul.f32 %v5352, %v5709
      %v5721 = vmul.f32 %v5353, %v5713
      %v5722 = vmul.f32 %v5354, %v5701
      %v5723 = vmul.f32 %v5355, %v5705
      %v5724 = vmul.f32 %v5356, %v5709
      %v5725 = vmul.f32 %v5357, %v5713
      %v5726 = vmul.f32 %v5358, %v5701
      %v5727 = vmul.f32 %v5359, %v5705
      %v5728 = vmul.f32 %v5360, %v5709
      %v5729 = vmul.f32 %v5361, %v5713
      %v5730 = vmul.f32 %v5362, %v5701
      %v5731 = vmul.f32 %v5363, %v5705
      %v5732 = vmul.f32 %v5364, %v5709
      %v5733 = vmul.f32 %v5365, %v5713
      %5734 = vst [vmem:[#allocation6 + $0x300] sm:$0xff] %v5718
      %5735 = vst [vmem:[#allocation6 + $0x308] sm:$0xff] %v5719
      %5736 = vst [vmem:[#allocation6 + $0x310] sm:$0xff] %v5720
      %5737 = vst [vmem:[#allocation6 + $0x318] sm:$0xff] %v5721
      %5738 = vst [vmem:[#allocation6 + $0x320] sm:$0xff] %v5722
      %5739 = vst [vmem:[#allocation6 + $0x328] sm:$0xff] %v5723
      %5740 = vst [vmem:[#allocation6 + $0x330] sm:$0xff] %v5724
      %5741 = vst [vmem:[#allocation6 + $0x338] sm:$0xff] %v5725
      %5742 = vst [vmem:[#allocation6 + $0x340] sm:$0xff] %v5726
      %5743 = vst [vmem:[#allocation6 + $0x348] sm:$0xff] %v5727
      %5744 = vst [vmem:[#allocation6 + $0x350] sm:$0xff] %v5728
      %5745 = vst [vmem:[#allocation6 + $0x358] sm:$0xff] %v5729
      %5746 = vst [vmem:[#allocation6 + $0x360] sm:$0xff] %v5730
      %5747 = vst [vmem:[#allocation6 + $0x368] sm:$0xff] %v5731
      %5748 = vst [vmem:[#allocation6 + $0x370] sm:$0xff] %v5732
      %5749 = vst [vmem:[#allocation6 + $0x378] sm:$0xff] %v5733
      %s5750 = scalar_lea.vmem %s2, 7
      %v5751 = vld [vmem:[%s5750] ss:$8 sm:$0xf]
      %v5753 = vlaneseq
      %v5754 = vshrl.u32 %v5753, 7
      %v5755 = vsub.s32 0, %v5754
      %v5756 = vrot.slane %v5751, %v5755
      %v5757 = vlaneseq
      %v5758 = vshrl.u32 %v5757, 7
      %v5759 = vsub.s32 1, %v5758
      %v5760 = vrot.slane %v5751, %v5759
      %v5761 = vlaneseq
      %v5762 = vshrl.u32 %v5761, 7
      %v5763 = vsub.s32 2, %v5762
      %v5764 = vrot.slane %v5751, %v5763
      %v5765 = vlaneseq
      %v5766 = vshrl.u32 %v5765, 7
      %v5767 = vsub.s32 3, %v5766
      %v5768 = vrot.slane %v5751, %v5767
      %v5773 = vmul.f32 %v5350, %v5756
      %v5774 = vmul.f32 %v5351, %v5760
      %v5775 = vmul.f32 %v5352, %v5764
      %v5776 = vmul.f32 %v5353, %v5768
      %v5777 = vmul.f32 %v5354, %v5756
      %v5778 = vmul.f32 %v5355, %v5760
      %v5779 = vmul.f32 %v5356, %v5764
      %v5780 = vmul.f32 %v5357, %v5768
      %v5781 = vmul.f32 %v5358, %v5756
      %v5782 = vmul.f32 %v5359, %v5760
      %v5783 = vmul.f32 %v5360, %v5764
      %v5784 = vmul.f32 %v5361, %v5768
      %v5785 = vmul.f32 %v5362, %v5756
      %v5786 = vmul.f32 %v5363, %v5760
      %v5787 = vmul.f32 %v5364, %v5764
      %v5788 = vmul.f32 %v5365, %v5768
      %5789 = vst [vmem:[#allocation6 + $0x380] sm:$0xff] %v5773
      %5790 = vst [vmem:[#allocation6 + $0x388] sm:$0xff] %v5774
      %5791 = vst [vmem:[#allocation6 + $0x390] sm:$0xff] %v5775
      %5792 = vst [vmem:[#allocation6 + $0x398] sm:$0xff] %v5776
      %5793 = vst [vmem:[#allocation6 + $0x3a0] sm:$0xff] %v5777
      %5794 = vst [vmem:[#allocation6 + $0x3a8] sm:$0xff] %v5778
      %5795 = vst [vmem:[#allocation6 + $0x3b0] sm:$0xff] %v5779
      %5796 = vst [vmem:[#allocation6 + $0x3b8] sm:$0xff] %v5780
      %5797 = vst [vmem:[#allocation6 + $0x3c0] sm:$0xff] %v5781
      %5798 = vst [vmem:[#allocation6 + $0x3c8] sm:$0xff] %v5782
      %5799 = vst [vmem:[#allocation6 + $0x3d0] sm:$0xff] %v5783
      %5800 = vst [vmem:[#allocation6 + $0x3d8] sm:$0xff] %v5784
      %5801 = vst [vmem:[#allocation6 + $0x3e0] sm:$0xff] %v5785
      %5802 = vst [vmem:[#allocation6 + $0x3e8] sm:$0xff] %v5786
      %5803 = vst [vmem:[#allocation6 + $0x3f0] sm:$0xff] %v5787
      %5804 = vst [vmem:[#allocation6 + $0x3f8] sm:$0xff] %v5788
      %s5805 = scalar_lea.vmem %s2, 32
      %v5806 = vld [vmem:[%s5805] ss:$8 sm:$0xf]
      %v5808 = vlaneseq
      %v5809 = vshrl.u32 %v5808, 7
      %v5810 = vsub.s32 0, %v5809
      %v5811 = vrot.slane %v5806, %v5810
      %v5812 = vlaneseq
      %v5813 = vshrl.u32 %v5812, 7
      %v5814 = vsub.s32 1, %v5813
      %v5815 = vrot.slane %v5806, %v5814
      %v5816 = vlaneseq
      %v5817 = vshrl.u32 %v5816, 7
      %v5818 = vsub.s32 2, %v5817
      %v5819 = vrot.slane %v5806, %v5818
      %v5820 = vlaneseq
      %v5821 = vshrl.u32 %v5820, 7
      %v5822 = vsub.s32 3, %v5821
      %v5823 = vrot.slane %v5806, %v5822
      %v5828 = vmul.f32 %v5350, %v5811
      %v5829 = vmul.f32 %v5351, %v5815
      %v5830 = vmul.f32 %v5352, %v5819
      %v5831 = vmul.f32 %v5353, %v5823
      %v5832 = vmul.f32 %v5354, %v5811
      %v5833 = vmul.f32 %v5355, %v5815
      %v5834 = vmul.f32 %v5356, %v5819
      %v5835 = vmul.f32 %v5357, %v5823
      %v5836 = vmul.f32 %v5358, %v5811
      %v5837 = vmul.f32 %v5359, %v5815
      %v5838 = vmul.f32 %v5360, %v5819
      %v5839 = vmul.f32 %v5361, %v5823
      %v5840 = vmul.f32 %v5362, %v5811
      %v5841 = vmul.f32 %v5363, %v5815
      %v5842 = vmul.f32 %v5364, %v5819
      %v5843 = vmul.f32 %v5365, %v5823
      %5844 = vst [vmem:[#allocation6 + $0x400] sm:$0xff] %v5828
      %5845 = vst [vmem:[#allocation6 + $0x408] sm:$0xff] %v5829
      %5846 = vst [vmem:[#allocation6 + $0x410] sm:$0xff] %v5830
      %5847 = vst [vmem:[#allocation6 + $0x418] sm:$0xff] %v5831
      %5848 = vst [vmem:[#allocation6 + $0x420] sm:$0xff] %v5832
      %5849 = vst [vmem:[#allocation6 + $0x428] sm:$0xff] %v5833
      %5850 = vst [vmem:[#allocation6 + $0x430] sm:$0xff] %v5834
      %5851 = vst [vmem:[#allocation6 + $0x438] sm:$0xff] %v5835
      %5852 = vst [vmem:[#allocation6 + $0x440] sm:$0xff] %v5836
      %5853 = vst [vmem:[#allocation6 + $0x448] sm:$0xff] %v5837
      %5854 = vst [vmem:[#allocation6 + $0x450] sm:$0xff] %v5838
      %5855 = vst [vmem:[#allocation6 + $0x458] sm:$0xff] %v5839
      %5856 = vst [vmem:[#allocation6 + $0x460] sm:$0xff] %v5840
      %5857 = vst [vmem:[#allocation6 + $0x468] sm:$0xff] %v5841
      %5858 = vst [vmem:[#allocation6 + $0x470] sm:$0xff] %v5842
      %5859 = vst [vmem:[#allocation6 + $0x478] sm:$0xff] %v5843
      %s5860 = scalar_lea.vmem %s2, 33
      %v5861 = vld [vmem:[%s5860] ss:$8 sm:$0xf]
      %v5863 = vlaneseq
      %v5864 = vshrl.u32 %v5863, 7
      %v5865 = vsub.s32 0, %v5864
      %v5866 = vrot.slane %v5861, %v5865
      %v5867 = vlaneseq
      %v5868 = vshrl.u32 %v5867, 7
      %v5869 = vsub.s32 1, %v5868
      %v5870 = vrot.slane %v5861, %v5869
      %v5871 = vlaneseq
      %v5872 = vshrl.u32 %v5871, 7
      %v5873 = vsub.s32 2, %v5872
      %v5874 = vrot.slane %v5861, %v5873
      %v5875 = vlaneseq
      %v5876 = vshrl.u32 %v5875, 7
      %v5877 = vsub.s32 3, %v5876
      %v5878 = vrot.slane %v5861, %v5877
      %v5883 = vmul.f32 %v5350, %v5866
      %v5884 = vmul.f32 %v5351, %v5870
      %v5885 = vmul.f32 %v5352, %v5874
      %v5886 = vmul.f32 %v5353, %v5878
      %v5887 = vmul.f32 %v5354, %v5866
      %v5888 = vmul.f32 %v5355, %v5870
      %v5889 = vmul.f32 %v5356, %v5874
      %v5890 = vmul.f32 %v5357, %v5878
      %v5891 = vmul.f32 %v5358, %v5866
      %v5892 = vmul.f32 %v5359, %v5870
      %v5893 = vmul.f32 %v5360, %v5874
      %v5894 = vmul.f32 %v5361, %v5878
      %v5895 = vmul.f32 %v5362, %v5866
      %v5896 = vmul.f32 %v5363, %v5870
      %v5897 = vmul.f32 %v5364, %v5874
      %v5898 = vmul.f32 %v5365, %v5878
      %5899 = vst [vmem:[#allocation6 + $0x480] sm:$0xff] %v5883
      %5900 = vst [vmem:[#allocation6 + $0x488] sm:$0xff] %v5884
      %5901 = vst [vmem:[#allocation6 + $0x490] sm:$0xff] %v5885
      %5902 = vst [vmem:[#allocation6 + $0x498] sm:$0xff] %v5886
      %5903 = vst [vmem:[#allocation6 + $0x4a0] sm:$0xff] %v5887
      %5904 = vst [vmem:[#allocation6 + $0x4a8] sm:$0xff] %v5888
      %5905 = vst [vmem:[#allocation6 + $0x4b0] sm:$0xff] %v5889
      %5906 = vst [vmem:[#allocation6 + $0x4b8] sm:$0xff] %v5890
      %5907 = vst [vmem:[#allocation6 + $0x4c0] sm:$0xff] %v5891
      %5908 = vst [vmem:[#allocation6 + $0x4c8] sm:$0xff] %v5892
      %5909 = vst [vmem:[#allocation6 + $0x4d0] sm:$0xff] %v5893
      %5910 = vst [vmem:[#allocation6 + $0x4d8] sm:$0xff] %v5894
      %5911 = vst [vmem:[#allocation6 + $0x4e0] sm:$0xff] %v5895
      %5912 = vst [vmem:[#allocation6 + $0x4e8] sm:$0xff] %v5896
      %5913 = vst [vmem:[#allocation6 + $0x4f0] sm:$0xff] %v5897
      %5914 = vst [vmem:[#allocation6 + $0x4f8] sm:$0xff] %v5898
      %s5915 = scalar_lea.vmem %s2, 34
      %v5916 = vld [vmem:[%s5915] ss:$8 sm:$0xf]
      %v5918 = vlaneseq
      %v5919 = vshrl.u32 %v5918, 7
      %v5920 = vsub.s32 0, %v5919
      %v5921 = vrot.slane %v5916, %v5920
      %v5922 = vlaneseq
      %v5923 = vshrl.u32 %v5922, 7
      %v5924 = vsub.s32 1, %v5923
      %v5925 = vrot.slane %v5916, %v5924
      %v5926 = vlaneseq
      %v5927 = vshrl.u32 %v5926, 7
      %v5928 = vsub.s32 2, %v5927
      %v5929 = vrot.slane %v5916, %v5928
      %v5930 = vlaneseq
      %v5931 = vshrl.u32 %v5930, 7
      %v5932 = vsub.s32 3, %v5931
      %v5933 = vrot.slane %v5916, %v5932
      %v5938 = vmul.f32 %v5350, %v5921
      %v5939 = vmul.f32 %v5351, %v5925
      %v5940 = vmul.f32 %v5352, %v5929
      %v5941 = vmul.f32 %v5353, %v5933
      %v5942 = vmul.f32 %v5354, %v5921
      %v5943 = vmul.f32 %v5355, %v5925
      %v5944 = vmul.f32 %v5356, %v5929
      %v5945 = vmul.f32 %v5357, %v5933
      %v5946 = vmul.f32 %v5358, %v5921
      %v5947 = vmul.f32 %v5359, %v5925
      %v5948 = vmul.f32 %v5360, %v5929
      %v5949 = vmul.f32 %v5361, %v5933
      %v5950 = vmul.f32 %v5362, %v5921
      %v5951 = vmul.f32 %v5363, %v5925
      %v5952 = vmul.f32 %v5364, %v5929
      %v5953 = vmul.f32 %v5365, %v5933
      %5954 = vst [vmem:[#allocation6 + $0x500] sm:$0xff] %v5938
      %5955 = vst [vmem:[#allocation6 + $0x508] sm:$0xff] %v5939
      %5956 = vst [vmem:[#allocation6 + $0x510] sm:$0xff] %v5940
      %5957 = vst [vmem:[#allocation6 + $0x518] sm:$0xff] %v5941
      %5958 = vst [vmem:[#allocation6 + $0x520] sm:$0xff] %v5942
      %5959 = vst [vmem:[#allocation6 + $0x528] sm:$0xff] %v5943
      %5960 = vst [vmem:[#allocation6 + $0x530] sm:$0xff] %v5944
      %5961 = vst [vmem:[#allocation6 + $0x538] sm:$0xff] %v5945
      %5962 = vst [vmem:[#allocation6 + $0x540] sm:$0xff] %v5946
      %5963 = vst [vmem:[#allocation6 + $0x548] sm:$0xff] %v5947
      %5964 = vst [vmem:[#allocation6 + $0x550] sm:$0xff] %v5948
      %5965 = vst [vmem:[#allocation6 + $0x558] sm:$0xff] %v5949
      %5966 = vst [vmem:[#allocation6 + $0x560] sm:$0xff] %v5950
      %5967 = vst [vmem:[#allocation6 + $0x568] sm:$0xff] %v5951
      %5968 = vst [vmem:[#allocation6 + $0x570] sm:$0xff] %v5952
      %5969 = vst [vmem:[#allocation6 + $0x578] sm:$0xff] %v5953
      %s5970 = scalar_lea.vmem %s2, 35
      %v5971 = vld [vmem:[%s5970] ss:$8 sm:$0xf]
      %v5973 = vlaneseq
      %v5974 = vshrl.u32 %v5973, 7
      %v5975 = vsub.s32 0, %v5974
      %v5976 = vrot.slane %v5971, %v5975
      %v5977 = vlaneseq
      %v5978 = vshrl.u32 %v5977, 7
      %v5979 = vsub.s32 1, %v5978
      %v5980 = vrot.slane %v5971, %v5979
      %v5981 = vlaneseq
      %v5982 = vshrl.u32 %v5981, 7
      %v5983 = vsub.s32 2, %v5982
      %v5984 = vrot.slane %v5971, %v5983
      %v5985 = vlaneseq
      %v5986 = vshrl.u32 %v5985, 7
      %v5987 = vsub.s32 3, %v5986
      %v5988 = vrot.slane %v5971, %v5987
      %v5993 = vmul.f32 %v5350, %v5976
      %v5994 = vmul.f32 %v5351, %v5980
      %v5995 = vmul.f32 %v5352, %v5984
      %v5996 = vmul.f32 %v5353, %v5988
      %v5997 = vmul.f32 %v5354, %v5976
      %v5998 = vmul.f32 %v5355, %v5980
      %v5999 = vmul.f32 %v5356, %v5984
      %v6000 = vmul.f32 %v5357, %v5988
      %v6001 = vmul.f32 %v5358, %v5976
      %v6002 = vmul.f32 %v5359, %v5980
      %v6003 = vmul.f32 %v5360, %v5984
      %v6004 = vmul.f32 %v5361, %v5988
      %v6005 = vmul.f32 %v5362, %v5976
      %v6006 = vmul.f32 %v5363, %v5980
      %v6007 = vmul.f32 %v5364, %v5984
      %v6008 = vmul.f32 %v5365, %v5988
      %6009 = vst [vmem:[#allocation6 + $0x580] sm:$0xff] %v5993
      %6010 = vst [vmem:[#allocation6 + $0x588] sm:$0xff] %v5994
      %6011 = vst [vmem:[#allocation6 + $0x590] sm:$0xff] %v5995
      %6012 = vst [vmem:[#allocation6 + $0x598] sm:$0xff] %v5996
      %6013 = vst [vmem:[#allocation6 + $0x5a0] sm:$0xff] %v5997
      %6014 = vst [vmem:[#allocation6 + $0x5a8] sm:$0xff] %v5998
      %6015 = vst [vmem:[#allocation6 + $0x5b0] sm:$0xff] %v5999
      %6016 = vst [vmem:[#allocation6 + $0x5b8] sm:$0xff] %v6000
      %6017 = vst [vmem:[#allocation6 + $0x5c0] sm:$0xff] %v6001
      %6018 = vst [vmem:[#allocation6 + $0x5c8] sm:$0xff] %v6002
      %6019 = vst [vmem:[#allocation6 + $0x5d0] sm:$0xff] %v6003
      %6020 = vst [vmem:[#allocation6 + $0x5d8] sm:$0xff] %v6004
      %6021 = vst [vmem:[#allocation6 + $0x5e0] sm:$0xff] %v6005
      %6022 = vst [vmem:[#allocation6 + $0x5e8] sm:$0xff] %v6006
      %6023 = vst [vmem:[#allocation6 + $0x5f0] sm:$0xff] %v6007
      %6024 = vst [vmem:[#allocation6 + $0x5f8] sm:$0xff] %v6008
      %s6025 = scalar_lea.vmem %s2, 36
      %v6026 = vld [vmem:[%s6025] ss:$8 sm:$0xf]
      %v6028 = vlaneseq
      %v6029 = vshrl.u32 %v6028, 7
      %v6030 = vsub.s32 0, %v6029
      %v6031 = vrot.slane %v6026, %v6030
      %v6032 = vlaneseq
      %v6033 = vshrl.u32 %v6032, 7
      %v6034 = vsub.s32 1, %v6033
      %v6035 = vrot.slane %v6026, %v6034
      %v6036 = vlaneseq
      %v6037 = vshrl.u32 %v6036, 7
      %v6038 = vsub.s32 2, %v6037
      %v6039 = vrot.slane %v6026, %v6038
      %v6040 = vlaneseq
      %v6041 = vshrl.u32 %v6040, 7
      %v6042 = vsub.s32 3, %v6041
      %v6043 = vrot.slane %v6026, %v6042
      %v6048 = vmul.f32 %v5350, %v6031
      %v6049 = vmul.f32 %v5351, %v6035
      %v6050 = vmul.f32 %v5352, %v6039
      %v6051 = vmul.f32 %v5353, %v6043
      %v6052 = vmul.f32 %v5354, %v6031
      %v6053 = vmul.f32 %v5355, %v6035
      %v6054 = vmul.f32 %v5356, %v6039
      %v6055 = vmul.f32 %v5357, %v6043
      %v6056 = vmul.f32 %v5358, %v6031
      %v6057 = vmul.f32 %v5359, %v6035
      %v6058 = vmul.f32 %v5360, %v6039
      %v6059 = vmul.f32 %v5361, %v6043
      %v6060 = vmul.f32 %v5362, %v6031
      %v6061 = vmul.f32 %v5363, %v6035
      %v6062 = vmul.f32 %v5364, %v6039
      %v6063 = vmul.f32 %v5365, %v6043
      %6064 = vst [vmem:[#allocation6 + $0x600] sm:$0xff] %v6048
      %6065 = vst [vmem:[#allocation6 + $0x608] sm:$0xff] %v6049
      %6066 = vst [vmem:[#allocation6 + $0x610] sm:$0xff] %v6050
      %6067 = vst [vmem:[#allocation6 + $0x618] sm:$0xff] %v6051
      %6068 = vst [vmem:[#allocation6 + $0x620] sm:$0xff] %v6052
      %6069 = vst [vmem:[#allocation6 + $0x628] sm:$0xff] %v6053
      %6070 = vst [vmem:[#allocation6 + $0x630] sm:$0xff] %v6054
      %6071 = vst [vmem:[#allocation6 + $0x638] sm:$0xff] %v6055
      %6072 = vst [vmem:[#allocation6 + $0x640] sm:$0xff] %v6056
      %6073 = vst [vmem:[#allocation6 + $0x648] sm:$0xff] %v6057
      %6074 = vst [vmem:[#allocation6 + $0x650] sm:$0xff] %v6058
      %6075 = vst [vmem:[#allocation6 + $0x658] sm:$0xff] %v6059
      %6076 = vst [vmem:[#allocation6 + $0x660] sm:$0xff] %v6060
      %6077 = vst [vmem:[#allocation6 + $0x668] sm:$0xff] %v6061
      %6078 = vst [vmem:[#allocation6 + $0x670] sm:$0xff] %v6062
      %6079 = vst [vmem:[#allocation6 + $0x678] sm:$0xff] %v6063
      %s6080 = scalar_lea.vmem %s2, 37
      %v6081 = vld [vmem:[%s6080] ss:$8 sm:$0xf]
      %v6083 = vlaneseq
      %v6084 = vshrl.u32 %v6083, 7
      %v6085 = vsub.s32 0, %v6084
      %v6086 = vrot.slane %v6081, %v6085
      %v6087 = vlaneseq
      %v6088 = vshrl.u32 %v6087, 7
      %v6089 = vsub.s32 1, %v6088
      %v6090 = vrot.slane %v6081, %v6089
      %v6091 = vlaneseq
      %v6092 = vshrl.u32 %v6091, 7
      %v6093 = vsub.s32 2, %v6092
      %v6094 = vrot.slane %v6081, %v6093
      %v6095 = vlaneseq
      %v6096 = vshrl.u32 %v6095, 7
      %v6097 = vsub.s32 3, %v6096
      %v6098 = vrot.slane %v6081, %v6097
      %v6103 = vmul.f32 %v5350, %v6086
      %v6104 = vmul.f32 %v5351, %v6090
      %v6105 = vmul.f32 %v5352, %v6094
      %v6106 = vmul.f32 %v5353, %v6098
      %v6107 = vmul.f32 %v5354, %v6086
      %v6108 = vmul.f32 %v5355, %v6090
      %v6109 = vmul.f32 %v5356, %v6094
      %v6110 = vmul.f32 %v5357, %v6098
      %v6111 = vmul.f32 %v5358, %v6086
      %v6112 = vmul.f32 %v5359, %v6090
      %v6113 = vmul.f32 %v5360, %v6094
      %v6114 = vmul.f32 %v5361, %v6098
      %v6115 = vmul.f32 %v5362, %v6086
      %v6116 = vmul.f32 %v5363, %v6090
      %v6117 = vmul.f32 %v5364, %v6094
      %v6118 = vmul.f32 %v5365, %v6098
      %6119 = vst [vmem:[#allocation6 + $0x680] sm:$0xff] %v6103
      %6120 = vst [vmem:[#allocation6 + $0x688] sm:$0xff] %v6104
      %6121 = vst [vmem:[#allocation6 + $0x690] sm:$0xff] %v6105
      %6122 = vst [vmem:[#allocation6 + $0x698] sm:$0xff] %v6106
      %6123 = vst [vmem:[#allocation6 + $0x6a0] sm:$0xff] %v6107
      %6124 = vst [vmem:[#allocation6 + $0x6a8] sm:$0xff] %v6108
      %6125 = vst [vmem:[#allocation6 + $0x6b0] sm:$0xff] %v6109
      %6126 = vst [vmem:[#allocation6 + $0x6b8] sm:$0xff] %v6110
      %6127 = vst [vmem:[#allocation6 + $0x6c0] sm:$0xff] %v6111
      %6128 = vst [vmem:[#allocation6 + $0x6c8] sm:$0xff] %v6112
      %6129 = vst [vmem:[#allocation6 + $0x6d0] sm:$0xff] %v6113
      %6130 = vst [vmem:[#allocation6 + $0x6d8] sm:$0xff] %v6114
      %6131 = vst [vmem:[#allocation6 + $0x6e0] sm:$0xff] %v6115
      %6132 = vst [vmem:[#allocation6 + $0x6e8] sm:$0xff] %v6116
      %6133 = vst [vmem:[#allocation6 + $0x6f0] sm:$0xff] %v6117
      %6134 = vst [vmem:[#allocation6 + $0x6f8] sm:$0xff] %v6118
      %s6135 = scalar_lea.vmem %s2, 38
      %v6136 = vld [vmem:[%s6135] ss:$8 sm:$0xf]
      %v6138 = vlaneseq
      %v6139 = vshrl.u32 %v6138, 7
      %v6140 = vsub.s32 0, %v6139
      %v6141 = vrot.slane %v6136, %v6140
      %v6142 = vlaneseq
      %v6143 = vshrl.u32 %v6142, 7
      %v6144 = vsub.s32 1, %v6143
      %v6145 = vrot.slane %v6136, %v6144
      %v6146 = vlaneseq
      %v6147 = vshrl.u32 %v6146, 7
      %v6148 = vsub.s32 2, %v6147
      %v6149 = vrot.slane %v6136, %v6148
      %v6150 = vlaneseq
      %v6151 = vshrl.u32 %v6150, 7
      %v6152 = vsub.s32 3, %v6151
      %v6153 = vrot.slane %v6136, %v6152
      %v6158 = vmul.f32 %v5350, %v6141
      %v6159 = vmul.f32 %v5351, %v6145
      %v6160 = vmul.f32 %v5352, %v6149
      %v6161 = vmul.f32 %v5353, %v6153
      %v6162 = vmul.f32 %v5354, %v6141
      %v6163 = vmul.f32 %v5355, %v6145
      %v6164 = vmul.f32 %v5356, %v6149
      %v6165 = vmul.f32 %v5357, %v6153
      %v6166 = vmul.f32 %v5358, %v6141
      %v6167 = vmul.f32 %v5359, %v6145
      %v6168 = vmul.f32 %v5360, %v6149
      %v6169 = vmul.f32 %v5361, %v6153
      %v6170 = vmul.f32 %v5362, %v6141
      %v6171 = vmul.f32 %v5363, %v6145
      %v6172 = vmul.f32 %v5364, %v6149
      %v6173 = vmul.f32 %v5365, %v6153
      %6174 = vst [vmem:[#allocation6 + $0x700] sm:$0xff] %v6158
      %6175 = vst [vmem:[#allocation6 + $0x708] sm:$0xff] %v6159
      %6176 = vst [vmem:[#allocation6 + $0x710] sm:$0xff] %v6160
      %6177 = vst [vmem:[#allocation6 + $0x718] sm:$0xff] %v6161
      %6178 = vst [vmem:[#allocation6 + $0x720] sm:$0xff] %v6162
      %6179 = vst [vmem:[#allocation6 + $0x728] sm:$0xff] %v6163
      %6180 = vst [vmem:[#allocation6 + $0x730] sm:$0xff] %v6164
      %6181 = vst [vmem:[#allocation6 + $0x738] sm:$0xff] %v6165
      %6182 = vst [vmem:[#allocation6 + $0x740] sm:$0xff] %v6166
      %6183 = vst [vmem:[#allocation6 + $0x748] sm:$0xff] %v6167
      %6184 = vst [vmem:[#allocation6 + $0x750] sm:$0xff] %v6168
      %6185 = vst [vmem:[#allocation6 + $0x758] sm:$0xff] %v6169
      %6186 = vst [vmem:[#allocation6 + $0x760] sm:$0xff] %v6170
      %6187 = vst [vmem:[#allocation6 + $0x768] sm:$0xff] %v6171
      %6188 = vst [vmem:[#allocation6 + $0x770] sm:$0xff] %v6172
      %6189 = vst [vmem:[#allocation6 + $0x778] sm:$0xff] %v6173
      %s6190 = scalar_lea.vmem %s2, 39
      %v6191 = vld [vmem:[%s6190] ss:$8 sm:$0xf]
      %v6193 = vlaneseq
      %v6194 = vshrl.u32 %v6193, 7
      %v6195 = vsub.s32 0, %v6194
      %v6196 = vrot.slane %v6191, %v6195
      %v6197 = vlaneseq
      %v6198 = vshrl.u32 %v6197, 7
      %v6199 = vsub.s32 1, %v6198
      %v6200 = vrot.slane %v6191, %v6199
      %v6201 = vlaneseq
      %v6202 = vshrl.u32 %v6201, 7
      %v6203 = vsub.s32 2, %v6202
      %v6204 = vrot.slane %v6191, %v6203
      %v6205 = vlaneseq
      %v6206 = vshrl.u32 %v6205, 7
      %v6207 = vsub.s32 3, %v6206
      %v6208 = vrot.slane %v6191, %v6207
      %v6213 = vmul.f32 %v5350, %v6196
      %v6214 = vmul.f32 %v5351, %v6200
      %v6215 = vmul.f32 %v5352, %v6204
      %v6216 = vmul.f32 %v5353, %v6208
      %v6217 = vmul.f32 %v5354, %v6196
      %v6218 = vmul.f32 %v5355, %v6200
      %v6219 = vmul.f32 %v5356, %v6204
      %v6220 = vmul.f32 %v5357, %v6208
      %v6221 = vmul.f32 %v5358, %v6196
      %v6222 = vmul.f32 %v5359, %v6200
      %v6223 = vmul.f32 %v5360, %v6204
      %v6224 = vmul.f32 %v5361, %v6208
      %v6225 = vmul.f32 %v5362, %v6196
      %v6226 = vmul.f32 %v5363, %v6200
      %v6227 = vmul.f32 %v5364, %v6204
      %v6228 = vmul.f32 %v5365, %v6208
      %6229 = vst [vmem:[#allocation6 + $0x780] sm:$0xff] %v6213
      %6230 = vst [vmem:[#allocation6 + $0x788] sm:$0xff] %v6214
      %6231 = vst [vmem:[#allocation6 + $0x790] sm:$0xff] %v6215
      %6232 = vst [vmem:[#allocation6 + $0x798] sm:$0xff] %v6216
      %6233 = vst [vmem:[#allocation6 + $0x7a0] sm:$0xff] %v6217
      %6234 = vst [vmem:[#allocation6 + $0x7a8] sm:$0xff] %v6218
      %6235 = vst [vmem:[#allocation6 + $0x7b0] sm:$0xff] %v6219
      %6236 = vst [vmem:[#allocation6 + $0x7b8] sm:$0xff] %v6220
      %6237 = vst [vmem:[#allocation6 + $0x7c0] sm:$0xff] %v6221
      %6238 = vst [vmem:[#allocation6 + $0x7c8] sm:$0xff] %v6222
      %6239 = vst [vmem:[#allocation6 + $0x7d0] sm:$0xff] %v6223
      %6240 = vst [vmem:[#allocation6 + $0x7d8] sm:$0xff] %v6224
      %6241 = vst [vmem:[#allocation6 + $0x7e0] sm:$0xff] %v6225
      %6242 = vst [vmem:[#allocation6 + $0x7e8] sm:$0xff] %v6226
      %6243 = vst [vmem:[#allocation6 + $0x7f0] sm:$0xff] %v6227
      %6244 = vst [vmem:[#allocation6 + $0x7f8] sm:$0xff] %v6228
      %v6245 = vld [vmem:[#allocation3] sm:$0xff]
      %v6246 = vld [vmem:[#allocation3 + $0x8] sm:$0xff]
      %v6247 = vld [vmem:[#allocation3 + $0x10] sm:$0xff]
      %v6248 = vld [vmem:[#allocation3 + $0x18] sm:$0xff]
      %v6249 = vld [vmem:[#allocation3 + $0x20] sm:$0xff]
      %v6250 = vld [vmem:[#allocation3 + $0x28] sm:$0xff]
      %v6251 = vld [vmem:[#allocation3 + $0x30] sm:$0xff]
      %v6252 = vld [vmem:[#allocation3 + $0x38] sm:$0xff]
      %v6253 = vld [vmem:[#allocation3 + $0x40] sm:$0xff]
      %v6254 = vld [vmem:[#allocation3 + $0x48] sm:$0xff]
      %v6255 = vld [vmem:[#allocation3 + $0x50] sm:$0xff]
      %v6256 = vld [vmem:[#allocation3 + $0x58] sm:$0xff]
      %v6257 = vld [vmem:[#allocation3 + $0x60] sm:$0xff]
      %v6258 = vld [vmem:[#allocation3 + $0x68] sm:$0xff]
      %v6259 = vld [vmem:[#allocation3 + $0x70] sm:$0xff]
      %v6260 = vld [vmem:[#allocation3 + $0x78] sm:$0xff]
      %v6261 = vld [vmem:[#allocation6] sm:$0xff]
      %v6262 = vld [vmem:[#allocation6 + $0x8] sm:$0xff]
      %v6263 = vld [vmem:[#allocation6 + $0x10] sm:$0xff]
      %v6264 = vld [vmem:[#allocation6 + $0x18] sm:$0xff]
      %v6265 = vld [vmem:[#allocation6 + $0x20] sm:$0xff]
      %v6266 = vld [vmem:[#allocation6 + $0x28] sm:$0xff]
      %v6267 = vld [vmem:[#allocation6 + $0x30] sm:$0xff]
      %v6268 = vld [vmem:[#allocation6 + $0x38] sm:$0xff]
      %v6269 = vld [vmem:[#allocation6 + $0x40] sm:$0xff]
      %v6270 = vld [vmem:[#allocation6 + $0x48] sm:$0xff]
      %v6271 = vld [vmem:[#allocation6 + $0x50] sm:$0xff]
      %v6272 = vld [vmem:[#allocation6 + $0x58] sm:$0xff]
      %v6273 = vld [vmem:[#allocation6 + $0x60] sm:$0xff]
      %v6274 = vld [vmem:[#allocation6 + $0x68] sm:$0xff]
      %v6275 = vld [vmem:[#allocation6 + $0x70] sm:$0xff]
      %v6276 = vld [vmem:[#allocation6 + $0x78] sm:$0xff]
      %v6277 = vld [vmem:[#allocation6 + $0x80] sm:$0xff]
      %v6278 = vld [vmem:[#allocation6 + $0x88] sm:$0xff]
      %v6279 = vld [vmem:[#allocation6 + $0x90] sm:$0xff]
      %v6280 = vld [vmem:[#allocation6 + $0x98] sm:$0xff]
      %v6281 = vld [vmem:[#allocation6 + $0xa0] sm:$0xff]
      %v6282 = vld [vmem:[#allocation6 + $0xa8] sm:$0xff]
      %v6283 = vld [vmem:[#allocation6 + $0xb0] sm:$0xff]
      %v6284 = vld [vmem:[#allocation6 + $0xb8] sm:$0xff]
      %v6285 = vld [vmem:[#allocation6 + $0xc0] sm:$0xff]
      %v6286 = vld [vmem:[#allocation6 + $0xc8] sm:$0xff]
      %v6287 = vld [vmem:[#allocation6 + $0xd0] sm:$0xff]
      %v6288 = vld [vmem:[#allocation6 + $0xd8] sm:$0xff]
      %v6289 = vld [vmem:[#allocation6 + $0xe0] sm:$0xff]
      %v6290 = vld [vmem:[#allocation6 + $0xe8] sm:$0xff]
      %v6291 = vld [vmem:[#allocation6 + $0xf0] sm:$0xff]
      %v6292 = vld [vmem:[#allocation6 + $0xf8] sm:$0xff]
      %v6293 = vld [vmem:[#allocation6 + $0x100] sm:$0xff]
      %v6294 = vld [vmem:[#allocation6 + $0x108] sm:$0xff]
      %v6295 = vld [vmem:[#allocation6 + $0x110] sm:$0xff]
      %v6296 = vld [vmem:[#allocation6 + $0x118] sm:$0xff]
      %v6297 = vld [vmem:[#allocation6 + $0x120] sm:$0xff]
      %v6298 = vld [vmem:[#allocation6 + $0x128] sm:$0xff]
      %v6299 = vld [vmem:[#allocation6 + $0x130] sm:$0xff]
      %v6300 = vld [vmem:[#allocation6 + $0x138] sm:$0xff]
      %v6301 = vld [vmem:[#allocation6 + $0x140] sm:$0xff]
      %v6302 = vld [vmem:[#allocation6 + $0x148] sm:$0xff]
      %v6303 = vld [vmem:[#allocation6 + $0x150] sm:$0xff]
      %v6304 = vld [vmem:[#allocation6 + $0x158] sm:$0xff]
      %v6305 = vld [vmem:[#allocation6 + $0x160] sm:$0xff]
      %v6306 = vld [vmem:[#allocation6 + $0x168] sm:$0xff]
      %v6307 = vld [vmem:[#allocation6 + $0x170] sm:$0xff]
      %v6308 = vld [vmem:[#allocation6 + $0x178] sm:$0xff]
      %v6309 = vld [vmem:[#allocation6 + $0x180] sm:$0xff]
      %v6310 = vld [vmem:[#allocation6 + $0x188] sm:$0xff]
      %v6311 = vld [vmem:[#allocation6 + $0x190] sm:$0xff]
      %v6312 = vld [vmem:[#allocation6 + $0x198] sm:$0xff]
      %v6313 = vld [vmem:[#allocation6 + $0x1a0] sm:$0xff]
      %v6314 = vld [vmem:[#allocation6 + $0x1a8] sm:$0xff]
      %v6315 = vld [vmem:[#allocation6 + $0x1b0] sm:$0xff]
      %v6316 = vld [vmem:[#allocation6 + $0x1b8] sm:$0xff]
      %v6317 = vld [vmem:[#allocation6 + $0x1c0] sm:$0xff]
      %v6318 = vld [vmem:[#allocation6 + $0x1c8] sm:$0xff]
      %v6319 = vld [vmem:[#allocation6 + $0x1d0] sm:$0xff]
      %v6320 = vld [vmem:[#allocation6 + $0x1d8] sm:$0xff]
      %v6321 = vld [vmem:[#allocation6 + $0x1e0] sm:$0xff]
      %v6322 = vld [vmem:[#allocation6 + $0x1e8] sm:$0xff]
      %v6323 = vld [vmem:[#allocation6 + $0x1f0] sm:$0xff]
      %v6324 = vld [vmem:[#allocation6 + $0x1f8] sm:$0xff]
      %v6325 = vld [vmem:[#allocation6 + $0x200] sm:$0xff]
      %v6326 = vld [vmem:[#allocation6 + $0x208] sm:$0xff]
      %v6327 = vld [vmem:[#allocation6 + $0x210] sm:$0xff]
      %v6328 = vld [vmem:[#allocation6 + $0x218] sm:$0xff]
      %v6329 = vld [vmem:[#allocation6 + $0x220] sm:$0xff]
      %v6330 = vld [vmem:[#allocation6 + $0x228] sm:$0xff]
      %v6331 = vld [vmem:[#allocation6 + $0x230] sm:$0xff]
      %v6332 = vld [vmem:[#allocation6 + $0x238] sm:$0xff]
      %v6333 = vld [vmem:[#allocation6 + $0x240] sm:$0xff]
      %v6334 = vld [vmem:[#allocation6 + $0x248] sm:$0xff]
      %v6335 = vld [vmem:[#allocation6 + $0x250] sm:$0xff]
      %v6336 = vld [vmem:[#allocation6 + $0x258] sm:$0xff]
      %v6337 = vld [vmem:[#allocation6 + $0x260] sm:$0xff]
      %v6338 = vld [vmem:[#allocation6 + $0x268] sm:$0xff]
      %v6339 = vld [vmem:[#allocation6 + $0x270] sm:$0xff]
      %v6340 = vld [vmem:[#allocation6 + $0x278] sm:$0xff]
      %v6341 = vld [vmem:[#allocation6 + $0x280] sm:$0xff]
      %v6342 = vld [vmem:[#allocation6 + $0x288] sm:$0xff]
      %v6343 = vld [vmem:[#allocation6 + $0x290] sm:$0xff]
      %v6344 = vld [vmem:[#allocation6 + $0x298] sm:$0xff]
      %v6345 = vld [vmem:[#allocation6 + $0x2a0] sm:$0xff]
      %v6346 = vld [vmem:[#allocation6 + $0x2a8] sm:$0xff]
      %v6347 = vld [vmem:[#allocation6 + $0x2b0] sm:$0xff]
      %v6348 = vld [vmem:[#allocation6 + $0x2b8] sm:$0xff]
      %v6349 = vld [vmem:[#allocation6 + $0x2c0] sm:$0xff]
      %v6350 = vld [vmem:[#allocation6 + $0x2c8] sm:$0xff]
      %v6351 = vld [vmem:[#allocation6 + $0x2d0] sm:$0xff]
      %v6352 = vld [vmem:[#allocation6 + $0x2d8] sm:$0xff]
      %v6353 = vld [vmem:[#allocation6 + $0x2e0] sm:$0xff]
      %v6354 = vld [vmem:[#allocation6 + $0x2e8] sm:$0xff]
      %v6355 = vld [vmem:[#allocation6 + $0x2f0] sm:$0xff]
      %v6356 = vld [vmem:[#allocation6 + $0x2f8] sm:$0xff]
      %v6357 = vld [vmem:[#allocation6 + $0x300] sm:$0xff]
      %v6358 = vld [vmem:[#allocation6 + $0x308] sm:$0xff]
      %v6359 = vld [vmem:[#allocation6 + $0x310] sm:$0xff]
      %v6360 = vld [vmem:[#allocation6 + $0x318] sm:$0xff]
      %v6361 = vld [vmem:[#allocation6 + $0x320] sm:$0xff]
      %v6362 = vld [vmem:[#allocation6 + $0x328] sm:$0xff]
      %v6363 = vld [vmem:[#allocation6 + $0x330] sm:$0xff]
      %v6364 = vld [vmem:[#allocation6 + $0x338] sm:$0xff]
      %v6365 = vld [vmem:[#allocation6 + $0x340] sm:$0xff]
      %v6366 = vld [vmem:[#allocation6 + $0x348] sm:$0xff]
      %v6367 = vld [vmem:[#allocation6 + $0x350] sm:$0xff]
      %v6368 = vld [vmem:[#allocation6 + $0x358] sm:$0xff]
      %v6369 = vld [vmem:[#allocation6 + $0x360] sm:$0xff]
      %v6370 = vld [vmem:[#allocation6 + $0x368] sm:$0xff]
      %v6371 = vld [vmem:[#allocation6 + $0x370] sm:$0xff]
      %v6372 = vld [vmem:[#allocation6 + $0x378] sm:$0xff]
      %v6373 = vld [vmem:[#allocation6 + $0x380] sm:$0xff]
      %v6374 = vld [vmem:[#allocation6 + $0x388] sm:$0xff]
      %v6375 = vld [vmem:[#allocation6 + $0x390] sm:$0xff]
      %v6376 = vld [vmem:[#allocation6 + $0x398] sm:$0xff]
      %v6377 = vld [vmem:[#allocation6 + $0x3a0] sm:$0xff]
      %v6378 = vld [vmem:[#allocation6 + $0x3a8] sm:$0xff]
      %v6379 = vld [vmem:[#allocation6 + $0x3b0] sm:$0xff]
      %v6380 = vld [vmem:[#allocation6 + $0x3b8] sm:$0xff]
      %v6381 = vld [vmem:[#allocation6 + $0x3c0] sm:$0xff]
      %v6382 = vld [vmem:[#allocation6 + $0x3c8] sm:$0xff]
      %v6383 = vld [vmem:[#allocation6 + $0x3d0] sm:$0xff]
      %v6384 = vld [vmem:[#allocation6 + $0x3d8] sm:$0xff]
      %v6385 = vld [vmem:[#allocation6 + $0x3e0] sm:$0xff]
      %v6386 = vld [vmem:[#allocation6 + $0x3e8] sm:$0xff]
      %v6387 = vld [vmem:[#allocation6 + $0x3f0] sm:$0xff]
      %v6388 = vld [vmem:[#allocation6 + $0x3f8] sm:$0xff]
      %v6389 = vld [vmem:[#allocation6 + $0x400] sm:$0xff]
      %v6390 = vld [vmem:[#allocation6 + $0x408] sm:$0xff]
      %v6391 = vld [vmem:[#allocation6 + $0x410] sm:$0xff]
      %v6392 = vld [vmem:[#allocation6 + $0x418] sm:$0xff]
      %v6393 = vld [vmem:[#allocation6 + $0x420] sm:$0xff]
      %v6394 = vld [vmem:[#allocation6 + $0x428] sm:$0xff]
      %v6395 = vld [vmem:[#allocation6 + $0x430] sm:$0xff]
      %v6396 = vld [vmem:[#allocation6 + $0x438] sm:$0xff]
      %v6397 = vld [vmem:[#allocation6 + $0x440] sm:$0xff]
      %v6398 = vld [vmem:[#allocation6 + $0x448] sm:$0xff]
      %v6399 = vld [vmem:[#allocation6 + $0x450] sm:$0xff]
      %v6400 = vld [vmem:[#allocation6 + $0x458] sm:$0xff]
      %v6401 = vld [vmem:[#allocation6 + $0x460] sm:$0xff]
      %v6402 = vld [vmem:[#allocation6 + $0x468] sm:$0xff]
      %v6403 = vld [vmem:[#allocation6 + $0x470] sm:$0xff]
      %v6404 = vld [vmem:[#allocation6 + $0x478] sm:$0xff]
      %v6405 = vld [vmem:[#allocation6 + $0x480] sm:$0xff]
      %v6406 = vld [vmem:[#allocation6 + $0x488] sm:$0xff]
      %v6407 = vld [vmem:[#allocation6 + $0x490] sm:$0xff]
      %v6408 = vld [vmem:[#allocation6 + $0x498] sm:$0xff]
      %v6409 = vld [vmem:[#allocation6 + $0x4a0] sm:$0xff]
      %v6410 = vld [vmem:[#allocation6 + $0x4a8] sm:$0xff]
      %v6411 = vld [vmem:[#allocation6 + $0x4b0] sm:$0xff]
      %v6412 = vld [vmem:[#allocation6 + $0x4b8] sm:$0xff]
      %v6413 = vld [vmem:[#allocation6 + $0x4c0] sm:$0xff]
      %v6414 = vld [vmem:[#allocation6 + $0x4c8] sm:$0xff]
      %v6415 = vld [vmem:[#allocation6 + $0x4d0] sm:$0xff]
      %v6416 = vld [vmem:[#allocation6 + $0x4d8] sm:$0xff]
      %v6417 = vld [vmem:[#allocation6 + $0x4e0] sm:$0xff]
      %v6418 = vld [vmem:[#allocation6 + $0x4e8] sm:$0xff]
      %v6419 = vld [vmem:[#allocation6 + $0x4f0] sm:$0xff]
      %v6420 = vld [vmem:[#allocation6 + $0x4f8] sm:$0xff]
      %v6421 = vld [vmem:[#allocation6 + $0x500] sm:$0xff]
      %v6422 = vld [vmem:[#allocation6 + $0x508] sm:$0xff]
      %v6423 = vld [vmem:[#allocation6 + $0x510] sm:$0xff]
      %v6424 = vld [vmem:[#allocation6 + $0x518] sm:$0xff]
      %v6425 = vld [vmem:[#allocation6 + $0x520] sm:$0xff]
      %v6426 = vld [vmem:[#allocation6 + $0x528] sm:$0xff]
      %v6427 = vld [vmem:[#allocation6 + $0x530] sm:$0xff]
      %v6428 = vld [vmem:[#allocation6 + $0x538] sm:$0xff]
      %v6429 = vld [vmem:[#allocation6 + $0x540] sm:$0xff]
      %v6430 = vld [vmem:[#allocation6 + $0x548] sm:$0xff]
      %v6431 = vld [vmem:[#allocation6 + $0x550] sm:$0xff]
      %v6432 = vld [vmem:[#allocation6 + $0x558] sm:$0xff]
      %v6433 = vld [vmem:[#allocation6 + $0x560] sm:$0xff]
      %v6434 = vld [vmem:[#allocation6 + $0x568] sm:$0xff]
      %v6435 = vld [vmem:[#allocation6 + $0x570] sm:$0xff]
      %v6436 = vld [vmem:[#allocation6 + $0x578] sm:$0xff]
      %v6437 = vld [vmem:[#allocation6 + $0x580] sm:$0xff]
      %v6438 = vld [vmem:[#allocation6 + $0x588] sm:$0xff]
      %v6439 = vld [vmem:[#allocation6 + $0x590] sm:$0xff]
      %v6440 = vld [vmem:[#allocation6 + $0x598] sm:$0xff]
      %v6441 = vld [vmem:[#allocation6 + $0x5a0] sm:$0xff]
      %v6442 = vld [vmem:[#allocation6 + $0x5a8] sm:$0xff]
      %v6443 = vld [vmem:[#allocation6 + $0x5b0] sm:$0xff]
      %v6444 = vld [vmem:[#allocation6 + $0x5b8] sm:$0xff]
      %v6445 = vld [vmem:[#allocation6 + $0x5c0] sm:$0xff]
      %v6446 = vld [vmem:[#allocation6 + $0x5c8] sm:$0xff]
      %v6447 = vld [vmem:[#allocation6 + $0x5d0] sm:$0xff]
      %v6448 = vld [vmem:[#allocation6 + $0x5d8] sm:$0xff]
      %v6449 = vld [vmem:[#allocation6 + $0x5e0] sm:$0xff]
      %v6450 = vld [vmem:[#allocation6 + $0x5e8] sm:$0xff]
      %v6451 = vld [vmem:[#allocation6 + $0x5f0] sm:$0xff]
      %v6452 = vld [vmem:[#allocation6 + $0x5f8] sm:$0xff]
      %v6453 = vld [vmem:[#allocation6 + $0x600] sm:$0xff]
      %v6454 = vld [vmem:[#allocation6 + $0x608] sm:$0xff]
      %v6455 = vld [vmem:[#allocation6 + $0x610] sm:$0xff]
      %v6456 = vld [vmem:[#allocation6 + $0x618] sm:$0xff]
      %v6457 = vld [vmem:[#allocation6 + $0x620] sm:$0xff]
      %v6458 = vld [vmem:[#allocation6 + $0x628] sm:$0xff]
      %v6459 = vld [vmem:[#allocation6 + $0x630] sm:$0xff]
      %v6460 = vld [vmem:[#allocation6 + $0x638] sm:$0xff]
      %v6461 = vld [vmem:[#allocation6 + $0x640] sm:$0xff]
      %v6462 = vld [vmem:[#allocation6 + $0x648] sm:$0xff]
      %v6463 = vld [vmem:[#allocation6 + $0x650] sm:$0xff]
      %v6464 = vld [vmem:[#allocation6 + $0x658] sm:$0xff]
      %v6465 = vld [vmem:[#allocation6 + $0x660] sm:$0xff]
      %v6466 = vld [vmem:[#allocation6 + $0x668] sm:$0xff]
      %v6467 = vld [vmem:[#allocation6 + $0x670] sm:$0xff]
      %v6468 = vld [vmem:[#allocation6 + $0x678] sm:$0xff]
      %v6469 = vld [vmem:[#allocation6 + $0x680] sm:$0xff]
      %v6470 = vld [vmem:[#allocation6 + $0x688] sm:$0xff]
      %v6471 = vld [vmem:[#allocation6 + $0x690] sm:$0xff]
      %v6472 = vld [vmem:[#allocation6 + $0x698] sm:$0xff]
      %v6473 = vld [vmem:[#allocation6 + $0x6a0] sm:$0xff]
      %v6474 = vld [vmem:[#allocation6 + $0x6a8] sm:$0xff]
      %v6475 = vld [vmem:[#allocation6 + $0x6b0] sm:$0xff]
      %v6476 = vld [vmem:[#allocation6 + $0x6b8] sm:$0xff]
      %v6477 = vld [vmem:[#allocation6 + $0x6c0] sm:$0xff]
      %v6478 = vld [vmem:[#allocation6 + $0x6c8] sm:$0xff]
      %v6479 = vld [vmem:[#allocation6 + $0x6d0] sm:$0xff]
      %v6480 = vld [vmem:[#allocation6 + $0x6d8] sm:$0xff]
      %v6481 = vld [vmem:[#allocation6 + $0x6e0] sm:$0xff]
      %v6482 = vld [vmem:[#allocation6 + $0x6e8] sm:$0xff]
      %v6483 = vld [vmem:[#allocation6 + $0x6f0] sm:$0xff]
      %v6484 = vld [vmem:[#allocation6 + $0x6f8] sm:$0xff]
      %v6485 = vld [vmem:[#allocation6 + $0x700] sm:$0xff]
      %v6486 = vld [vmem:[#allocation6 + $0x708] sm:$0xff]
      %v6487 = vld [vmem:[#allocation6 + $0x710] sm:$0xff]
      %v6488 = vld [vmem:[#allocation6 + $0x718] sm:$0xff]
      %v6489 = vld [vmem:[#allocation6 + $0x720] sm:$0xff]
      %v6490 = vld [vmem:[#allocation6 + $0x728] sm:$0xff]
      %v6491 = vld [vmem:[#allocation6 + $0x730] sm:$0xff]
      %v6492 = vld [vmem:[#allocation6 + $0x738] sm:$0xff]
      %v6493 = vld [vmem:[#allocation6 + $0x740] sm:$0xff]
      %v6494 = vld [vmem:[#allocation6 + $0x748] sm:$0xff]
      %v6495 = vld [vmem:[#allocation6 + $0x750] sm:$0xff]
      %v6496 = vld [vmem:[#allocation6 + $0x758] sm:$0xff]
      %v6497 = vld [vmem:[#allocation6 + $0x760] sm:$0xff]
      %v6498 = vld [vmem:[#allocation6 + $0x768] sm:$0xff]
      %v6499 = vld [vmem:[#allocation6 + $0x770] sm:$0xff]
      %v6500 = vld [vmem:[#allocation6 + $0x778] sm:$0xff]
      %v6501 = vld [vmem:[#allocation6 + $0x780] sm:$0xff]
      %v6502 = vld [vmem:[#allocation6 + $0x788] sm:$0xff]
      %v6503 = vld [vmem:[#allocation6 + $0x790] sm:$0xff]
      %v6504 = vld [vmem:[#allocation6 + $0x798] sm:$0xff]
      %v6505 = vld [vmem:[#allocation6 + $0x7a0] sm:$0xff]
      %v6506 = vld [vmem:[#allocation6 + $0x7a8] sm:$0xff]
      %v6507 = vld [vmem:[#allocation6 + $0x7b0] sm:$0xff]
      %v6508 = vld [vmem:[#allocation6 + $0x7b8] sm:$0xff]
      %v6509 = vld [vmem:[#allocation6 + $0x7c0] sm:$0xff]
      %v6510 = vld [vmem:[#allocation6 + $0x7c8] sm:$0xff]
      %v6511 = vld [vmem:[#allocation6 + $0x7d0] sm:$0xff]
      %v6512 = vld [vmem:[#allocation6 + $0x7d8] sm:$0xff]
      %v6513 = vld [vmem:[#allocation6 + $0x7e0] sm:$0xff]
      %v6514 = vld [vmem:[#allocation6 + $0x7e8] sm:$0xff]
      %v6515 = vld [vmem:[#allocation6 + $0x7f0] sm:$0xff]
      %v6516 = vld [vmem:[#allocation6 + $0x7f8] sm:$0xff]
      %v6518 = vlaneseq
      %v6519 = vshrl.u32 %v6518, 7
      %v6520 = vsub.s32 0, %v6519
      %v6521 = vrot.slane %v765, %v6520
      %v6522 = vlaneseq
      %v6523 = vshrl.u32 %v6522, 7
      %v6524 = vsub.s32 1, %v6523
      %v6525 = vrot.slane %v765, %v6524
      %v6526 = vlaneseq
      %v6527 = vshrl.u32 %v6526, 7
      %v6528 = vsub.s32 2, %v6527
      %v6529 = vrot.slane %v765, %v6528
      %v6530 = vlaneseq
      %v6531 = vshrl.u32 %v6530, 7
      %v6532 = vsub.s32 3, %v6531
      %v6533 = vrot.slane %v765, %v6532
      %6538 = vmatprep.subr.mxu0 %v6322
      %6539 = vmatpush1.msra.mxu0 %v6321
      %6540 = vmatprep.subr.mxu0 %v6318
      %6541 = vmatpush1.msra.mxu0 %v6317
      %6542 = vmatprep.subr.mxu0 %v6314
      %6543 = vmatpush1.msra.mxu0 %v6313
      %6544 = vmatprep.subr.mxu0 %v6310
      %6545 = vmatpush1.msra.mxu0 %v6309
      %6546 = vmatprep.subr.mxu0 %v6306
      %6547 = vmatpush1.msra.mxu0 %v6305
      %6548 = vmatprep.subr.mxu0 %v6302
      %6549 = vmatpush1.msra.mxu0 %v6301
      %6550 = vmatprep.subr.mxu0 %v6298
      %6551 = vmatpush1.msra.mxu0 %v6297
      %6552 = vmatprep.subr.mxu0 %v6294
      %6553 = vmatpush1.msra.mxu0 %v6293
      %6554 = vmatprep.subr.mxu0 %v6290
      %6555 = vmatpush1.msra.mxu0 %v6289
      %6556 = vmatprep.subr.mxu0 %v6286
      %6557 = vmatpush1.msra.mxu0 %v6285
      %6558 = vmatprep.subr.mxu0 %v6282
      %6559 = vmatpush1.msra.mxu0 %v6281
      %6560 = vmatprep.subr.mxu0 %v6278
      %6561 = vmatpush1.msra.mxu0 %v6277
      %6562 = vmatprep.subr.mxu0 %v6274
      %6563 = vmatpush1.msra.mxu0 %v6273
      %6564 = vmatprep.subr.mxu0 %v6270
      %6565 = vmatpush1.msra.mxu0 %v6269
      %6566 = vmatprep.subr.mxu0 %v6266
      %6567 = vmatpush1.msra.mxu0 %v6265
      %6568 = vmatprep.subr.mxu0 %v6262
      %6569 = vmatpush1.msra.mxu0 %v6261
      %6570 = vmatprep.subr.mxu0 %v6386
      %6571 = vmatpush2.msra.mxu0 %v6385
      %6572 = vmatprep.subr.mxu0 %v6382
      %6573 = vmatpush2.msra.mxu0 %v6381
      %6574 = vmatprep.subr.mxu0 %v6378
      %6575 = vmatpush2.msra.mxu0 %v6377
      %6576 = vmatprep.subr.mxu0 %v6374
      %6577 = vmatpush2.msra.mxu0 %v6373
      %6578 = vmatprep.subr.mxu0 %v6370
      %6579 = vmatpush2.msra.mxu0 %v6369
      %6580 = vmatprep.subr.mxu0 %v6366
      %6581 = vmatpush2.msra.mxu0 %v6365
      %6582 = vmatprep.subr.mxu0 %v6362
      %6583 = vmatpush2.msra.mxu0 %v6361
      %6584 = vmatprep.subr.mxu0 %v6358
      %6585 = vmatpush2.msra.mxu0 %v6357
      %6586 = vmatprep.subr.mxu0 %v6354
      %6587 = vmatpush2.msra.mxu0 %v6353
      %6588 = vmatprep.subr.mxu0 %v6350
      %6589 = vmatpush2.msra.mxu0 %v6349
      %6590 = vmatprep.subr.mxu0 %v6346
      %6591 = vmatpush2.msra.mxu0 %v6345
      %6592 = vmatprep.subr.mxu0 %v6342
      %6593 = vmatpush2.msra.mxu0 %v6341
      %6594 = vmatprep.subr.mxu0 %v6338
      %6595 = vmatpush2.msra.mxu0 %v6337
      %6596 = vmatprep.subr.mxu0 %v6334
      %6597 = vmatpush2.msra.mxu0 %v6333
      %6598 = vmatprep.subr.mxu0 %v6330
      %6599 = vmatpush2.msra.mxu0 %v6329
      %6600 = vmatprep.subr.mxu0 %v6326
      %6601 = vmatpush2.msra.mxu0 %v6325
      %6602 = vmatprep.mubr.f32.mxu0 %v6246
      %6603 = vmatmul.mubr.f32.gmra.mxu0 %v6245
      %v6604 = vpop.f32.mrf.mxu0
      %v6605 = vadd.f32 %v6521, %v6604
      %v6606 = vpop.f32.mrf.mxu0
      %v6607 = vadd.f32 %v6525, %v6606
      %6608 = vmatprep.mubr.f32.mxu0 %v6250
      %6609 = vmatmul.mubr.f32.gmra.mxu0 %v6249
      %v6610 = vpop.f32.mrf.mxu0
      %v6611 = vadd.f32 %v6521, %v6610
      %v6612 = vpop.f32.mrf.mxu0
      %v6613 = vadd.f32 %v6525, %v6612
      %6614 = vmatprep.mubr.f32.mxu0 %v6254
      %6615 = vmatmul.mubr.f32.gmra.mxu0 %v6253
      %v6616 = vpop.f32.mrf.mxu0
      %v6617 = vadd.f32 %v6521, %v6616
      %v6618 = vpop.f32.mrf.mxu0
      %v6619 = vadd.f32 %v6525, %v6618
      %6620 = vmatprep.mubr.f32.mxu0 %v6258
      %6621 = vmatmul.mubr.f32.gmra.mxu0 %v6257
      %v6622 = vpop.f32.mrf.mxu0
      %v6623 = vadd.f32 %v6521, %v6622
      %v6624 = vpop.f32.mrf.mxu0
      %v6625 = vadd.f32 %v6525, %v6624
      %6626 = vdwg.mxu0
      %6627 = vmatprep.subr.mxu0 %v6450
      %6628 = vmatpush1.msra.mxu0 %v6449
      %6629 = vmatprep.subr.mxu0 %v6446
      %6630 = vmatpush1.msra.mxu0 %v6445
      %6631 = vmatprep.subr.mxu0 %v6442
      %6632 = vmatpush1.msra.mxu0 %v6441
      %6633 = vmatprep.subr.mxu0 %v6438
      %6634 = vmatpush1.msra.mxu0 %v6437
      %6635 = vmatprep.subr.mxu0 %v6434
      %6636 = vmatpush1.msra.mxu0 %v6433
      %6637 = vmatprep.subr.mxu0 %v6430
      %6638 = vmatpush1.msra.mxu0 %v6429
      %6639 = vmatprep.subr.mxu0 %v6426
      %6640 = vmatpush1.msra.mxu0 %v6425
      %6641 = vmatprep.subr.mxu0 %v6422
      %6642 = vmatpush1.msra.mxu0 %v6421
      %6643 = vmatprep.subr.mxu0 %v6418
      %6644 = vmatpush1.msra.mxu0 %v6417
      %6645 = vmatprep.subr.mxu0 %v6414
      %6646 = vmatpush1.msra.mxu0 %v6413
      %6647 = vmatprep.subr.mxu0 %v6410
      %6648 = vmatpush1.msra.mxu0 %v6409
      %6649 = vmatprep.subr.mxu0 %v6406
      %6650 = vmatpush1.msra.mxu0 %v6405
      %6651 = vmatprep.subr.mxu0 %v6402
      %6652 = vmatpush1.msra.mxu0 %v6401
      %6653 = vmatprep.subr.mxu0 %v6398
      %6654 = vmatpush1.msra.mxu0 %v6397
      %6655 = vmatprep.subr.mxu0 %v6394
      %6656 = vmatpush1.msra.mxu0 %v6393
      %6657 = vmatprep.subr.mxu0 %v6390
      %6658 = vmatpush1.msra.mxu0 %v6389
      %6659 = vmatprep.subr.mxu0 %v6514
      %6660 = vmatpush2.msra.mxu0 %v6513
      %6661 = vmatprep.subr.mxu0 %v6510
      %6662 = vmatpush2.msra.mxu0 %v6509
      %6663 = vmatprep.subr.mxu0 %v6506
      %6664 = vmatpush2.msra.mxu0 %v6505
      %6665 = vmatprep.subr.mxu0 %v6502
      %6666 = vmatpush2.msra.mxu0 %v6501
      %6667 = vmatprep.subr.mxu0 %v6498
      %6668 = vmatpush2.msra.mxu0 %v6497
      %6669 = vmatprep.subr.mxu0 %v6494
      %6670 = vmatpush2.msra.mxu0 %v6493
      %6671 = vmatprep.subr.mxu0 %v6490
      %6672 = vmatpush2.msra.mxu0 %v6489
      %6673 = vmatprep.subr.mxu0 %v6486
      %6674 = vmatpush2.msra.mxu0 %v6485
      %6675 = vmatprep.subr.mxu0 %v6482
      %6676 = vmatpush2.msra.mxu0 %v6481
      %6677 = vmatprep.subr.mxu0 %v6478
      %6678 = vmatpush2.msra.mxu0 %v6477
      %6679 = vmatprep.subr.mxu0 %v6474
      %6680 = vmatpush2.msra.mxu0 %v6473
      %6681 = vmatprep.subr.mxu0 %v6470
      %6682 = vmatpush2.msra.mxu0 %v6469
      %6683 = vmatprep.subr.mxu0 %v6466
      %6684 = vmatpush2.msra.mxu0 %v6465
      %6685 = vmatprep.subr.mxu0 %v6462
      %6686 = vmatpush2.msra.mxu0 %v6461
      %6687 = vmatprep.subr.mxu0 %v6458
      %6688 = vmatpush2.msra.mxu0 %v6457
      %6689 = vmatprep.subr.mxu0 %v6454
      %6690 = vmatpush2.msra.mxu0 %v6453
      %6691 = vmatprep.mubr.f32.mxu0 %v6248
      %6692 = vmatmul.mubr.f32.gmra.mxu0 %v6247
      %v6693 = vpop.f32.mrf.mxu0
      %v6694 = vadd.f32 %v6605, %v6693
      %v6695 = vpop.f32.mrf.mxu0
      %v6696 = vadd.f32 %v6607, %v6695
      %6697 = vmatprep.mubr.f32.mxu0 %v6252
      %6698 = vmatmul.mubr.f32.gmra.mxu0 %v6251
      %v6699 = vpop.f32.mrf.mxu0
      %v6700 = vadd.f32 %v6611, %v6699
      %v6701 = vpop.f32.mrf.mxu0
      %v6702 = vadd.f32 %v6613, %v6701
      %6703 = vmatprep.mubr.f32.mxu0 %v6256
      %6704 = vmatmul.mubr.f32.gmra.mxu0 %v6255
      %v6705 = vpop.f32.mrf.mxu0
      %v6706 = vadd.f32 %v6617, %v6705
      %v6707 = vpop.f32.mrf.mxu0
      %v6708 = vadd.f32 %v6619, %v6707
      %6709 = vmatprep.mubr.f32.mxu0 %v6260
      %6710 = vmatmul.mubr.f32.gmra.mxu0 %v6259
      %v6711 = vpop.f32.mrf.mxu0
      %v6712 = vadd.f32 %v6623, %v6711
      %v6713 = vpop.f32.mrf.mxu0
      %v6714 = vadd.f32 %v6625, %v6713
      %6715 = vdwg.mxu0
      %6716 = vmatprep.subr.mxu0 %v6324
      %6717 = vmatpush1.msra.mxu0 %v6323
      %6718 = vmatprep.subr.mxu0 %v6320
      %6719 = vmatpush1.msra.mxu0 %v6319
      %6720 = vmatprep.subr.mxu0 %v6316
      %6721 = vmatpush1.msra.mxu0 %v6315
      %6722 = vmatprep.subr.mxu0 %v6312
      %6723 = vmatpush1.msra.mxu0 %v6311
      %6724 = vmatprep.subr.mxu0 %v6308
      %6725 = vmatpush1.msra.mxu0 %v6307
      %6726 = vmatprep.subr.mxu0 %v6304
      %6727 = vmatpush1.msra.mxu0 %v6303
      %6728 = vmatprep.subr.mxu0 %v6300
      %6729 = vmatpush1.msra.mxu0 %v6299
      %6730 = vmatprep.subr.mxu0 %v6296
      %6731 = vmatpush1.msra.mxu0 %v6295
      %6732 = vmatprep.subr.mxu0 %v6292
      %6733 = vmatpush1.msra.mxu0 %v6291
      %6734 = vmatprep.subr.mxu0 %v6288
      %6735 = vmatpush1.msra.mxu0 %v6287
      %6736 = vmatprep.subr.mxu0 %v6284
      %6737 = vmatpush1.msra.mxu0 %v6283
      %6738 = vmatprep.subr.mxu0 %v6280
      %6739 = vmatpush1.msra.mxu0 %v6279
      %6740 = vmatprep.subr.mxu0 %v6276
      %6741 = vmatpush1.msra.mxu0 %v6275
      %6742 = vmatprep.subr.mxu0 %v6272
      %6743 = vmatpush1.msra.mxu0 %v6271
      %6744 = vmatprep.subr.mxu0 %v6268
      %6745 = vmatpush1.msra.mxu0 %v6267
      %6746 = vmatprep.subr.mxu0 %v6264
      %6747 = vmatpush1.msra.mxu0 %v6263
      %6748 = vmatprep.subr.mxu0 %v6388
      %6749 = vmatpush2.msra.mxu0 %v6387
      %6750 = vmatprep.subr.mxu0 %v6384
      %6751 = vmatpush2.msra.mxu0 %v6383
      %6752 = vmatprep.subr.mxu0 %v6380
      %6753 = vmatpush2.msra.mxu0 %v6379
      %6754 = vmatprep.subr.mxu0 %v6376
      %6755 = vmatpush2.msra.mxu0 %v6375
      %6756 = vmatprep.subr.mxu0 %v6372
      %6757 = vmatpush2.msra.mxu0 %v6371
      %6758 = vmatprep.subr.mxu0 %v6368
      %6759 = vmatpush2.msra.mxu0 %v6367
      %6760 = vmatprep.subr.mxu0 %v6364
      %6761 = vmatpush2.msra.mxu0 %v6363
      %6762 = vmatprep.subr.mxu0 %v6360
      %6763 = vmatpush2.msra.mxu0 %v6359
      %6764 = vmatprep.subr.mxu0 %v6356
      %6765 = vmatpush2.msra.mxu0 %v6355
      %6766 = vmatprep.subr.mxu0 %v6352
      %6767 = vmatpush2.msra.mxu0 %v6351
      %6768 = vmatprep.subr.mxu0 %v6348
      %6769 = vmatpush2.msra.mxu0 %v6347
      %6770 = vmatprep.subr.mxu0 %v6344
      %6771 = vmatpush2.msra.mxu0 %v6343
      %6772 = vmatprep.subr.mxu0 %v6340
      %6773 = vmatpush2.msra.mxu0 %v6339
      %6774 = vmatprep.subr.mxu0 %v6336
      %6775 = vmatpush2.msra.mxu0 %v6335
      %6776 = vmatprep.subr.mxu0 %v6332
      %6777 = vmatpush2.msra.mxu0 %v6331
      %6778 = vmatprep.subr.mxu0 %v6328
      %6779 = vmatpush2.msra.mxu0 %v6327
      %6780 = vmatprep.mubr.f32.mxu0 %v6246
      %6781 = vmatmul.mubr.f32.gmra.mxu0 %v6245
      %v6782 = vpop.f32.mrf.mxu0
      %v6783 = vadd.f32 %v6529, %v6782
      %v6784 = vpop.f32.mrf.mxu0
      %v6785 = vadd.f32 %v6533, %v6784
      %6786 = vmatprep.mubr.f32.mxu0 %v6250
      %6787 = vmatmul.mubr.f32.gmra.mxu0 %v6249
      %v6788 = vpop.f32.mrf.mxu0
      %v6789 = vadd.f32 %v6529, %v6788
      %v6790 = vpop.f32.mrf.mxu0
      %v6791 = vadd.f32 %v6533, %v6790
      %6792 = vmatprep.mubr.f32.mxu0 %v6254
      %6793 = vmatmul.mubr.f32.gmra.mxu0 %v6253
      %v6794 = vpop.f32.mrf.mxu0
      %v6795 = vadd.f32 %v6529, %v6794
      %v6796 = vpop.f32.mrf.mxu0
      %v6797 = vadd.f32 %v6533, %v6796
      %6798 = vmatprep.mubr.f32.mxu0 %v6258
      %6799 = vmatmul.mubr.f32.gmra.mxu0 %v6257
      %v6800 = vpop.f32.mrf.mxu0
      %v6801 = vadd.f32 %v6529, %v6800
      %v6802 = vpop.f32.mrf.mxu0
      %v6803 = vadd.f32 %v6533, %v6802
      %6804 = vdwg.mxu0
      %6805 = vmatprep.subr.mxu0 %v6452
      %6806 = vmatpush1.msra.mxu0 %v6451
      %6807 = vmatprep.subr.mxu0 %v6448
      %6808 = vmatpush1.msra.mxu0 %v6447
      %6809 = vmatprep.subr.mxu0 %v6444
      %6810 = vmatpush1.msra.mxu0 %v6443
      %6811 = vmatprep.subr.mxu0 %v6440
      %6812 = vmatpush1.msra.mxu0 %v6439
      %6813 = vmatprep.subr.mxu0 %v6436
      %6814 = vmatpush1.msra.mxu0 %v6435
      %6815 = vmatprep.subr.mxu0 %v6432
      %6816 = vmatpush1.msra.mxu0 %v6431
      %6817 = vmatprep.subr.mxu0 %v6428
      %6818 = vmatpush1.msra.mxu0 %v6427
      %6819 = vmatprep.subr.mxu0 %v6424
      %6820 = vmatpush1.msra.mxu0 %v6423
      %6821 = vmatprep.subr.mxu0 %v6420
      %6822 = vmatpush1.msra.mxu0 %v6419
      %6823 = vmatprep.subr.mxu0 %v6416
      %6824 = vmatpush1.msra.mxu0 %v6415
      %6825 = vmatprep.subr.mxu0 %v6412
      %6826 = vmatpush1.msra.mxu0 %v6411
      %6827 = vmatprep.subr.mxu0 %v6408
      %6828 = vmatpush1.msra.mxu0 %v6407
      %6829 = vmatprep.subr.mxu0 %v6404
      %6830 = vmatpush1.msra.mxu0 %v6403
      %6831 = vmatprep.subr.mxu0 %v6400
      %6832 = vmatpush1.msra.mxu0 %v6399
      %6833 = vmatprep.subr.mxu0 %v6396
      %6834 = vmatpush1.msra.mxu0 %v6395
      %6835 = vmatprep.subr.mxu0 %v6392
      %6836 = vmatpush1.msra.mxu0 %v6391
      %6837 = vmatprep.subr.mxu0 %v6516
      %6838 = vmatpush2.msra.mxu0 %v6515
      %6839 = vmatprep.subr.mxu0 %v6512
      %6840 = vmatpush2.msra.mxu0 %v6511
      %6841 = vmatprep.subr.mxu0 %v6508
      %6842 = vmatpush2.msra.mxu0 %v6507
      %6843 = vmatprep.subr.mxu0 %v6504
      %6844 = vmatpush2.msra.mxu0 %v6503
      %6845 = vmatprep.subr.mxu0 %v6500
      %6846 = vmatpush2.msra.mxu0 %v6499
      %6847 = vmatprep.subr.mxu0 %v6496
      %6848 = vmatpush2.msra.mxu0 %v6495
      %6849 = vmatprep.subr.mxu0 %v6492
      %6850 = vmatpush2.msra.mxu0 %v6491
      %6851 = vmatprep.subr.mxu0 %v6488
      %6852 = vmatpush2.msra.mxu0 %v6487
      %6853 = vmatprep.subr.mxu0 %v6484
      %6854 = vmatpush2.msra.mxu0 %v6483
      %6855 = vmatprep.subr.mxu0 %v6480
      %6856 = vmatpush2.msra.mxu0 %v6479
      %6857 = vmatprep.subr.mxu0 %v6476
      %6858 = vmatpush2.msra.mxu0 %v6475
      %6859 = vmatprep.subr.mxu0 %v6472
      %6860 = vmatpush2.msra.mxu0 %v6471
      %6861 = vmatprep.subr.mxu0 %v6468
      %6862 = vmatpush2.msra.mxu0 %v6467
      %6863 = vmatprep.subr.mxu0 %v6464
      %6864 = vmatpush2.msra.mxu0 %v6463
      %6865 = vmatprep.subr.mxu0 %v6460
      %6866 = vmatpush2.msra.mxu0 %v6459
      %6867 = vmatprep.subr.mxu0 %v6456
      %6868 = vmatpush2.msra.mxu0 %v6455
      %6869 = vmatprep.mubr.f32.mxu0 %v6248
      %6870 = vmatmul.mubr.f32.gmra.mxu0 %v6247
      %v6871 = vpop.f32.mrf.mxu0
      %v6872 = vadd.f32 %v6783, %v6871
      %v6873 = vpop.f32.mrf.mxu0
      %v6874 = vadd.f32 %v6785, %v6873
      %6875 = vmatprep.mubr.f32.mxu0 %v6252
      %6876 = vmatmul.mubr.f32.gmra.mxu0 %v6251
      %v6877 = vpop.f32.mrf.mxu0
      %v6878 = vadd.f32 %v6789, %v6877
      %v6879 = vpop.f32.mrf.mxu0
      %v6880 = vadd.f32 %v6791, %v6879
      %6881 = vmatprep.mubr.f32.mxu0 %v6256
      %6882 = vmatmul.mubr.f32.gmra.mxu0 %v6255
      %v6883 = vpop.f32.mrf.mxu0
      %v6884 = vadd.f32 %v6795, %v6883
      %v6885 = vpop.f32.mrf.mxu0
      %v6886 = vadd.f32 %v6797, %v6885
      %6887 = vmatprep.mubr.f32.mxu0 %v6260
      %6888 = vmatmul.mubr.f32.gmra.mxu0 %v6259
      %v6889 = vpop.f32.mrf.mxu0
      %v6890 = vadd.f32 %v6801, %v6889
      %v6891 = vpop.f32.mrf.mxu0
      %v6892 = vadd.f32 %v6803, %v6891
      %6893 = vdwg.mxu0
      %v6894 = vld [vmem:[#allocation2] sm:$0xff]
      %v6895 = vld [vmem:[#allocation2 + $0x8] sm:$0xff]
      %v6896 = vld [vmem:[#allocation2 + $0x10] sm:$0xff]
      %v6897 = vld [vmem:[#allocation2 + $0x18] sm:$0xff]
      %v6898 = vld [vmem:[#allocation2 + $0x20] sm:$0xff]
      %v6899 = vld [vmem:[#allocation2 + $0x28] sm:$0xff]
      %v6900 = vld [vmem:[#allocation2 + $0x30] sm:$0xff]
      %v6901 = vld [vmem:[#allocation2 + $0x38] sm:$0xff]
      %v6902 = vld [vmem:[#allocation2 + $0x40] sm:$0xff]
      %v6903 = vld [vmem:[#allocation2 + $0x48] sm:$0xff]
      %v6904 = vld [vmem:[#allocation2 + $0x50] sm:$0xff]
      %v6905 = vld [vmem:[#allocation2 + $0x58] sm:$0xff]
      %v6906 = vld [vmem:[#allocation2 + $0x60] sm:$0xff]
      %v6907 = vld [vmem:[#allocation2 + $0x68] sm:$0xff]
      %v6908 = vld [vmem:[#allocation2 + $0x70] sm:$0xff]
      %v6909 = vld [vmem:[#allocation2 + $0x78] sm:$0xff]
      %v6910 = vadd.f32 %v6694, %v6894
      %v6911 = vadd.f32 %v6696, %v6895
      %v6912 = vadd.f32 %v6872, %v6896
      %v6913 = vadd.f32 %v6874, %v6897
      %v6914 = vadd.f32 %v6700, %v6898
      %v6915 = vadd.f32 %v6702, %v6899
      %v6916 = vadd.f32 %v6878, %v6900
      %v6917 = vadd.f32 %v6880, %v6901
      %v6918 = vadd.f32 %v6706, %v6902
      %v6919 = vadd.f32 %v6708, %v6903
      %v6920 = vadd.f32 %v6884, %v6904
      %v6921 = vadd.f32 %v6886, %v6905
      %v6922 = vadd.f32 %v6712, %v6906
      %v6923 = vadd.f32 %v6714, %v6907
      %v6924 = vadd.f32 %v6890, %v6908
      %v6925 = vadd.f32 %v6892, %v6909
      %v6926 = vadd.f32 %v6910, %v6914
      %v6927 = vadd.f32 %v6926, %v6918
      %v6928 = vadd.f32 %v6927, %v6922
      %v6929 = vrot.slane %v6928, 4
      %v6930 = vadd.f32 %v6928, %v6929
      %v6931 = vrot.slane %v6930, 2
      %v6932 = vadd.f32 %v6930, %v6931
      %v6933 = vrot.slane %v6932, 1
      %v6934 = vadd.f32 %v6932, %v6933
      %v6935 = vadd.f32 %v6911, %v6915
      %v6936 = vadd.f32 %v6935, %v6919
      %v6937 = vadd.f32 %v6936, %v6923
      %v6938 = vrot.slane %v6937, 4
      %v6939 = vadd.f32 %v6937, %v6938
      %v6940 = vrot.slane %v6939, 2
      %v6941 = vadd.f32 %v6939, %v6940
      %v6942 = vrot.slane %v6941, 1
      %v6943 = vadd.f32 %v6941, %v6942
      %v6944 = vadd.f32 %v6912, %v6916
      %v6945 = vadd.f32 %v6944, %v6920
      %v6946 = vadd.f32 %v6945, %v6924
      %v6947 = vrot.slane %v6946, 4
      %v6948 = vadd.f32 %v6946, %v6947
      %v6949 = vrot.slane %v6948, 2
      %v6950 = vadd.f32 %v6948, %v6949
      %v6951 = vrot.slane %v6950, 1
      %v6952 = vadd.f32 %v6950, %v6951
      %v6953 = vadd.f32 %v6913, %v6917
      %v6954 = vadd.f32 %v6953, %v6921
      %v6955 = vadd.f32 %v6954, %v6925
      %v6956 = vrot.slane %v6955, 4
      %v6957 = vadd.f32 %v6955, %v6956
      %v6958 = vrot.slane %v6957, 2
      %v6959 = vadd.f32 %v6957, %v6958
      %v6960 = vrot.slane %v6959, 1
      %v6961 = vadd.f32 %v6959, %v6960
      %v6962 = vmul.f32 %v6910, %v6910
      %v6963 = vmul.f32 %v6911, %v6911
      %v6964 = vmul.f32 %v6912, %v6912
      %v6965 = vmul.f32 %v6913, %v6913
      %v6966 = vmul.f32 %v6914, %v6914
      %v6967 = vmul.f32 %v6915, %v6915
      %v6968 = vmul.f32 %v6916, %v6916
      %v6969 = vmul.f32 %v6917, %v6917
      %v6970 = vmul.f32 %v6918, %v6918
      %v6971 = vmul.f32 %v6919, %v6919
      %v6972 = vmul.f32 %v6920, %v6920
      %v6973 = vmul.f32 %v6921, %v6921
      %v6974 = vmul.f32 %v6922, %v6922
      %v6975 = vmul.f32 %v6923, %v6923
      %v6976 = vmul.f32 %v6924, %v6924
      %v6977 = vmul.f32 %v6925, %v6925
      %v6978 = vadd.f32 %v6962, %v6966
      %v6979 = vadd.f32 %v6978, %v6970
      %v6980 = vadd.f32 %v6979, %v6974
      %v6981 = vrot.slane %v6980, 4
      %v6982 = vadd.f32 %v6980, %v6981
      %v6983 = vrot.slane %v6982, 2
      %v6984 = vadd.f32 %v6982, %v6983
      %v6985 = vrot.slane %v6984, 1
      %v6986 = vadd.f32 %v6984, %v6985
      %v6987 = vadd.f32 %v6963, %v6967
      %v6988 = vadd.f32 %v6987, %v6971
      %v6989 = vadd.f32 %v6988, %v6975
      %v6990 = vrot.slane %v6989, 4
      %v6991 = vadd.f32 %v6989, %v6990
      %v6992 = vrot.slane %v6991, 2
      %v6993 = vadd.f32 %v6991, %v6992
      %v6994 = vrot.slane %v6993, 1
      %v6995 = vadd.f32 %v6993, %v6994
      %v6996 = vadd.f32 %v6964, %v6968
      %v6997 = vadd.f32 %v6996, %v6972
      %v6998 = vadd.f32 %v6997, %v6976
      %v6999 = vrot.slane %v6998, 4
      %v7000 = vadd.f32 %v6998, %v6999
      %v7001 = vrot.slane %v7000, 2
      %v7002 = vadd.f32 %v7000, %v7001
      %v7003 = vrot.slane %v7002, 1
      %v7004 = vadd.f32 %v7002, %v7003
      %v7005 = vadd.f32 %v6965, %v6969
      %v7006 = vadd.f32 %v7005, %v6973
      %v7007 = vadd.f32 %v7006, %v6977
      %v7008 = vrot.slane %v7007, 4
      %v7009 = vadd.f32 %v7007, %v7008
      %v7010 = vrot.slane %v7009, 2
      %v7011 = vadd.f32 %v7009, %v7010
      %v7012 = vrot.slane %v7011, 1
      %v7013 = vadd.f32 %v7011, %v7012
      %7014 = vrot.lane.b32.xlu0 %v6934, 32
      %v7015 = vpop.permute.xlu0 %7014
      %7016 = vrot.lane.b32.xlu0 %v6943, 32
      %v7017 = vpop.permute.xlu0 %7016
      %7018 = vrot.lane.b32.xlu0 %v6952, 32
      %v7019 = vpop.permute.xlu0 %7018
      %7020 = vrot.lane.b32.xlu0 %v6961, 32
      %v7021 = vpop.permute.xlu0 %7020
      %v7022 = vsel %vm978, %v7019, %v7021
      %v7023 = vsel %vm978, %v7017, %v7019
      %v7024 = vsel %vm978, %v7015, %v7017
      %v7025 = vsel %vm978, %v7021, %v7015
      %v7026 = vadd.f32 %v6934, %v7025
      %v7027 = vadd.f32 %v6943, %v7024
      %v7028 = vadd.f32 %v6952, %v7023
      %v7029 = vadd.f32 %v6961, %v7022
      %7030 = vrot.lane.b32.xlu0 %v6986, 32
      %v7031 = vpop.permute.xlu0 %7030
      %7032 = vrot.lane.b32.xlu0 %v6995, 32
      %v7033 = vpop.permute.xlu0 %7032
      %7034 = vrot.lane.b32.xlu0 %v7004, 32
      %v7035 = vpop.permute.xlu0 %7034
      %7036 = vrot.lane.b32.xlu0 %v7013, 32
      %v7037 = vpop.permute.xlu0 %7036
      %v7038 = vsel %vm978, %v7035, %v7037
      %v7039 = vsel %vm978, %v7033, %v7035
      %v7040 = vsel %vm978, %v7031, %v7033
      %v7041 = vsel %vm978, %v7037, %v7031
      %v7042 = vadd.f32 %v6986, %v7041
      %v7043 = vadd.f32 %v6995, %v7040
      %v7044 = vadd.f32 %v7004, %v7039
      %v7045 = vadd.f32 %v7013, %v7038
      %7046 = vrot.lane.b32.xlu0 %v7026, 64
      %v7047 = vpop.permute.xlu0 %7046
      %7048 = vrot.lane.b32.xlu0 %v7027, 64
      %v7049 = vpop.permute.xlu0 %7048
      %7050 = vrot.lane.b32.xlu0 %v7028, 64
      %v7051 = vpop.permute.xlu0 %7050
      %7052 = vrot.lane.b32.xlu0 %v7029, 64
      %v7053 = vpop.permute.xlu0 %7052
      %v7054 = vsel %vm891, %v7051, %v7053
      %v7055 = vsel %vm891, %v7049, %v7051
      %v7056 = vsel %vm891, %v7047, %v7049
      %v7057 = vsel %vm891, %v7053, %v7047
      %v7058 = vadd.f32 %v7026, %v7057
      %v7059 = vadd.f32 %v7027, %v7056
      %v7060 = vadd.f32 %v7028, %v7055
      %v7061 = vadd.f32 %v7029, %v7054
      %7062 = vrot.lane.b32.xlu0 %v7042, 64
      %v7063 = vpop.permute.xlu0 %7062
      %7064 = vrot.lane.b32.xlu0 %v7043, 64
      %v7065 = vpop.permute.xlu0 %7064
      %7066 = vrot.lane.b32.xlu0 %v7044, 64
      %v7067 = vpop.permute.xlu0 %7066
      %7068 = vrot.lane.b32.xlu0 %v7045, 64
      %v7069 = vpop.permute.xlu0 %7068
      %v7070 = vsel %vm891, %v7067, %v7069
      %v7071 = vsel %vm891, %v7065, %v7067
      %v7072 = vsel %vm891, %v7063, %v7065
      %v7073 = vsel %vm891, %v7069, %v7063
      %v7074 = vadd.f32 %v7042, %v7073
      %v7075 = vadd.f32 %v7043, %v7072
      %v7076 = vadd.f32 %v7044, %v7071
      %v7077 = vadd.f32 %v7045, %v7070
      %v7078 = vadd.f32 %v7058, %v7061
      %v7079 = vadd.f32 %v7059, %v7058
      %v7080 = vadd.f32 %v7060, %v7059
      %v7081 = vadd.f32 %v7061, %v7060
      %v7082 = vadd.f32 %v7074, %v7077
      %v7083 = vadd.f32 %v7075, %v7074
      %v7084 = vadd.f32 %v7076, %v7075
      %v7085 = vadd.f32 %v7077, %v7076
      %v7086 = vadd.f32 %v7078, %v7080
      %v7087 = vadd.f32 %v7079, %v7081
      %v7088 = vadd.f32 %v7082, %v7084
      %v7089 = vadd.f32 %v7083, %v7085
      %v7090 = vmul.f32 %v7086, 0.001953125
      %v7091 = vmul.f32 %v7087, 0.001953125
      %v7092 = vmul.f32 %v7088, 0.001953125
      %v7093 = vmul.f32 %v7089, 0.001953125
      %v7094 = vmul.f32 %v7090, %v7090
      %v7095 = vmul.f32 %v7091, %v7091
      %v7096 = vsub.f32 %v7092, %v7094
      %v7097 = vsub.f32 %v7093, %v7095
      %v7098 = vmax.f32 %v7096, 0.0
      %v7099 = vmax.f32 %v7097, 0.0
      %v7100 = vlaneseq
      %v7101 = vshrl.u32 %v7100, 7
      %v7102 = vsub.s32 0, %v7101
      %v7103 = vrot.slane %v7090, %v7102
      %v7104 = vlaneseq
      %v7105 = vshrl.u32 %v7104, 7
      %v7106 = vsub.s32 0, %v7105
      %v7107 = vrot.slane %v7091, %v7106
      %v7108 = vsub.f32 %v6910, %v7103
      %v7109 = vsub.f32 %v6911, %v7107
      %v7110 = vsub.f32 %v6912, %v7103
      %v7111 = vsub.f32 %v6913, %v7107
      %v7112 = vsub.f32 %v6914, %v7103
      %v7113 = vsub.f32 %v6915, %v7107
      %v7114 = vsub.f32 %v6916, %v7103
      %v7115 = vsub.f32 %v6917, %v7107
      %v7116 = vsub.f32 %v6918, %v7103
      %v7117 = vsub.f32 %v6919, %v7107
      %v7118 = vsub.f32 %v6920, %v7103
      %v7119 = vsub.f32 %v6921, %v7107
      %v7120 = vsub.f32 %v6922, %v7103
      %v7121 = vsub.f32 %v6923, %v7107
      %v7122 = vsub.f32 %v6924, %v7103
      %v7123 = vsub.f32 %v6925, %v7107
      %v7124 = vadd.f32 %v7098, 1e-05
      %v7125 = vadd.f32 %v7099, 1e-05
      %v7126 = vrsqrt.pop %v7124
      %v7127 = vrsqrt.pop %v7125
      %v7128 = vlaneseq
      %v7129 = vshrl.u32 %v7128, 7
      %v7130 = vsub.s32 0, %v7129
      %v7131 = vrot.slane %v7126, %v7130
      %v7132 = vlaneseq
      %v7133 = vshrl.u32 %v7132, 7
      %v7134 = vsub.s32 0, %v7133
      %v7135 = vrot.slane %v7127, %v7134
      %v7136 = vmul.f32 %v7108, %v7131
      %v7137 = vmul.f32 %v7109, %v7135
      %v7138 = vmul.f32 %v7110, %v7131
      %v7139 = vmul.f32 %v7111, %v7135
      %v7140 = vmul.f32 %v7112, %v7131
      %v7141 = vmul.f32 %v7113, %v7135
      %v7142 = vmul.f32 %v7114, %v7131
      %v7143 = vmul.f32 %v7115, %v7135
      %v7144 = vmul.f32 %v7116, %v7131
      %v7145 = vmul.f32 %v7117, %v7135
      %v7146 = vmul.f32 %v7118, %v7131
      %v7147 = vmul.f32 %v7119, %v7135
      %v7148 = vmul.f32 %v7120, %v7131
      %v7149 = vmul.f32 %v7121, %v7135
      %v7150 = vmul.f32 %v7122, %v7131
      %v7151 = vmul.f32 %v7123, %v7135
      %v7153 = vlaneseq
      %v7154 = vshrl.u32 %v7153, 7
      %v7155 = vsub.s32 0, %v7154
      %v7156 = vrot.slane %v767, %v7155
      %v7157 = vlaneseq
      %v7158 = vshrl.u32 %v7157, 7
      %v7159 = vsub.s32 1, %v7158
      %v7160 = vrot.slane %v767, %v7159
      %v7161 = vlaneseq
      %v7162 = vshrl.u32 %v7161, 7
      %v7163 = vsub.s32 2, %v7162
      %v7164 = vrot.slane %v767, %v7163
      %v7165 = vlaneseq
      %v7166 = vshrl.u32 %v7165, 7
      %v7167 = vsub.s32 3, %v7166
      %v7168 = vrot.slane %v767, %v7167
      %v7173 = vmul.f32 %v7136, %v7156
      %v7174 = vmul.f32 %v7137, %v7160
      %v7175 = vmul.f32 %v7138, %v7164
      %v7176 = vmul.f32 %v7139, %v7168
      %v7177 = vmul.f32 %v7140, %v7156
      %v7178 = vmul.f32 %v7141, %v7160
      %v7179 = vmul.f32 %v7142, %v7164
      %v7180 = vmul.f32 %v7143, %v7168
      %v7181 = vmul.f32 %v7144, %v7156
      %v7182 = vmul.f32 %v7145, %v7160
      %v7183 = vmul.f32 %v7146, %v7164
      %v7184 = vmul.f32 %v7147, %v7168
      %v7185 = vmul.f32 %v7148, %v7156
      %v7186 = vmul.f32 %v7149, %v7160
      %v7187 = vmul.f32 %v7150, %v7164
      %v7188 = vmul.f32 %v7151, %v7168
      %v7190 = vlaneseq
      %v7191 = vshrl.u32 %v7190, 7
      %v7192 = vsub.s32 0, %v7191
      %v7193 = vrot.slane %v769, %v7192
      %v7194 = vlaneseq
      %v7195 = vshrl.u32 %v7194, 7
      %v7196 = vsub.s32 1, %v7195
      %v7197 = vrot.slane %v769, %v7196
      %v7198 = vlaneseq
      %v7199 = vshrl.u32 %v7198, 7
      %v7200 = vsub.s32 2, %v7199
      %v7201 = vrot.slane %v769, %v7200
      %v7202 = vlaneseq
      %v7203 = vshrl.u32 %v7202, 7
      %v7204 = vsub.s32 3, %v7203
      %v7205 = vrot.slane %v769, %v7204
      %v7210 = vadd.f32 %v7173, %v7193
      %v7211 = vadd.f32 %v7174, %v7197
      %v7212 = vadd.f32 %v7175, %v7201
      %v7213 = vadd.f32 %v7176, %v7205
      %v7214 = vadd.f32 %v7177, %v7193
      %v7215 = vadd.f32 %v7178, %v7197
      %v7216 = vadd.f32 %v7179, %v7201
      %v7217 = vadd.f32 %v7180, %v7205
      %v7218 = vadd.f32 %v7181, %v7193
      %v7219 = vadd.f32 %v7182, %v7197
      %v7220 = vadd.f32 %v7183, %v7201
      %v7221 = vadd.f32 %v7184, %v7205
      %v7222 = vadd.f32 %v7185, %v7193
      %v7223 = vadd.f32 %v7186, %v7197
      %v7224 = vadd.f32 %v7187, %v7201
      %v7225 = vadd.f32 %v7188, %v7205
      %v7226 = vmul.f32 %v7210, 0.5
      %v7227 = vmul.f32 %v7211, 0.5
      %v7228 = vmul.f32 %v7212, 0.5
      %v7229 = vmul.f32 %v7213, 0.5
      %v7230 = vmul.f32 %v7214, 0.5
      %v7231 = vmul.f32 %v7215, 0.5
      %v7232 = vmul.f32 %v7216, 0.5
      %v7233 = vmul.f32 %v7217, 0.5
      %v7234 = vmul.f32 %v7218, 0.5
      %v7235 = vmul.f32 %v7219, 0.5
      %v7236 = vmul.f32 %v7220, 0.5
      %v7237 = vmul.f32 %v7221, 0.5
      %v7238 = vmul.f32 %v7222, 0.5
      %v7239 = vmul.f32 %v7223, 0.5
      %v7240 = vmul.f32 %v7224, 0.5
      %v7241 = vmul.f32 %v7225, 0.5
      %v7242 = vmul.f32 %v7210, 0.70710677
      %v7243 = vmul.f32 %v7211, 0.70710677
      %v7244 = vmul.f32 %v7212, 0.70710677
      %v7245 = vmul.f32 %v7213, 0.70710677
      %v7246 = vmul.f32 %v7214, 0.70710677
      %v7247 = vmul.f32 %v7215, 0.70710677
      %v7248 = vmul.f32 %v7216, 0.70710677
      %v7249 = vmul.f32 %v7217, 0.70710677
      %v7250 = vmul.f32 %v7218, 0.70710677
      %v7251 = vmul.f32 %v7219, 0.70710677
      %v7252 = vmul.f32 %v7220, 0.70710677
      %v7253 = vmul.f32 %v7221, 0.70710677
      %v7254 = vmul.f32 %v7222, 0.70710677
      %v7255 = vmul.f32 %v7223, 0.70710677
      %v7256 = vmul.f32 %v7224, 0.70710677
      %v7257 = vmul.f32 %v7225, 0.70710677
      %v7258 = verf.f32.pop %v7242
      %v7259 = verf.f32.pop %v7243
      %v7260 = verf.f32.pop %v7244
      %v7261 = verf.f32.pop %v7245
      %v7262 = verf.f32.pop %v7246
      %v7263 = verf.f32.pop %v7247
      %v7264 = verf.f32.pop %v7248
      %v7265 = verf.f32.pop %v7249
      %v7266 = verf.f32.pop %v7250
      %v7267 = verf.f32.pop %v7251
      %v7268 = verf.f32.pop %v7252
      %v7269 = verf.f32.pop %v7253
      %v7270 = verf.f32.pop %v7254
      %v7271 = verf.f32.pop %v7255
      %v7272 = verf.f32.pop %v7256
      %v7273 = verf.f32.pop %v7257
      %v7274 = vadd.f32 %v7258, 1.0
      %v7275 = vadd.f32 %v7259, 1.0
      %v7276 = vadd.f32 %v7260, 1.0
      %v7277 = vadd.f32 %v7261, 1.0
      %v7278 = vadd.f32 %v7262, 1.0
      %v7279 = vadd.f32 %v7263, 1.0
      %v7280 = vadd.f32 %v7264, 1.0
      %v7281 = vadd.f32 %v7265, 1.0
      %v7282 = vadd.f32 %v7266, 1.0
      %v7283 = vadd.f32 %v7267, 1.0
      %v7284 = vadd.f32 %v7268, 1.0
      %v7285 = vadd.f32 %v7269, 1.0
      %v7286 = vadd.f32 %v7270, 1.0
      %v7287 = vadd.f32 %v7271, 1.0
      %v7288 = vadd.f32 %v7272, 1.0
      %v7289 = vadd.f32 %v7273, 1.0
      %v7290 = vmul.f32 %v7226, %v7274
      %v7291 = vmul.f32 %v7227, %v7275
      %v7292 = vmul.f32 %v7228, %v7276
      %v7293 = vmul.f32 %v7229, %v7277
      %v7294 = vmul.f32 %v7230, %v7278
      %v7295 = vmul.f32 %v7231, %v7279
      %v7296 = vmul.f32 %v7232, %v7280
      %v7297 = vmul.f32 %v7233, %v7281
      %v7298 = vmul.f32 %v7234, %v7282
      %v7299 = vmul.f32 %v7235, %v7283
      %v7300 = vmul.f32 %v7236, %v7284
      %v7301 = vmul.f32 %v7237, %v7285
      %v7302 = vmul.f32 %v7238, %v7286
      %v7303 = vmul.f32 %v7239, %v7287
      %v7304 = vmul.f32 %v7240, %v7288
      %v7305 = vmul.f32 %v7241, %v7289
      %7306 = vst [vmem:[#allocation2] sm:$0xff] %v7290
      %7307 = vst [vmem:[#allocation2 + $0x8] sm:$0xff] %v7291
      %7308 = vst [vmem:[#allocation2 + $0x10] sm:$0xff] %v7292
      %7309 = vst [vmem:[#allocation2 + $0x18] sm:$0xff] %v7293
      %7310 = vst [vmem:[#allocation2 + $0x20] sm:$0xff] %v7294
      %7311 = vst [vmem:[#allocation2 + $0x28] sm:$0xff] %v7295
      %7312 = vst [vmem:[#allocation2 + $0x30] sm:$0xff] %v7296
      %7313 = vst [vmem:[#allocation2 + $0x38] sm:$0xff] %v7297
      %7314 = vst [vmem:[#allocation2 + $0x40] sm:$0xff] %v7298
      %7315 = vst [vmem:[#allocation2 + $0x48] sm:$0xff] %v7299
      %7316 = vst [vmem:[#allocation2 + $0x50] sm:$0xff] %v7300
      %7317 = vst [vmem:[#allocation2 + $0x58] sm:$0xff] %v7301
      %7318 = vst [vmem:[#allocation2 + $0x60] sm:$0xff] %v7302
      %7319 = vst [vmem:[#allocation2 + $0x68] sm:$0xff] %v7303
      %7320 = vst [vmem:[#allocation2 + $0x70] sm:$0xff] %v7304
      %7321 = vst [vmem:[#allocation2 + $0x78] sm:$0xff] %v7305
      %p7322 = scmp.eq.s32.totalorder %s26, 1
      // Predicated region
      $region77: #{boundary_branch.1} parent=71 // pred_check
        %p7323 = pneg %p7322
      $region78: #{boundary_branch.1} parent=71 // pred_check_branch
        %7325 = sbr.rel (%p7323) target = $region80
      $region79: #{boundary_branch.1} parent=71 // pred_region
        %v7326 = vld [vmem:[#allocation2] sm:$0xff]
        %v7327 = vld [vmem:[#allocation2 + $0x8] sm:$0xff]
        %v7328 = vld [vmem:[#allocation2 + $0x10] sm:$0xff]
        %v7329 = vld [vmem:[#allocation2 + $0x18] sm:$0xff]
        %v7330 = vld [vmem:[#allocation2 + $0x20] sm:$0xff]
        %v7331 = vld [vmem:[#allocation2 + $0x28] sm:$0xff]
        %v7332 = vld [vmem:[#allocation2 + $0x30] sm:$0xff]
        %v7333 = vld [vmem:[#allocation2 + $0x38] sm:$0xff]
        %v7334 = vld [vmem:[#allocation2 + $0x40] sm:$0xff]
        %v7335 = vld [vmem:[#allocation2 + $0x48] sm:$0xff]
        %v7336 = vld [vmem:[#allocation2 + $0x50] sm:$0xff]
        %v7337 = vld [vmem:[#allocation2 + $0x58] sm:$0xff]
        %v7338 = vld [vmem:[#allocation2 + $0x60] sm:$0xff]
        %v7339 = vld [vmem:[#allocation2 + $0x68] sm:$0xff]
        %v7340 = vld [vmem:[#allocation2 + $0x70] sm:$0xff]
        %v7341 = vld [vmem:[#allocation2 + $0x78] sm:$0xff]
        %v7342 = vld [vmem:[%s4] sm:$0xff]
        %v7343 = vld [vmem:[%s4 + $0x8] sm:$0xff]
        %v7344 = vld [vmem:[%s4 + $0x10] sm:$0xff]
        %v7345 = vld [vmem:[%s4 + $0x18] sm:$0xff]
        %v7346 = vld [vmem:[%s3] sm:$0x1]
        %v7347 = vlaneseq
        %v7348 = vshrl.u32 %v7347, 7
        %v7349 = vsub.s32 0, %v7348
        %v7350 = vrot.slane %v7346, %v7349
        %v7351 = vmul.f32 %v7342, %v7350
        %v7352 = vmul.f32 %v7343, %v7350
        %v7353 = vmul.f32 %v7344, %v7350
        %v7354 = vmul.f32 %v7345, %v7350
        %7355 = vst [vmem:[#allocation7] sm:$0xff] %v7351
        %7356 = vst [vmem:[#allocation7 + $0x8] sm:$0xff] %v7352
        %7357 = vst [vmem:[#allocation7 + $0x10] sm:$0xff] %v7353
        %7358 = vst [vmem:[#allocation7 + $0x18] sm:$0xff] %v7354
        %v7359 = vld [vmem:[%s3 + $0x1] sm:$0x1]
        %v7360 = vlaneseq
        %v7361 = vshrl.u32 %v7360, 7
        %v7362 = vsub.s32 0, %v7361
        %v7363 = vrot.slane %v7359, %v7362
        %v7364 = vmul.f32 %v7342, %v7363
        %v7365 = vmul.f32 %v7343, %v7363
        %v7366 = vmul.f32 %v7344, %v7363
        %v7367 = vmul.f32 %v7345, %v7363
        %7368 = vst [vmem:[#allocation7 + $0x20] sm:$0xff] %v7364
        %7369 = vst [vmem:[#allocation7 + $0x28] sm:$0xff] %v7365
        %7370 = vst [vmem:[#allocation7 + $0x30] sm:$0xff] %v7366
        %7371 = vst [vmem:[#allocation7 + $0x38] sm:$0xff] %v7367
        %v7372 = vld [vmem:[%s3 + $0x2] sm:$0x1]
        %v7373 = vlaneseq
        %v7374 = vshrl.u32 %v7373, 7
        %v7375 = vsub.s32 0, %v7374
        %v7376 = vrot.slane %v7372, %v7375
        %v7377 = vmul.f32 %v7342, %v7376
        %v7378 = vmul.f32 %v7343, %v7376
        %v7379 = vmul.f32 %v7344, %v7376
        %v7380 = vmul.f32 %v7345, %v7376
        %7381 = vst [vmem:[#allocation7 + $0x40] sm:$0xff] %v7377
        %7382 = vst [vmem:[#allocation7 + $0x48] sm:$0xff] %v7378
        %7383 = vst [vmem:[#allocation7 + $0x50] sm:$0xff] %v7379
        %7384 = vst [vmem:[#allocation7 + $0x58] sm:$0xff] %v7380
        %v7385 = vld [vmem:[%s3 + $0x3] sm:$0x1]
        %v7386 = vlaneseq
        %v7387 = vshrl.u32 %v7386, 7
        %v7388 = vsub.s32 0, %v7387
        %v7389 = vrot.slane %v7385, %v7388
        %v7390 = vmul.f32 %v7342, %v7389
        %v7391 = vmul.f32 %v7343, %v7389
        %v7392 = vmul.f32 %v7344, %v7389
        %v7393 = vmul.f32 %v7345, %v7389
        %7394 = vst [vmem:[#allocation7 + $0x60] sm:$0xff] %v7390
        %7395 = vst [vmem:[#allocation7 + $0x68] sm:$0xff] %v7391
        %7396 = vst [vmem:[#allocation7 + $0x70] sm:$0xff] %v7392
        %7397 = vst [vmem:[#allocation7 + $0x78] sm:$0xff] %v7393
        %v7398 = vld [vmem:[%s3 + $0x4] sm:$0x1]
        %v7399 = vlaneseq
        %v7400 = vshrl.u32 %v7399, 7
        %v7401 = vsub.s32 0, %v7400
        %v7402 = vrot.slane %v7398, %v7401
        %v7403 = vmul.f32 %v7342, %v7402
        %v7404 = vmul.f32 %v7343, %v7402
        %v7405 = vmul.f32 %v7344, %v7402
        %v7406 = vmul.f32 %v7345, %v7402
        %7407 = vst [vmem:[#allocation7 + $0x80] sm:$0xff] %v7403
        %7408 = vst [vmem:[#allocation7 + $0x88] sm:$0xff] %v7404
        %7409 = vst [vmem:[#allocation7 + $0x90] sm:$0xff] %v7405
        %7410 = vst [vmem:[#allocation7 + $0x98] sm:$0xff] %v7406
        %v7411 = vld [vmem:[%s3 + $0x5] sm:$0x1]
        %v7412 = vlaneseq
        %v7413 = vshrl.u32 %v7412, 7
        %v7414 = vsub.s32 0, %v7413
        %v7415 = vrot.slane %v7411, %v7414
        %v7416 = vmul.f32 %v7342, %v7415
        %v7417 = vmul.f32 %v7343, %v7415
        %v7418 = vmul.f32 %v7344, %v7415
        %v7419 = vmul.f32 %v7345, %v7415
        %7420 = vst [vmem:[#allocation7 + $0xa0] sm:$0xff] %v7416
        %7421 = vst [vmem:[#allocation7 + $0xa8] sm:$0xff] %v7417
        %7422 = vst [vmem:[#allocation7 + $0xb0] sm:$0xff] %v7418
        %7423 = vst [vmem:[#allocation7 + $0xb8] sm:$0xff] %v7419
        %v7424 = vld [vmem:[%s3 + $0x6] sm:$0x1]
        %v7425 = vlaneseq
        %v7426 = vshrl.u32 %v7425, 7
        %v7427 = vsub.s32 0, %v7426
        %v7428 = vrot.slane %v7424, %v7427
        %v7429 = vmul.f32 %v7342, %v7428
        %v7430 = vmul.f32 %v7343, %v7428
        %v7431 = vmul.f32 %v7344, %v7428
        %v7432 = vmul.f32 %v7345, %v7428
        %7433 = vst [vmem:[#allocation7 + $0xc0] sm:$0xff] %v7429
        %7434 = vst [vmem:[#allocation7 + $0xc8] sm:$0xff] %v7430
        %7435 = vst [vmem:[#allocation7 + $0xd0] sm:$0xff] %v7431
        %7436 = vst [vmem:[#allocation7 + $0xd8] sm:$0xff] %v7432
        %v7437 = vld [vmem:[%s3 + $0x7] sm:$0x1]
        %v7438 = vlaneseq
        %v7439 = vshrl.u32 %v7438, 7
        %v7440 = vsub.s32 0, %v7439
        %v7441 = vrot.slane %v7437, %v7440
        %v7442 = vmul.f32 %v7342, %v7441
        %v7443 = vmul.f32 %v7343, %v7441
        %v7444 = vmul.f32 %v7344, %v7441
        %v7445 = vmul.f32 %v7345, %v7441
        %7446 = vst [vmem:[#allocation7 + $0xe0] sm:$0xff] %v7442
        %7447 = vst [vmem:[#allocation7 + $0xe8] sm:$0xff] %v7443
        %7448 = vst [vmem:[#allocation7 + $0xf0] sm:$0xff] %v7444
        %7449 = vst [vmem:[#allocation7 + $0xf8] sm:$0xff] %v7445
        %v7450 = vld [vmem:[%s3 + $0x8] sm:$0x1]
        %v7451 = vlaneseq
        %v7452 = vshrl.u32 %v7451, 7
        %v7453 = vsub.s32 0, %v7452
        %v7454 = vrot.slane %v7450, %v7453
        %v7455 = vmul.f32 %v7342, %v7454
        %v7456 = vmul.f32 %v7343, %v7454
        %v7457 = vmul.f32 %v7344, %v7454
        %v7458 = vmul.f32 %v7345, %v7454
        %7459 = vst [vmem:[#allocation7 + $0x100] sm:$0xff] %v7455
        %7460 = vst [vmem:[#allocation7 + $0x108] sm:$0xff] %v7456
        %7461 = vst [vmem:[#allocation7 + $0x110] sm:$0xff] %v7457
        %7462 = vst [vmem:[#allocation7 + $0x118] sm:$0xff] %v7458
        %v7463 = vld [vmem:[%s3 + $0x9] sm:$0x1]
        %v7464 = vlaneseq
        %v7465 = vshrl.u32 %v7464, 7
        %v7466 = vsub.s32 0, %v7465
        %v7467 = vrot.slane %v7463, %v7466
        %v7468 = vmul.f32 %v7342, %v7467
        %v7469 = vmul.f32 %v7343, %v7467
        %v7470 = vmul.f32 %v7344, %v7467
        %v7471 = vmul.f32 %v7345, %v7467
        %7472 = vst [vmem:[#allocation7 + $0x120] sm:$0xff] %v7468
        %7473 = vst [vmem:[#allocation7 + $0x128] sm:$0xff] %v7469
        %7474 = vst [vmem:[#allocation7 + $0x130] sm:$0xff] %v7470
        %7475 = vst [vmem:[#allocation7 + $0x138] sm:$0xff] %v7471
        %v7476 = vld [vmem:[%s3 + $0xa] sm:$0x1]
        %v7477 = vlaneseq
        %v7478 = vshrl.u32 %v7477, 7
        %v7479 = vsub.s32 0, %v7478
        %v7480 = vrot.slane %v7476, %v7479
        %v7481 = vmul.f32 %v7342, %v7480
        %v7482 = vmul.f32 %v7343, %v7480
        %v7483 = vmul.f32 %v7344, %v7480
        %v7484 = vmul.f32 %v7345, %v7480
        %7485 = vst [vmem:[#allocation7 + $0x140] sm:$0xff] %v7481
        %7486 = vst [vmem:[#allocation7 + $0x148] sm:$0xff] %v7482
        %7487 = vst [vmem:[#allocation7 + $0x150] sm:$0xff] %v7483
        %7488 = vst [vmem:[#allocation7 + $0x158] sm:$0xff] %v7484
        %v7489 = vld [vmem:[%s3 + $0xb] sm:$0x1]
        %v7490 = vlaneseq
        %v7491 = vshrl.u32 %v7490, 7
        %v7492 = vsub.s32 0, %v7491
        %v7493 = vrot.slane %v7489, %v7492
        %v7494 = vmul.f32 %v7342, %v7493
        %v7495 = vmul.f32 %v7343, %v7493
        %v7496 = vmul.f32 %v7344, %v7493
        %v7497 = vmul.f32 %v7345, %v7493
        %7498 = vst [vmem:[#allocation7 + $0x160] sm:$0xff] %v7494
        %7499 = vst [vmem:[#allocation7 + $0x168] sm:$0xff] %v7495
        %7500 = vst [vmem:[#allocation7 + $0x170] sm:$0xff] %v7496
        %7501 = vst [vmem:[#allocation7 + $0x178] sm:$0xff] %v7497
        %v7502 = vld [vmem:[%s3 + $0xc] sm:$0x1]
        %v7503 = vlaneseq
        %v7504 = vshrl.u32 %v7503, 7
        %v7505 = vsub.s32 0, %v7504
        %v7506 = vrot.slane %v7502, %v7505
        %v7507 = vmul.f32 %v7342, %v7506
        %v7508 = vmul.f32 %v7343, %v7506
        %v7509 = vmul.f32 %v7344, %v7506
        %v7510 = vmul.f32 %v7345, %v7506
        %7511 = vst [vmem:[#allocation7 + $0x180] sm:$0xff] %v7507
        %7512 = vst [vmem:[#allocation7 + $0x188] sm:$0xff] %v7508
        %7513 = vst [vmem:[#allocation7 + $0x190] sm:$0xff] %v7509
        %7514 = vst [vmem:[#allocation7 + $0x198] sm:$0xff] %v7510
        %v7515 = vld [vmem:[%s3 + $0xd] sm:$0x1]
        %v7516 = vlaneseq
        %v7517 = vshrl.u32 %v7516, 7
        %v7518 = vsub.s32 0, %v7517
        %v7519 = vrot.slane %v7515, %v7518
        %v7520 = vmul.f32 %v7342, %v7519
        %v7521 = vmul.f32 %v7343, %v7519
        %v7522 = vmul.f32 %v7344, %v7519
        %v7523 = vmul.f32 %v7345, %v7519
        %7524 = vst [vmem:[#allocation7 + $0x1a0] sm:$0xff] %v7520
        %7525 = vst [vmem:[#allocation7 + $0x1a8] sm:$0xff] %v7521
        %7526 = vst [vmem:[#allocation7 + $0x1b0] sm:$0xff] %v7522
        %7527 = vst [vmem:[#allocation7 + $0x1b8] sm:$0xff] %v7523
        %v7528 = vld [vmem:[%s3 + $0xe] sm:$0x1]
        %v7529 = vlaneseq
        %v7530 = vshrl.u32 %v7529, 7
        %v7531 = vsub.s32 0, %v7530
        %v7532 = vrot.slane %v7528, %v7531
        %v7533 = vmul.f32 %v7342, %v7532
        %v7534 = vmul.f32 %v7343, %v7532
        %v7535 = vmul.f32 %v7344, %v7532
        %v7536 = vmul.f32 %v7345, %v7532
        %7537 = vst [vmem:[#allocation7 + $0x1c0] sm:$0xff] %v7533
        %7538 = vst [vmem:[#allocation7 + $0x1c8] sm:$0xff] %v7534
        %7539 = vst [vmem:[#allocation7 + $0x1d0] sm:$0xff] %v7535
        %7540 = vst [vmem:[#allocation7 + $0x1d8] sm:$0xff] %v7536
        %v7541 = vld [vmem:[%s3 + $0xf] sm:$0x1]
        %v7542 = vlaneseq
        %v7543 = vshrl.u32 %v7542, 7
        %v7544 = vsub.s32 0, %v7543
        %v7545 = vrot.slane %v7541, %v7544
        %v7546 = vmul.f32 %v7342, %v7545
        %v7547 = vmul.f32 %v7343, %v7545
        %v7548 = vmul.f32 %v7344, %v7545
        %v7549 = vmul.f32 %v7345, %v7545
        %7550 = vst [vmem:[#allocation7 + $0x1e0] sm:$0xff] %v7546
        %7551 = vst [vmem:[#allocation7 + $0x1e8] sm:$0xff] %v7547
        %7552 = vst [vmem:[#allocation7 + $0x1f0] sm:$0xff] %v7548
        %7553 = vst [vmem:[#allocation7 + $0x1f8] sm:$0xff] %v7549
        %v7554 = vld [vmem:[#allocation7] sm:$0xff]
        %v7555 = vld [vmem:[#allocation7 + $0x8] sm:$0xff]
        %v7556 = vld [vmem:[#allocation7 + $0x10] sm:$0xff]
        %v7557 = vld [vmem:[#allocation7 + $0x18] sm:$0xff]
        %v7558 = vld [vmem:[#allocation7 + $0x20] sm:$0xff]
        %v7559 = vld [vmem:[#allocation7 + $0x28] sm:$0xff]
        %v7560 = vld [vmem:[#allocation7 + $0x30] sm:$0xff]
        %v7561 = vld [vmem:[#allocation7 + $0x38] sm:$0xff]
        %v7562 = vld [vmem:[#allocation7 + $0x40] sm:$0xff]
        %v7563 = vld [vmem:[#allocation7 + $0x48] sm:$0xff]
        %v7564 = vld [vmem:[#allocation7 + $0x50] sm:$0xff]
        %v7565 = vld [vmem:[#allocation7 + $0x58] sm:$0xff]
        %v7566 = vld [vmem:[#allocation7 + $0x60] sm:$0xff]
        %v7567 = vld [vmem:[#allocation7 + $0x68] sm:$0xff]
        %v7568 = vld [vmem:[#allocation7 + $0x70] sm:$0xff]
        %v7569 = vld [vmem:[#allocation7 + $0x78] sm:$0xff]
        %v7570 = vld [vmem:[#allocation7 + $0x80] sm:$0xff]
        %v7571 = vld [vmem:[#allocation7 + $0x88] sm:$0xff]
        %v7572 = vld [vmem:[#allocation7 + $0x90] sm:$0xff]
        %v7573 = vld [vmem:[#allocation7 + $0x98] sm:$0xff]
        %v7574 = vld [vmem:[#allocation7 + $0xa0] sm:$0xff]
        %v7575 = vld [vmem:[#allocation7 + $0xa8] sm:$0xff]
        %v7576 = vld [vmem:[#allocation7 + $0xb0] sm:$0xff]
        %v7577 = vld [vmem:[#allocation7 + $0xb8] sm:$0xff]
        %v7578 = vld [vmem:[#allocation7 + $0xc0] sm:$0xff]
        %v7579 = vld [vmem:[#allocation7 + $0xc8] sm:$0xff]
        %v7580 = vld [vmem:[#allocation7 + $0xd0] sm:$0xff]
        %v7581 = vld [vmem:[#allocation7 + $0xd8] sm:$0xff]
        %v7582 = vld [vmem:[#allocation7 + $0xe0] sm:$0xff]
        %v7583 = vld [vmem:[#allocation7 + $0xe8] sm:$0xff]
        %v7584 = vld [vmem:[#allocation7 + $0xf0] sm:$0xff]
        %v7585 = vld [vmem:[#allocation7 + $0xf8] sm:$0xff]
        %v7586 = vld [vmem:[#allocation7 + $0x100] sm:$0xff]
        %v7587 = vld [vmem:[#allocation7 + $0x108] sm:$0xff]
        %v7588 = vld [vmem:[#allocation7 + $0x110] sm:$0xff]
        %v7589 = vld [vmem:[#allocation7 + $0x118] sm:$0xff]
        %v7590 = vld [vmem:[#allocation7 + $0x120] sm:$0xff]
        %v7591 = vld [vmem:[#allocation7 + $0x128] sm:$0xff]
        %v7592 = vld [vmem:[#allocation7 + $0x130] sm:$0xff]
        %v7593 = vld [vmem:[#allocation7 + $0x138] sm:$0xff]
        %v7594 = vld [vmem:[#allocation7 + $0x140] sm:$0xff]
        %v7595 = vld [vmem:[#allocation7 + $0x148] sm:$0xff]
        %v7596 = vld [vmem:[#allocation7 + $0x150] sm:$0xff]
        %v7597 = vld [vmem:[#allocation7 + $0x158] sm:$0xff]
        %v7598 = vld [vmem:[#allocation7 + $0x160] sm:$0xff]
        %v7599 = vld [vmem:[#allocation7 + $0x168] sm:$0xff]
        %v7600 = vld [vmem:[#allocation7 + $0x170] sm:$0xff]
        %v7601 = vld [vmem:[#allocation7 + $0x178] sm:$0xff]
        %v7602 = vld [vmem:[#allocation7 + $0x180] sm:$0xff]
        %v7603 = vld [vmem:[#allocation7 + $0x188] sm:$0xff]
        %v7604 = vld [vmem:[#allocation7 + $0x190] sm:$0xff]
        %v7605 = vld [vmem:[#allocation7 + $0x198] sm:$0xff]
        %v7606 = vld [vmem:[#allocation7 + $0x1a0] sm:$0xff]
        %v7607 = vld [vmem:[#allocation7 + $0x1a8] sm:$0xff]
        %v7608 = vld [vmem:[#allocation7 + $0x1b0] sm:$0xff]
        %v7609 = vld [vmem:[#allocation7 + $0x1b8] sm:$0xff]
        %v7610 = vld [vmem:[#allocation7 + $0x1c0] sm:$0xff]
        %v7611 = vld [vmem:[#allocation7 + $0x1c8] sm:$0xff]
        %v7612 = vld [vmem:[#allocation7 + $0x1d0] sm:$0xff]
        %v7613 = vld [vmem:[#allocation7 + $0x1d8] sm:$0xff]
        %v7614 = vld [vmem:[#allocation7 + $0x1e0] sm:$0xff]
        %v7615 = vld [vmem:[#allocation7 + $0x1e8] sm:$0xff]
        %v7616 = vld [vmem:[#allocation7 + $0x1f0] sm:$0xff]
        %v7617 = vld [vmem:[#allocation7 + $0x1f8] sm:$0xff]
        %v7618 = vld [vmem:[%s5] sm:$0x1]
        %v7620 = vlaneseq
        %v7621 = vshrl.u32 %v7620, 7
        %v7622 = vsub.s32 0, %v7621
        %v7623 = vrot.slane %v7618, %v7622
        %7625 = vmatprep.subr.mxu0 0.0
        %7626 = vmatpush1.msra.mxu0 %v7569
        %7627 = vmatprep.subr.mxu0 0.0
        %7628 = vmatpush1.msra.mxu0 %v7568
        %7629 = vmatprep.subr.mxu0 0.0
        %7630 = vmatpush1.msra.mxu0 %v7567
        %7631 = vmatprep.subr.mxu0 0.0
        %7632 = vmatpush1.msra.mxu0 %v7566
        %7633 = vmatprep.subr.mxu0 0.0
        %7634 = vmatpush1.msra.mxu0 %v7565
        %7635 = vmatprep.subr.mxu0 0.0
        %7636 = vmatpush1.msra.mxu0 %v7564
        %7637 = vmatprep.subr.mxu0 0.0
        %7638 = vmatpush1.msra.mxu0 %v7563
        %7639 = vmatprep.subr.mxu0 0.0
        %7640 = vmatpush1.msra.mxu0 %v7562
        %7641 = vmatprep.subr.mxu0 0.0
        %7642 = vmatpush1.msra.mxu0 %v7561
        %7643 = vmatprep.subr.mxu0 0.0
        %7644 = vmatpush1.msra.mxu0 %v7560
        %7645 = vmatprep.subr.mxu0 0.0
        %7646 = vmatpush1.msra.mxu0 %v7559
        %7647 = vmatprep.subr.mxu0 0.0
        %7648 = vmatpush1.msra.mxu0 %v7558
        %7649 = vmatprep.subr.mxu0 0.0
        %7650 = vmatpush1.msra.mxu0 %v7557
        %7651 = vmatprep.subr.mxu0 0.0
        %7652 = vmatpush1.msra.mxu0 %v7556
        %7653 = vmatprep.subr.mxu0 0.0
        %7654 = vmatpush1.msra.mxu0 %v7555
        %7655 = vmatprep.subr.mxu0 0.0
        %7656 = vmatpush1.msra.mxu0 %v7554
        %7657 = vmatprep.subr.mxu0 0.0
        %7658 = vmatpush2.msra.mxu0 %v7585
        %7659 = vmatprep.subr.mxu0 0.0
        %7660 = vmatpush2.msra.mxu0 %v7584
        %7661 = vmatprep.subr.mxu0 0.0
        %7662 = vmatpush2.msra.mxu0 %v7583
        %7663 = vmatprep.subr.mxu0 0.0
        %7664 = vmatpush2.msra.mxu0 %v7582
        %7665 = vmatprep.subr.mxu0 0.0
        %7666 = vmatpush2.msra.mxu0 %v7581
        %7667 = vmatprep.subr.mxu0 0.0
        %7668 = vmatpush2.msra.mxu0 %v7580
        %7669 = vmatprep.subr.mxu0 0.0
        %7670 = vmatpush2.msra.mxu0 %v7579
        %7671 = vmatprep.subr.mxu0 0.0
        %7672 = vmatpush2.msra.mxu0 %v7578
        %7673 = vmatprep.subr.mxu0 0.0
        %7674 = vmatpush2.msra.mxu0 %v7577
        %7675 = vmatprep.subr.mxu0 0.0
        %7676 = vmatpush2.msra.mxu0 %v7576
        %7677 = vmatprep.subr.mxu0 0.0
        %7678 = vmatpush2.msra.mxu0 %v7575
        %7679 = vmatprep.subr.mxu0 0.0
        %7680 = vmatpush2.msra.mxu0 %v7574
        %7681 = vmatprep.subr.mxu0 0.0
        %7682 = vmatpush2.msra.mxu0 %v7573
        %7683 = vmatprep.subr.mxu0 0.0
        %7684 = vmatpush2.msra.mxu0 %v7572
        %7685 = vmatprep.subr.mxu0 0.0
        %7686 = vmatpush2.msra.mxu0 %v7571
        %7687 = vmatprep.subr.mxu0 0.0
        %7688 = vmatpush2.msra.mxu0 %v7570
        %7689 = vmatprep.mubr.f32.mxu0 %v7327
        %7690 = vmatmul.mubr.f32.gmra.mxu0 %v7326
        %v7691 = vpop.f32.mrf.mxu0
        %v7692 = vadd.f32 %v7623, %v7691
        %v7693 = vpop.f32.mrf.mxu0
        %7694 = vmatprep.mubr.f32.mxu0 %v7331
        %7695 = vmatmul.mubr.f32.gmra.mxu0 %v7330
        %v7696 = vpop.f32.mrf.mxu0
        %v7697 = vadd.f32 %v7623, %v7696
        %v7698 = vpop.f32.mrf.mxu0
        %7699 = vmatprep.mubr.f32.mxu0 %v7335
        %7700 = vmatmul.mubr.f32.gmra.mxu0 %v7334
        %v7701 = vpop.f32.mrf.mxu0
        %v7702 = vadd.f32 %v7623, %v7701
        %v7703 = vpop.f32.mrf.mxu0
        %7704 = vmatprep.mubr.f32.mxu0 %v7339
        %7705 = vmatmul.mubr.f32.gmra.mxu0 %v7338
        %v7706 = vpop.f32.mrf.mxu0
        %v7707 = vadd.f32 %v7623, %v7706
        %v7708 = vpop.f32.mrf.mxu0
        %7709 = vdwg.mxu0
        %7710 = vmatprep.subr.mxu0 0.0
        %7711 = vmatpush1.msra.mxu0 %v7601
        %7712 = vmatprep.subr.mxu0 0.0
        %7713 = vmatpush1.msra.mxu0 %v7600
        %7714 = vmatprep.subr.mxu0 0.0
        %7715 = vmatpush1.msra.mxu0 %v7599
        %7716 = vmatprep.subr.mxu0 0.0
        %7717 = vmatpush1.msra.mxu0 %v7598
        %7718 = vmatprep.subr.mxu0 0.0
        %7719 = vmatpush1.msra.mxu0 %v7597
        %7720 = vmatprep.subr.mxu0 0.0
        %7721 = vmatpush1.msra.mxu0 %v7596
        %7722 = vmatprep.subr.mxu0 0.0
        %7723 = vmatpush1.msra.mxu0 %v7595
        %7724 = vmatprep.subr.mxu0 0.0
        %7725 = vmatpush1.msra.mxu0 %v7594
        %7726 = vmatprep.subr.mxu0 0.0
        %7727 = vmatpush1.msra.mxu0 %v7593
        %7728 = vmatprep.subr.mxu0 0.0
        %7729 = vmatpush1.msra.mxu0 %v7592
        %7730 = vmatprep.subr.mxu0 0.0
        %7731 = vmatpush1.msra.mxu0 %v7591
        %7732 = vmatprep.subr.mxu0 0.0
        %7733 = vmatpush1.msra.mxu0 %v7590
        %7734 = vmatprep.subr.mxu0 0.0
        %7735 = vmatpush1.msra.mxu0 %v7589
        %7736 = vmatprep.subr.mxu0 0.0
        %7737 = vmatpush1.msra.mxu0 %v7588
        %7738 = vmatprep.subr.mxu0 0.0
        %7739 = vmatpush1.msra.mxu0 %v7587
        %7740 = vmatprep.subr.mxu0 0.0
        %7741 = vmatpush1.msra.mxu0 %v7586
        %7742 = vmatprep.subr.mxu0 0.0
        %7743 = vmatpush2.msra.mxu0 %v7617
        %7744 = vmatprep.subr.mxu0 0.0
        %7745 = vmatpush2.msra.mxu0 %v7616
        %7746 = vmatprep.subr.mxu0 0.0
        %7747 = vmatpush2.msra.mxu0 %v7615
        %7748 = vmatprep.subr.mxu0 0.0
        %7749 = vmatpush2.msra.mxu0 %v7614
        %7750 = vmatprep.subr.mxu0 0.0
        %7751 = vmatpush2.msra.mxu0 %v7613
        %7752 = vmatprep.subr.mxu0 0.0
        %7753 = vmatpush2.msra.mxu0 %v7612
        %7754 = vmatprep.subr.mxu0 0.0
        %7755 = vmatpush2.msra.mxu0 %v7611
        %7756 = vmatprep.subr.mxu0 0.0
        %7757 = vmatpush2.msra.mxu0 %v7610
        %7758 = vmatprep.subr.mxu0 0.0
        %7759 = vmatpush2.msra.mxu0 %v7609
        %7760 = vmatprep.subr.mxu0 0.0
        %7761 = vmatpush2.msra.mxu0 %v7608
        %7762 = vmatprep.subr.mxu0 0.0
        %7763 = vmatpush2.msra.mxu0 %v7607
        %7764 = vmatprep.subr.mxu0 0.0
        %7765 = vmatpush2.msra.mxu0 %v7606
        %7766 = vmatprep.subr.mxu0 0.0
        %7767 = vmatpush2.msra.mxu0 %v7605
        %7768 = vmatprep.subr.mxu0 0.0
        %7769 = vmatpush2.msra.mxu0 %v7604
        %7770 = vmatprep.subr.mxu0 0.0
        %7771 = vmatpush2.msra.mxu0 %v7603
        %7772 = vmatprep.subr.mxu0 0.0
        %7773 = vmatpush2.msra.mxu0 %v7602
        %7774 = vmatprep.mubr.f32.mxu0 %v7329
        %7775 = vmatmul.mubr.f32.gmra.mxu0 %v7328
        %v7776 = vpop.f32.mrf.mxu0
        %v7777 = vadd.f32 %v7692, %v7776
        %v7778 = vpop.f32.mrf.mxu0
        %7779 = vmatprep.mubr.f32.mxu0 %v7333
        %7780 = vmatmul.mubr.f32.gmra.mxu0 %v7332
        %v7781 = vpop.f32.mrf.mxu0
        %v7782 = vadd.f32 %v7697, %v7781
        %v7783 = vpop.f32.mrf.mxu0
        %7784 = vmatprep.mubr.f32.mxu0 %v7337
        %7785 = vmatmul.mubr.f32.gmra.mxu0 %v7336
        %v7786 = vpop.f32.mrf.mxu0
        %v7787 = vadd.f32 %v7702, %v7786
        %v7788 = vpop.f32.mrf.mxu0
        %7789 = vmatprep.mubr.f32.mxu0 %v7341
        %7790 = vmatmul.mubr.f32.gmra.mxu0 %v7340
        %v7791 = vpop.f32.mrf.mxu0
        %v7792 = vadd.f32 %v7707, %v7791
        %v7793 = vpop.f32.mrf.mxu0
        %7794 = vdwg.mxu0
        %7795 = vst [vmem:[%s13] sm:$0xff] %v7777
        %7796 = vst [vmem:[%s13 + $0x8] sm:$0xff] %v7782
        %7797 = vst [vmem:[%s13 + $0x10] sm:$0xff] %v7787
        %7798 = vst [vmem:[%s13 + $0x18] sm:$0xff] %v7792
        %v7799 = vld [vmem:[%s0] sm:$0xff]
        %v7800 = vld [vmem:[%s0 + $0x8] sm:$0xff]
        %v7801 = vld [vmem:[%s0 + $0x10] sm:$0xff]
        %v7802 = vld [vmem:[%s0 + $0x18] sm:$0xff]
        %v7803 = vld [vmem:[%s0 + $0x20] sm:$0xff]
        %v7804 = vld [vmem:[%s0 + $0x28] sm:$0xff]
        %v7805 = vld [vmem:[%s0 + $0x30] sm:$0xff]
        %v7806 = vld [vmem:[%s0 + $0x38] sm:$0xff]
        %v7807 = vld [vmem:[%s0 + $0x40] sm:$0xff]
        %v7808 = vld [vmem:[%s0 + $0x48] sm:$0xff]
        %v7809 = vld [vmem:[%s0 + $0x50] sm:$0xff]
        %v7810 = vld [vmem:[%s0 + $0x58] sm:$0xff]
        %v7811 = vld [vmem:[%s0 + $0x60] sm:$0xff]
        %v7812 = vld [vmem:[%s0 + $0x68] sm:$0xff]
        %v7813 = vld [vmem:[%s0 + $0x70] sm:$0xff]
        %v7814 = vld [vmem:[%s0 + $0x78] sm:$0xff]
        %v7815 = vadd.f32 %v7326, %v7799
        %v7816 = vadd.f32 %v7327, %v7800
        %v7817 = vadd.f32 %v7328, %v7801
        %v7818 = vadd.f32 %v7329, %v7802
        %v7819 = vadd.f32 %v7330, %v7803
        %v7820 = vadd.f32 %v7331, %v7804
        %v7821 = vadd.f32 %v7332, %v7805
        %v7822 = vadd.f32 %v7333, %v7806
        %v7823 = vadd.f32 %v7334, %v7807
        %v7824 = vadd.f32 %v7335, %v7808
        %v7825 = vadd.f32 %v7336, %v7809
        %v7826 = vadd.f32 %v7337, %v7810
        %v7827 = vadd.f32 %v7338, %v7811
        %v7828 = vadd.f32 %v7339, %v7812
        %v7829 = vadd.f32 %v7340, %v7813
        %v7830 = vadd.f32 %v7341, %v7814
        %7831 = vst [vmem:[%s14] sm:$0xff] %v7815
        %7832 = vst [vmem:[%s14 + $0x8] sm:$0xff] %v7816
        %7833 = vst [vmem:[%s14 + $0x10] sm:$0xff] %v7817
        %7834 = vst [vmem:[%s14 + $0x18] sm:$0xff] %v7818
        %7835 = vst [vmem:[%s14 + $0x20] sm:$0xff] %v7819
        %7836 = vst [vmem:[%s14 + $0x28] sm:$0xff] %v7820
        %7837 = vst [vmem:[%s14 + $0x30] sm:$0xff] %v7821
        %7838 = vst [vmem:[%s14 + $0x38] sm:$0xff] %v7822
        %7839 = vst [vmem:[%s14 + $0x40] sm:$0xff] %v7823
        %7840 = vst [vmem:[%s14 + $0x48] sm:$0xff] %v7824
        %7841 = vst [vmem:[%s14 + $0x50] sm:$0xff] %v7825
        %7842 = vst [vmem:[%s14 + $0x58] sm:$0xff] %v7826
        %7843 = vst [vmem:[%s14 + $0x60] sm:$0xff] %v7827
        %7844 = vst [vmem:[%s14 + $0x68] sm:$0xff] %v7828
        %7845 = vst [vmem:[%s14 + $0x70] sm:$0xff] %v7829
        %7846 = vst [vmem:[%s14 + $0x78] sm:$0xff] %v7830
      $region80: #{boundary_branch.1} parent=71 // pred_fallthru
        _
      // Predicated region
      $region81: #{boundary_branch.1} parent=71 // pred_check
        %p7847 = pneg %p347
      $region82: #{boundary_branch.1} parent=71 // pred_check_branch
        %7849 = sbr.rel (%p7847) target = $region84
      $region83: #{boundary_branch.1} parent=71 // pred_region
        _
      $region84: #{boundary_branch.1} parent=71 // pred_fallthru
        _
      // Predicated region
      $region85: #{boundary_branch.1} parent=71 // pred_check
        %p7850 = pneg %p368
      $region86: #{boundary_branch.1} parent=71 // pred_check_branch
        %7852 = sbr.rel (%p7850) target = $region88
      $region87: #{boundary_branch.1} parent=71 // pred_region
        _
      $region88: #{boundary_branch.1} parent=71 // pred_fallthru
        _
      // Predicated region
      $region89: #{boundary_branch.1} parent=71 // pred_check
        %p7853 = pneg %p347
      $region90: #{boundary_branch.1} parent=71 // pred_check_branch
        %7855 = sbr.rel (%p7853) target = $region92
      $region91: #{boundary_branch.1} parent=71 // pred_region
        _
      $region92: #{boundary_branch.1} parent=71 // pred_fallthru
        _
      // Predicated region
      $region93: #{boundary_branch.1} parent=71 // pred_check
        %p7856 = pneg %p368
      $region94: #{boundary_branch.1} parent=71 // pred_check_branch
        %7858 = sbr.rel (%p7856) target = $region96
      $region95: #{boundary_branch.1} parent=71 // pred_region
        _
      $region96: #{boundary_branch.1} parent=71 // pred_fallthru
        _
    $region72: #{boundary_branch.1} parent=5 // pred_fallthru
      _
    %p7859 = scmp.le.s32.totalorder 2, %s21
    // Predicated region
    $region97: #{boundary_branch.1} parent=5 // pred_check
      %p7860 = pneg %p7859
    $region98: #{boundary_branch.1} parent=5 // pred_check_branch
      %7862 = sbr.rel (%p7860) target = $region100
    $region99: #{boundary_branch.1} parent=5 // pred_region
      %s7863 = ssub.s32 %s21, 2
    $region100: #{boundary_branch.1} parent=5 // pred_fallthru
      _
  $region6: #{boundary_branch.1} parent=0 // loop_footer
    %s25 = sadd.s32 1, %s21
  $region7: #{boundary_branch.1} parent=0 // loop_footer_branch
    %20 = sbr.rel target = $region3
  $region8: #{boundary_branch.1} parent=0 // loop_exit
    _

</llo_original>
